<compile_context>
chip_gen: v5e
topology: v5e:2x2
jax: 0.10.0
libtpu: 0.0.40
codegen_flags: <defaults>
</compile_context>

<pallas_src>
import functools

import jax
import jax.numpy as jnp
from jax.experimental import pallas as pl
from jax.experimental.pallas import tpu as pltpu


TILE_MM = 256   # contraction / matmul tiles (feeds the 256-wide MXU on v6e/v7x)
TILE_N2 = 512   # N^2 streaming tiles (adj / A / pos): amortizes per-grid-step overhead
_VMEM_LIMIT = 48 * 1024 * 1024  # fits v7x's 64 MiB physical VMEM, conservative on v5e/v6e


def _bf16(a):
    return a if a.dtype == jnp.bfloat16 else a.astype(jnp.bfloat16)


def _fit(dim, tile):
    t = min(tile, dim)
    # TODO(synk): real HeCo graphs (N=4019/4057/6564, feats 1902/334) are not tile
    #             multiples; pad inputs up to the tile grid before using these wrappers.
    assert dim % t == 0, f"dimension {dim} must be divisible by tile {t}"
    return t


def _elu(y):
    # Safe ELU: exp only ever sees non-positive arguments (no overflow in dead branch).
    return jnp.where(y > 0.0, y, jnp.exp(jnp.minimum(y, 0.0)) - 1.0)


# ----------------------------------------------------------------------------
# Kernel 1: fused dual linear  (y0, y1) = (x @ W0 + b0, x @ W1 + b1)
#   Both fc_list layers share a single streaming pass over x.
#   grid = (M/tm, K/tk), K last ("arbitrary"), f32 VMEM accumulators.
# ----------------------------------------------------------------------------
def _dual_linear_kernel(x_ref, w0_ref, b0_ref, w1_ref, b1_ref,
                        o0_ref, o1_ref, acc0_ref, acc1_ref):
    k = pl.program_id(1)

    @pl.when(k == 0)
    def _():
        acc0_ref[...] = jnp.zeros_like(acc0_ref)
        acc1_ref[...] = jnp.zeros_like(acc1_ref)

    xb = x_ref[...]
    acc0_ref[...] += jnp.dot(xb, w0_ref[...], preferred_element_type=jnp.float32)
    acc1_ref[...] += jnp.dot(xb, w1_ref[...], preferred_element_type=jnp.float32)

    @pl.when(k == pl.num_programs(1) - 1)
    def _():
        o0_ref[...] = (acc0_ref[...] + b0_ref[...]).astype(o0_ref.dtype)
        o1_ref[...] = (acc1_ref[...] + b1_ref[...]).astype(o1_ref.dtype)


def dual_linear(x, w0, b0, w1, b1, tm=TILE_N2, tk=TILE_MM):
    M, K = x.shape
    H0 = w0.shape[1]
    H1 = w1.shape[1]
    tm, tk = _fit(M, tm), _fit(K, tk)
    return pl.pallas_call(
        _dual_linear_kernel,
        out_shape=(jax.ShapeDtypeStruct((M, H0), jnp.bfloat16),
                   jax.ShapeDtypeStruct((M, H1), jnp.bfloat16)),
        grid=(M // tm, K // tk),
        in_specs=[
            pl.BlockSpec((tm, tk), lambda i, k: (i, k)),   # x
            pl.BlockSpec((tk, H0), lambda i, k: (k, 0)),   # W0
            pl.BlockSpec((1, H0), lambda i, k: (0, 0)),    # b0
            pl.BlockSpec((tk, H1), lambda i, k: (k, 0)),   # W1
            pl.BlockSpec((1, H1), lambda i, k: (0, 0)),    # b1
        ],
        out_specs=(pl.BlockSpec((tm, H0), lambda i, k: (i, 0)),
                   pl.BlockSpec((tm, H1), lambda i, k: (i, 0))),
        scratch_shapes=[pltpu.VMEM((tm, H0), jnp.float32),
                        pltpu.VMEM((tm, H1), jnp.float32)],
        compiler_params=pltpu.CompilerParams(
            dimension_semantics=("parallel", "arbitrary"),
            vmem_limit_bytes=_VMEM_LIMIT),
    )(_bf16(x), _bf16(w0), b0.reshape(1, H0).astype(jnp.float32),
      _bf16(w1), b1.reshape(1, H1).astype(jnp.float32))


# ----------------------------------------------------------------------------
# Kernel 2: fused (optionally edge-weighted) aggregation + GCN linear + ELU
#   out = elu( ((adj [* e]) @ h) @ W + b )          (bf16 output)
#   mp_encode: grid (row_tile, k_tile);  sc_encode: grid (P, row_tile, k_tile)
# ----------------------------------------------------------------------------
def _agg_linear_kernel(k_axis, has_e, a_ref, *rest):
    if has_e:
        e_ref, h_ref, w_ref, b_ref, o_ref, acc_ref = rest
    else:
        h_ref, w_ref, b_ref, o_ref, acc_ref = rest

    k = pl.program_id(k_axis)

    @pl.when(k == 0)
    def _():
        acc_ref[...] = jnp.zeros_like(acc_ref)

    aw = a_ref[...]
    if has_e:
        aw = aw * e_ref[...]
    acc_ref[...] += jnp.dot(aw, h_ref[...], preferred_element_type=jnp.float32)

    @pl.when(k == pl.num_programs(k_axis) - 1)
    def _():
        # epilogue matmul in bf16 (f32 accumulation already bounded the values)
        y = jnp.dot(acc_ref[...].astype(jnp.bfloat16), w_ref[...],
                    preferred_element_type=jnp.float32) + b_ref[...]
        o_ref[...] = _elu(y).astype(o_ref.dtype)


def mp_encode(adj, e, h, w, b, tm=TILE_N2, tk=TILE_N2):
    N = adj.shape[0]
    D = h.shape[1]
    H = w.shape[1]
    tm, tk = _fit(N, tm), _fit(N, tk)
    return pl.pallas_call(
        functools.partial(_agg_linear_kernel, 1, True),
        out_shape=jax.ShapeDtypeStruct((N, H), jnp.bfloat16),
        grid=(N // tm, N // tk),
        in_specs=[
            pl.BlockSpec((tm, tk), lambda i, k: (i, k)),   # adj (bf16)
            pl.BlockSpec((tm, tk), lambda i, k: (i, k)),   # edge weights (bf16)
            pl.BlockSpec((tk, D), lambda i, k: (k, 0)),    # node features (bf16)
            pl.BlockSpec((D, H), lambda i, k: (0, 0)),     # GCN weight (bf16)
            pl.BlockSpec((1, H), lambda i, k: (0, 0)),     # bias (f32)
        ],
        out_specs=pl.BlockSpec((tm, H), lambda i, k: (i, 0)),
        scratch_shapes=[pltpu.VMEM((tm, D), jnp.float32)],
        compiler_params=pltpu.CompilerParams(
            dimension_semantics=("parallel", "arbitrary"),
            vmem_limit_bytes=_VMEM_LIMIT),
    )(_bf16(adj), _bf16(e), _bf16(h), _bf16(w),
      b.reshape(1, H).astype(jnp.float32))


def sc_encode(A, h, w, b, tm=TILE_N2, tk=TILE_N2):
    # A: [P, N, N], h: [N, D], w: [P, D, H], b: [P, H]  ->  [P, N, H] (bf16)
    P, N, _ = A.shape
    D = h.shape[1]
    H = w.shape[2]
    tm, tk = _fit(N, tm), _fit(N, tk)
    return pl.pallas_call(
        functools.partial(_agg_linear_kernel, 2, False),
        out_shape=jax.ShapeDtypeStruct((P, N, H), jnp.bfloat16),
        grid=(P, N // tm, N // tk),
        in_specs=[
            pl.BlockSpec((None, tm, tk), lambda p, i, k: (p, i, k)),  # A[p]
            pl.BlockSpec((tk, D), lambda p, i, k: (k, 0)),            # h_all
            pl.BlockSpec((None, D, H), lambda p, i, k: (p, 0, 0)),    # Wsc[p]
            pl.BlockSpec((None, 1, H), lambda p, i, k: (p, 0, 0)),    # bsc[p]
        ],
        out_specs=pl.BlockSpec((None, tm, H), lambda p, i, k: (p, i, 0)),
        scratch_shapes=[pltpu.VMEM((tm, D), jnp.float32)],
        compiler_params=pltpu.CompilerParams(
            dimension_semantics=("parallel", "parallel", "arbitrary"),
            vmem_limit_bytes=_VMEM_LIMIT),
    )(_bf16(A), _bf16(h), _bf16(w), b.reshape(P, 1, H).astype(jnp.float32))


# ----------------------------------------------------------------------------
# Kernel 3: semantic-attention scores, one scalar per schema
#   score_p = mean_i ( tanh(emb_p[i] @ Watt + batt) . a_att )
#   Per-lane partials accumulate in a (1,H) VMEM buffer; only the finalize step
#   does the cross-lane reduction + SMEM write.
# ----------------------------------------------------------------------------
def _attn_score_kernel(inv_n, emb_ref, w_ref, b_ref, a_ref, o_ref, acc_ref):
    p = pl.program_id(0)
    i = pl.program_id(1)

    @pl.when(i == 0)
    def _():
        acc_ref[...] = jnp.zeros_like(acc_ref)

    t = jnp.dot(emb_ref[...], w_ref[...],
                preferred_element_type=jnp.float32) + b_ref[...]
    t = jnp.tanh(t)
    acc_ref[...] += jnp.sum(t * a_ref[...], axis=0, keepdims=True)

    @pl.when(i == pl.num_programs(1) - 1)
    def _():
        o_ref[p] = jnp.sum(acc_ref[...]) * inv_n


def semantic_attention_scores(embs, w_att, b_att, a_att, tm=TILE_N2):
    P, N, H = embs.shape
    tm = _fit(N, tm)
    return pl.pallas_call(
        functools.partial(_attn_score_kernel, 1.0 / N),
        out_shape=jax.ShapeDtypeStruct((P,), jnp.float32),
        grid=(P, N // tm),
        in_specs=[
            pl.BlockSpec((None, tm, H), lambda p, i: (p, i, 0)),
            pl.BlockSpec((H, H), lambda p, i: (0, 0)),
            pl.BlockSpec((1, H), lambda p, i: (0, 0)),
            pl.BlockSpec((1, H), lambda p, i: (0, 0)),
        ],
        out_specs=pl.BlockSpec(memory_space=pltpu.MemorySpace.SMEM),
        scratch_shapes=[pltpu.VMEM((1, H), jnp.float32)],
        compiler_params=pltpu.CompilerParams(
            dimension_semantics=("arbitrary", "arbitrary"),
            vmem_limit_bytes=_VMEM_LIMIT),
    )(_bf16(embs), _bf16(w_att),
      b_att.reshape(1, H).astype(jnp.float32),
      a_att.reshape(1, H).astype(jnp.float32))


# ----------------------------------------------------------------------------
# Kernel 4: shared projection MLP + row L2-normalization (batched [2N, H])
#   zp = normalize( elu(z @ Wp1 + b1) @ Wp2 + b2 )    -> bf16 contrast operands
# ----------------------------------------------------------------------------
def _project_norm_kernel(z_ref, w1_ref, b1_ref, w2_ref, b2_ref, o_ref):
    h1 = jnp.dot(z_ref[...].astype(jnp.bfloat16), w1_ref[...],
                 preferred_element_type=jnp.float32) + b1_ref[...]
    h1 = _elu(h1)
    h2 = jnp.dot(h1.astype(jnp.bfloat16), w2_ref[...],
                 preferred_element_type=jnp.float32) + b2_ref[...]
    inv_norm = jax.lax.rsqrt(jnp.sum(h2 * h2, axis=-1, keepdims=True) + 1e-12)
    o_ref[...] = (h2 * inv_norm).astype(o_ref.dtype)


def project_and_normalize(z, w1, b1, w2, b2, tm=TILE_N2):
    M, H = z.shape
    Hout = w2.shape[1]
    tm = _fit(M, tm)
    return pl.pallas_call(
        _project_norm_kernel,
        out_shape=jax.ShapeDtypeStruct((M, Hout), jnp.bfloat16),
        grid=(M // tm,),
        in_specs=[
            pl.BlockSpec((tm, H), lambda i: (i, 0)),
            pl.BlockSpec((H, H), lambda i: (0, 0)),
            pl.BlockSpec((1, H), lambda i: (0, 0)),
            pl.BlockSpec((H, Hout), lambda i: (0, 0)),
            pl.BlockSpec((1, Hout), lambda i: (0, 0)),
        ],
        out_specs=pl.BlockSpec((tm, Hout), lambda i: (i, 0)),
        compiler_params=pltpu.CompilerParams(
            dimension_semantics=("parallel",),
            vmem_limit_bytes=_VMEM_LIMIT),
    )(_bf16(z), _bf16(w1), b1.reshape(1, H).astype(jnp.float32),
      _bf16(w2), b2.reshape(1, Hout).astype(jnp.float32))


# ----------------------------------------------------------------------------
# Kernel 5: streaming bidirectional contrastive statistics
#   sim_ij = exp( (z1n_i . z2n_j) / tau )  -- never materialized beyond one tile.
#   Emits:
#     row_nll      [N, 1]    : -log( sum_j pos_ij sim_ij / (sum_j sim_ij + 1e-8) )
#     col_den_part [ni, 1, N]: per-row-tile partial column sums of sim
#     col_num_part [ni, 1, N]: per-row-tile partial column sums of sim * pos^T
#   Row axis is "parallel" (each row tile is independent), column axis last.
#   Safety: operands are L2-normalized, |s| <= 1, so exp(s/tau) cannot overflow
#   for tau = O(1); no max-subtraction needed.
# ----------------------------------------------------------------------------
def _contrast_tiles_kernel(inv_tau, z1_ref, z2_ref, pos_ref, posT_ref,
                           rownll_ref, colden_ref, colnum_ref,
                           row_den, row_num):
    j = pl.program_id(1)

    @pl.when(j == 0)
    def _():
        row_den[...] = jnp.zeros_like(row_den)
        row_num[...] = jnp.zeros_like(row_num)

    s = jax.lax.dot_general(z1_ref[...], z2_ref[...],
                            (((1,), (1,)), ((), ())),
                            preferred_element_type=jnp.float32)      # (tm, tn)
    sim = jnp.exp(s * inv_tau)
    pos = pos_ref[...].astype(jnp.float32)                           # (tm, tn)
    # pos^T tile built in-kernel (XLU transpose) from the (tn, tm) block of pos.
    pos_t = posT_ref[...].astype(jnp.float32).T                      # (tm, tn)

    row_den[...] += jnp.sum(sim, axis=1, keepdims=True)
    row_num[...] += jnp.sum(sim * pos, axis=1, keepdims=True)
    colden_ref[...] = jnp.sum(sim, axis=0, keepdims=True)            # (1, tn)
    colnum_ref[...] = jnp.sum(sim * pos_t, axis=0, keepdims=True)    # (1, tn)

    @pl.when(j == pl.num_programs(1) - 1)
    def _():
        ratio = row_num[...] / (row_den[...] + 1e-8)                 # (tm, 1)
        rownll_ref[...] = -jnp.log(ratio)


def contrast_parts(z1n, z2n, pos, tau, tm=TILE_N2, tn=TILE_N2):
    N, H = z1n.shape
    tm, tn = _fit(N, tm), _fit(N, tn)
    ni, nj = N // tm, N // tn
    return pl.pallas_call(
        functools.partial(_contrast_tiles_kernel, 1.0 / float(tau)),
        out_shape=(jax.ShapeDtypeStruct((N, 1), jnp.float32),
                   jax.ShapeDtypeStruct((ni, 1, N), jnp.float32),
                   jax.ShapeDtypeStruct((ni, 1, N), jnp.float32)),
        grid=(ni, nj),
        in_specs=[
            pl.BlockSpec((tm, H), lambda i, j: (i, 0)),       # z_mp proj+norm (bf16)
            pl.BlockSpec((tn, H), lambda i, j: (j, 0)),       # z_sc proj+norm (bf16)
            pl.BlockSpec((tm, tn), lambda i, j: (i, j)),      # pos tile
            pl.BlockSpec((tn, tm), lambda i, j: (j, i)),      # pos tile to transpose
        ],
        out_specs=(pl.BlockSpec((tm, 1), lambda i, j: (i, 0)),
                   pl.BlockSpec((None, 1, tn), lambda i, j: (i, 0, j)),
                   pl.BlockSpec((None, 1, tn), lambda i, j: (i, 0, j))),
        scratch_shapes=[
            pltpu.VMEM((tm, 1), jnp.float32),                 # row denominators
            pltpu.VMEM((tm, 1), jnp.float32),                 # row pos-masked numerators
        ],
        compiler_params=pltpu.CompilerParams(
            dimension_semantics=("parallel", "arbitrary"),
            vmem_limit_bytes=_VMEM_LIMIT),
    )(_bf16(z1n), _bf16(z2n), _bf16(pos), _bf16(pos))


# ----------------------------------------------------------------------------
# HeCo forward (eval mode: dropout = identity)
# ----------------------------------------------------------------------------
def heco_forward(params, x, adj, e, A, pos, tau, lam):
    # fc_list[0]: feats_dim -> hidden_dim (schema encoder input)
    # fc_list[1]: feats_dim -> feats_dim  (meta-path encoder input)
    h_all, x2 = dual_linear(x, params["W0"], params["b0"],
                            params["W1"], params["b1"])                # bf16

    # --- Mp_encoder: fused edge-weighted aggregation + GCN linear + ELU ------
    z_mp = mp_encode(adj, e, x2, params["Wmp"], params["bmp"])         # [N, H] bf16

    # --- Sc_encoder: per-schema fused aggregation + linear + ELU -------------
    embs = sc_encode(A, h_all, params["Wsc"], params["bsc"])           # [P, N, H] bf16
    scores = semantic_attention_scores(embs, params["Watt"], params["batt"],
                                       params["a_att"])                # [P]
    beta = jax.nn.softmax(scores)                                      # tiny glue
    z_sc = jnp.einsum("p,pnh->nh", beta.astype(jnp.bfloat16), embs)    # [N, H] bf16

    # --- Contrast: batched projection MLP + L2-norm, streaming InfoNCE -------
    N = z_mp.shape[0]
    z_both = jnp.concatenate([z_mp, z_sc], axis=0)                     # [2N, H] bf16
    zp = project_and_normalize(z_both, params["Wp1"], params["bp1"],
                               params["Wp2"], params["bp2"])           # [2N, H] bf16
    zp_mp, zp_sc = zp[:N], zp[N:]

    row_nll, col_den_p, col_num_p = contrast_parts(zp_mp, zp_sc, pos, tau)

    # tiny O(N) epilogue in JAX
    lori_mp = jnp.mean(row_nll)
    col_den = jnp.sum(col_den_p, axis=0).reshape(-1)                   # (N,)
    col_num = jnp.sum(col_num_p, axis=0).reshape(-1)                   # (N,)
    lori_sc = jnp.mean(-jnp.log(col_num / (col_den + 1e-8)))
    return lam * lori_mp + (1.0 - lam) * lori_sc


# ----------------------------------------------------------------------------
# Deterministic parameter init (xavier-normal, matching the __init__ shapes)
# ----------------------------------------------------------------------------
def xavier_normal(key, shape, gain=1.0):
    fan_in, fan_out = shape[-2], shape[-1]
    std = gain * (2.0 / (fan_in + fan_out)) ** 0.5
    return (std * jax.random.normal(key, shape)).astype(jnp.float32)


if __name__ == "__main__":
    # Lane-aligned small demo sizes: nodes, feats_dim, hidden_dim, num schemas
    N, F, H, P = 256, 128, 128, 2
    tau, lam = 0.8, 0.5

    key = jax.random.PRNGKey(0)
    keys = jax.random.split(key, 20)

    params = {
        "W0": xavier_normal(keys[0], (F, H), gain=1.414),
        "b0": jnp.zeros((H,), jnp.float32),
        "W1": xavier_normal(keys[1], (F, F)),
        "b1": jnp.zeros((F,), jnp.float32),
        "Wmp": xavier_normal(keys[2], (F, H)),
        "bmp": jnp.zeros((H,), jnp.float32),
        "Wsc": jnp.stack([xavier_normal(keys[3 + p], (H, H)) for p in range(P)]),
        "bsc": jnp.zeros((P, H), jnp.float32),
        "Watt": xavier_normal(keys[6], (H, H)),
        "batt": jnp.zeros((H,), jnp.float32),
        "a_att": xavier_normal(keys[7], (1, H)),
        "Wp1": xavier_normal(keys[8], (H, H)),
        "bp1": jnp.zeros((H,), jnp.float32),
        "Wp2": xavier_normal(keys[9], (H, H)),
        "bp2": jnp.zeros((H,), jnp.float32),
    }

    x = jax.random.normal(keys[10], (N, F), jnp.float32)
    adj = (jax.random.uniform(keys[11], (N, N)) < 0.1).astype(jnp.float32)
    e = jax.random.uniform(keys[12], (N, N), dtype=jnp.float32)        # edge weights
    A = (jax.random.uniform(keys[13], (P, N, N)) < 0.1).astype(jnp.float32)
    pos = jnp.clip(
        (jax.random.uniform(keys[14], (N, N)) < 0.05).astype(jnp.float32)
        + jnp.eye(N, dtype=jnp.float32),
        0.0, 1.0,
    )

    # Hoist bf16 casts of the static graph tensors out of the jitted forward:
    # 0/1 masks are exact in bf16; continuous edge weights lose ~3 decimal digits.
    x_bf = x.astype(jnp.bfloat16)
    adj_bf = adj.astype(jnp.bfloat16)
    e_bf = e.astype(jnp.bfloat16)
    A_bf = A.astype(jnp.bfloat16)
    pos_bf = pos.astype(jnp.bfloat16)

    fwd = jax.jit(functools.partial(heco_forward, tau=tau, lam=lam))
    loss = fwd(params, x_bf, adj_bf, e_bf, A_bf, pos_bf)
    loss = jax.block_until_ready(loss)
    assert bool(jnp.isfinite(loss)), loss
    print("KERNEL_OK")
</pallas_src>

<mosaic_0001>
module attributes {stable_mosaic.version = 11 : i64} {
  func.func @_dual_linear_kernel(%arg0: i32, %arg1: i32, %arg2: memref<256x128xbf16, #tpu.memory_space<vmem>>, %arg3: memref<128x128xbf16, #tpu.memory_space<vmem>>, %arg4: memref<1x128xf32, #tpu.memory_space<vmem>>, %arg5: memref<128x128xbf16, #tpu.memory_space<vmem>>, %arg6: memref<1x128xf32, #tpu.memory_space<vmem>>, %arg7: memref<256x128xbf16, #tpu.memory_space<vmem>>, %arg8: memref<256x128xbf16, #tpu.memory_space<vmem>>, %arg9: memref<256x128xf32, #tpu.memory_space<vmem>>, %arg10: memref<256x128xf32, #tpu.memory_space<vmem>>) attributes {dimension_semantics = [#tpu.dimension_semantics<parallel>, #tpu.dimension_semantics<arbitrary>], iteration_bounds = array<i64: 1, 1>, scalar_prefetch = 0 : i64, scratch_operands = 2 : i64, tpu.core_type = #tpu.core_type<tc>, window_params = [{transform_indices = @transform_0, window_bounds = array<i64: 256, 128>}, {transform_indices = @transform_1, window_bounds = array<i64: 128, 128>}, {pipeline_mode = #tpu.pipeline_mode<synchronous>, transform_indices = @transform_2, window_bounds = array<i64: 1, 128>}, {transform_indices = @transform_3, window_bounds = array<i64: 128, 128>}, {pipeline_mode = #tpu.pipeline_mode<synchronous>, transform_indices = @transform_4, window_bounds = array<i64: 1, 128>}, {transform_indices = @transform_5, window_bounds = array<i64: 256, 128>}, {transform_indices = @transform_6, window_bounds = array<i64: 256, 128>}]} {
    %c0_i32 = arith.constant 0 : i32
    %0 = arith.cmpi eq, %arg1, %c0_i32 : i32
    %1 = arith.extui %0 : i1 to i32
    %c0_i32_0 = arith.constant 0 : i32
    %2 = arith.cmpi ne, %1, %c0_i32_0 : i32
    scf.if %2 {
      %cst_17 = arith.constant 0.000000e+00 : f32
      %17 = vector.broadcast %cst_17 : f32 to vector<256x128xf32>
      %c0_18 = arith.constant 0 : index
      %c0_19 = arith.constant 0 : index
      %18 = vector.load %arg9[%c0_18, %c0_19] : memref<256x128xf32, #tpu.memory_space<vmem>>, vector<256x128xf32>
      tpu.vector_store %arg9[%c0_18, %c0_19], %17 {strides = array<i32>} : memref<256x128xf32, #tpu.memory_space<vmem>>, vector<256x128xf32>,
      %cst_20 = arith.constant 0.000000e+00 : f32
      %19 = vector.broadcast %cst_20 : f32 to vector<256x128xf32>
      %c0_21 = arith.constant 0 : index
      %c0_22 = arith.constant 0 : index
      %20 = vector.load %arg10[%c0_21, %c0_22] : memref<256x128xf32, #tpu.memory_space<vmem>>, vector<256x128xf32>
      tpu.vector_store %arg10[%c0_21, %c0_22], %19 {strides = array<i32>} : memref<256x128xf32, #tpu.memory_space<vmem>>, vector<256x128xf32>,
    } else {
    }
    %c0 = arith.constant 0 : index
    %c0_1 = arith.constant 0 : index
    %3 = vector.load %arg2[%c0, %c0_1] : memref<256x128xbf16, #tpu.memory_space<vmem>>, vector<256x128xbf16>
    %c0_2 = arith.constant 0 : index
    %c0_3 = arith.constant 0 : index
    %4 = vector.load %arg9[%c0_2, %c0_3] : memref<256x128xf32, #tpu.memory_space<vmem>>, vector<256x128xf32>
    %c0_4 = arith.constant 0 : index
    %c0_5 = arith.constant 0 : index
    %5 = vector.load %arg3[%c0_4, %c0_5] : memref<128x128xbf16, #tpu.memory_space<vmem>>, vector<128x128xbf16>
    %cst = arith.constant dense<0.000000e+00> : vector<256x128xf32>
    %6 = tpu.matmul %3, %5, %cst {dimension_numbers = #tpu.dot_dimension_numbers<[1], [0], [0], [1], [0, 0, 1, 1], [], []>} : vector<256x128xbf16>, vector<128x128xbf16>, vector<256x128xf32> -> vector<256x128xf32>
    %7 = arith.addf %4, %6 : vector<256x128xf32>
    %c0_6 = arith.constant 0 : index
    %c0_7 = arith.constant 0 : index
    %8 = vector.load %arg9[%c0_6, %c0_7] : memref<256x128xf32, #tpu.memory_space<vmem>>, vector<256x128xf32>
    tpu.vector_store %arg9[%c0_6, %c0_7], %7 {strides = array<i32>} : memref<256x128xf32, #tpu.memory_space<vmem>>, vector<256x128xf32>,
    %c0_8 = arith.constant 0 : index
    %c0_9 = arith.constant 0 : index
    %9 = vector.load %arg10[%c0_8, %c0_9] : memref<256x128xf32, #tpu.memory_space<vmem>>, vector<256x128xf32>
    %c0_10 = arith.constant 0 : index
    %c0_11 = arith.constant 0 : index
    %10 = vector.load %arg5[%c0_10, %c0_11] : memref<128x128xbf16, #tpu.memory_space<vmem>>, vector<128x128xbf16>
    %cst_12 = arith.constant dense<0.000000e+00> : vector<256x128xf32>
    %11 = tpu.matmul %3, %10, %cst_12 {dimension_numbers = #tpu.dot_dimension_numbers<[1], [0], [0], [1], [0, 0, 1, 1], [], []>} : vector<256x128xbf16>, vector<128x128xbf16>, vector<256x128xf32> -> vector<256x128xf32>
    %12 = arith.addf %9, %11 : vector<256x128xf32>
    %c0_13 = arith.constant 0 : index
    %c0_14 = arith.constant 0 : index
    %13 = vector.load %arg10[%c0_13, %c0_14] : memref<256x128xf32, #tpu.memory_space<vmem>>, vector<256x128xf32>
    tpu.vector_store %arg10[%c0_13, %c0_14], %12 {strides = array<i32>} : memref<256x128xf32, #tpu.memory_space<vmem>>, vector<256x128xf32>,
    %c0_i32_15 = arith.constant 0 : i32
    %14 = arith.cmpi eq, %arg1, %c0_i32_15 : i32
    %15 = arith.extui %14 : i1 to i32
    %c0_i32_16 = arith.constant 0 : i32
    %16 = arith.cmpi ne, %15, %c0_i32_16 : i32
    scf.if %16 {
      %c0_17 = arith.constant 0 : index
      %c0_18 = arith.constant 0 : index
      %17 = vector.load %arg9[%c0_17, %c0_18] : memref<256x128xf32, #tpu.memory_space<vmem>>, vector<256x128xf32>
      %c0_19 = arith.constant 0 : index
      %c0_20 = arith.constant 0 : index
      %18 = vector.load %arg4[%c0_19, %c0_20] : memref<1x128xf32, #tpu.memory_space<vmem>>, vector<1x128xf32>
      %19 = vector.broadcast %18 : vector<1x128xf32> to vector<256x128xf32>
      %20 = arith.addf %17, %19 : vector<256x128xf32>
      %21 = arith.truncf %20 : vector<256x128xf32> to vector<256x128xbf16>
      %c0_21 = arith.constant 0 : index
      %c0_22 = arith.constant 0 : index
      %22 = vector.load %arg7[%c0_21, %c0_22] : memref<256x128xbf16, #tpu.memory_space<vmem>>, vector<256x128xbf16>
      tpu.vector_store %arg7[%c0_21, %c0_22], %21 {strides = array<i32>} : memref<256x128xbf16, #tpu.memory_space<vmem>>, vector<256x128xbf16>,
      %c0_23 = arith.constant 0 : index
      %c0_24 = arith.constant 0 : index
      %23 = vector.load %arg10[%c0_23, %c0_24] : memref<256x128xf32, #tpu.memory_space<vmem>>, vector<256x128xf32>
      %c0_25 = arith.constant 0 : index
      %c0_26 = arith.constant 0 : index
      %24 = vector.load %arg6[%c0_25, %c0_26] : memref<1x128xf32, #tpu.memory_space<vmem>>, vector<1x128xf32>
      %25 = vector.broadcast %24 : vector<1x128xf32> to vector<256x128xf32>
      %26 = arith.addf %23, %25 : vector<256x128xf32>
      %27 = arith.truncf %26 : vector<256x128xf32> to vector<256x128xbf16>
      %c0_27 = arith.constant 0 : index
      %c0_28 = arith.constant 0 : index
      %28 = vector.load %arg8[%c0_27, %c0_28] : memref<256x128xbf16, #tpu.memory_space<vmem>>, vector<256x128xbf16>
      tpu.vector_store %arg8[%c0_27, %c0_28], %27 {strides = array<i32>} : memref<256x128xbf16, #tpu.memory_space<vmem>>, vector<256x128xbf16>,
    } else {
    }
    return
  }
  func.func @transform_0(%arg0: i32, %arg1: i32) -> (i32, i32) {
    %c0_i32 = arith.constant 0 : i32
    return %arg0, %arg1 : i32, i32
  }
  func.func @transform_1(%arg0: i32, %arg1: i32) -> (i32, i32) {
    %c0_i32 = arith.constant 0 : i32
    %c0_i32_0 = arith.constant 0 : i32
    return %arg1, %c0_i32 : i32, i32
  }
  func.func @transform_2(%arg0: i32, %arg1: i32) -> (i32, i32) {
    %c0_i32 = arith.constant 0 : i32
    %c0_i32_0 = arith.constant 0 : i32
    %c0_i32_1 = arith.constant 0 : i32
    return %c0_i32, %c0_i32_0 : i32, i32
  }
  func.func @transform_3(%arg0: i32, %arg1: i32) -> (i32, i32) {
    %c0_i32 = arith.constant 0 : i32
    %c0_i32_0 = arith.constant 0 : i32
    return %arg1, %c0_i32 : i32, i32
  }
  func.func @transform_4(%arg0: i32, %arg1: i32) -> (i32, i32) {
    %c0_i32 = arith.constant 0 : i32
    %c0_i32_0 = arith.constant 0 : i32
    %c0_i32_1 = arith.constant 0 : i32
    return %c0_i32, %c0_i32_0 : i32, i32
  }
  func.func @transform_5(%arg0: i32, %arg1: i32) -> (i32, i32) {
    %c0_i32 = arith.constant 0 : i32
    %c0_i32_0 = arith.constant 0 : i32
    return %arg0, %c0_i32 : i32, i32
  }
  func.func @transform_6(%arg0: i32, %arg1: i32) -> (i32, i32) {
    %c0_i32 = arith.constant 0 : i32
    %c0_i32_0 = arith.constant 0 : i32
    return %arg0, %c0_i32 : i32, i32
  }
}

module attributes {stable_mosaic.version = 11 : i64} {
  func.func @_agg_linear_kernel(%arg0: i32, %arg1: i32, %arg2: i32, %arg3: memref<1x256x256xbf16, #tpu.memory_space<vmem>>, %arg4: memref<256x128xbf16, #tpu.memory_space<vmem>>, %arg5: memref<1x128x128xbf16, #tpu.memory_space<vmem>>, %arg6: memref<1x1x128xf32, #tpu.memory_space<vmem>>, %arg7: memref<1x256x128xbf16, #tpu.memory_space<vmem>>, %arg8: memref<256x128xf32, #tpu.memory_space<vmem>>) attributes {dimension_semantics = [#tpu.dimension_semantics<parallel>, #tpu.dimension_semantics<parallel>, #tpu.dimension_semantics<arbitrary>], iteration_bounds = array<i64: 2, 1, 1>, scalar_prefetch = 0 : i64, scratch_operands = 1 : i64, tpu.core_type = #tpu.core_type<tc>, window_params = [{transform_indices = @transform_0, window_bounds = array<i64: 1, 256, 256>}, {transform_indices = @transform_1, window_bounds = array<i64: 256, 128>}, {transform_indices = @transform_2, window_bounds = array<i64: 1, 128, 128>}, {transform_indices = @transform_3, window_bounds = array<i64: 1, 1, 128>}, {transform_indices = @transform_4, window_bounds = array<i64: 1, 256, 128>}]} {
    %c0_i32 = arith.constant 0 : i32
    %0 = arith.cmpi eq, %arg2, %c0_i32 : i32
    %1 = arith.extui %0 : i1 to i32
    %c0_i32_0 = arith.constant 0 : i32
    %2 = arith.cmpi ne, %1, %c0_i32_0 : i32
    scf.if %2 {
      %cst_11 = arith.constant 0.000000e+00 : f32
      %13 = vector.broadcast %cst_11 : f32 to vector<256x128xf32>
      %c0_12 = arith.constant 0 : index
      %c0_13 = arith.constant 0 : index
      %14 = vector.load %arg8[%c0_12, %c0_13] : memref<256x128xf32, #tpu.memory_space<vmem>>, vector<256x128xf32>
      tpu.vector_store %arg8[%c0_12, %c0_13], %13 {strides = array<i32>} : memref<256x128xf32, #tpu.memory_space<vmem>>, vector<256x128xf32>,
    } else {
    }
    %c0 = arith.constant 0 : index
    %c0_1 = arith.constant 0 : index
    %c0_2 = arith.constant 0 : index
    %3 = vector.load %arg3[%c0, %c0_1, %c0_2] : memref<1x256x256xbf16, #tpu.memory_space<vmem>>, vector<1x256x256xbf16>
    %4 = vector.shape_cast %3 : vector<1x256x256xbf16> to vector<256x256xbf16>
    %c0_3 = arith.constant 0 : index
    %c0_4 = arith.constant 0 : index
    %5 = vector.load %arg8[%c0_3, %c0_4] : memref<256x128xf32, #tpu.memory_space<vmem>>, vector<256x128xf32>
    %c0_5 = arith.constant 0 : index
    %c0_6 = arith.constant 0 : index
    %6 = vector.load %arg4[%c0_5, %c0_6] : memref<256x128xbf16, #tpu.memory_space<vmem>>, vector<256x128xbf16>
    %cst = arith.constant dense<0.000000e+00> : vector<256x128xf32>
    %7 = tpu.matmul %4, %6, %cst {dimension_numbers = #tpu.dot_dimension_numbers<[1], [0], [0], [1], [0, 0, 1, 1], [], []>} : vector<256x256xbf16>, vector<256x128xbf16>, vector<256x128xf32> -> vector<256x128xf32>
    %8 = arith.addf %5, %7 : vector<256x128xf32>
    %c0_7 = arith.constant 0 : index
    %c0_8 = arith.constant 0 : index
    %9 = vector.load %arg8[%c0_7, %c0_8] : memref<256x128xf32, #tpu.memory_space<vmem>>, vector<256x128xf32>
    tpu.vector_store %arg8[%c0_7, %c0_8], %8 {strides = array<i32>} : memref<256x128xf32, #tpu.memory_space<vmem>>, vector<256x128xf32>,
    %c0_i32_9 = arith.constant 0 : i32
    %10 = arith.cmpi eq, %arg2, %c0_i32_9 : i32
    %11 = arith.extui %10 : i1 to i32
    %c0_i32_10 = arith.constant 0 : i32
    %12 = arith.cmpi ne, %11, %c0_i32_10 : i32
    scf.if %12 {
      %c0_11 = arith.constant 0 : index
      %c0_12 = arith.constant 0 : index
      %13 = vector.load %arg8[%c0_11, %c0_12] : memref<256x128xf32, #tpu.memory_space<vmem>>, vector<256x128xf32>
      %14 = arith.truncf %13 : vector<256x128xf32> to vector<256x128xbf16>
      %c0_13 = arith.constant 0 : index
      %c0_14 = arith.constant 0 : index
      %c0_15 = arith.constant 0 : index
      %15 = vector.load %arg5[%c0_13, %c0_14, %c0_15] : memref<1x128x128xbf16, #tpu.memory_space<vmem>>, vector<1x128x128xbf16>
      %16 = vector.shape_cast %15 : vector<1x128x128xbf16> to vector<128x128xbf16>
      %cst_16 = arith.constant dense<0.000000e+00> : vector<256x128xf32>
      %17 = tpu.matmul %14, %16, %cst_16 {dimension_numbers = #tpu.dot_dimension_numbers<[1], [0], [0], [1], [0, 0, 1, 1], [], []>} : vector<256x128xbf16>, vector<128x128xbf16>, vector<256x128xf32> -> vector<256x128xf32>
      %c0_17 = arith.constant 0 : index
      %c0_18 = arith.constant 0 : index
      %c0_19 = arith.constant 0 : index
      %18 = vector.load %arg6[%c0_17, %c0_18, %c0_19] : memref<1x1x128xf32, #tpu.memory_space<vmem>>, vector<1x1x128xf32>
      %19 = vector.shape_cast %18 : vector<1x1x128xf32> to vector<1x128xf32>
      %20 = vector.broadcast %19 : vector<1x128xf32> to vector<256x128xf32>
      %21 = arith.addf %17, %20 : vector<256x128xf32>
      %cst_20 = arith.constant 0.000000e+00 : f32
      %22 = vector.broadcast %cst_20 : f32 to vector<256x128xf32>
      %23 = arith.cmpf ogt, %21, %22 : vector<256x128xf32>
      %cst_21 = arith.constant 0.000000e+00 : f32
      %24 = vector.broadcast %cst_21 : f32 to vector<256x128xf32>
      %25 = arith.minimumf %21, %24 : vector<256x128xf32>
      %26 = math.exp %25 : vector<256x128xf32>
      %cst_22 = arith.constant 1.000000e+00 : f32
      %27 = vector.broadcast %cst_22 : f32 to vector<256x128xf32>
      %28 = arith.subf %26, %27 : vector<256x128xf32>
      %29 = arith.select %23, %21, %28 : vector<256x128xi1>, vector<256x128xf32>
      %30 = arith.truncf %29 : vector<256x128xf32> to vector<256x128xbf16>
      %c0_23 = arith.constant 0 : index
      %c0_24 = arith.constant 0 : index
      %c0_25 = arith.constant 0 : index
      %31 = vector.load %arg7[%c0_23, %c0_24, %c0_25] : memref<1x256x128xbf16, #tpu.memory_space<vmem>>, vector<1x256x128xbf16>
      %32 = vector.shape_cast %31 : vector<1x256x128xbf16> to vector<256x128xbf16>
      %33 = vector.shape_cast %30 : vector<256x128xbf16> to vector<1x256x128xbf16>
      tpu.vector_store %arg7[%c0_23, %c0_24, %c0_25], %33 {strides = array<i32>} : memref<1x256x128xbf16, #tpu.memory_space<vmem>>, vector<1x256x128xbf16>,
    } else {
    }
    return
  }
  func.func @transform_0(%arg0: i32, %arg1: i32, %arg2: i32) -> (i32, i32, i32) {
    %c0_i32 = arith.constant 0 : i32
    return %arg0, %arg1, %arg2 : i32, i32, i32
  }
  func.func @transform_1(%arg0: i32, %arg1: i32, %arg2: i32) -> (i32, i32) {
    %c0_i32 = arith.constant 0 : i32
    %c0_i32_0 = arith.constant 0 : i32
    return %arg2, %c0_i32 : i32, i32
  }
  func.func @transform_2(%arg0: i32, %arg1: i32, %arg2: i32) -> (i32, i32, i32) {
    %c0_i32 = arith.constant 0 : i32
    %c0_i32_0 = arith.constant 0 : i32
    %c0_i32_1 = arith.constant 0 : i32
    return %arg0, %c0_i32, %c0_i32_0 : i32, i32, i32
  }
  func.func @transform_3(%arg0: i32, %arg1: i32, %arg2: i32) -> (i32, i32, i32) {
    %c0_i32 = arith.constant 0 : i32
    %c0_i32_0 = arith.constant 0 : i32
    %c0_i32_1 = arith.constant 0 : i32
    return %arg0, %c0_i32, %c0_i32_0 : i32, i32, i32
  }
  func.func @transform_4(%arg0: i32, %arg1: i32, %arg2: i32) -> (i32, i32, i32) {
    %c0_i32 = arith.constant 0 : i32
    %c0_i32_0 = arith.constant 0 : i32
    return %arg0, %arg1, %c0_i32 : i32, i32, i32
  }
}

module attributes {stable_mosaic.version = 11 : i64} {
  func.func @_attn_score_kernel(%arg0: i32, %arg1: i32, %arg2: memref<1x256x128xbf16, #tpu.memory_space<vmem>>, %arg3: memref<128x128xbf16, #tpu.memory_space<vmem>>, %arg4: memref<1x128xf32, #tpu.memory_space<vmem>>, %arg5: memref<1x128xf32, #tpu.memory_space<vmem>>, %arg6: memref<2xf32, #tpu.memory_space<smem>>, %arg7: memref<1x128xf32, #tpu.memory_space<vmem>>) attributes {dimension_semantics = [#tpu.dimension_semantics<arbitrary>, #tpu.dimension_semantics<arbitrary>], iteration_bounds = array<i64: 2, 1>, scalar_prefetch = 0 : i64, scratch_operands = 1 : i64, tpu.core_type = #tpu.core_type<tc>, window_params = [{transform_indices = @transform_0, window_bounds = array<i64: 1, 256, 128>}, {pipeline_mode = #tpu.pipeline_mode<synchronous>, transform_indices = @transform_1, window_bounds = array<i64: 128, 128>}, {pipeline_mode = #tpu.pipeline_mode<synchronous>, transform_indices = @transform_2, window_bounds = array<i64: 1, 128>}, {pipeline_mode = #tpu.pipeline_mode<synchronous>, transform_indices = @transform_3, window_bounds = array<i64: 1, 128>}, {transform_indices = @transform_4, window_bounds = array<i64: 2>}]} {
    %c0_i32 = arith.constant 0 : i32
    %0 = arith.cmpi eq, %arg1, %c0_i32 : i32
    %1 = arith.extui %0 : i1 to i32
    %c0_i32_0 = arith.constant 0 : i32
    %2 = arith.cmpi ne, %1, %c0_i32_0 : i32
    scf.if %2 {
      %cst_16 = arith.constant 0.000000e+00 : f32
      %22 = vector.broadcast %cst_16 : f32 to vector<1x128xf32>
      %c0_17 = arith.constant 0 : index
      %c0_18 = arith.constant 0 : index
      %23 = vector.load %arg7[%c0_17, %c0_18] : memref<1x128xf32, #tpu.memory_space<vmem>>, vector<1x128xf32>
      tpu.vector_store %arg7[%c0_17, %c0_18], %22 {strides = array<i32>} : memref<1x128xf32, #tpu.memory_space<vmem>>, vector<1x128xf32>,
    } else {
    }
    %c0 = arith.constant 0 : index
    %c0_1 = arith.constant 0 : index
    %c0_2 = arith.constant 0 : index
    %3 = vector.load %arg2[%c0, %c0_1, %c0_2] : memref<1x256x128xbf16, #tpu.memory_space<vmem>>, vector<1x256x128xbf16>
    %4 = vector.shape_cast %3 : vector<1x256x128xbf16> to vector<256x128xbf16>
    %c0_3 = arith.constant 0 : index
    %c0_4 = arith.constant 0 : index
    %5 = vector.load %arg3[%c0_3, %c0_4] : memref<128x128xbf16, #tpu.memory_space<vmem>>, vector<128x128xbf16>
    %cst = arith.constant dense<0.000000e+00> : vector<256x128xf32>
    %6 = tpu.matmul %4, %5, %cst {dimension_numbers = #tpu.dot_dimension_numbers<[1], [0], [0], [1], [0, 0, 1, 1], [], []>} : vector<256x128xbf16>, vector<128x128xbf16>, vector<256x128xf32> -> vector<256x128xf32>
    %c0_5 = arith.constant 0 : index
    %c0_6 = arith.constant 0 : index
    %7 = vector.load %arg4[%c0_5, %c0_6] : memref<1x128xf32, #tpu.memory_space<vmem>>, vector<1x128xf32>
    %8 = vector.broadcast %7 : vector<1x128xf32> to vector<256x128xf32>
    %9 = arith.addf %6, %8 : vector<256x128xf32>
    %10 = math.tanh %9 : vector<256x128xf32>
    %c0_7 = arith.constant 0 : index
    %c0_8 = arith.constant 0 : index
    %11 = vector.load %arg7[%c0_7, %c0_8] : memref<1x128xf32, #tpu.memory_space<vmem>>, vector<1x128xf32>
    %c0_9 = arith.constant 0 : index
    %c0_10 = arith.constant 0 : index
    %12 = vector.load %arg5[%c0_9, %c0_10] : memref<1x128xf32, #tpu.memory_space<vmem>>, vector<1x128xf32>
    %13 = vector.broadcast %12 : vector<1x128xf32> to vector<256x128xf32>
    %14 = arith.mulf %10, %13 : vector<256x128xf32>
    %cst_11 = arith.constant dense<0.000000e+00> : vector<128xf32>
    %15 = vector.multi_reduction <add>, %14, %cst_11 [0] : vector<256x128xf32> to vector<128xf32>
    %16 = vector.shape_cast %15 : vector<128xf32> to vector<1x128xf32>
    %17 = arith.addf %11, %16 : vector<1x128xf32>
    %c0_12 = arith.constant 0 : index
    %c0_13 = arith.constant 0 : index
    %18 = vector.load %arg7[%c0_12, %c0_13] : memref<1x128xf32, #tpu.memory_space<vmem>>, vector<1x128xf32>
    tpu.vector_store %arg7[%c0_12, %c0_13], %17 {strides = array<i32>} : memref<1x128xf32, #tpu.memory_space<vmem>>, vector<1x128xf32>,
    %c0_i32_14 = arith.constant 0 : i32
    %19 = arith.cmpi eq, %arg1, %c0_i32_14 : i32
    %20 = arith.extui %19 : i1 to i32
    %c0_i32_15 = arith.constant 0 : i32
    %21 = arith.cmpi ne, %20, %c0_i32_15 : i32
    scf.if %21 {
      %c0_16 = arith.constant 0 : index
      %c0_17 = arith.constant 0 : index
      %22 = vector.load %arg7[%c0_16, %c0_17] : memref<1x128xf32, #tpu.memory_space<vmem>>, vector<1x128xf32>
      %23 = vector.shape_cast %22 : vector<1x128xf32> to vector<1x1x128xf32>
      %cst_18 = arith.constant dense<0.000000e+00> : vector<1xf32>
      %24 = vector.multi_reduction <add>, %23, %cst_18 [1, 2] : vector<1x1x128xf32> to vector<1xf32>
      %25 = vector.shape_cast %24 : vector<1xf32> to vector<1x1x1xf32>
      %26 = vector.extract %25[0, 0, 0] : f32 from vector<1x1x1xf32>
      %cst_19 = arith.constant 3.906250e-03 : f32
      %27 = arith.mulf %26, %cst_19 : f32
      %28 = arith.index_cast %arg0 : i32 to index
      %29 = memref.load %arg6[%28] : memref<2xf32, #tpu.memory_space<smem>>
      memref.store %27, %arg6[%28] : memref<2xf32, #tpu.memory_space<smem>>
    } else {
    }
    return
  }
  func.func @transform_0(%arg0: i32, %arg1: i32) -> (i32, i32, i32) {
    %c0_i32 = arith.constant 0 : i32
    %c0_i32_0 = arith.constant 0 : i32
    return %arg0, %arg1, %c0_i32 : i32, i32, i32
  }
  func.func @transform_1(%arg0: i32, %arg1: i32) -> (i32, i32) {
    %c0_i32 = arith.constant 0 : i32
    %c0_i32_0 = arith.constant 0 : i32
    %c0_i32_1 = arith.constant 0 : i32
    return %c0_i32, %c0_i32_0 : i32, i32
  }
  func.func @transform_2(%arg0: i32, %arg1: i32) -> (i32, i32) {
    %c0_i32 = arith.constant 0 : i32
    %c0_i32_0 = arith.constant 0 : i32
    %c0_i32_1 = arith.constant 0 : i32
    return %c0_i32, %c0_i32_0 : i32, i32
  }
  func.func @transform_3(%arg0: i32, %arg1: i32) -> (i32, i32) {
    %c0_i32 = arith.constant 0 : i32
    %c0_i32_0 = arith.constant 0 : i32
    %c0_i32_1 = arith.constant 0 : i32
    return %c0_i32, %c0_i32_0 : i32, i32
  }
  func.func @transform_4(%arg0: i32, %arg1: i32) -> i32 {
    %c0_i32 = arith.constant 0 : i32
    %c0_i32_0 = arith.constant 0 : i32
    return %c0_i32 : i32
  }
}

module attributes {stable_mosaic.version = 11 : i64} {
  func.func @_agg_linear_kernel(%arg0: i32, %arg1: i32, %arg2: memref<256x256xbf16, #tpu.memory_space<vmem>>, %arg3: memref<256x256xbf16, #tpu.memory_space<vmem>>, %arg4: memref<256x128xbf16, #tpu.memory_space<vmem>>, %arg5: memref<128x128xbf16, #tpu.memory_space<vmem>>, %arg6: memref<1x128xf32, #tpu.memory_space<vmem>>, %arg7: memref<256x128xbf16, #tpu.memory_space<vmem>>, %arg8: memref<256x128xf32, #tpu.memory_space<vmem>>) attributes {dimension_semantics = [#tpu.dimension_semantics<parallel>, #tpu.dimension_semantics<arbitrary>], iteration_bounds = array<i64: 1, 1>, scalar_prefetch = 0 : i64, scratch_operands = 1 : i64, tpu.core_type = #tpu.core_type<tc>, window_params = [{transform_indices = @transform_0, window_bounds = array<i64: 256, 256>}, {transform_indices = @transform_1, window_bounds = array<i64: 256, 256>}, {transform_indices = @transform_2, window_bounds = array<i64: 256, 128>}, {pipeline_mode = #tpu.pipeline_mode<synchronous>, transform_indices = @transform_3, window_bounds = array<i64: 128, 128>}, {pipeline_mode = #tpu.pipeline_mode<synchronous>, transform_indices = @transform_4, window_bounds = array<i64: 1, 128>}, {transform_indices = @transform_5, window_bounds = array<i64: 256, 128>}]} {
    %c0_i32 = arith.constant 0 : i32
    %0 = arith.cmpi eq, %arg1, %c0_i32 : i32
    %1 = arith.extui %0 : i1 to i32
    %c0_i32_0 = arith.constant 0 : i32
    %2 = arith.cmpi ne, %1, %c0_i32_0 : i32
    scf.if %2 {
      %cst_12 = arith.constant 0.000000e+00 : f32
      %14 = vector.broadcast %cst_12 : f32 to vector<256x128xf32>
      %c0_13 = arith.constant 0 : index
      %c0_14 = arith.constant 0 : index
      %15 = vector.load %arg8[%c0_13, %c0_14] : memref<256x128xf32, #tpu.memory_space<vmem>>, vector<256x128xf32>
      tpu.vector_store %arg8[%c0_13, %c0_14], %14 {strides = array<i32>} : memref<256x128xf32, #tpu.memory_space<vmem>>, vector<256x128xf32>,
    } else {
    }
    %c0 = arith.constant 0 : index
    %c0_1 = arith.constant 0 : index
    %3 = vector.load %arg2[%c0, %c0_1] : memref<256x256xbf16, #tpu.memory_space<vmem>>, vector<256x256xbf16>
    %c0_2 = arith.constant 0 : index
    %c0_3 = arith.constant 0 : index
    %4 = vector.load %arg3[%c0_2, %c0_3] : memref<256x256xbf16, #tpu.memory_space<vmem>>, vector<256x256xbf16>
    %5 = arith.mulf %3, %4 : vector<256x256xbf16>
    %c0_4 = arith.constant 0 : index
    %c0_5 = arith.constant 0 : index
    %6 = vector.load %arg8[%c0_4, %c0_5] : memref<256x128xf32, #tpu.memory_space<vmem>>, vector<256x128xf32>
    %c0_6 = arith.constant 0 : index
    %c0_7 = arith.constant 0 : index
    %7 = vector.load %arg4[%c0_6, %c0_7] : memref<256x128xbf16, #tpu.memory_space<vmem>>, vector<256x128xbf16>
    %cst = arith.constant dense<0.000000e+00> : vector<256x128xf32>
    %8 = tpu.matmul %5, %7, %cst {dimension_numbers = #tpu.dot_dimension_numbers<[1], [0], [0], [1], [0, 0, 1, 1], [], []>} : vector<256x256xbf16>, vector<256x128xbf16>, vector<256x128xf32> -> vector<256x128xf32>
    %9 = arith.addf %6, %8 : vector<256x128xf32>
    %c0_8 = arith.constant 0 : index
    %c0_9 = arith.constant 0 : index
    %10 = vector.load %arg8[%c0_8, %c0_9] : memref<256x128xf32, #tpu.memory_space<vmem>>, vector<256x128xf32>
    tpu.vector_store %arg8[%c0_8, %c0_9], %9 {strides = array<i32>} : memref<256x128xf32, #tpu.memory_space<vmem>>, vector<256x128xf32>,
    %c0_i32_10 = arith.constant 0 : i32
    %11 = arith.cmpi eq, %arg1, %c0_i32_10 : i32
    %12 = arith.extui %11 : i1 to i32
    %c0_i32_11 = arith.constant 0 : i32
    %13 = arith.cmpi ne, %12, %c0_i32_11 : i32
    scf.if %13 {
      %c0_12 = arith.constant 0 : index
      %c0_13 = arith.constant 0 : index
      %14 = vector.load %arg8[%c0_12, %c0_13] : memref<256x128xf32, #tpu.memory_space<vmem>>, vector<256x128xf32>
      %15 = arith.truncf %14 : vector<256x128xf32> to vector<256x128xbf16>
      %c0_14 = arith.constant 0 : index
      %c0_15 = arith.constant 0 : index
      %16 = vector.load %arg5[%c0_14, %c0_15] : memref<128x128xbf16, #tpu.memory_space<vmem>>, vector<128x128xbf16>
      %cst_16 = arith.constant dense<0.000000e+00> : vector<256x128xf32>
      %17 = tpu.matmul %15, %16, %cst_16 {dimension_numbers = #tpu.dot_dimension_numbers<[1], [0], [0], [1], [0, 0, 1, 1], [], []>} : vector<256x128xbf16>, vector<128x128xbf16>, vector<256x128xf32> -> vector<256x128xf32>
      %c0_17 = arith.constant 0 : index
      %c0_18 = arith.constant 0 : index
      %18 = vector.load %arg6[%c0_17, %c0_18] : memref<1x128xf32, #tpu.memory_space<vmem>>, vector<1x128xf32>
      %19 = vector.broadcast %18 : vector<1x128xf32> to vector<256x128xf32>
      %20 = arith.addf %17, %19 : vector<256x128xf32>
      %cst_19 = arith.constant 0.000000e+00 : f32
      %21 = vector.broadcast %cst_19 : f32 to vector<256x128xf32>
      %22 = arith.cmpf ogt, %20, %21 : vector<256x128xf32>
      %cst_20 = arith.constant 0.000000e+00 : f32
      %23 = vector.broadcast %cst_20 : f32 to vector<256x128xf32>
      %24 = arith.minimumf %20, %23 : vector<256x128xf32>
      %25 = math.exp %24 : vector<256x128xf32>
      %cst_21 = arith.constant 1.000000e+00 : f32
      %26 = vector.broadcast %cst_21 : f32 to vector<256x128xf32>
      %27 = arith.subf %25, %26 : vector<256x128xf32>
      %28 = arith.select %22, %20, %27 : vector<256x128xi1>, vector<256x128xf32>
      %29 = arith.truncf %28 : vector<256x128xf32> to vector<256x128xbf16>
      %c0_22 = arith.constant 0 : index
      %c0_23 = arith.constant 0 : index
      %30 = vector.load %arg7[%c0_22, %c0_23] : memref<256x128xbf16, #tpu.memory_space<vmem>>, vector<256x128xbf16>
      tpu.vector_store %arg7[%c0_22, %c0_23], %29 {strides = array<i32>} : memref<256x128xbf16, #tpu.memory_space<vmem>>, vector<256x128xbf16>,
    } else {
    }
    return
  }
  func.func @transform_0(%arg0: i32, %arg1: i32) -> (i32, i32) {
    %c0_i32 = arith.constant 0 : i32
    return %arg0, %arg1 : i32, i32
  }
  func.func @transform_1(%arg0: i32, %arg1: i32) -> (i32, i32) {
    %c0_i32 = arith.constant 0 : i32
    return %arg0, %arg1 : i32, i32
  }
  func.func @transform_2(%arg0: i32, %arg1: i32) -> (i32, i32) {
    %c0_i32 = arith.constant 0 : i32
    %c0_i32_0 = arith.constant 0 : i32
    return %arg1, %c0_i32 : i32, i32
  }
  func.func @transform_3(%arg0: i32, %arg1: i32) -> (i32, i32) {
    %c0_i32 = arith.constant 0 : i32
    %c0_i32_0 = arith.constant 0 : i32
    %c0_i32_1 = arith.constant 0 : i32
    return %c0_i32, %c0_i32_0 : i32, i32
  }
  func.func @transform_4(%arg0: i32, %arg1: i32) -> (i32, i32) {
    %c0_i32 = arith.constant 0 : i32
    %c0_i32_0 = arith.constant 0 : i32
    %c0_i32_1 = arith.constant 0 : i32
    return %c0_i32, %c0_i32_0 : i32, i32
  }
  func.func @transform_5(%arg0: i32, %arg1: i32) -> (i32, i32) {
    %c0_i32 = arith.constant 0 : i32
    %c0_i32_0 = arith.constant 0 : i32
    return %arg0, %c0_i32 : i32, i32
  }
}

module attributes {stable_mosaic.version = 11 : i64} {
  func.func @_project_norm_kernel(%arg0: i32, %arg1: memref<512x128xbf16, #tpu.memory_space<vmem>>, %arg2: memref<128x128xbf16, #tpu.memory_space<vmem>>, %arg3: memref<1x128xf32, #tpu.memory_space<vmem>>, %arg4: memref<128x128xbf16, #tpu.memory_space<vmem>>, %arg5: memref<1x128xf32, #tpu.memory_space<vmem>>, %arg6: memref<512x128xbf16, #tpu.memory_space<vmem>>) attributes {dimension_semantics = [#tpu.dimension_semantics<parallel>], iteration_bounds = array<i64: 1>, scalar_prefetch = 0 : i64, scratch_operands = 0 : i64, tpu.core_type = #tpu.core_type<tc>, window_params = [{transform_indices = @transform_0, window_bounds = array<i64: 512, 128>}, {pipeline_mode = #tpu.pipeline_mode<synchronous>, transform_indices = @transform_1, window_bounds = array<i64: 128, 128>}, {pipeline_mode = #tpu.pipeline_mode<synchronous>, transform_indices = @transform_2, window_bounds = array<i64: 1, 128>}, {pipeline_mode = #tpu.pipeline_mode<synchronous>, transform_indices = @transform_3, window_bounds = array<i64: 128, 128>}, {pipeline_mode = #tpu.pipeline_mode<synchronous>, transform_indices = @transform_4, window_bounds = array<i64: 1, 128>}, {transform_indices = @transform_5, window_bounds = array<i64: 512, 128>}]} {
    %c0 = arith.constant 0 : index
    %c0_0 = arith.constant 0 : index
    %0 = vector.load %arg1[%c0, %c0_0] : memref<512x128xbf16, #tpu.memory_space<vmem>>, vector<512x128xbf16>
    %c0_1 = arith.constant 0 : index
    %c0_2 = arith.constant 0 : index
    %1 = vector.load %arg2[%c0_1, %c0_2] : memref<128x128xbf16, #tpu.memory_space<vmem>>, vector<128x128xbf16>
    %cst = arith.constant dense<0.000000e+00> : vector<512x128xf32>
    %2 = tpu.matmul %0, %1, %cst {dimension_numbers = #tpu.dot_dimension_numbers<[1], [0], [0], [1], [0, 0, 1, 1], [], []>} : vector<512x128xbf16>, vector<128x128xbf16>, vector<512x128xf32> -> vector<512x128xf32>
    %c0_3 = arith.constant 0 : index
    %c0_4 = arith.constant 0 : index
    %3 = vector.load %arg3[%c0_3, %c0_4] : memref<1x128xf32, #tpu.memory_space<vmem>>, vector<1x128xf32>
    %4 = vector.broadcast %3 : vector<1x128xf32> to vector<512x128xf32>
    %5 = arith.addf %2, %4 : vector<512x128xf32>
    %cst_5 = arith.constant 0.000000e+00 : f32
    %6 = vector.broadcast %cst_5 : f32 to vector<512x128xf32>
    %7 = arith.cmpf ogt, %5, %6 : vector<512x128xf32>
    %cst_6 = arith.constant 0.000000e+00 : f32
    %8 = vector.broadcast %cst_6 : f32 to vector<512x128xf32>
    %9 = arith.minimumf %5, %8 : vector<512x128xf32>
    %10 = math.exp %9 : vector<512x128xf32>
    %cst_7 = arith.constant 1.000000e+00 : f32
    %11 = vector.broadcast %cst_7 : f32 to vector<512x128xf32>
    %12 = arith.subf %10, %11 : vector<512x128xf32>
    %13 = arith.select %7, %5, %12 : vector<512x128xi1>, vector<512x128xf32>
    %14 = arith.truncf %13 : vector<512x128xf32> to vector<512x128xbf16>
    %c0_8 = arith.constant 0 : index
    %c0_9 = arith.constant 0 : index
    %15 = vector.load %arg4[%c0_8, %c0_9] : memref<128x128xbf16, #tpu.memory_space<vmem>>, vector<128x128xbf16>
    %cst_10 = arith.constant dense<0.000000e+00> : vector<512x128xf32>
    %16 = tpu.matmul %14, %15, %cst_10 {dimension_numbers = #tpu.dot_dimension_numbers<[1], [0], [0], [1], [0, 0, 1, 1], [], []>} : vector<512x128xbf16>, vector<128x128xbf16>, vector<512x128xf32> -> vector<512x128xf32>
    %c0_11 = arith.constant 0 : index
    %c0_12 = arith.constant 0 : index
    %17 = vector.load %arg5[%c0_11, %c0_12] : memref<1x128xf32, #tpu.memory_space<vmem>>, vector<1x128xf32>
    %18 = vector.broadcast %17 : vector<1x128xf32> to vector<512x128xf32>
    %19 = arith.addf %16, %18 : vector<512x128xf32>
    %20 = arith.mulf %19, %19 : vector<512x128xf32>
    %cst_13 = arith.constant dense<0.000000e+00> : vector<512xf32>
    %21 = vector.multi_reduction <add>, %20, %cst_13 [1] : vector<512x128xf32> to vector<512xf32>
    %22 = vector.shape_cast %21 : vector<512xf32> to vector<512x1xf32>
    %cst_14 = arith.constant 9.99999996E-13 : f32
    %23 = vector.broadcast %cst_14 : f32 to vector<512x1xf32>
    %24 = arith.addf %22, %23 : vector<512x1xf32>
    %25 = math.rsqrt %24 : vector<512x1xf32>
    %26 = vector.broadcast %25 : vector<512x1xf32> to vector<512x128xf32>
    %27 = arith.mulf %19, %26 : vector<512x128xf32>
    %28 = arith.truncf %27 : vector<512x128xf32> to vector<512x128xbf16>
    %c0_15 = arith.constant 0 : index
    %c0_16 = arith.constant 0 : index
    %29 = vector.load %arg6[%c0_15, %c0_16] : memref<512x128xbf16, #tpu.memory_space<vmem>>, vector<512x128xbf16>
    tpu.vector_store %arg6[%c0_15, %c0_16], %28 {strides = array<i32>} : memref<512x128xbf16, #tpu.memory_space<vmem>>, vector<512x128xbf16>,
    return
  }
  func.func @transform_0(%arg0: i32) -> (i32, i32) {
    %c0_i32 = arith.constant 0 : i32
    %c0_i32_0 = arith.constant 0 : i32
    return %arg0, %c0_i32 : i32, i32
  }
  func.func @transform_1(%arg0: i32) -> (i32, i32) {
    %c0_i32 = arith.constant 0 : i32
    %c0_i32_0 = arith.constant 0 : i32
    %c0_i32_1 = arith.constant 0 : i32
    return %c0_i32, %c0_i32_0 : i32, i32
  }
  func.func @transform_2(%arg0: i32) -> (i32, i32) {
    %c0_i32 = arith.constant 0 : i32
    %c0_i32_0 = arith.constant 0 : i32
    %c0_i32_1 = arith.constant 0 : i32
    return %c0_i32, %c0_i32_0 : i32, i32
  }
  func.func @transform_3(%arg0: i32) -> (i32, i32) {
    %c0_i32 = arith.constant 0 : i32
    %c0_i32_0 = arith.constant 0 : i32
    %c0_i32_1 = arith.constant 0 : i32
    return %c0_i32, %c0_i32_0 : i32, i32
  }
  func.func @transform_4(%arg0: i32) -> (i32, i32) {
    %c0_i32 = arith.constant 0 : i32
    %c0_i32_0 = arith.constant 0 : i32
    %c0_i32_1 = arith.constant 0 : i32
    return %c0_i32, %c0_i32_0 : i32, i32
  }
  func.func @transform_5(%arg0: i32) -> (i32, i32) {
    %c0_i32 = arith.constant 0 : i32
    %c0_i32_0 = arith.constant 0 : i32
    return %arg0, %c0_i32 : i32, i32
  }
}

module attributes {stable_mosaic.version = 11 : i64} {
  func.func @_contrast_tiles_kernel(%arg0: i32, %arg1: i32, %arg2: memref<256x128xbf16, #tpu.memory_space<vmem>>, %arg3: memref<256x128xbf16, #tpu.memory_space<vmem>>, %arg4: memref<256x256xbf16, #tpu.memory_space<vmem>>, %arg5: memref<256x256xbf16, #tpu.memory_space<vmem>>, %arg6: memref<256x1xf32, #tpu.memory_space<vmem>>, %arg7: memref<1x1x256xf32, #tpu.memory_space<vmem>>, %arg8: memref<1x1x256xf32, #tpu.memory_space<vmem>>, %arg9: memref<256x1xf32, #tpu.memory_space<vmem>>, %arg10: memref<256x1xf32, #tpu.memory_space<vmem>>) attributes {dimension_semantics = [#tpu.dimension_semantics<parallel>, #tpu.dimension_semantics<arbitrary>], iteration_bounds = array<i64: 1, 1>, scalar_prefetch = 0 : i64, scratch_operands = 2 : i64, tpu.core_type = #tpu.core_type<tc>, window_params = [{transform_indices = @transform_0, window_bounds = array<i64: 256, 128>}, {transform_indices = @transform_1, window_bounds = array<i64: 256, 128>}, {transform_indices = @transform_2, window_bounds = array<i64: 256, 256>}, {transform_indices = @transform_3, window_bounds = array<i64: 256, 256>}, {transform_indices = @transform_4, window_bounds = array<i64: 256, 1>}, {transform_indices = @transform_5, window_bounds = array<i64: 1, 1, 256>}, {transform_indices = @transform_6, window_bounds = array<i64: 1, 1, 256>}]} {
    %c0_i32 = arith.constant 0 : i32
    %0 = arith.cmpi eq, %arg1, %c0_i32 : i32
    %1 = arith.extui %0 : i1 to i32
    %c0_i32_0 = arith.constant 0 : i32
    %2 = arith.cmpi ne, %1, %c0_i32_0 : i32
    scf.if %2 {
      %cst_29 = arith.constant 0.000000e+00 : f32
      %39 = vector.broadcast %cst_29 : f32 to vector<256x1xf32>
      %c0_30 = arith.constant 0 : index
      %c0_31 = arith.constant 0 : index
      %40 = vector.load %arg9[%c0_30, %c0_31] : memref<256x1xf32, #tpu.memory_space<vmem>>, vector<256x1xf32>
      tpu.vector_store %arg9[%c0_30, %c0_31], %39 {strides = array<i32>} : memref<256x1xf32, #tpu.memory_space<vmem>>, vector<256x1xf32>,
      %cst_32 = arith.constant 0.000000e+00 : f32
      %41 = vector.broadcast %cst_32 : f32 to vector<256x1xf32>
      %c0_33 = arith.constant 0 : index
      %c0_34 = arith.constant 0 : index
      %42 = vector.load %arg10[%c0_33, %c0_34] : memref<256x1xf32, #tpu.memory_space<vmem>>, vector<256x1xf32>
      tpu.vector_store %arg10[%c0_33, %c0_34], %41 {strides = array<i32>} : memref<256x1xf32, #tpu.memory_space<vmem>>, vector<256x1xf32>,
    } else {
    }
    %c0 = arith.constant 0 : index
    %c0_1 = arith.constant 0 : index
    %3 = vector.load %arg2[%c0, %c0_1] : memref<256x128xbf16, #tpu.memory_space<vmem>>, vector<256x128xbf16>
    %c0_2 = arith.constant 0 : index
    %c0_3 = arith.constant 0 : index
    %4 = vector.load %arg3[%c0_2, %c0_3] : memref<256x128xbf16, #tpu.memory_space<vmem>>, vector<256x128xbf16>
    %cst = arith.constant dense<0.000000e+00> : vector<256x256xf32>
    %5 = tpu.matmul %3, %4, %cst {dimension_numbers = #tpu.dot_dimension_numbers<[1], [1], [0], [0], [0, 0, 1, 0], [], []>} : vector<256x128xbf16>, vector<256x128xbf16>, vector<256x256xf32> -> vector<256x256xf32>
    %cst_4 = arith.constant 1.250000e+00 : f32
    %6 = vector.broadcast %cst_4 : f32 to vector<256x256xf32>
    %7 = arith.mulf %5, %6 : vector<256x256xf32>
    %8 = math.exp %7 : vector<256x256xf32>
    %c0_5 = arith.constant 0 : index
    %c0_6 = arith.constant 0 : index
    %9 = vector.load %arg4[%c0_5, %c0_6] : memref<256x256xbf16, #tpu.memory_space<vmem>>, vector<256x256xbf16>
    %10 = arith.extf %9 : vector<256x256xbf16> to vector<256x256xf32>
    %c0_7 = arith.constant 0 : index
    %c0_8 = arith.constant 0 : index
    %11 = vector.load %arg5[%c0_7, %c0_8] : memref<256x256xbf16, #tpu.memory_space<vmem>>, vector<256x256xbf16>
    %12 = arith.extf %11 : vector<256x256xbf16> to vector<256x256xf32>
    %13 = tpu.transpose %12, [1, 0] : vector<256x256xf32> -> vector<256x256xf32>
    %c0_9 = arith.constant 0 : index
    %c0_10 = arith.constant 0 : index
    %14 = vector.load %arg9[%c0_9, %c0_10] : memref<256x1xf32, #tpu.memory_space<vmem>>, vector<256x1xf32>
    %cst_11 = arith.constant dense<0.000000e+00> : vector<256xf32>
    %15 = vector.multi_reduction <add>, %8, %cst_11 [1] : vector<256x256xf32> to vector<256xf32>
    %16 = vector.shape_cast %15 : vector<256xf32> to vector<256x1xf32>
    %17 = arith.addf %14, %16 : vector<256x1xf32>
    %c0_12 = arith.constant 0 : index
    %c0_13 = arith.constant 0 : index
    %18 = vector.load %arg9[%c0_12, %c0_13] : memref<256x1xf32, #tpu.memory_space<vmem>>, vector<256x1xf32>
    tpu.vector_store %arg9[%c0_12, %c0_13], %17 {strides = array<i32>} : memref<256x1xf32, #tpu.memory_space<vmem>>, vector<256x1xf32>,
    %c0_14 = arith.constant 0 : index
    %c0_15 = arith.constant 0 : index
    %19 = vector.load %arg10[%c0_14, %c0_15] : memref<256x1xf32, #tpu.memory_space<vmem>>, vector<256x1xf32>
    %20 = arith.mulf %8, %10 : vector<256x256xf32>
    %cst_16 = arith.constant dense<0.000000e+00> : vector<256xf32>
    %21 = vector.multi_reduction <add>, %20, %cst_16 [1] : vector<256x256xf32> to vector<256xf32>
    %22 = vector.shape_cast %21 : vector<256xf32> to vector<256x1xf32>
    %23 = arith.addf %19, %22 : vector<256x1xf32>
    %c0_17 = arith.constant 0 : index
    %c0_18 = arith.constant 0 : index
    %24 = vector.load %arg10[%c0_17, %c0_18] : memref<256x1xf32, #tpu.memory_space<vmem>>, vector<256x1xf32>
    tpu.vector_store %arg10[%c0_17, %c0_18], %23 {strides = array<i32>} : memref<256x1xf32, #tpu.memory_space<vmem>>, vector<256x1xf32>,
    %cst_19 = arith.constant dense<0.000000e+00> : vector<256xf32>
    %25 = vector.multi_reduction <add>, %8, %cst_19 [0] : vector<256x256xf32> to vector<256xf32>
    %26 = vector.shape_cast %25 : vector<256xf32> to vector<1x256xf32>
    %c0_20 = arith.constant 0 : index
    %c0_21 = arith.constant 0 : index
    %c0_22 = arith.constant 0 : index
    %27 = vector.load %arg7[%c0_20, %c0_21, %c0_22] : memref<1x1x256xf32, #tpu.memory_space<vmem>>, vector<1x1x256xf32>
    %28 = vector.shape_cast %27 : vector<1x1x256xf32> to vector<1x256xf32>
    %29 = vector.shape_cast %26 : vector<1x256xf32> to vector<1x1x256xf32>
    tpu.vector_store %arg7[%c0_20, %c0_21, %c0_22], %29 {strides = array<i32>} : memref<1x1x256xf32, #tpu.memory_space<vmem>>, vector<1x1x256xf32>,
    %30 = arith.mulf %8, %13 : vector<256x256xf32>
    %cst_23 = arith.constant dense<0.000000e+00> : vector<256xf32>
    %31 = vector.multi_reduction <add>, %30, %cst_23 [0] : vector<256x256xf32> to vector<256xf32>
    %32 = vector.shape_cast %31 : vector<256xf32> to vector<1x256xf32>
    %c0_24 = arith.constant 0 : index
    %c0_25 = arith.constant 0 : index
    %c0_26 = arith.constant 0 : index
    %33 = vector.load %arg8[%c0_24, %c0_25, %c0_26] : memref<1x1x256xf32, #tpu.memory_space<vmem>>, vector<1x1x256xf32>
    %34 = vector.shape_cast %33 : vector<1x1x256xf32> to vector<1x256xf32>
    %35 = vector.shape_cast %32 : vector<1x256xf32> to vector<1x1x256xf32>
    tpu.vector_store %arg8[%c0_24, %c0_25, %c0_26], %35 {strides = array<i32>} : memref<1x1x256xf32, #tpu.memory_space<vmem>>, vector<1x1x256xf32>,
    %c0_i32_27 = arith.constant 0 : i32
    %36 = arith.cmpi eq, %arg1, %c0_i32_27 : i32
    %37 = arith.extui %36 : i1 to i32
    %c0_i32_28 = arith.constant 0 : i32
    %38 = arith.cmpi ne, %37, %c0_i32_28 : i32
    scf.if %38 {
      %c0_29 = arith.constant 0 : index
      %c0_30 = arith.constant 0 : index
      %39 = vector.load %arg10[%c0_29, %c0_30] : memref<256x1xf32, #tpu.memory_space<vmem>>, vector<256x1xf32>
      %c0_31 = arith.constant 0 : index
      %c0_32 = arith.constant 0 : index
      %40 = vector.load %arg9[%c0_31, %c0_32] : memref<256x1xf32, #tpu.memory_space<vmem>>, vector<256x1xf32>
      %cst_33 = arith.constant 9.99999993E-9 : f32
      %41 = vector.broadcast %cst_33 : f32 to vector<256x1xf32>
      %42 = arith.addf %40, %41 : vector<256x1xf32>
      %43 = arith.divf %39, %42 : vector<256x1xf32>
      %44 = math.log %43 : vector<256x1xf32>
      %cst_34 = arith.constant 0.000000e+00 : f32
      %45 = vector.broadcast %cst_34 : f32 to vector<256x1xf32>
      %46 = arith.subf %45, %44 : vector<256x1xf32>
      %c0_35 = arith.constant 0 : index
      %c0_36 = arith.constant 0 : index
      %47 = vector.load %arg6[%c0_35, %c0_36] : memref<256x1xf32, #tpu.memory_space<vmem>>, vector<256x1xf32>
      tpu.vector_store %arg6[%c0_35, %c0_36], %46 {strides = array<i32>} : memref<256x1xf32, #tpu.memory_space<vmem>>, vector<256x1xf32>,
    } else {
    }
    return
  }
  func.func @transform_0(%arg0: i32, %arg1: i32) -> (i32, i32) {
    %c0_i32 = arith.constant 0 : i32
    %c0_i32_0 = arith.constant 0 : i32
    return %arg0, %c0_i32 : i32, i32
  }
  func.func @transform_1(%arg0: i32, %arg1: i32) -> (i32, i32) {
    %c0_i32 = arith.constant 0 : i32
    %c0_i32_0 = arith.constant 0 : i32
    return %arg1, %c0_i32 : i32, i32
  }
  func.func @transform_2(%arg0: i32, %arg1: i32) -> (i32, i32) {
    %c0_i32 = arith.constant 0 : i32
    return %arg0, %arg1 : i32, i32
  }
  func.func @transform_3(%arg0: i32, %arg1: i32) -> (i32, i32) {
    %c0_i32 = arith.constant 0 : i32
    return %arg1, %arg0 : i32, i32
  }
  func.func @transform_4(%arg0: i32, %arg1: i32) -> (i32, i32) {
    %c0_i32 = arith.constant 0 : i32
    %c0_i32_0 = arith.constant 0 : i32
    return %arg0, %c0_i32 : i32, i32
  }
  func.func @transform_5(%arg0: i32, %arg1: i32) -> (i32, i32, i32) {
    %c0_i32 = arith.constant 0 : i32
    %c0_i32_0 = arith.constant 0 : i32
    return %arg0, %c0_i32, %arg1 : i32, i32, i32
  }
  func.func @transform_6(%arg0: i32, %arg1: i32) -> (i32, i32, i32) {
    %c0_i32 = arith.constant 0 : i32
    %c0_i32_0 = arith.constant 0 : i32
    return %arg0, %c0_i32, %arg1 : i32, i32, i32
  }
}

</mosaic_0001>

<llo_original>
// kernel: heco_forward.9
$region0: #{heco_forward.9}
  #allocation0 [shape = 'u32[]', space=smem, size = 0x4, offset = 0x4, fixed_abs, tag = 'smem constant byte address 0x4 - core index']
  #allocation1 [shape = 'u32[72,128]{1,0:T(1,128)}', space=vmem, size = 0x9000, scoped, tag = 'internal scratch']
  #allocation2 [shape = 'f32[1,128]{1,0:T(1,128)}', space=vmem, size = 0x200, scoped, tag = 'scratch operand']
  %s0 = inlined_call_operand.vmem [shape: bf16[2,256,128], index: 0, kind: input, shape index: {}]
  %s1 = inlined_call_operand.vmem [shape: bf16[128,128], index: 1, kind: input, shape index: {}]
  %s2 = inlined_call_operand.vmem [shape: f32[1,128], index: 2, kind: input, shape index: {}]
  %s3 = inlined_call_operand.vmem [shape: f32[1,128], index: 3, kind: input, shape index: {}]
  %s4 = inlined_call_operand.vmem [shape: f32[2], index: 4, kind: output, shape index: {}]
  %s5 = sld [smem:[#allocation0]]
  $region57: #{heco_forward.9} parent=0
    _
  %s7 = ssub.s32 1, %s5
  %s8 = scalar_select 0, %s7, %s5
  $region1: #{heco_forward.9} parent=0
    #allocation3 [shape = 'u8[512]{0}', space=smem, size = 0x200, scoped, tag = 'output window, operand 0, single buffered']
    #allocation4 [shape = 's32[2]{0}', space=sflag, size = 0x8, scoped, tag = 'scoped memory for heco_forward.9']
    %9 = vsyncpa [#allocation4], 0
    loop: start=0, step=1, limit=4
    $region2: #{heco_forward.9} parent=1 // loop_pre_header
      _
    $region3: #{heco_forward.9} parent=1 // loop_header
      %s11 = sphi 0, %s15
      %p12 = scmp.ge.s32.totalorder %s11, 4
      %s18 = sphi 0, %s30
      %s19 = sphi 0, %s26
      %s20 = sphi 0, %s18
      %s21 = sphi 0, %s19
      %s22 = sphi 0, %s20
      %s23 = sphi 0, %s21
      %s35 = sphi 0, %s37
      %s38 = sphi 0, %s35
      %s39 = sphi 0, %s38
      %s55 = sphi 0, %s39
      %s59 = sphi 0, %s59
      %s61 = sphi 0, %s59
      %s62 = sphi 0, %s61
      %s76 = sphi 0, %s62
      %s80 = sphi 0, %s80
      %s82 = sphi 0, %s80
      %s83 = sphi 0, %s82
      %s97 = sphi 0, %s83
      %s101 = sphi 0, %s101
      %s103 = sphi 0, %s101
      %s104 = sphi 0, %s103
      %s118 = sphi 0, %s104
      %s122 = sphi 0, %s122
      %s124 = sphi 0, %s122
      %s125 = sphi 0, %s124
      %s139 = sphi 0, %s125
    $region4: #{heco_forward.9} parent=1 // loop_header_branch
      %14 = sbr.rel (%p12) target = $region8
    $region5: #{heco_forward.9} parent=1 // loop_body
      %s16 = ssub.s32 %s11, 1
      %s17 = ssub.s32 %s11, 2
      %s24 = sadd.s32 1, %s19
      %p25 = scmp.ge.s32.totalorder %s24, 1
      %s26 = scalar_select %p25, 0, %s24
      %s27 = sadd.s32 1, %s18
      %s28 = scalar_select %p25, %s27, %s18
      %p29 = scmp.ge.s32.totalorder %s28, 2
      %s30 = scalar_select %p29, 0, %s28
      %s31 = ssub.s32 %s18, %s30
      %s32 = ssub.s32 %s19, %s26
      %s33 = sor.u32 %s31, %s32
      %p34 = scmp.eq.s32.totalorder %s33, 0
      %s36 = sadd.s32 %s35, 1
      %s37 = scalar_select %p34, %s35, %s36
      %p40 = pneg %p34
      %p41 = scmp.eq.s32.totalorder %s11, 1
      %p42 = por %p40, %p41
      %p43 = scmp.ne.s32.totalorder %s35, %s38
      %p44 = scmp.eq.s32.totalorder %s11, 0
      %p45 = por %p43, %p44
      %p46 = scmp.ne.s32.totalorder %s35, %s38
      %p47 = scmp.eq.s32.totalorder %s16, 1
      %p48 = por %p46, %p47
      %p49 = scmp.ne.s32.totalorder %s38, %s39
      %p50 = scmp.eq.s32.totalorder %s16, 0
      %p51 = por %p49, %p50
      %p52 = scmp.ne.s32.totalorder %s38, %s39
      %p53 = scmp.eq.s32.totalorder %s17, 1
      %p54 = por %p52, %p53
      %p56 = scmp.ne.s32.totalorder %s39, %s55
      %p57 = scmp.eq.s32.totalorder %s17, 0
      %p58 = por %p56, %p57
      %s60 = sadd.s32 %s59, 1
      %p63 = scmp.eq.s32.totalorder %s11, 1
      %p64 = scmp.ne.s32.totalorder %s59, %s61
      %p65 = scmp.eq.s32.totalorder %s11, 0
      %p66 = por %p64, %p65
      %p67 = scmp.ne.s32.totalorder %s59, %s61
      %p68 = scmp.eq.s32.totalorder %s16, 1
      %p69 = por %p67, %p68
      %p70 = scmp.ne.s32.totalorder %s61, %s62
      %p71 = scmp.eq.s32.totalorder %s16, 0
      %p72 = por %p70, %p71
      %p73 = scmp.ne.s32.totalorder %s61, %s62
      %p74 = scmp.eq.s32.totalorder %s17, 1
      %p75 = por %p73, %p74
      %p77 = scmp.ne.s32.totalorder %s62, %s76
      %p78 = scmp.eq.s32.totalorder %s17, 0
      %p79 = por %p77, %p78
      %s81 = sadd.s32 %s80, 1
      %p84 = scmp.eq.s32.totalorder %s11, 1
      %p85 = scmp.ne.s32.totalorder %s80, %s82
      %p86 = scmp.eq.s32.totalorder %s11, 0
      %p87 = por %p85, %p86
      %p88 = scmp.ne.s32.totalorder %s80, %s82
      %p89 = scmp.eq.s32.totalorder %s16, 1
      %p90 = por %p88, %p89
      %p91 = scmp.ne.s32.totalorder %s82, %s83
      %p92 = scmp.eq.s32.totalorder %s16, 0
      %p93 = por %p91, %p92
      %p94 = scmp.ne.s32.totalorder %s82, %s83
      %p95 = scmp.eq.s32.totalorder %s17, 1
      %p96 = por %p94, %p95
      %p98 = scmp.ne.s32.totalorder %s83, %s97
      %p99 = scmp.eq.s32.totalorder %s17, 0
      %p100 = por %p98, %p99
      %s102 = sadd.s32 %s101, 1
      %p105 = scmp.eq.s32.totalorder %s11, 1
      %p106 = scmp.ne.s32.totalorder %s101, %s103
      %p107 = scmp.eq.s32.totalorder %s11, 0
      %p108 = por %p106, %p107
      %p109 = scmp.ne.s32.totalorder %s101, %s103
      %p110 = scmp.eq.s32.totalorder %s16, 1
      %p111 = por %p109, %p110
      %p112 = scmp.ne.s32.totalorder %s103, %s104
      %p113 = scmp.eq.s32.totalorder %s16, 0
      %p114 = por %p112, %p113
      %p115 = scmp.ne.s32.totalorder %s103, %s104
      %p116 = scmp.eq.s32.totalorder %s17, 1
      %p117 = por %p115, %p116
      %p119 = scmp.ne.s32.totalorder %s104, %s118
      %p120 = scmp.eq.s32.totalorder %s17, 0
      %p121 = por %p119, %p120
      %s123 = sadd.s32 %s122, 1
      %p126 = scmp.eq.s32.totalorder %s11, 1
      %p127 = scmp.ne.s32.totalorder %s122, %s124
      %p128 = scmp.eq.s32.totalorder %s11, 0
      %p129 = por %p127, %p128
      %p130 = scmp.ne.s32.totalorder %s122, %s124
      %p131 = scmp.eq.s32.totalorder %s16, 1
      %p132 = por %p130, %p131
      %p133 = scmp.ne.s32.totalorder %s124, %s125
      %p134 = scmp.eq.s32.totalorder %s16, 0
      %p135 = por %p133, %p134
      %p136 = scmp.ne.s32.totalorder %s124, %s125
      %p137 = scmp.eq.s32.totalorder %s17, 1
      %p138 = por %p136, %p137
      %p140 = scmp.ne.s32.totalorder %s125, %s139
      %p141 = scmp.eq.s32.totalorder %s17, 0
      %p142 = por %p140, %p141
      %p143 = scmp.le.s32.totalorder 1, %s11
      %p144 = scmp.lt.s32.totalorder %s11, 3
      %p145 = pnand %p143, %p144
      %p146 = pneg %p145
      // Predicated region
      $region9: #{heco_forward.9} parent=5 // pred_check
        _
      $region10: #{heco_forward.9} parent=5 // pred_check_branch
        %148 = sbr.rel (%p145) target = $region12
      $region11: #{heco_forward.9} parent=5 // pred_region
        %s149 = ssub.s32 %s11, 1
        // Predicated region
        $region13: #{heco_forward.9} parent=11 // pred_check
          %p150 = pneg %p72
        $region14: #{heco_forward.9} parent=11 // pred_check_branch
          %152 = sbr.rel (%p150) target = $region16
        $region15: #{heco_forward.9} parent=11 // pred_region
          _
        $region16: #{heco_forward.9} parent=11 // pred_fallthru
          _
        // Predicated region
        $region17: #{heco_forward.9} parent=11 // pred_check
          %p153 = pneg %p93
        $region18: #{heco_forward.9} parent=11 // pred_check_branch
          %155 = sbr.rel (%p153) target = $region20
        $region19: #{heco_forward.9} parent=11 // pred_region
          _
        $region20: #{heco_forward.9} parent=11 // pred_fallthru
          _
        // Predicated region
        $region21: #{heco_forward.9} parent=11 // pred_check
          %p156 = pneg %p114
        $region22: #{heco_forward.9} parent=11 // pred_check_branch
          %158 = sbr.rel (%p156) target = $region24
        $region23: #{heco_forward.9} parent=11 // pred_region
          _
        $region24: #{heco_forward.9} parent=11 // pred_fallthru
          _
      $region12: #{heco_forward.9} parent=5 // pred_fallthru
        _
      %p159 = scmp.lt.s32.totalorder %s11, 2
      // Predicated region
      $region25: #{heco_forward.9} parent=5 // pred_check
        %p160 = pneg %p159
      $region26: #{heco_forward.9} parent=5 // pred_check_branch
        %162 = sbr.rel (%p160) target = $region28
      $region27: #{heco_forward.9} parent=5 // pred_region
        // Predicated region
        $region29: #{heco_forward.9} parent=27 // pred_check
          %p163 = pneg %p45
        $region30: #{heco_forward.9} parent=27 // pred_check_branch
          %165 = sbr.rel (%p163) target = $region32
        $region31: #{heco_forward.9} parent=27 // pred_region
          %s166 = smul.u32 32, %s19
          %p167 = scmp.lt.s32.totalorder %s18, 1
          %s168 = scalar_select %p167, %s18, 1
          %p169 = scmp.lt.s32.totalorder %s166, 31
          %s170 = scalar_select %p169, %s166, 31
          %s171 = smul.addr %s168, 32
          %s172 = sadd.s32 %s170, %s171
          %s173 = smul.addr %s172, 4
          %s174 = scalar_lea.vmem %s0, %s173
          %s175 = smul.u32 32, %s19
        $region32: #{heco_forward.9} parent=27 // pred_fallthru
          _
      $region28: #{heco_forward.9} parent=5 // pred_fallthru
        _
      %p176 = scmp.le.s32.totalorder 1, %s11
      %p177 = scmp.lt.s32.totalorder %s11, 3
      %p178 = pnand %p176, %p177
      %p179 = pneg %p178
      // Predicated region
      $region33: #{heco_forward.9} parent=5 // pred_check
        _
      $region34: #{heco_forward.9} parent=5 // pred_check_branch
        %181 = sbr.rel (%p178) target = $region36
      $region35: #{heco_forward.9} parent=5 // pred_region
        %s182 = ssub.s32 %s11, 1
        %s183 = smul.u32 32, %s21
        %p184 = scmp.lt.s32.totalorder %s20, 1
        %s185 = scalar_select %p184, %s20, 1
        %p186 = scmp.lt.s32.totalorder %s183, 31
        %s187 = scalar_select %p186, %s183, 31
        %s188 = smul.addr %s185, 32
        %s189 = sadd.s32 %s187, %s188
        %s190 = smul.addr %s189, 4
        %s191 = scalar_lea.vmem %s0, %s190
        %p192 = pneg %p51
        %p193 = pneg %p48
        %p194 = pneg %p72
        %p195 = pneg %p69
        %p196 = pneg %p93
        %p197 = pneg %p90
        %p198 = pneg %p114
        %p199 = pneg %p111
        %p200 = pneg %p135
        %p201 = pneg %p132
        %s202 = smul.u32 32, %s21
        %p203 = scmp.lt.s32.totalorder %s20, 1
        %s204 = scalar_select %p203, %s20, 1
        %p205 = scmp.lt.s32.totalorder %s202, 31
        %s206 = scalar_select %p205, %s202, 31
        %s207 = smul.addr %s204, 32
        %s208 = sadd.s32 %s206, %s207
        %s209 = smul.addr %s208, 4
        %s210 = scalar_lea.vmem %s0, %s209
        %s211 = smul.u32 32, %s21
        %p212 = scmp.eq.s32.totalorder %s21, 0
        // Predicated region
        $region37: #{heco_forward.9} parent=35 // pred_check
          %p213 = pneg %p212
        $region38: #{heco_forward.9} parent=35 // pred_check_branch
          %215 = sbr.rel (%p213) target = $region40
        $region39: #{heco_forward.9} parent=35 // pred_region
          %216 = vst [vmem:[#allocation2] sm:$0x1] 0.0
        $region40: #{heco_forward.9} parent=35 // pred_fallthru
          _
        %v217 = vld [vmem:[%s210] sm:$0xf]
        %v218 = vld [vmem:[%s210 + $0x4] sm:$0xf]
        %v219 = vld [vmem:[%s210 + $0x8] sm:$0xf]
        %v220 = vld [vmem:[%s210 + $0xc] sm:$0xf]
        %v221 = vld [vmem:[%s210 + $0x10] sm:$0xf]
        %v222 = vld [vmem:[%s210 + $0x14] sm:$0xf]
        %v223 = vld [vmem:[%s210 + $0x18] sm:$0xf]
        %v224 = vld [vmem:[%s210 + $0x1c] sm:$0xf]
        %v225 = vld [vmem:[%s210 + $0x20] sm:$0xf]
        %v226 = vld [vmem:[%s210 + $0x24] sm:$0xf]
        %v227 = vld [vmem:[%s210 + $0x28] sm:$0xf]
        %v228 = vld [vmem:[%s210 + $0x2c] sm:$0xf]
        %v229 = vld [vmem:[%s210 + $0x30] sm:$0xf]
        %v230 = vld [vmem:[%s210 + $0x34] sm:$0xf]
        %v231 = vld [vmem:[%s210 + $0x38] sm:$0xf]
        %v232 = vld [vmem:[%s210 + $0x3c] sm:$0xf]
        %v233 = vld [vmem:[%s210 + $0x40] sm:$0xf]
        %v234 = vld [vmem:[%s210 + $0x44] sm:$0xf]
        %v235 = vld [vmem:[%s210 + $0x48] sm:$0xf]
        %v236 = vld [vmem:[%s210 + $0x4c] sm:$0xf]
        %v237 = vld [vmem:[%s210 + $0x50] sm:$0xf]
        %v238 = vld [vmem:[%s210 + $0x54] sm:$0xf]
        %v239 = vld [vmem:[%s210 + $0x58] sm:$0xf]
        %v240 = vld [vmem:[%s210 + $0x5c] sm:$0xf]
        %v241 = vld [vmem:[%s210 + $0x60] sm:$0xf]
        %v242 = vld [vmem:[%s210 + $0x64] sm:$0xf]
        %v243 = vld [vmem:[%s210 + $0x68] sm:$0xf]
        %v244 = vld [vmem:[%s210 + $0x6c] sm:$0xf]
        %v245 = vld [vmem:[%s210 + $0x70] sm:$0xf]
        %v246 = vld [vmem:[%s210 + $0x74] sm:$0xf]
        %v247 = vld [vmem:[%s210 + $0x78] sm:$0xf]
        %v248 = vld [vmem:[%s210 + $0x7c] sm:$0xf]
        %v249 = vld [vmem:[%s1] sm:$0xf]
        %v250 = vld [vmem:[%s1 + $0x4] sm:$0xf]
        %v251 = vld [vmem:[%s1 + $0x8] sm:$0xf]
        %v252 = vld [vmem:[%s1 + $0xc] sm:$0xf]
        %v253 = vld [vmem:[%s1 + $0x10] sm:$0xf]
        %v254 = vld [vmem:[%s1 + $0x14] sm:$0xf]
        %v255 = vld [vmem:[%s1 + $0x18] sm:$0xf]
        %v256 = vld [vmem:[%s1 + $0x1c] sm:$0xf]
        %v257 = vld [vmem:[%s1 + $0x20] sm:$0xf]
        %v258 = vld [vmem:[%s1 + $0x24] sm:$0xf]
        %v259 = vld [vmem:[%s1 + $0x28] sm:$0xf]
        %v260 = vld [vmem:[%s1 + $0x2c] sm:$0xf]
        %v261 = vld [vmem:[%s1 + $0x30] sm:$0xf]
        %v262 = vld [vmem:[%s1 + $0x34] sm:$0xf]
        %v263 = vld [vmem:[%s1 + $0x38] sm:$0xf]
        %v264 = vld [vmem:[%s1 + $0x3c] sm:$0xf]
        %v265 = vld [vmem:[%s2] sm:$0x1]
        %v267 = vperm.slane %v265, 0
        %v301 = vunpack.c.l.b16 %v217
        %v302 = vunpack.c.l.b16 %v218
        %v303 = vunpack.c.l.b16 %v219
        %v304 = vunpack.c.l.b16 %v220
        %v305 = vunpack.c.l.b16 %v221
        %v306 = vunpack.c.l.b16 %v222
        %v307 = vunpack.c.l.b16 %v223
        %v308 = vunpack.c.l.b16 %v224
        %v309 = vunpack.c.l.b16 %v225
        %v310 = vunpack.c.l.b16 %v226
        %v311 = vunpack.c.l.b16 %v227
        %v312 = vunpack.c.l.b16 %v228
        %v313 = vunpack.c.l.b16 %v229
        %v314 = vunpack.c.l.b16 %v230
        %v315 = vunpack.c.l.b16 %v231
        %v316 = vunpack.c.l.b16 %v232
        %v317 = vunpack.c.l.b16 %v233
        %v318 = vunpack.c.l.b16 %v234
        %v319 = vunpack.c.l.b16 %v235
        %v320 = vunpack.c.l.b16 %v236
        %v321 = vunpack.c.l.b16 %v237
        %v322 = vunpack.c.l.b16 %v238
        %v323 = vunpack.c.l.b16 %v239
        %v324 = vunpack.c.l.b16 %v240
        %v325 = vunpack.c.l.b16 %v241
        %v326 = vunpack.c.l.b16 %v242
        %v327 = vunpack.c.l.b16 %v243
        %v328 = vunpack.c.l.b16 %v244
        %v329 = vunpack.c.l.b16 %v245
        %v330 = vunpack.c.l.b16 %v246
        %v331 = vunpack.c.l.b16 %v247
        %v332 = vunpack.c.l.b16 %v248
        %v333 = vpack.c.b16 %v302, %v301
        %v334 = vpack.c.b16 %v304, %v303
        %v335 = vpack.c.b16 %v306, %v305
        %v336 = vpack.c.b16 %v308, %v307
        %v337 = vpack.c.b16 %v310, %v309
        %v338 = vpack.c.b16 %v312, %v311
        %v339 = vpack.c.b16 %v314, %v313
        %v340 = vpack.c.b16 %v316, %v315
        %v341 = vpack.c.b16 %v318, %v317
        %v342 = vpack.c.b16 %v320, %v319
        %v343 = vpack.c.b16 %v322, %v321
        %v344 = vpack.c.b16 %v324, %v323
        %v345 = vpack.c.b16 %v326, %v325
        %v346 = vpack.c.b16 %v328, %v327
        %v347 = vpack.c.b16 %v330, %v329
        %v348 = vpack.c.b16 %v332, %v331
        %v381 = vunpack.c.l.b16 %v249
        %v382 = vunpack.c.l.b16 %v250
        %v383 = vunpack.c.l.b16 %v251
        %v384 = vunpack.c.l.b16 %v252
        %v385 = vunpack.c.l.b16 %v253
        %v386 = vunpack.c.l.b16 %v254
        %v387 = vunpack.c.l.b16 %v255
        %v388 = vunpack.c.l.b16 %v256
        %v389 = vunpack.c.l.b16 %v257
        %v390 = vunpack.c.l.b16 %v258
        %v391 = vunpack.c.l.b16 %v259
        %v392 = vunpack.c.l.b16 %v260
        %v393 = vunpack.c.l.b16 %v261
        %v394 = vunpack.c.l.b16 %v262
        %v395 = vunpack.c.l.b16 %v263
        %v396 = vunpack.c.l.b16 %v264
        %v397 = vpack.c.b16 %v382, %v381
        %v398 = vpack.c.b16 %v384, %v383
        %v399 = vpack.c.b16 %v386, %v385
        %v400 = vpack.c.b16 %v388, %v387
        %v401 = vpack.c.b16 %v390, %v389
        %v402 = vpack.c.b16 %v392, %v391
        %v403 = vpack.c.b16 %v394, %v393
        %v404 = vpack.c.b16 %v396, %v395
        %413 = vmatpush.bf16.msra.mxu0 %v404
        %414 = vmatpush.bf16.msra.mxu0 %v403
        %415 = vmatpush.bf16.msra.mxu0 %v402
        %416 = vmatpush.bf16.msra.mxu0 %v401
        %417 = vmatpush.bf16.msra.mxu0 %v400
        %418 = vmatpush.bf16.msra.mxu0 %v399
        %419 = vmatpush.bf16.msra.mxu0 %v398
        %420 = vmatpush.bf16.msra.mxu0 %v397
        %421 = vmatmul.bf16.gmra.mxu0 %v333
        %v422 = vpop.f32.mrf.mxu0
        %v423 = vadd.f32 %v267, %v422
        %v424 = vpop.f32.mrf.mxu0
        %v425 = vadd.f32 %v267, %v424
        %426 = vmatmul.bf16.gmra.mxu0 %v334
        %v427 = vpop.f32.mrf.mxu0
        %v428 = vadd.f32 %v267, %v427
        %v429 = vpop.f32.mrf.mxu0
        %v430 = vadd.f32 %v267, %v429
        %431 = vmatmul.bf16.gmra.mxu0 %v335
        %v432 = vpop.f32.mrf.mxu0
        %v433 = vadd.f32 %v267, %v432
        %v434 = vpop.f32.mrf.mxu0
        %v435 = vadd.f32 %v267, %v434
        %436 = vmatmul.bf16.gmra.mxu0 %v336
        %v437 = vpop.f32.mrf.mxu0
        %v438 = vadd.f32 %v267, %v437
        %v439 = vpop.f32.mrf.mxu0
        %v440 = vadd.f32 %v267, %v439
        %441 = vmatmul.bf16.gmra.mxu0 %v337
        %v442 = vpop.f32.mrf.mxu0
        %v443 = vadd.f32 %v267, %v442
        %v444 = vpop.f32.mrf.mxu0
        %v445 = vadd.f32 %v267, %v444
        %446 = vmatmul.bf16.gmra.mxu0 %v338
        %v447 = vpop.f32.mrf.mxu0
        %v448 = vadd.f32 %v267, %v447
        %v449 = vpop.f32.mrf.mxu0
        %v450 = vadd.f32 %v267, %v449
        %451 = vmatmul.bf16.gmra.mxu0 %v339
        %v452 = vpop.f32.mrf.mxu0
        %v453 = vadd.f32 %v267, %v452
        %v454 = vpop.f32.mrf.mxu0
        %v455 = vadd.f32 %v267, %v454
        %456 = vmatmul.bf16.gmra.mxu0 %v340
        %v457 = vpop.f32.mrf.mxu0
        %v458 = vadd.f32 %v267, %v457
        %v459 = vpop.f32.mrf.mxu0
        %v460 = vadd.f32 %v267, %v459
        %461 = vmatmul.bf16.gmra.mxu0 %v341
        %v462 = vpop.f32.mrf.mxu0
        %v463 = vadd.f32 %v267, %v462
        %v464 = vpop.f32.mrf.mxu0
        %v465 = vadd.f32 %v267, %v464
        %466 = vmatmul.bf16.gmra.mxu0 %v342
        %v467 = vpop.f32.mrf.mxu0
        %v468 = vadd.f32 %v267, %v467
        %v469 = vpop.f32.mrf.mxu0
        %v470 = vadd.f32 %v267, %v469
        %471 = vmatmul.bf16.gmra.mxu0 %v343
        %v472 = vpop.f32.mrf.mxu0
        %v473 = vadd.f32 %v267, %v472
        %v474 = vpop.f32.mrf.mxu0
        %v475 = vadd.f32 %v267, %v474
        %476 = vmatmul.bf16.gmra.mxu0 %v344
        %v477 = vpop.f32.mrf.mxu0
        %v478 = vadd.f32 %v267, %v477
        %v479 = vpop.f32.mrf.mxu0
        %v480 = vadd.f32 %v267, %v479
        %481 = vmatmul.bf16.gmra.mxu0 %v345
        %v482 = vpop.f32.mrf.mxu0
        %v483 = vadd.f32 %v267, %v482
        %v484 = vpop.f32.mrf.mxu0
        %v485 = vadd.f32 %v267, %v484
        %486 = vmatmul.bf16.gmra.mxu0 %v346
        %v487 = vpop.f32.mrf.mxu0
        %v488 = vadd.f32 %v267, %v487
        %v489 = vpop.f32.mrf.mxu0
        %v490 = vadd.f32 %v267, %v489
        %491 = vmatmul.bf16.gmra.mxu0 %v347
        %v492 = vpop.f32.mrf.mxu0
        %v493 = vadd.f32 %v267, %v492
        %v494 = vpop.f32.mrf.mxu0
        %v495 = vadd.f32 %v267, %v494
        %496 = vmatmul.bf16.gmra.mxu0 %v348
        %v497 = vpop.f32.mrf.mxu0
        %v498 = vadd.f32 %v267, %v497
        %v499 = vpop.f32.mrf.mxu0
        %v500 = vadd.f32 %v267, %v499
        %501 = vdwg.mxu0
        %v502 = vtanh.pop %v423
        %v503 = vtanh.pop %v425
        %v504 = vtanh.pop %v428
        %v505 = vtanh.pop %v430
        %v506 = vtanh.pop %v433
        %v507 = vtanh.pop %v435
        %v508 = vtanh.pop %v438
        %v509 = vtanh.pop %v440
        %v510 = vtanh.pop %v443
        %v511 = vtanh.pop %v445
        %v512 = vtanh.pop %v448
        %v513 = vtanh.pop %v450
        %v514 = vtanh.pop %v453
        %v515 = vtanh.pop %v455
        %v516 = vtanh.pop %v458
        %v517 = vtanh.pop %v460
        %v518 = vtanh.pop %v463
        %v519 = vtanh.pop %v465
        %v520 = vtanh.pop %v468
        %v521 = vtanh.pop %v470
        %v522 = vtanh.pop %v473
        %v523 = vtanh.pop %v475
        %v524 = vtanh.pop %v478
        %v525 = vtanh.pop %v480
        %v526 = vtanh.pop %v483
        %v527 = vtanh.pop %v485
        %v528 = vtanh.pop %v488
        %v529 = vtanh.pop %v490
        %v530 = vtanh.pop %v493
        %v531 = vtanh.pop %v495
        %v532 = vtanh.pop %v498
        %v533 = vtanh.pop %v500
        %v534 = vld [vmem:[#allocation2] sm:$0x1]
        %v535 = vld [vmem:[%s3] sm:$0x1]
        %v537 = vperm.slane %v535, 0
        %v539 = vmul.f32 %v502, %v537
        %v540 = vmul.f32 %v503, %v537
        %v541 = vmul.f32 %v504, %v537
        %v542 = vmul.f32 %v505, %v537
        %v543 = vmul.f32 %v506, %v537
        %v544 = vmul.f32 %v507, %v537
        %v545 = vmul.f32 %v508, %v537
        %v546 = vmul.f32 %v509, %v537
        %v547 = vmul.f32 %v510, %v537
        %v548 = vmul.f32 %v511, %v537
        %v549 = vmul.f32 %v512, %v537
        %v550 = vmul.f32 %v513, %v537
        %v551 = vmul.f32 %v514, %v537
        %v552 = vmul.f32 %v515, %v537
        %v553 = vmul.f32 %v516, %v537
        %v554 = vmul.f32 %v517, %v537
        %v555 = vmul.f32 %v518, %v537
        %v556 = vmul.f32 %v519, %v537
        %v557 = vmul.f32 %v520, %v537
        %v558 = vmul.f32 %v521, %v537
        %v559 = vmul.f32 %v522, %v537
        %v560 = vmul.f32 %v523, %v537
        %v561 = vmul.f32 %v524, %v537
        %v562 = vmul.f32 %v525, %v537
        %v563 = vmul.f32 %v526, %v537
        %v564 = vmul.f32 %v527, %v537
        %v565 = vmul.f32 %v528, %v537
        %v566 = vmul.f32 %v529, %v537
        %v567 = vmul.f32 %v530, %v537
        %v568 = vmul.f32 %v531, %v537
        %v569 = vmul.f32 %v532, %v537
        %v570 = vmul.f32 %v533, %v537
        %v571 = vadd.f32 %v539, %v540
        %v572 = vadd.f32 %v571, %v541
        %v573 = vadd.f32 %v572, %v542
        %v574 = vadd.f32 %v573, %v543
        %v575 = vadd.f32 %v574, %v544
        %v576 = vadd.f32 %v575, %v545
        %v577 = vadd.f32 %v576, %v546
        %v578 = vadd.f32 %v577, %v547
        %v579 = vadd.f32 %v578, %v548
        %v580 = vadd.f32 %v579, %v549
        %v581 = vadd.f32 %v580, %v550
        %v582 = vadd.f32 %v581, %v551
        %v583 = vadd.f32 %v582, %v552
        %v584 = vadd.f32 %v583, %v553
        %v585 = vadd.f32 %v584, %v554
        %v586 = vadd.f32 %v585, %v555
        %v587 = vadd.f32 %v586, %v556
        %v588 = vadd.f32 %v587, %v557
        %v589 = vadd.f32 %v588, %v558
        %v590 = vadd.f32 %v589, %v559
        %v591 = vadd.f32 %v590, %v560
        %v592 = vadd.f32 %v591, %v561
        %v593 = vadd.f32 %v592, %v562
        %v594 = vadd.f32 %v593, %v563
        %v595 = vadd.f32 %v594, %v564
        %v596 = vadd.f32 %v595, %v565
        %v597 = vadd.f32 %v596, %v566
        %v598 = vadd.f32 %v597, %v567
        %v599 = vadd.f32 %v598, %v568
        %v600 = vadd.f32 %v599, %v569
        %v601 = vadd.f32 %v600, %v570
        %v602 = vrot.slane %v601, 4
        %v603 = vadd.f32 %v601, %v602
        %v604 = vrot.slane %v603, 2
        %v605 = vadd.f32 %v603, %v604
        %v606 = vrot.slane %v605, 1
        %v607 = vadd.f32 %v605, %v606
        %v608 = vadd.f32 %v534, %v607
        %609 = vst [vmem:[#allocation2] sm:$0x1] %v608
        // Predicated region
        $region41: #{heco_forward.9} parent=35 // pred_check
          %p610 = pneg %p212
        $region42: #{heco_forward.9} parent=35 // pred_check_branch
          %612 = sbr.rel (%p610) target = $region44
        $region43: #{heco_forward.9} parent=35 // pred_region
          %v613 = vld [vmem:[#allocation2] sm:$0x1]
          %vm614 = vcmask 1040384
          %v615 = vsel %vm614, %v613, 0.0
          %616 = vadd.xlane.f32.xlu0 %v615
          %v617 = vpop.xlane.xlu0 %616
          %v618 = vrot.slane %v617, 4
          %v619 = vadd.f32 %v617, %v618
          %v620 = vrot.slane %v619, 2
          %v621 = vadd.f32 %v619, %v620
          %v622 = vrot.slane %v621, 1
          %v623 = vadd.f32 %v621, %v622
          %s624 = vtos %v623
          %s625 = smul.f32 %s624, 0.00390625
          %s626 = scalar_lea.smem [#allocation3], %s20
          %627 = sst [smem:[%s626]] %s625
        $region44: #{heco_forward.9} parent=35 // pred_fallthru
          _
        // Predicated region
        $region45: #{heco_forward.9} parent=35 // pred_check
          %p628 = pneg %p132
        $region46: #{heco_forward.9} parent=35 // pred_check_branch
          %630 = sbr.rel (%p628) target = $region48
        $region47: #{heco_forward.9} parent=35 // pred_region
          %632 = vsyncadd [#allocation4], 0
          %s634 = sshll.u32 %s4, 4
          %s635 = int_to_ptr.vmem [resolvable:$true] %s634
          %637 = dma.smem_to_vmem [#allocation3], 16, %s635, [#allocation4]
        $region48: #{heco_forward.9} parent=35 // pred_fallthru
          _
        // Predicated region
        $region49: #{heco_forward.9} parent=35 // pred_check
          %p638 = pneg %p132
        $region50: #{heco_forward.9} parent=35 // pred_check_branch
          %640 = sbr.rel (%p638) target = $region52
        $region51: #{heco_forward.9} parent=35 // pred_region
          %642 = dma.done [#allocation4], 16
        $region52: #{heco_forward.9} parent=35 // pred_fallthru
          _
        %643 = sfence
      $region36: #{heco_forward.9} parent=5 // pred_fallthru
        _
      %p644 = scmp.le.s32.totalorder 2, %s11
      // Predicated region
      $region53: #{heco_forward.9} parent=5 // pred_check
        %p645 = pneg %p644
      $region54: #{heco_forward.9} parent=5 // pred_check_branch
        %647 = sbr.rel (%p645) target = $region56
      $region55: #{heco_forward.9} parent=5 // pred_region
        %s648 = ssub.s32 %s11, 2
      $region56: #{heco_forward.9} parent=5 // pred_fallthru
        _
    $region6: #{heco_forward.9} parent=1 // loop_footer
      %s15 = sadd.s32 1, %s11
    $region7: #{heco_forward.9} parent=1 // loop_footer_branch
      %10 = sbr.rel target = $region3
    $region8: #{heco_forward.9} parent=1 // loop_exit
      _
    %649 = vsyncpa [#allocation4], 1
    %s650 = scalar_lea.sflag [#allocation4], 1
    %651 = vsyncpa %s650, 1

// kernel: heco_forward.6
$region0: #{heco_forward.6}
  #allocation0 [shape = 'u32[]', space=smem, size = 0x4, offset = 0x4, fixed_abs, tag = 'smem constant byte address 0x4 - core index']
  #allocation1 [shape = 'u32[72,128]{1,0:T(1,128)}', space=vmem, size = 0x9000, scoped, tag = 'internal scratch']
  #allocation2 [shape = 'f32[256,128]{1,0:T(8,128)}', space=vmem, size = 0x20000, scoped, tag = 'scratch operand']
  #allocation3 [shape = 'f32[256,128]{1,0:T(8,128)}', space=vmem, size = 0x20000, scoped, tag = 'scratch operand']
  %s0 = inlined_call_operand.hbm [shape: bf16[256,128], index: 0, kind: input, shape index: {}]
  %s1 = inlined_call_operand.vmem [shape: bf16[128,128], index: 1, kind: input, shape index: {}]
  %s2 = inlined_call_operand.vmem [shape: f32[1,128], index: 2, kind: input, shape index: {}]
  %s3 = inlined_call_operand.vmem [shape: bf16[128,128], index: 3, kind: input, shape index: {}]
  %s4 = inlined_call_operand.vmem [shape: f32[1,128], index: 4, kind: input, shape index: {}]
  %s5 = inlined_call_operand.vmem [shape: bf16[256,128], index: 5, kind: output, shape index: {0}]
  %s6 = inlined_call_operand.vmem [shape: bf16[256,128], index: 6, kind: output, shape index: {1}]
  %7 = xla_tuple %s5, %s6
  %s8 = sld [smem:[#allocation0]]
  $region50: #{heco_forward.6} parent=0
    _
  %s10 = ssub.s32 1, %s8
  %s11 = scalar_select 0, %s10, %s8
  $region1: #{heco_forward.6} parent=0
    #allocation4 [shape = 'u8[65536]{0}', space=vmem, size = 0x10000, scoped, tag = 'input window, operand 0, single buffered']
    #allocation5 [shape = 's32[1]{0}', space=sflag, size = 0x4, scoped, tag = 'scoped memory for heco_forward.6']
    %12 = vsyncpa [#allocation5], 0
    // Predicated region
    $region2: #{heco_forward.6} parent=1 // pred_check
      _
    $region3: #{heco_forward.6} parent=1 // pred_check_branch
      %14 = sbr.rel (0) target = $region5
    $region4: #{heco_forward.6} parent=1 // pred_region
      %16 = vsyncadd [#allocation5], 0
      %s17 = sshll.u32 %s0, 4
      %s18 = int_to_ptr.hbm [resolvable:$true] %s17
      %s19 = sshll.u32 [#allocation4], 4
      %s20 = int_to_ptr.vmem [resolvable:$true] %s19
      %25 = dma.hbm_to_vmem [thread:$0]  %s18, 2048, %s20, [#allocation5], 64, 64, 4
    $region5: #{heco_forward.6} parent=1 // pred_fallthru
      _
    // Predicated region
    $region6: #{heco_forward.6} parent=1 // pred_check
      _
    $region7: #{heco_forward.6} parent=1 // pred_check_branch
      %27 = sbr.rel (0) target = $region9
    $region8: #{heco_forward.6} parent=1 // pred_region
      _
    $region9: #{heco_forward.6} parent=1 // pred_fallthru
      _
    // Predicated region
    $region10: #{heco_forward.6} parent=1 // pred_check
      _
    $region11: #{heco_forward.6} parent=1 // pred_check_branch
      %29 = sbr.rel (0) target = $region13
    $region12: #{heco_forward.6} parent=1 // pred_region
      _
    $region13: #{heco_forward.6} parent=1 // pred_fallthru
      _
    // Predicated region
    $region14: #{heco_forward.6} parent=1 // pred_check
      _
    $region15: #{heco_forward.6} parent=1 // pred_check_branch
      %31 = sbr.rel (0) target = $region17
    $region16: #{heco_forward.6} parent=1 // pred_region
      _
    $region17: #{heco_forward.6} parent=1 // pred_fallthru
      _
    // Predicated region
    $region18: #{heco_forward.6} parent=1 // pred_check
      _
    $region19: #{heco_forward.6} parent=1 // pred_check_branch
      %33 = sbr.rel (0) target = $region21
    $region20: #{heco_forward.6} parent=1 // pred_region
      _
    $region21: #{heco_forward.6} parent=1 // pred_fallthru
      _
    // Predicated region
    $region22: #{heco_forward.6} parent=1 // pred_check
      _
    $region23: #{heco_forward.6} parent=1 // pred_check_branch
      %35 = sbr.rel (0) target = $region25
    $region24: #{heco_forward.6} parent=1 // pred_region
      %37 = dma.done [#allocation5], 2048
    $region25: #{heco_forward.6} parent=1 // pred_fallthru
      _
    %p38 = scmp.eq.s32.totalorder 0, 0
    // Predicated region
    $region26: #{heco_forward.6} parent=1 // pred_check
      %p39 = pneg %p38
    $region27: #{heco_forward.6} parent=1 // pred_check_branch
      %41 = sbr.rel (%p39) target = $region29
    $region28: #{heco_forward.6} parent=1 // pred_region
      %42 = vst [vmem:[#allocation2] sm:$0xff] 0.0
      %43 = vst [vmem:[#allocation2 + $0x8] sm:$0xff] 0.0
      %44 = vst [vmem:[#allocation2 + $0x10] sm:$0xff] 0.0
      %45 = vst [vmem:[#allocation2 + $0x18] sm:$0xff] 0.0
      %46 = vst [vmem:[#allocation2 + $0x20] sm:$0xff] 0.0
      %47 = vst [vmem:[#allocation2 + $0x28] sm:$0xff] 0.0
      %48 = vst [vmem:[#allocation2 + $0x30] sm:$0xff] 0.0
      %49 = vst [vmem:[#allocation2 + $0x38] sm:$0xff] 0.0
      %50 = vst [vmem:[#allocation2 + $0x40] sm:$0xff] 0.0
      %51 = vst [vmem:[#allocation2 + $0x48] sm:$0xff] 0.0
      %52 = vst [vmem:[#allocation2 + $0x50] sm:$0xff] 0.0
      %53 = vst [vmem:[#allocation2 + $0x58] sm:$0xff] 0.0
      %54 = vst [vmem:[#allocation2 + $0x60] sm:$0xff] 0.0
      %55 = vst [vmem:[#allocation2 + $0x68] sm:$0xff] 0.0
      %56 = vst [vmem:[#allocation2 + $0x70] sm:$0xff] 0.0
      %57 = vst [vmem:[#allocation2 + $0x78] sm:$0xff] 0.0
      %58 = vst [vmem:[#allocation2 + $0x80] sm:$0xff] 0.0
      %59 = vst [vmem:[#allocation2 + $0x88] sm:$0xff] 0.0
      %60 = vst [vmem:[#allocation2 + $0x90] sm:$0xff] 0.0
      %61 = vst [vmem:[#allocation2 + $0x98] sm:$0xff] 0.0
      %62 = vst [vmem:[#allocation2 + $0xa0] sm:$0xff] 0.0
      %63 = vst [vmem:[#allocation2 + $0xa8] sm:$0xff] 0.0
      %64 = vst [vmem:[#allocation2 + $0xb0] sm:$0xff] 0.0
      %65 = vst [vmem:[#allocation2 + $0xb8] sm:$0xff] 0.0
      %66 = vst [vmem:[#allocation2 + $0xc0] sm:$0xff] 0.0
      %67 = vst [vmem:[#allocation2 + $0xc8] sm:$0xff] 0.0
      %68 = vst [vmem:[#allocation2 + $0xd0] sm:$0xff] 0.0
      %69 = vst [vmem:[#allocation2 + $0xd8] sm:$0xff] 0.0
      %70 = vst [vmem:[#allocation2 + $0xe0] sm:$0xff] 0.0
      %71 = vst [vmem:[#allocation2 + $0xe8] sm:$0xff] 0.0
      %72 = vst [vmem:[#allocation2 + $0xf0] sm:$0xff] 0.0
      %73 = vst [vmem:[#allocation2 + $0xf8] sm:$0xff] 0.0
      %74 = vst [vmem:[#allocation3] sm:$0xff] 0.0
      %75 = vst [vmem:[#allocation3 + $0x8] sm:$0xff] 0.0
      %76 = vst [vmem:[#allocation3 + $0x10] sm:$0xff] 0.0
      %77 = vst [vmem:[#allocation3 + $0x18] sm:$0xff] 0.0
      %78 = vst [vmem:[#allocation3 + $0x20] sm:$0xff] 0.0
      %79 = vst [vmem:[#allocation3 + $0x28] sm:$0xff] 0.0
      %80 = vst [vmem:[#allocation3 + $0x30] sm:$0xff] 0.0
      %81 = vst [vmem:[#allocation3 + $0x38] sm:$0xff] 0.0
      %82 = vst [vmem:[#allocation3 + $0x40] sm:$0xff] 0.0
      %83 = vst [vmem:[#allocation3 + $0x48] sm:$0xff] 0.0
      %84 = vst [vmem:[#allocation3 + $0x50] sm:$0xff] 0.0
      %85 = vst [vmem:[#allocation3 + $0x58] sm:$0xff] 0.0
      %86 = vst [vmem:[#allocation3 + $0x60] sm:$0xff] 0.0
      %87 = vst [vmem:[#allocation3 + $0x68] sm:$0xff] 0.0
      %88 = vst [vmem:[#allocation3 + $0x70] sm:$0xff] 0.0
      %89 = vst [vmem:[#allocation3 + $0x78] sm:$0xff] 0.0
      %90 = vst [vmem:[#allocation3 + $0x80] sm:$0xff] 0.0
      %91 = vst [vmem:[#allocation3 + $0x88] sm:$0xff] 0.0
      %92 = vst [vmem:[#allocation3 + $0x90] sm:$0xff] 0.0
      %93 = vst [vmem:[#allocation3 + $0x98] sm:$0xff] 0.0
      %94 = vst [vmem:[#allocation3 + $0xa0] sm:$0xff] 0.0
      %95 = vst [vmem:[#allocation3 + $0xa8] sm:$0xff] 0.0
      %96 = vst [vmem:[#allocation3 + $0xb0] sm:$0xff] 0.0
      %97 = vst [vmem:[#allocation3 + $0xb8] sm:$0xff] 0.0
      %98 = vst [vmem:[#allocation3 + $0xc0] sm:$0xff] 0.0
      %99 = vst [vmem:[#allocation3 + $0xc8] sm:$0xff] 0.0
      %100 = vst [vmem:[#allocation3 + $0xd0] sm:$0xff] 0.0
      %101 = vst [vmem:[#allocation3 + $0xd8] sm:$0xff] 0.0
      %102 = vst [vmem:[#allocation3 + $0xe0] sm:$0xff] 0.0
      %103 = vst [vmem:[#allocation3 + $0xe8] sm:$0xff] 0.0
      %104 = vst [vmem:[#allocation3 + $0xf0] sm:$0xff] 0.0
      %105 = vst [vmem:[#allocation3 + $0xf8] sm:$0xff] 0.0
    $region29: #{heco_forward.6} parent=1 // pred_fallthru
      _
    %v106 = vld [vmem:[#allocation4] sm:$0xf]
    %v107 = vld [vmem:[#allocation4 + $0x4] sm:$0xf]
    %v108 = vld [vmem:[#allocation4 + $0x8] sm:$0xf]
    %v109 = vld [vmem:[#allocation4 + $0xc] sm:$0xf]
    %v110 = vld [vmem:[#allocation4 + $0x10] sm:$0xf]
    %v111 = vld [vmem:[#allocation4 + $0x14] sm:$0xf]
    %v112 = vld [vmem:[#allocation4 + $0x18] sm:$0xf]
    %v113 = vld [vmem:[#allocation4 + $0x1c] sm:$0xf]
    %v114 = vld [vmem:[#allocation4 + $0x20] sm:$0xf]
    %v115 = vld [vmem:[#allocation4 + $0x24] sm:$0xf]
    %v116 = vld [vmem:[#allocation4 + $0x28] sm:$0xf]
    %v117 = vld [vmem:[#allocation4 + $0x2c] sm:$0xf]
    %v118 = vld [vmem:[#allocation4 + $0x30] sm:$0xf]
    %v119 = vld [vmem:[#allocation4 + $0x34] sm:$0xf]
    %v120 = vld [vmem:[#allocation4 + $0x38] sm:$0xf]
    %v121 = vld [vmem:[#allocation4 + $0x3c] sm:$0xf]
    %v122 = vld [vmem:[#allocation4 + $0x40] sm:$0xf]
    %v123 = vld [vmem:[#allocation4 + $0x44] sm:$0xf]
    %v124 = vld [vmem:[#allocation4 + $0x48] sm:$0xf]
    %v125 = vld [vmem:[#allocation4 + $0x4c] sm:$0xf]
    %v126 = vld [vmem:[#allocation4 + $0x50] sm:$0xf]
    %v127 = vld [vmem:[#allocation4 + $0x54] sm:$0xf]
    %v128 = vld [vmem:[#allocation4 + $0x58] sm:$0xf]
    %v129 = vld [vmem:[#allocation4 + $0x5c] sm:$0xf]
    %v130 = vld [vmem:[#allocation4 + $0x60] sm:$0xf]
    %v131 = vld [vmem:[#allocation4 + $0x64] sm:$0xf]
    %v132 = vld [vmem:[#allocation4 + $0x68] sm:$0xf]
    %v133 = vld [vmem:[#allocation4 + $0x6c] sm:$0xf]
    %v134 = vld [vmem:[#allocation4 + $0x70] sm:$0xf]
    %v135 = vld [vmem:[#allocation4 + $0x74] sm:$0xf]
    %v136 = vld [vmem:[#allocation4 + $0x78] sm:$0xf]
    %v137 = vld [vmem:[#allocation4 + $0x7c] sm:$0xf]
    %v138 = vld [vmem:[#allocation2] sm:$0xff]
    %v139 = vld [vmem:[#allocation2 + $0x8] sm:$0xff]
    %v140 = vld [vmem:[#allocation2 + $0x10] sm:$0xff]
    %v141 = vld [vmem:[#allocation2 + $0x18] sm:$0xff]
    %v142 = vld [vmem:[#allocation2 + $0x20] sm:$0xff]
    %v143 = vld [vmem:[#allocation2 + $0x28] sm:$0xff]
    %v144 = vld [vmem:[#allocation2 + $0x30] sm:$0xff]
    %v145 = vld [vmem:[#allocation2 + $0x38] sm:$0xff]
    %v146 = vld [vmem:[#allocation2 + $0x40] sm:$0xff]
    %v147 = vld [vmem:[#allocation2 + $0x48] sm:$0xff]
    %v148 = vld [vmem:[#allocation2 + $0x50] sm:$0xff]
    %v149 = vld [vmem:[#allocation2 + $0x58] sm:$0xff]
    %v150 = vld [vmem:[#allocation2 + $0x60] sm:$0xff]
    %v151 = vld [vmem:[#allocation2 + $0x68] sm:$0xff]
    %v152 = vld [vmem:[#allocation2 + $0x70] sm:$0xff]
    %v153 = vld [vmem:[#allocation2 + $0x78] sm:$0xff]
    %v154 = vld [vmem:[#allocation2 + $0x80] sm:$0xff]
    %v155 = vld [vmem:[#allocation2 + $0x88] sm:$0xff]
    %v156 = vld [vmem:[#allocation2 + $0x90] sm:$0xff]
    %v157 = vld [vmem:[#allocation2 + $0x98] sm:$0xff]
    %v158 = vld [vmem:[#allocation2 + $0xa0] sm:$0xff]
    %v159 = vld [vmem:[#allocation2 + $0xa8] sm:$0xff]
    %v160 = vld [vmem:[#allocation2 + $0xb0] sm:$0xff]
    %v161 = vld [vmem:[#allocation2 + $0xb8] sm:$0xff]
    %v162 = vld [vmem:[#allocation2 + $0xc0] sm:$0xff]
    %v163 = vld [vmem:[#allocation2 + $0xc8] sm:$0xff]
    %v164 = vld [vmem:[#allocation2 + $0xd0] sm:$0xff]
    %v165 = vld [vmem:[#allocation2 + $0xd8] sm:$0xff]
    %v166 = vld [vmem:[#allocation2 + $0xe0] sm:$0xff]
    %v167 = vld [vmem:[#allocation2 + $0xe8] sm:$0xff]
    %v168 = vld [vmem:[#allocation2 + $0xf0] sm:$0xff]
    %v169 = vld [vmem:[#allocation2 + $0xf8] sm:$0xff]
    %v170 = vld [vmem:[%s1] sm:$0xf]
    %v171 = vld [vmem:[%s1 + $0x4] sm:$0xf]
    %v172 = vld [vmem:[%s1 + $0x8] sm:$0xf]
    %v173 = vld [vmem:[%s1 + $0xc] sm:$0xf]
    %v174 = vld [vmem:[%s1 + $0x10] sm:$0xf]
    %v175 = vld [vmem:[%s1 + $0x14] sm:$0xf]
    %v176 = vld [vmem:[%s1 + $0x18] sm:$0xf]
    %v177 = vld [vmem:[%s1 + $0x1c] sm:$0xf]
    %v178 = vld [vmem:[%s1 + $0x20] sm:$0xf]
    %v179 = vld [vmem:[%s1 + $0x24] sm:$0xf]
    %v180 = vld [vmem:[%s1 + $0x28] sm:$0xf]
    %v181 = vld [vmem:[%s1 + $0x2c] sm:$0xf]
    %v182 = vld [vmem:[%s1 + $0x30] sm:$0xf]
    %v183 = vld [vmem:[%s1 + $0x34] sm:$0xf]
    %v184 = vld [vmem:[%s1 + $0x38] sm:$0xf]
    %v185 = vld [vmem:[%s1 + $0x3c] sm:$0xf]
    %v218 = vunpack.c.l.b16 %v106
    %v219 = vunpack.c.l.b16 %v107
    %v220 = vunpack.c.l.b16 %v108
    %v221 = vunpack.c.l.b16 %v109
    %v222 = vunpack.c.l.b16 %v110
    %v223 = vunpack.c.l.b16 %v111
    %v224 = vunpack.c.l.b16 %v112
    %v225 = vunpack.c.l.b16 %v113
    %v226 = vunpack.c.l.b16 %v114
    %v227 = vunpack.c.l.b16 %v115
    %v228 = vunpack.c.l.b16 %v116
    %v229 = vunpack.c.l.b16 %v117
    %v230 = vunpack.c.l.b16 %v118
    %v231 = vunpack.c.l.b16 %v119
    %v232 = vunpack.c.l.b16 %v120
    %v233 = vunpack.c.l.b16 %v121
    %v234 = vunpack.c.l.b16 %v122
    %v235 = vunpack.c.l.b16 %v123
    %v236 = vunpack.c.l.b16 %v124
    %v237 = vunpack.c.l.b16 %v125
    %v238 = vunpack.c.l.b16 %v126
    %v239 = vunpack.c.l.b16 %v127
    %v240 = vunpack.c.l.b16 %v128
    %v241 = vunpack.c.l.b16 %v129
    %v242 = vunpack.c.l.b16 %v130
    %v243 = vunpack.c.l.b16 %v131
    %v244 = vunpack.c.l.b16 %v132
    %v245 = vunpack.c.l.b16 %v133
    %v246 = vunpack.c.l.b16 %v134
    %v247 = vunpack.c.l.b16 %v135
    %v248 = vunpack.c.l.b16 %v136
    %v249 = vunpack.c.l.b16 %v137
    %v250 = vpack.c.b16 %v219, %v218
    %v251 = vpack.c.b16 %v221, %v220
    %v252 = vpack.c.b16 %v223, %v222
    %v253 = vpack.c.b16 %v225, %v224
    %v254 = vpack.c.b16 %v227, %v226
    %v255 = vpack.c.b16 %v229, %v228
    %v256 = vpack.c.b16 %v231, %v230
    %v257 = vpack.c.b16 %v233, %v232
    %v258 = vpack.c.b16 %v235, %v234
    %v259 = vpack.c.b16 %v237, %v236
    %v260 = vpack.c.b16 %v239, %v238
    %v261 = vpack.c.b16 %v241, %v240
    %v262 = vpack.c.b16 %v243, %v242
    %v263 = vpack.c.b16 %v245, %v244
    %v264 = vpack.c.b16 %v247, %v246
    %v265 = vpack.c.b16 %v249, %v248
    %v298 = vunpack.c.l.b16 %v170
    %v299 = vunpack.c.l.b16 %v171
    %v300 = vunpack.c.l.b16 %v172
    %v301 = vunpack.c.l.b16 %v173
    %v302 = vunpack.c.l.b16 %v174
    %v303 = vunpack.c.l.b16 %v175
    %v304 = vunpack.c.l.b16 %v176
    %v305 = vunpack.c.l.b16 %v177
    %v306 = vunpack.c.l.b16 %v178
    %v307 = vunpack.c.l.b16 %v179
    %v308 = vunpack.c.l.b16 %v180
    %v309 = vunpack.c.l.b16 %v181
    %v310 = vunpack.c.l.b16 %v182
    %v311 = vunpack.c.l.b16 %v183
    %v312 = vunpack.c.l.b16 %v184
    %v313 = vunpack.c.l.b16 %v185
    %v314 = vpack.c.b16 %v299, %v298
    %v315 = vpack.c.b16 %v301, %v300
    %v316 = vpack.c.b16 %v303, %v302
    %v317 = vpack.c.b16 %v305, %v304
    %v318 = vpack.c.b16 %v307, %v306
    %v319 = vpack.c.b16 %v309, %v308
    %v320 = vpack.c.b16 %v311, %v310
    %v321 = vpack.c.b16 %v313, %v312
    %330 = vmatpush.bf16.msra.mxu0 %v321
    %331 = vmatpush.bf16.msra.mxu0 %v320
    %332 = vmatpush.bf16.msra.mxu0 %v319
    %333 = vmatpush.bf16.msra.mxu0 %v318
    %334 = vmatpush.bf16.msra.mxu0 %v317
    %335 = vmatpush.bf16.msra.mxu0 %v316
    %336 = vmatpush.bf16.msra.mxu0 %v315
    %337 = vmatpush.bf16.msra.mxu0 %v314
    %338 = vmatmul.bf16.gmra.mxu0 %v250
    %v339 = vpop.f32.mrf.mxu0
    %v340 = vadd.f32 0.0, %v339
    %v341 = vpop.f32.mrf.mxu0
    %v342 = vadd.f32 0.0, %v341
    %343 = vmatmul.bf16.gmra.mxu0 %v251
    %v344 = vpop.f32.mrf.mxu0
    %v345 = vadd.f32 0.0, %v344
    %v346 = vpop.f32.mrf.mxu0
    %v347 = vadd.f32 0.0, %v346
    %348 = vmatmul.bf16.gmra.mxu0 %v252
    %v349 = vpop.f32.mrf.mxu0
    %v350 = vadd.f32 0.0, %v349
    %v351 = vpop.f32.mrf.mxu0
    %v352 = vadd.f32 0.0, %v351
    %353 = vmatmul.bf16.gmra.mxu0 %v253
    %v354 = vpop.f32.mrf.mxu0
    %v355 = vadd.f32 0.0, %v354
    %v356 = vpop.f32.mrf.mxu0
    %v357 = vadd.f32 0.0, %v356
    %358 = vmatmul.bf16.gmra.mxu0 %v254
    %v359 = vpop.f32.mrf.mxu0
    %v360 = vadd.f32 0.0, %v359
    %v361 = vpop.f32.mrf.mxu0
    %v362 = vadd.f32 0.0, %v361
    %363 = vmatmul.bf16.gmra.mxu0 %v255
    %v364 = vpop.f32.mrf.mxu0
    %v365 = vadd.f32 0.0, %v364
    %v366 = vpop.f32.mrf.mxu0
    %v367 = vadd.f32 0.0, %v366
    %368 = vmatmul.bf16.gmra.mxu0 %v256
    %v369 = vpop.f32.mrf.mxu0
    %v370 = vadd.f32 0.0, %v369
    %v371 = vpop.f32.mrf.mxu0
    %v372 = vadd.f32 0.0, %v371
    %373 = vmatmul.bf16.gmra.mxu0 %v257
    %v374 = vpop.f32.mrf.mxu0
    %v375 = vadd.f32 0.0, %v374
    %v376 = vpop.f32.mrf.mxu0
    %v377 = vadd.f32 0.0, %v376
    %378 = vmatmul.bf16.gmra.mxu0 %v258
    %v379 = vpop.f32.mrf.mxu0
    %v380 = vadd.f32 0.0, %v379
    %v381 = vpop.f32.mrf.mxu0
    %v382 = vadd.f32 0.0, %v381
    %383 = vmatmul.bf16.gmra.mxu0 %v259
    %v384 = vpop.f32.mrf.mxu0
    %v385 = vadd.f32 0.0, %v384
    %v386 = vpop.f32.mrf.mxu0
    %v387 = vadd.f32 0.0, %v386
    %388 = vmatmul.bf16.gmra.mxu0 %v260
    %v389 = vpop.f32.mrf.mxu0
    %v390 = vadd.f32 0.0, %v389
    %v391 = vpop.f32.mrf.mxu0
    %v392 = vadd.f32 0.0, %v391
    %393 = vmatmul.bf16.gmra.mxu0 %v261
    %v394 = vpop.f32.mrf.mxu0
    %v395 = vadd.f32 0.0, %v394
    %v396 = vpop.f32.mrf.mxu0
    %v397 = vadd.f32 0.0, %v396
    %398 = vmatmul.bf16.gmra.mxu0 %v262
    %v399 = vpop.f32.mrf.mxu0
    %v400 = vadd.f32 0.0, %v399
    %v401 = vpop.f32.mrf.mxu0
    %v402 = vadd.f32 0.0, %v401
    %403 = vmatmul.bf16.gmra.mxu0 %v263
    %v404 = vpop.f32.mrf.mxu0
    %v405 = vadd.f32 0.0, %v404
    %v406 = vpop.f32.mrf.mxu0
    %v407 = vadd.f32 0.0, %v406
    %408 = vmatmul.bf16.gmra.mxu0 %v264
    %v409 = vpop.f32.mrf.mxu0
    %v410 = vadd.f32 0.0, %v409
    %v411 = vpop.f32.mrf.mxu0
    %v412 = vadd.f32 0.0, %v411
    %413 = vmatmul.bf16.gmra.mxu0 %v265
    %v414 = vpop.f32.mrf.mxu0
    %v415 = vadd.f32 0.0, %v414
    %v416 = vpop.f32.mrf.mxu0
    %v417 = vadd.f32 0.0, %v416
    %418 = vdwg.mxu0
    %v419 = vadd.f32 %v138, %v340
    %v420 = vadd.f32 %v139, %v342
    %v421 = vadd.f32 %v140, %v345
    %v422 = vadd.f32 %v141, %v347
    %v423 = vadd.f32 %v142, %v350
    %v424 = vadd.f32 %v143, %v352
    %v425 = vadd.f32 %v144, %v355
    %v426 = vadd.f32 %v145, %v357
    %v427 = vadd.f32 %v146, %v360
    %v428 = vadd.f32 %v147, %v362
    %v429 = vadd.f32 %v148, %v365
    %v430 = vadd.f32 %v149, %v367
    %v431 = vadd.f32 %v150, %v370
    %v432 = vadd.f32 %v151, %v372
    %v433 = vadd.f32 %v152, %v375
    %v434 = vadd.f32 %v153, %v377
    %v435 = vadd.f32 %v154, %v380
    %v436 = vadd.f32 %v155, %v382
    %v437 = vadd.f32 %v156, %v385
    %v438 = vadd.f32 %v157, %v387
    %v439 = vadd.f32 %v158, %v390
    %v440 = vadd.f32 %v159, %v392
    %v441 = vadd.f32 %v160, %v395
    %v442 = vadd.f32 %v161, %v397
    %v443 = vadd.f32 %v162, %v400
    %v444 = vadd.f32 %v163, %v402
    %v445 = vadd.f32 %v164, %v405
    %v446 = vadd.f32 %v165, %v407
    %v447 = vadd.f32 %v166, %v410
    %v448 = vadd.f32 %v167, %v412
    %v449 = vadd.f32 %v168, %v415
    %v450 = vadd.f32 %v169, %v417
    %451 = vst [vmem:[#allocation2] sm:$0xff] %v419
    %452 = vst [vmem:[#allocation2 + $0x8] sm:$0xff] %v420
    %453 = vst [vmem:[#allocation2 + $0x10] sm:$0xff] %v421
    %454 = vst [vmem:[#allocation2 + $0x18] sm:$0xff] %v422
    %455 = vst [vmem:[#allocation2 + $0x20] sm:$0xff] %v423
    %456 = vst [vmem:[#allocation2 + $0x28] sm:$0xff] %v424
    %457 = vst [vmem:[#allocation2 + $0x30] sm:$0xff] %v425
    %458 = vst [vmem:[#allocation2 + $0x38] sm:$0xff] %v426
    %459 = vst [vmem:[#allocation2 + $0x40] sm:$0xff] %v427
    %460 = vst [vmem:[#allocation2 + $0x48] sm:$0xff] %v428
    %461 = vst [vmem:[#allocation2 + $0x50] sm:$0xff] %v429
    %462 = vst [vmem:[#allocation2 + $0x58] sm:$0xff] %v430
    %463 = vst [vmem:[#allocation2 + $0x60] sm:$0xff] %v431
    %464 = vst [vmem:[#allocation2 + $0x68] sm:$0xff] %v432
    %465 = vst [vmem:[#allocation2 + $0x70] sm:$0xff] %v433
    %466 = vst [vmem:[#allocation2 + $0x78] sm:$0xff] %v434
    %467 = vst [vmem:[#allocation2 + $0x80] sm:$0xff] %v435
    %468 = vst [vmem:[#allocation2 + $0x88] sm:$0xff] %v436
    %469 = vst [vmem:[#allocation2 + $0x90] sm:$0xff] %v437
    %470 = vst [vmem:[#allocation2 + $0x98] sm:$0xff] %v438
    %471 = vst [vmem:[#allocation2 + $0xa0] sm:$0xff] %v439
    %472 = vst [vmem:[#allocation2 + $0xa8] sm:$0xff] %v440
    %473 = vst [vmem:[#allocation2 + $0xb0] sm:$0xff] %v441
    %474 = vst [vmem:[#allocation2 + $0xb8] sm:$0xff] %v442
    %475 = vst [vmem:[#allocation2 + $0xc0] sm:$0xff] %v443
    %476 = vst [vmem:[#allocation2 + $0xc8] sm:$0xff] %v444
    %477 = vst [vmem:[#allocation2 + $0xd0] sm:$0xff] %v445
    %478 = vst [vmem:[#allocation2 + $0xd8] sm:$0xff] %v446
    %479 = vst [vmem:[#allocation2 + $0xe0] sm:$0xff] %v447
    %480 = vst [vmem:[#allocation2 + $0xe8] sm:$0xff] %v448
    %481 = vst [vmem:[#allocation2 + $0xf0] sm:$0xff] %v449
    %482 = vst [vmem:[#allocation2 + $0xf8] sm:$0xff] %v450
    %v483 = vld [vmem:[#allocation3] sm:$0xff]
    %v484 = vld [vmem:[#allocation3 + $0x8] sm:$0xff]
    %v485 = vld [vmem:[#allocation3 + $0x10] sm:$0xff]
    %v486 = vld [vmem:[#allocation3 + $0x18] sm:$0xff]
    %v487 = vld [vmem:[#allocation3 + $0x20] sm:$0xff]
    %v488 = vld [vmem:[#allocation3 + $0x28] sm:$0xff]
    %v489 = vld [vmem:[#allocation3 + $0x30] sm:$0xff]
    %v490 = vld [vmem:[#allocation3 + $0x38] sm:$0xff]
    %v491 = vld [vmem:[#allocation3 + $0x40] sm:$0xff]
    %v492 = vld [vmem:[#allocation3 + $0x48] sm:$0xff]
    %v493 = vld [vmem:[#allocation3 + $0x50] sm:$0xff]
    %v494 = vld [vmem:[#allocation3 + $0x58] sm:$0xff]
    %v495 = vld [vmem:[#allocation3 + $0x60] sm:$0xff]
    %v496 = vld [vmem:[#allocation3 + $0x68] sm:$0xff]
    %v497 = vld [vmem:[#allocation3 + $0x70] sm:$0xff]
    %v498 = vld [vmem:[#allocation3 + $0x78] sm:$0xff]
    %v499 = vld [vmem:[#allocation3 + $0x80] sm:$0xff]
    %v500 = vld [vmem:[#allocation3 + $0x88] sm:$0xff]
    %v501 = vld [vmem:[#allocation3 + $0x90] sm:$0xff]
    %v502 = vld [vmem:[#allocation3 + $0x98] sm:$0xff]
    %v503 = vld [vmem:[#allocation3 + $0xa0] sm:$0xff]
    %v504 = vld [vmem:[#allocation3 + $0xa8] sm:$0xff]
    %v505 = vld [vmem:[#allocation3 + $0xb0] sm:$0xff]
    %v506 = vld [vmem:[#allocation3 + $0xb8] sm:$0xff]
    %v507 = vld [vmem:[#allocation3 + $0xc0] sm:$0xff]
    %v508 = vld [vmem:[#allocation3 + $0xc8] sm:$0xff]
    %v509 = vld [vmem:[#allocation3 + $0xd0] sm:$0xff]
    %v510 = vld [vmem:[#allocation3 + $0xd8] sm:$0xff]
    %v511 = vld [vmem:[#allocation3 + $0xe0] sm:$0xff]
    %v512 = vld [vmem:[#allocation3 + $0xe8] sm:$0xff]
    %v513 = vld [vmem:[#allocation3 + $0xf0] sm:$0xff]
    %v514 = vld [vmem:[#allocation3 + $0xf8] sm:$0xff]
    %v515 = vld [vmem:[%s3] sm:$0xf]
    %v516 = vld [vmem:[%s3 + $0x4] sm:$0xf]
    %v517 = vld [vmem:[%s3 + $0x8] sm:$0xf]
    %v518 = vld [vmem:[%s3 + $0xc] sm:$0xf]
    %v519 = vld [vmem:[%s3 + $0x10] sm:$0xf]
    %v520 = vld [vmem:[%s3 + $0x14] sm:$0xf]
    %v521 = vld [vmem:[%s3 + $0x18] sm:$0xf]
    %v522 = vld [vmem:[%s3 + $0x1c] sm:$0xf]
    %v523 = vld [vmem:[%s3 + $0x20] sm:$0xf]
    %v524 = vld [vmem:[%s3 + $0x24] sm:$0xf]
    %v525 = vld [vmem:[%s3 + $0x28] sm:$0xf]
    %v526 = vld [vmem:[%s3 + $0x2c] sm:$0xf]
    %v527 = vld [vmem:[%s3 + $0x30] sm:$0xf]
    %v528 = vld [vmem:[%s3 + $0x34] sm:$0xf]
    %v529 = vld [vmem:[%s3 + $0x38] sm:$0xf]
    %v530 = vld [vmem:[%s3 + $0x3c] sm:$0xf]
    %v547 = vunpack.c.l.b16 %v515
    %v548 = vunpack.c.l.b16 %v516
    %v549 = vunpack.c.l.b16 %v517
    %v550 = vunpack.c.l.b16 %v518
    %v551 = vunpack.c.l.b16 %v519
    %v552 = vunpack.c.l.b16 %v520
    %v553 = vunpack.c.l.b16 %v521
    %v554 = vunpack.c.l.b16 %v522
    %v555 = vunpack.c.l.b16 %v523
    %v556 = vunpack.c.l.b16 %v524
    %v557 = vunpack.c.l.b16 %v525
    %v558 = vunpack.c.l.b16 %v526
    %v559 = vunpack.c.l.b16 %v527
    %v560 = vunpack.c.l.b16 %v528
    %v561 = vunpack.c.l.b16 %v529
    %v562 = vunpack.c.l.b16 %v530
    %v563 = vpack.c.b16 %v548, %v547
    %v564 = vpack.c.b16 %v550, %v549
    %v565 = vpack.c.b16 %v552, %v551
    %v566 = vpack.c.b16 %v554, %v553
    %v567 = vpack.c.b16 %v556, %v555
    %v568 = vpack.c.b16 %v558, %v557
    %v569 = vpack.c.b16 %v560, %v559
    %v570 = vpack.c.b16 %v562, %v561
    %579 = vmatpush.bf16.msra.mxu0 %v570
    %580 = vmatpush.bf16.msra.mxu0 %v569
    %581 = vmatpush.bf16.msra.mxu0 %v568
    %582 = vmatpush.bf16.msra.mxu0 %v567
    %583 = vmatpush.bf16.msra.mxu0 %v566
    %584 = vmatpush.bf16.msra.mxu0 %v565
    %585 = vmatpush.bf16.msra.mxu0 %v564
    %586 = vmatpush.bf16.msra.mxu0 %v563
    %587 = vmatmul.bf16.gmra.mxu0 %v250
    %v588 = vpop.f32.mrf.mxu0
    %v589 = vadd.f32 0.0, %v588
    %v590 = vpop.f32.mrf.mxu0
    %v591 = vadd.f32 0.0, %v590
    %592 = vmatmul.bf16.gmra.mxu0 %v251
    %v593 = vpop.f32.mrf.mxu0
    %v594 = vadd.f32 0.0, %v593
    %v595 = vpop.f32.mrf.mxu0
    %v596 = vadd.f32 0.0, %v595
    %597 = vmatmul.bf16.gmra.mxu0 %v252
    %v598 = vpop.f32.mrf.mxu0
    %v599 = vadd.f32 0.0, %v598
    %v600 = vpop.f32.mrf.mxu0
    %v601 = vadd.f32 0.0, %v600
    %602 = vmatmul.bf16.gmra.mxu0 %v253
    %v603 = vpop.f32.mrf.mxu0
    %v604 = vadd.f32 0.0, %v603
    %v605 = vpop.f32.mrf.mxu0
    %v606 = vadd.f32 0.0, %v605
    %607 = vmatmul.bf16.gmra.mxu0 %v254
    %v608 = vpop.f32.mrf.mxu0
    %v609 = vadd.f32 0.0, %v608
    %v610 = vpop.f32.mrf.mxu0
    %v611 = vadd.f32 0.0, %v610
    %612 = vmatmul.bf16.gmra.mxu0 %v255
    %v613 = vpop.f32.mrf.mxu0
    %v614 = vadd.f32 0.0, %v613
    %v615 = vpop.f32.mrf.mxu0
    %v616 = vadd.f32 0.0, %v615
    %617 = vmatmul.bf16.gmra.mxu0 %v256
    %v618 = vpop.f32.mrf.mxu0
    %v619 = vadd.f32 0.0, %v618
    %v620 = vpop.f32.mrf.mxu0
    %v621 = vadd.f32 0.0, %v620
    %622 = vmatmul.bf16.gmra.mxu0 %v257
    %v623 = vpop.f32.mrf.mxu0
    %v624 = vadd.f32 0.0, %v623
    %v625 = vpop.f32.mrf.mxu0
    %v626 = vadd.f32 0.0, %v625
    %627 = vmatmul.bf16.gmra.mxu0 %v258
    %v628 = vpop.f32.mrf.mxu0
    %v629 = vadd.f32 0.0, %v628
    %v630 = vpop.f32.mrf.mxu0
    %v631 = vadd.f32 0.0, %v630
    %632 = vmatmul.bf16.gmra.mxu0 %v259
    %v633 = vpop.f32.mrf.mxu0
    %v634 = vadd.f32 0.0, %v633
    %v635 = vpop.f32.mrf.mxu0
    %v636 = vadd.f32 0.0, %v635
    %637 = vmatmul.bf16.gmra.mxu0 %v260
    %v638 = vpop.f32.mrf.mxu0
    %v639 = vadd.f32 0.0, %v638
    %v640 = vpop.f32.mrf.mxu0
    %v641 = vadd.f32 0.0, %v640
    %642 = vmatmul.bf16.gmra.mxu0 %v261
    %v643 = vpop.f32.mrf.mxu0
    %v644 = vadd.f32 0.0, %v643
    %v645 = vpop.f32.mrf.mxu0
    %v646 = vadd.f32 0.0, %v645
    %647 = vmatmul.bf16.gmra.mxu0 %v262
    %v648 = vpop.f32.mrf.mxu0
    %v649 = vadd.f32 0.0, %v648
    %v650 = vpop.f32.mrf.mxu0
    %v651 = vadd.f32 0.0, %v650
    %652 = vmatmul.bf16.gmra.mxu0 %v263
    %v653 = vpop.f32.mrf.mxu0
    %v654 = vadd.f32 0.0, %v653
    %v655 = vpop.f32.mrf.mxu0
    %v656 = vadd.f32 0.0, %v655
    %657 = vmatmul.bf16.gmra.mxu0 %v264
    %v658 = vpop.f32.mrf.mxu0
    %v659 = vadd.f32 0.0, %v658
    %v660 = vpop.f32.mrf.mxu0
    %v661 = vadd.f32 0.0, %v660
    %662 = vmatmul.bf16.gmra.mxu0 %v265
    %v663 = vpop.f32.mrf.mxu0
    %v664 = vadd.f32 0.0, %v663
    %v665 = vpop.f32.mrf.mxu0
    %v666 = vadd.f32 0.0, %v665
    %667 = vdwg.mxu0
    %v668 = vadd.f32 %v483, %v589
    %v669 = vadd.f32 %v484, %v591
    %v670 = vadd.f32 %v485, %v594
    %v671 = vadd.f32 %v486, %v596
    %v672 = vadd.f32 %v487, %v599
    %v673 = vadd.f32 %v488, %v601
    %v674 = vadd.f32 %v489, %v604
    %v675 = vadd.f32 %v490, %v606
    %v676 = vadd.f32 %v491, %v609
    %v677 = vadd.f32 %v492, %v611
    %v678 = vadd.f32 %v493, %v614
    %v679 = vadd.f32 %v494, %v616
    %v680 = vadd.f32 %v495, %v619
    %v681 = vadd.f32 %v496, %v621
    %v682 = vadd.f32 %v497, %v624
    %v683 = vadd.f32 %v498, %v626
    %v684 = vadd.f32 %v499, %v629
    %v685 = vadd.f32 %v500, %v631
    %v686 = vadd.f32 %v501, %v634
    %v687 = vadd.f32 %v502, %v636
    %v688 = vadd.f32 %v503, %v639
    %v689 = vadd.f32 %v504, %v641
    %v690 = vadd.f32 %v505, %v644
    %v691 = vadd.f32 %v506, %v646
    %v692 = vadd.f32 %v507, %v649
    %v693 = vadd.f32 %v508, %v651
    %v694 = vadd.f32 %v509, %v654
    %v695 = vadd.f32 %v510, %v656
    %v696 = vadd.f32 %v511, %v659
    %v697 = vadd.f32 %v512, %v661
    %v698 = vadd.f32 %v513, %v664
    %v699 = vadd.f32 %v514, %v666
    %700 = vst [vmem:[#allocation3] sm:$0xff] %v668
    %701 = vst [vmem:[#allocation3 + $0x8] sm:$0xff] %v669
    %702 = vst [vmem:[#allocation3 + $0x10] sm:$0xff] %v670
    %703 = vst [vmem:[#allocation3 + $0x18] sm:$0xff] %v671
    %704 = vst [vmem:[#allocation3 + $0x20] sm:$0xff] %v672
    %705 = vst [vmem:[#allocation3 + $0x28] sm:$0xff] %v673
    %706 = vst [vmem:[#allocation3 + $0x30] sm:$0xff] %v674
    %707 = vst [vmem:[#allocation3 + $0x38] sm:$0xff] %v675
    %708 = vst [vmem:[#allocation3 + $0x40] sm:$0xff] %v676
    %709 = vst [vmem:[#allocation3 + $0x48] sm:$0xff] %v677
    %710 = vst [vmem:[#allocation3 + $0x50] sm:$0xff] %v678
    %711 = vst [vmem:[#allocation3 + $0x58] sm:$0xff] %v679
    %712 = vst [vmem:[#allocation3 + $0x60] sm:$0xff] %v680
    %713 = vst [vmem:[#allocation3 + $0x68] sm:$0xff] %v681
    %714 = vst [vmem:[#allocation3 + $0x70] sm:$0xff] %v682
    %715 = vst [vmem:[#allocation3 + $0x78] sm:$0xff] %v683
    %716 = vst [vmem:[#allocation3 + $0x80] sm:$0xff] %v684
    %717 = vst [vmem:[#allocation3 + $0x88] sm:$0xff] %v685
    %718 = vst [vmem:[#allocation3 + $0x90] sm:$0xff] %v686
    %719 = vst [vmem:[#allocation3 + $0x98] sm:$0xff] %v687
    %720 = vst [vmem:[#allocation3 + $0xa0] sm:$0xff] %v688
    %721 = vst [vmem:[#allocation3 + $0xa8] sm:$0xff] %v689
    %722 = vst [vmem:[#allocation3 + $0xb0] sm:$0xff] %v690
    %723 = vst [vmem:[#allocation3 + $0xb8] sm:$0xff] %v691
    %724 = vst [vmem:[#allocation3 + $0xc0] sm:$0xff] %v692
    %725 = vst [vmem:[#allocation3 + $0xc8] sm:$0xff] %v693
    %726 = vst [vmem:[#allocation3 + $0xd0] sm:$0xff] %v694
    %727 = vst [vmem:[#allocation3 + $0xd8] sm:$0xff] %v695
    %728 = vst [vmem:[#allocation3 + $0xe0] sm:$0xff] %v696
    %729 = vst [vmem:[#allocation3 + $0xe8] sm:$0xff] %v697
    %730 = vst [vmem:[#allocation3 + $0xf0] sm:$0xff] %v698
    %731 = vst [vmem:[#allocation3 + $0xf8] sm:$0xff] %v699
    // Predicated region
    $region30: #{heco_forward.6} parent=1 // pred_check
      %p732 = pneg %p38
    $region31: #{heco_forward.6} parent=1 // pred_check_branch
      %734 = sbr.rel (%p732) target = $region33
    $region32: #{heco_forward.6} parent=1 // pred_region
      %v735 = vld [vmem:[#allocation2] sm:$0xff]
      %v736 = vld [vmem:[#allocation2 + $0x8] sm:$0xff]
      %v737 = vld [vmem:[#allocation2 + $0x10] sm:$0xff]
      %v738 = vld [vmem:[#allocation2 + $0x18] sm:$0xff]
      %v739 = vld [vmem:[#allocation2 + $0x20] sm:$0xff]
      %v740 = vld [vmem:[#allocation2 + $0x28] sm:$0xff]
      %v741 = vld [vmem:[#allocation2 + $0x30] sm:$0xff]
      %v742 = vld [vmem:[#allocation2 + $0x38] sm:$0xff]
      %v743 = vld [vmem:[#allocation2 + $0x40] sm:$0xff]
      %v744 = vld [vmem:[#allocation2 + $0x48] sm:$0xff]
      %v745 = vld [vmem:[#allocation2 + $0x50] sm:$0xff]
      %v746 = vld [vmem:[#allocation2 + $0x58] sm:$0xff]
      %v747 = vld [vmem:[#allocation2 + $0x60] sm:$0xff]
      %v748 = vld [vmem:[#allocation2 + $0x68] sm:$0xff]
      %v749 = vld [vmem:[#allocation2 + $0x70] sm:$0xff]
      %v750 = vld [vmem:[#allocation2 + $0x78] sm:$0xff]
      %v751 = vld [vmem:[#allocation2 + $0x80] sm:$0xff]
      %v752 = vld [vmem:[#allocation2 + $0x88] sm:$0xff]
      %v753 = vld [vmem:[#allocation2 + $0x90] sm:$0xff]
      %v754 = vld [vmem:[#allocation2 + $0x98] sm:$0xff]
      %v755 = vld [vmem:[#allocation2 + $0xa0] sm:$0xff]
      %v756 = vld [vmem:[#allocation2 + $0xa8] sm:$0xff]
      %v757 = vld [vmem:[#allocation2 + $0xb0] sm:$0xff]
      %v758 = vld [vmem:[#allocation2 + $0xb8] sm:$0xff]
      %v759 = vld [vmem:[#allocation2 + $0xc0] sm:$0xff]
      %v760 = vld [vmem:[#allocation2 + $0xc8] sm:$0xff]
      %v761 = vld [vmem:[#allocation2 + $0xd0] sm:$0xff]
      %v762 = vld [vmem:[#allocation2 + $0xd8] sm:$0xff]
      %v763 = vld [vmem:[#allocation2 + $0xe0] sm:$0xff]
      %v764 = vld [vmem:[#allocation2 + $0xe8] sm:$0xff]
      %v765 = vld [vmem:[#allocation2 + $0xf0] sm:$0xff]
      %v766 = vld [vmem:[#allocation2 + $0xf8] sm:$0xff]
      %v767 = vld [vmem:[%s2] sm:$0x1]
      %v769 = vperm.slane %v767, 0
      %v771 = vadd.f32 %v735, %v769
      %v772 = vadd.f32 %v736, %v769
      %v773 = vadd.f32 %v737, %v769
      %v774 = vadd.f32 %v738, %v769
      %v775 = vadd.f32 %v739, %v769
      %v776 = vadd.f32 %v740, %v769
      %v777 = vadd.f32 %v741, %v769
      %v778 = vadd.f32 %v742, %v769
      %v779 = vadd.f32 %v743, %v769
      %v780 = vadd.f32 %v744, %v769
      %v781 = vadd.f32 %v745, %v769
      %v782 = vadd.f32 %v746, %v769
      %v783 = vadd.f32 %v747, %v769
      %v784 = vadd.f32 %v748, %v769
      %v785 = vadd.f32 %v749, %v769
      %v786 = vadd.f32 %v750, %v769
      %v787 = vadd.f32 %v751, %v769
      %v788 = vadd.f32 %v752, %v769
      %v789 = vadd.f32 %v753, %v769
      %v790 = vadd.f32 %v754, %v769
      %v791 = vadd.f32 %v755, %v769
      %v792 = vadd.f32 %v756, %v769
      %v793 = vadd.f32 %v757, %v769
      %v794 = vadd.f32 %v758, %v769
      %v795 = vadd.f32 %v759, %v769
      %v796 = vadd.f32 %v760, %v769
      %v797 = vadd.f32 %v761, %v769
      %v798 = vadd.f32 %v762, %v769
      %v799 = vadd.f32 %v763, %v769
      %v800 = vadd.f32 %v764, %v769
      %v801 = vadd.f32 %v765, %v769
      %v802 = vadd.f32 %v766, %v769
      %v803 = vpack.c.bf16 %v771, %v771
      %v804 = vpack.c.bf16 %v772, %v772
      %v805 = vpack.c.bf16 %v773, %v773
      %v806 = vpack.c.bf16 %v774, %v774
      %v807 = vpack.c.bf16 %v775, %v775
      %v808 = vpack.c.bf16 %v776, %v776
      %v809 = vpack.c.bf16 %v777, %v777
      %v810 = vpack.c.bf16 %v778, %v778
      %v811 = vpack.c.bf16 %v779, %v779
      %v812 = vpack.c.bf16 %v780, %v780
      %v813 = vpack.c.bf16 %v781, %v781
      %v814 = vpack.c.bf16 %v782, %v782
      %v815 = vpack.c.bf16 %v783, %v783
      %v816 = vpack.c.bf16 %v784, %v784
      %v817 = vpack.c.bf16 %v785, %v785
      %v818 = vpack.c.bf16 %v786, %v786
      %v819 = vpack.c.bf16 %v787, %v787
      %v820 = vpack.c.bf16 %v788, %v788
      %v821 = vpack.c.bf16 %v789, %v789
      %v822 = vpack.c.bf16 %v790, %v790
      %v823 = vpack.c.bf16 %v791, %v791
      %v824 = vpack.c.bf16 %v792, %v792
      %v825 = vpack.c.bf16 %v793, %v793
      %v826 = vpack.c.bf16 %v794, %v794
      %v827 = vpack.c.bf16 %v795, %v795
      %v828 = vpack.c.bf16 %v796, %v796
      %v829 = vpack.c.bf16 %v797, %v797
      %v830 = vpack.c.bf16 %v798, %v798
      %v831 = vpack.c.bf16 %v799, %v799
      %v832 = vpack.c.bf16 %v800, %v800
      %v833 = vpack.c.bf16 %v801, %v801
      %v834 = vpack.c.bf16 %v802, %v802
      %835 = vst [vmem:[%s5] sm:$0xf] %v803
      %836 = vst [vmem:[%s5 + $0x4] sm:$0xf] %v804
      %837 = vst [vmem:[%s5 + $0x8] sm:$0xf] %v805
      %838 = vst [vmem:[%s5 + $0xc] sm:$0xf] %v806
      %839 = vst [vmem:[%s5 + $0x10] sm:$0xf] %v807
      %840 = vst [vmem:[%s5 + $0x14] sm:$0xf] %v808
      %841 = vst [vmem:[%s5 + $0x18] sm:$0xf] %v809
      %842 = vst [vmem:[%s5 + $0x1c] sm:$0xf] %v810
      %843 = vst [vmem:[%s5 + $0x20] sm:$0xf] %v811
      %844 = vst [vmem:[%s5 + $0x24] sm:$0xf] %v812
      %845 = vst [vmem:[%s5 + $0x28] sm:$0xf] %v813
      %846 = vst [vmem:[%s5 + $0x2c] sm:$0xf] %v814
      %847 = vst [vmem:[%s5 + $0x30] sm:$0xf] %v815
      %848 = vst [vmem:[%s5 + $0x34] sm:$0xf] %v816
      %849 = vst [vmem:[%s5 + $0x38] sm:$0xf] %v817
      %850 = vst [vmem:[%s5 + $0x3c] sm:$0xf] %v818
      %851 = vst [vmem:[%s5 + $0x40] sm:$0xf] %v819
      %852 = vst [vmem:[%s5 + $0x44] sm:$0xf] %v820
      %853 = vst [vmem:[%s5 + $0x48] sm:$0xf] %v821
      %854 = vst [vmem:[%s5 + $0x4c] sm:$0xf] %v822
      %855 = vst [vmem:[%s5 + $0x50] sm:$0xf] %v823
      %856 = vst [vmem:[%s5 + $0x54] sm:$0xf] %v824
      %857 = vst [vmem:[%s5 + $0x58] sm:$0xf] %v825
      %858 = vst [vmem:[%s5 + $0x5c] sm:$0xf] %v826
      %859 = vst [vmem:[%s5 + $0x60] sm:$0xf] %v827
      %860 = vst [vmem:[%s5 + $0x64] sm:$0xf] %v828
      %861 = vst [vmem:[%s5 + $0x68] sm:$0xf] %v829
      %862 = vst [vmem:[%s5 + $0x6c] sm:$0xf] %v830
      %863 = vst [vmem:[%s5 + $0x70] sm:$0xf] %v831
      %864 = vst [vmem:[%s5 + $0x74] sm:$0xf] %v832
      %865 = vst [vmem:[%s5 + $0x78] sm:$0xf] %v833
      %866 = vst [vmem:[%s5 + $0x7c] sm:$0xf] %v834
      %v867 = vld [vmem:[#allocation3] sm:$0xff]
      %v868 = vld [vmem:[#allocation3 + $0x8] sm:$0xff]
      %v869 = vld [vmem:[#allocation3 + $0x10] sm:$0xff]
      %v870 = vld [vmem:[#allocation3 + $0x18] sm:$0xff]
      %v871 = vld [vmem:[#allocation3 + $0x20] sm:$0xff]
      %v872 = vld [vmem:[#allocation3 + $0x28] sm:$0xff]
      %v873 = vld [vmem:[#allocation3 + $0x30] sm:$0xff]
      %v874 = vld [vmem:[#allocation3 + $0x38] sm:$0xff]
      %v875 = vld [vmem:[#allocation3 + $0x40] sm:$0xff]
      %v876 = vld [vmem:[#allocation3 + $0x48] sm:$0xff]
      %v877 = vld [vmem:[#allocation3 + $0x50] sm:$0xff]
      %v878 = vld [vmem:[#allocation3 + $0x58] sm:$0xff]
      %v879 = vld [vmem:[#allocation3 + $0x60] sm:$0xff]
      %v880 = vld [vmem:[#allocation3 + $0x68] sm:$0xff]
      %v881 = vld [vmem:[#allocation3 + $0x70] sm:$0xff]
      %v882 = vld [vmem:[#allocation3 + $0x78] sm:$0xff]
      %v883 = vld [vmem:[#allocation3 + $0x80] sm:$0xff]
      %v884 = vld [vmem:[#allocation3 + $0x88] sm:$0xff]
      %v885 = vld [vmem:[#allocation3 + $0x90] sm:$0xff]
      %v886 = vld [vmem:[#allocation3 + $0x98] sm:$0xff]
      %v887 = vld [vmem:[#allocation3 + $0xa0] sm:$0xff]
      %v888 = vld [vmem:[#allocation3 + $0xa8] sm:$0xff]
      %v889 = vld [vmem:[#allocation3 + $0xb0] sm:$0xff]
      %v890 = vld [vmem:[#allocation3 + $0xb8] sm:$0xff]
      %v891 = vld [vmem:[#allocation3 + $0xc0] sm:$0xff]
      %v892 = vld [vmem:[#allocation3 + $0xc8] sm:$0xff]
      %v893 = vld [vmem:[#allocation3 + $0xd0] sm:$0xff]
      %v894 = vld [vmem:[#allocation3 + $0xd8] sm:$0xff]
      %v895 = vld [vmem:[#allocation3 + $0xe0] sm:$0xff]
      %v896 = vld [vmem:[#allocation3 + $0xe8] sm:$0xff]
      %v897 = vld [vmem:[#allocation3 + $0xf0] sm:$0xff]
      %v898 = vld [vmem:[#allocation3 + $0xf8] sm:$0xff]
      %v899 = vld [vmem:[%s4] sm:$0x1]
      %v901 = vperm.slane %v899, 0
      %v903 = vadd.f32 %v867, %v901
      %v904 = vadd.f32 %v868, %v901
      %v905 = vadd.f32 %v869, %v901
      %v906 = vadd.f32 %v870, %v901
      %v907 = vadd.f32 %v871, %v901
      %v908 = vadd.f32 %v872, %v901
      %v909 = vadd.f32 %v873, %v901
      %v910 = vadd.f32 %v874, %v901
      %v911 = vadd.f32 %v875, %v901
      %v912 = vadd.f32 %v876, %v901
      %v913 = vadd.f32 %v877, %v901
      %v914 = vadd.f32 %v878, %v901
      %v915 = vadd.f32 %v879, %v901
      %v916 = vadd.f32 %v880, %v901
      %v917 = vadd.f32 %v881, %v901
      %v918 = vadd.f32 %v882, %v901
      %v919 = vadd.f32 %v883, %v901
      %v920 = vadd.f32 %v884, %v901
      %v921 = vadd.f32 %v885, %v901
      %v922 = vadd.f32 %v886, %v901
      %v923 = vadd.f32 %v887, %v901
      %v924 = vadd.f32 %v888, %v901
      %v925 = vadd.f32 %v889, %v901
      %v926 = vadd.f32 %v890, %v901
      %v927 = vadd.f32 %v891, %v901
      %v928 = vadd.f32 %v892, %v901
      %v929 = vadd.f32 %v893, %v901
      %v930 = vadd.f32 %v894, %v901
      %v931 = vadd.f32 %v895, %v901
      %v932 = vadd.f32 %v896, %v901
      %v933 = vadd.f32 %v897, %v901
      %v934 = vadd.f32 %v898, %v901
      %v935 = vpack.c.bf16 %v903, %v903
      %v936 = vpack.c.bf16 %v904, %v904
      %v937 = vpack.c.bf16 %v905, %v905
      %v938 = vpack.c.bf16 %v906, %v906
      %v939 = vpack.c.bf16 %v907, %v907
      %v940 = vpack.c.bf16 %v908, %v908
      %v941 = vpack.c.bf16 %v909, %v909
      %v942 = vpack.c.bf16 %v910, %v910
      %v943 = vpack.c.bf16 %v911, %v911
      %v944 = vpack.c.bf16 %v912, %v912
      %v945 = vpack.c.bf16 %v913, %v913
      %v946 = vpack.c.bf16 %v914, %v914
      %v947 = vpack.c.bf16 %v915, %v915
      %v948 = vpack.c.bf16 %v916, %v916
      %v949 = vpack.c.bf16 %v917, %v917
      %v950 = vpack.c.bf16 %v918, %v918
      %v951 = vpack.c.bf16 %v919, %v919
      %v952 = vpack.c.bf16 %v920, %v920
      %v953 = vpack.c.bf16 %v921, %v921
      %v954 = vpack.c.bf16 %v922, %v922
      %v955 = vpack.c.bf16 %v923, %v923
      %v956 = vpack.c.bf16 %v924, %v924
      %v957 = vpack.c.bf16 %v925, %v925
      %v958 = vpack.c.bf16 %v926, %v926
      %v959 = vpack.c.bf16 %v927, %v927
      %v960 = vpack.c.bf16 %v928, %v928
      %v961 = vpack.c.bf16 %v929, %v929
      %v962 = vpack.c.bf16 %v930, %v930
      %v963 = vpack.c.bf16 %v931, %v931
      %v964 = vpack.c.bf16 %v932, %v932
      %v965 = vpack.c.bf16 %v933, %v933
      %v966 = vpack.c.bf16 %v934, %v934
      %967 = vst [vmem:[%s6] sm:$0xf] %v935
      %968 = vst [vmem:[%s6 + $0x4] sm:$0xf] %v936
      %969 = vst [vmem:[%s6 + $0x8] sm:$0xf] %v937
      %970 = vst [vmem:[%s6 + $0xc] sm:$0xf] %v938
      %971 = vst [vmem:[%s6 + $0x10] sm:$0xf] %v939
      %972 = vst [vmem:[%s6 + $0x14] sm:$0xf] %v940
      %973 = vst [vmem:[%s6 + $0x18] sm:$0xf] %v941
      %974 = vst [vmem:[%s6 + $0x1c] sm:$0xf] %v942
      %975 = vst [vmem:[%s6 + $0x20] sm:$0xf] %v943
      %976 = vst [vmem:[%s6 + $0x24] sm:$0xf] %v944
      %977 = vst [vmem:[%s6 + $0x28] sm:$0xf] %v945
      %978 = vst [vmem:[%s6 + $0x2c] sm:$0xf] %v946
      %979 = vst [vmem:[%s6 + $0x30] sm:$0xf] %v947
      %980 = vst [vmem:[%s6 + $0x34] sm:$0xf] %v948
      %981 = vst [vmem:[%s6 + $0x38] sm:$0xf] %v949
      %982 = vst [vmem:[%s6 + $0x3c] sm:$0xf] %v950
      %983 = vst [vmem:[%s6 + $0x40] sm:$0xf] %v951
      %984 = vst [vmem:[%s6 + $0x44] sm:$0xf] %v952
      %985 = vst [vmem:[%s6 + $0x48] sm:$0xf] %v953
      %986 = vst [vmem:[%s6 + $0x4c] sm:$0xf] %v954
      %987 = vst [vmem:[%s6 + $0x50] sm:$0xf] %v955
      %988 = vst [vmem:[%s6 + $0x54] sm:$0xf] %v956
      %989 = vst [vmem:[%s6 + $0x58] sm:$0xf] %v957
      %990 = vst [vmem:[%s6 + $0x5c] sm:$0xf] %v958
      %991 = vst [vmem:[%s6 + $0x60] sm:$0xf] %v959
      %992 = vst [vmem:[%s6 + $0x64] sm:$0xf] %v960
      %993 = vst [vmem:[%s6 + $0x68] sm:$0xf] %v961
      %994 = vst [vmem:[%s6 + $0x6c] sm:$0xf] %v962
      %995 = vst [vmem:[%s6 + $0x70] sm:$0xf] %v963
      %996 = vst [vmem:[%s6 + $0x74] sm:$0xf] %v964
      %997 = vst [vmem:[%s6 + $0x78] sm:$0xf] %v965
      %998 = vst [vmem:[%s6 + $0x7c] sm:$0xf] %v966
    $region33: #{heco_forward.6} parent=1 // pred_fallthru
      _
    // Predicated region
    $region34: #{heco_forward.6} parent=1 // pred_check
      _
    $region35: #{heco_forward.6} parent=1 // pred_check_branch
      %1000 = sbr.rel (0) target = $region37
    $region36: #{heco_forward.6} parent=1 // pred_region
      _
    $region37: #{heco_forward.6} parent=1 // pred_fallthru
      _
    // Predicated region
    $region38: #{heco_forward.6} parent=1 // pred_check
      _
    $region39: #{heco_forward.6} parent=1 // pred_check_branch
      %1002 = sbr.rel (0) target = $region41
    $region40: #{heco_forward.6} parent=1 // pred_region
      _
    $region41: #{heco_forward.6} parent=1 // pred_fallthru
      _
    // Predicated region
    $region42: #{heco_forward.6} parent=1 // pred_check
      _
    $region43: #{heco_forward.6} parent=1 // pred_check_branch
      %1004 = sbr.rel (0) target = $region45
    $region44: #{heco_forward.6} parent=1 // pred_region
      _
    $region45: #{heco_forward.6} parent=1 // pred_fallthru
      _
    // Predicated region
    $region46: #{heco_forward.6} parent=1 // pred_check
      _
    $region47: #{heco_forward.6} parent=1 // pred_check_branch
      %1006 = sbr.rel (0) target = $region49
    $region48: #{heco_forward.6} parent=1 // pred_region
      _
    $region49: #{heco_forward.6} parent=1 // pred_fallthru
      _
    %1007 = vsyncpa [#allocation5], 1

// kernel: heco_forward.8
$region0: #{heco_forward.8}
  #allocation0 [shape = 'u32[]', space=smem, size = 0x4, offset = 0x4, fixed_abs, tag = 'smem constant byte address 0x4 - core index']
  #allocation1 [shape = 'u32[72,128]{1,0:T(1,128)}', space=vmem, size = 0x9000, scoped, tag = 'internal scratch']
  #allocation2 [shape = 'f32[256,128]{1,0:T(8,128)}', space=vmem, size = 0x20000, scoped, tag = 'scratch operand']
  %s0 = inlined_call_operand.hbm [shape: bf16[2,256,256], index: 0, kind: input, shape index: {}]
  %s1 = inlined_call_operand.vmem [shape: bf16[256,128], index: 1, kind: input, shape index: {}]
  %s2 = inlined_call_operand.vmem [shape: bf16[2,128,128], index: 2, kind: input, shape index: {}]
  %s3 = inlined_call_operand.vmem [shape: f32[2,1,128], index: 3, kind: input, shape index: {}]
  %s4 = inlined_call_operand.vmem [shape: bf16[2,256,128], index: 4, kind: output, shape index: {}]
  %s5 = sld [smem:[#allocation0]]
  $region61: #{heco_forward.8} parent=0
    _
  %s7 = ssub.s32 1, %s5
  %s8 = scalar_select 0, %s7, %s5
  $region1: #{heco_forward.8} parent=0
    #allocation3 [shape = 'u8[262144]{0}', space=vmem, size = 0x40000, scoped, tag = 'input window, operand 0']
    #allocation4 [shape = 's32[2]{0}', space=sflag, size = 0x8, scoped, tag = 'scoped memory for heco_forward.8']
    %9 = vsyncpa [#allocation4], 0
    %s10 = scalar_lea.sflag [#allocation4], 1
    %11 = vsyncpa %s10, 0
    loop: start=0, step=1, limit=4
    $region2: #{heco_forward.8} parent=1 // loop_pre_header
      _
    $region3: #{heco_forward.8} parent=1 // loop_header
      %s13 = sphi 0, %s17
      %p14 = scmp.ge.s32.totalorder %s13, 4
      %s20 = sphi 0, %s39
      %s21 = sphi 0, %s35
      %s22 = sphi 0, %s31
      %s23 = sphi 0, %s20
      %s24 = sphi 0, %s21
      %s25 = sphi 0, %s22
      %s26 = sphi 0, %s23
      %s27 = sphi 0, %s24
      %s28 = sphi 0, %s25
      %s46 = sphi 0, %s48
      %s49 = sphi 0, %s46
      %s50 = sphi 0, %s49
      %s66 = sphi 0, %s50
      %s72 = sphi 0, %s74
      %s75 = sphi 0, %s72
      %s76 = sphi 0, %s75
      %s92 = sphi 0, %s76
      %s98 = sphi 0, %s100
      %s101 = sphi 0, %s98
      %s102 = sphi 0, %s101
      %s118 = sphi 0, %s102
      %s124 = sphi 0, %s126
      %s127 = sphi 0, %s124
      %s128 = sphi 0, %s127
      %s144 = sphi 0, %s128
      %s152 = sphi 0, %s154
      %s155 = sphi 0, %s152
      %s156 = sphi 0, %s155
      %s172 = sphi 0, %s156
    $region4: #{heco_forward.8} parent=1 // loop_header_branch
      %16 = sbr.rel (%p14) target = $region8
    $region5: #{heco_forward.8} parent=1 // loop_body
      %s18 = ssub.s32 %s13, 1
      %s19 = ssub.s32 %s13, 2
      %s29 = sadd.s32 1, %s22
      %p30 = scmp.ge.s32.totalorder %s29, 1
      %s31 = scalar_select %p30, 0, %s29
      %s32 = sadd.s32 1, %s21
      %s33 = scalar_select %p30, %s32, %s21
      %p34 = scmp.ge.s32.totalorder %s33, 1
      %s35 = scalar_select %p34, 0, %s33
      %s36 = sadd.s32 1, %s20
      %s37 = scalar_select %p34, %s36, %s20
      %p38 = scmp.ge.s32.totalorder %s37, 2
      %s39 = scalar_select %p38, 0, %s37
      %s40 = ssub.s32 %s20, %s39
      %s41 = ssub.s32 %s21, %s35
      %s42 = sor.u32 %s40, %s41
      %s43 = ssub.s32 %s22, %s31
      %s44 = sor.u32 %s42, %s43
      %p45 = scmp.eq.s32.totalorder %s44, 0
      %s47 = sadd.s32 %s46, 1
      %s48 = scalar_select %p45, %s46, %s47
      %p51 = pneg %p45
      %p52 = scmp.eq.s32.totalorder %s13, 1
      %p53 = por %p51, %p52
      %p54 = scmp.ne.s32.totalorder %s46, %s49
      %p55 = scmp.eq.s32.totalorder %s13, 0
      %p56 = por %p54, %p55
      %p57 = scmp.ne.s32.totalorder %s46, %s49
      %p58 = scmp.eq.s32.totalorder %s18, 1
      %p59 = por %p57, %p58
      %p60 = scmp.ne.s32.totalorder %s49, %s50
      %p61 = scmp.eq.s32.totalorder %s18, 0
      %p62 = por %p60, %p61
      %p63 = scmp.ne.s32.totalorder %s49, %s50
      %p64 = scmp.eq.s32.totalorder %s19, 1
      %p65 = por %p63, %p64
      %p67 = scmp.ne.s32.totalorder %s50, %s66
      %p68 = scmp.eq.s32.totalorder %s19, 0
      %p69 = por %p67, %p68
      %s70 = ssub.s32 %s22, %s31
      %p71 = scmp.eq.s32.totalorder %s70, 0
      %s73 = sadd.s32 %s72, 1
      %s74 = scalar_select %p71, %s72, %s73
      %p77 = pneg %p71
      %p78 = scmp.eq.s32.totalorder %s13, 1
      %p79 = por %p77, %p78
      %p80 = scmp.ne.s32.totalorder %s72, %s75
      %p81 = scmp.eq.s32.totalorder %s13, 0
      %p82 = por %p80, %p81
      %p83 = scmp.ne.s32.totalorder %s72, %s75
      %p84 = scmp.eq.s32.totalorder %s18, 1
      %p85 = por %p83, %p84
      %p86 = scmp.ne.s32.totalorder %s75, %s76
      %p87 = scmp.eq.s32.totalorder %s18, 0
      %p88 = por %p86, %p87
      %p89 = scmp.ne.s32.totalorder %s75, %s76
      %p90 = scmp.eq.s32.totalorder %s19, 1
      %p91 = por %p89, %p90
      %p93 = scmp.ne.s32.totalorder %s76, %s92
      %p94 = scmp.eq.s32.totalorder %s19, 0
      %p95 = por %p93, %p94
      %s96 = ssub.s32 %s20, %s39
      %p97 = scmp.eq.s32.totalorder %s96, 0
      %s99 = sadd.s32 %s98, 1
      %s100 = scalar_select %p97, %s98, %s99
      %p103 = pneg %p97
      %p104 = scmp.eq.s32.totalorder %s13, 1
      %p105 = por %p103, %p104
      %p106 = scmp.ne.s32.totalorder %s98, %s101
      %p107 = scmp.eq.s32.totalorder %s13, 0
      %p108 = por %p106, %p107
      %p109 = scmp.ne.s32.totalorder %s98, %s101
      %p110 = scmp.eq.s32.totalorder %s18, 1
      %p111 = por %p109, %p110
      %p112 = scmp.ne.s32.totalorder %s101, %s102
      %p113 = scmp.eq.s32.totalorder %s18, 0
      %p114 = por %p112, %p113
      %p115 = scmp.ne.s32.totalorder %s101, %s102
      %p116 = scmp.eq.s32.totalorder %s19, 1
      %p117 = por %p115, %p116
      %p119 = scmp.ne.s32.totalorder %s102, %s118
      %p120 = scmp.eq.s32.totalorder %s19, 0
      %p121 = por %p119, %p120
      %s122 = ssub.s32 %s20, %s39
      %p123 = scmp.eq.s32.totalorder %s122, 0
      %s125 = sadd.s32 %s124, 1
      %s126 = scalar_select %p123, %s124, %s125
      %p129 = pneg %p123
      %p130 = scmp.eq.s32.totalorder %s13, 1
      %p131 = por %p129, %p130
      %p132 = scmp.ne.s32.totalorder %s124, %s127
      %p133 = scmp.eq.s32.totalorder %s13, 0
      %p134 = por %p132, %p133
      %p135 = scmp.ne.s32.totalorder %s124, %s127
      %p136 = scmp.eq.s32.totalorder %s18, 1
      %p137 = por %p135, %p136
      %p138 = scmp.ne.s32.totalorder %s127, %s128
      %p139 = scmp.eq.s32.totalorder %s18, 0
      %p140 = por %p138, %p139
      %p141 = scmp.ne.s32.totalorder %s127, %s128
      %p142 = scmp.eq.s32.totalorder %s19, 1
      %p143 = por %p141, %p142
      %p145 = scmp.ne.s32.totalorder %s128, %s144
      %p146 = scmp.eq.s32.totalorder %s19, 0
      %p147 = por %p145, %p146
      %s148 = ssub.s32 %s20, %s39
      %s149 = ssub.s32 %s21, %s35
      %s150 = sor.u32 %s148, %s149
      %p151 = scmp.eq.s32.totalorder %s150, 0
      %s153 = sadd.s32 %s152, 1
      %s154 = scalar_select %p151, %s152, %s153
      %p157 = pneg %p151
      %p158 = scmp.eq.s32.totalorder %s13, 1
      %p159 = por %p157, %p158
      %p160 = scmp.ne.s32.totalorder %s152, %s155
      %p161 = scmp.eq.s32.totalorder %s13, 0
      %p162 = por %p160, %p161
      %p163 = scmp.ne.s32.totalorder %s152, %s155
      %p164 = scmp.eq.s32.totalorder %s18, 1
      %p165 = por %p163, %p164
      %p166 = scmp.ne.s32.totalorder %s155, %s156
      %p167 = scmp.eq.s32.totalorder %s18, 0
      %p168 = por %p166, %p167
      %p169 = scmp.ne.s32.totalorder %s155, %s156
      %p170 = scmp.eq.s32.totalorder %s19, 1
      %p171 = por %p169, %p170
      %p173 = scmp.ne.s32.totalorder %s156, %s172
      %p174 = scmp.eq.s32.totalorder %s19, 0
      %p175 = por %p173, %p174
      %p176 = scmp.le.s32.totalorder 1, %s13
      %p177 = scmp.lt.s32.totalorder %s13, 3
      %p178 = pnand %p176, %p177
      %p179 = pneg %p178
      // Predicated region
      $region9: #{heco_forward.8} parent=5 // pred_check
        _
      $region10: #{heco_forward.8} parent=5 // pred_check_branch
        %181 = sbr.rel (%p178) target = $region12
      $region11: #{heco_forward.8} parent=5 // pred_region
        %s182 = ssub.s32 %s13, 1
        // Predicated region
        $region13: #{heco_forward.8} parent=11 // pred_check
          %p183 = pneg %p88
        $region14: #{heco_forward.8} parent=11 // pred_check_branch
          %185 = sbr.rel (%p183) target = $region16
        $region15: #{heco_forward.8} parent=11 // pred_region
          %s186 = smul.u32 32, %s25
          %p187 = scmp.lt.s32.totalorder %s186, 31
          %s188 = scalar_select %p187, %s186, 31
          %s189 = smul.addr %s188, 4
          %s190 = scalar_lea.vmem %s1, %s189
          %s191 = smul.u32 32, %s25
        $region16: #{heco_forward.8} parent=11 // pred_fallthru
          _
      $region12: #{heco_forward.8} parent=5 // pred_fallthru
        _
      %p192 = scmp.lt.s32.totalorder %s13, 2
      // Predicated region
      $region17: #{heco_forward.8} parent=5 // pred_check
        %p193 = pneg %p192
      $region18: #{heco_forward.8} parent=5 // pred_check_branch
        %195 = sbr.rel (%p193) target = $region20
      $region19: #{heco_forward.8} parent=5 // pred_region
        // Predicated region
        $region21: #{heco_forward.8} parent=19 // pred_check
          %p196 = pneg %p56
        $region22: #{heco_forward.8} parent=19 // pred_check_branch
          %198 = sbr.rel (%p196) target = $region24
        $region23: #{heco_forward.8} parent=19 // pred_region
          %s199 = sand.u32 %s46, 1
          %s200 = scalar_lea.sflag [#allocation4], %s199
          %s201 = sand.u32 %s46, 1
          %s202 = smul.addr %s201, 256
          %s203 = scalar_lea.vmem [#allocation3], %s202
          %s204 = smul.u32 32, %s21
          %s205 = smul.u32 2, %s22
          %207 = vsyncadd %s200, 0
          %s208 = smul.addr %s204, 2
          %s209 = sadd.s32 %s205, %s208
          %s210 = smul.addr %s20, 64
          %s211 = sadd.s32 %s209, %s210
          %s212 = smul.addr %s211, 4
          %s213 = scalar_lea.hbm %s0, %s212
          %s214 = sshll.u32 %s213, 4
          %s215 = int_to_ptr.hbm [resolvable:$true] %s214
          %s216 = sshll.u32 %s203, 4
          %s217 = int_to_ptr.vmem [resolvable:$true] %s216
          %222 = dma.hbm_to_vmem [thread:$0]  %s215, 4096, %s217, %s200, 128, 128, 8
        $region24: #{heco_forward.8} parent=19 // pred_fallthru
          _
        // Predicated region
        $region25: #{heco_forward.8} parent=19 // pred_check
          %p223 = pneg %p108
        $region26: #{heco_forward.8} parent=19 // pred_check_branch
          %225 = sbr.rel (%p223) target = $region28
        $region27: #{heco_forward.8} parent=19 // pred_region
          %p226 = scmp.lt.s32.totalorder %s20, 1
          %s227 = scalar_select %p226, %s20, 1
          %s228 = smul.addr %s227, 16
          %s229 = smul.addr %s228, 4
          %s230 = scalar_lea.vmem %s2, %s229
        $region28: #{heco_forward.8} parent=19 // pred_fallthru
          _
        // Predicated region
        $region29: #{heco_forward.8} parent=19 // pred_check
          %p231 = pneg %p134
        $region30: #{heco_forward.8} parent=19 // pred_check_branch
          %233 = sbr.rel (%p231) target = $region32
        $region31: #{heco_forward.8} parent=19 // pred_region
          %p234 = scmp.lt.s32.totalorder %s20, 1
          %s235 = scalar_select %p234, %s20, 1
          %s236 = scalar_lea.vmem %s3, %s235
        $region32: #{heco_forward.8} parent=19 // pred_fallthru
          _
      $region20: #{heco_forward.8} parent=5 // pred_fallthru
        _
      %p237 = scmp.le.s32.totalorder 1, %s13
      %p238 = scmp.lt.s32.totalorder %s13, 3
      %p239 = pnand %p237, %p238
      %p240 = pneg %p239
      // Predicated region
      $region33: #{heco_forward.8} parent=5 // pred_check
        _
      $region34: #{heco_forward.8} parent=5 // pred_check_branch
        %242 = sbr.rel (%p239) target = $region36
      $region35: #{heco_forward.8} parent=5 // pred_region
        %s243 = ssub.s32 %s13, 1
        %s244 = sand.u32 %s49, 1
        %s245 = scalar_lea.sflag [#allocation4], %s244
        %s246 = sand.u32 %s49, 1
        %s247 = smul.addr %s246, 256
        %s248 = scalar_lea.vmem [#allocation3], %s247
        // Predicated region
        $region37: #{heco_forward.8} parent=35 // pred_check
          %p249 = pneg %p62
        $region38: #{heco_forward.8} parent=35 // pred_check_branch
          %251 = sbr.rel (%p249) target = $region40
        $region39: #{heco_forward.8} parent=35 // pred_region
          %253 = dma.done %s245, 4096
        $region40: #{heco_forward.8} parent=35 // pred_fallthru
          _
        %s254 = sand.u32 %s49, 1
        %s255 = scalar_lea.sflag [#allocation4], %s254
        %s256 = sand.u32 %s49, 1
        %s257 = smul.addr %s256, 256
        %s258 = scalar_lea.vmem [#allocation3], %s257
        %p259 = pneg %p62
        %p260 = pneg %p59
        %s261 = smul.u32 32, %s25
        %p262 = scmp.lt.s32.totalorder %s261, 31
        %s263 = scalar_select %p262, %s261, 31
        %s264 = smul.addr %s263, 4
        %s265 = scalar_lea.vmem %s1, %s264
        %p266 = pneg %p88
        %p267 = pneg %p85
        %p268 = scmp.lt.s32.totalorder %s23, 1
        %s269 = scalar_select %p268, %s23, 1
        %s270 = smul.addr %s269, 16
        %s271 = smul.addr %s270, 4
        %s272 = scalar_lea.vmem %s2, %s271
        %p273 = pneg %p114
        %p274 = pneg %p111
        %p275 = scmp.lt.s32.totalorder %s23, 1
        %s276 = scalar_select %p275, %s23, 1
        %s277 = scalar_lea.vmem %s3, %s276
        %p278 = pneg %p140
        %p279 = pneg %p137
        %p280 = pneg %p168
        %p281 = pneg %p165
        %s282 = smul.u32 32, %s24
        %p283 = scmp.lt.s32.totalorder %s23, 1
        %s284 = scalar_select %p283, %s23, 1
        %p285 = scmp.lt.s32.totalorder %s282, 31
        %s286 = scalar_select %p285, %s282, 31
        %s287 = smul.addr %s284, 32
        %s288 = sadd.s32 %s286, %s287
        %s289 = smul.addr %s288, 4
        %s290 = scalar_lea.vmem %s4, %s289
        %s291 = smul.u32 32, %s24
        %s292 = smul.u32 2, %s25
        %s293 = smul.u32 32, %s25
        %p294 = scmp.lt.s32.totalorder %s293, 31
        %s295 = scalar_select %p294, %s293, 31
        %s296 = smul.addr %s295, 4
        %s297 = scalar_lea.vmem %s1, %s296
        %s298 = smul.u32 32, %s25
        %p299 = scmp.lt.s32.totalorder %s23, 1
        %s300 = scalar_select %p299, %s23, 1
        %s301 = smul.addr %s300, 16
        %s302 = smul.addr %s301, 4
        %s303 = scalar_lea.vmem %s2, %s302
        %p304 = scmp.lt.s32.totalorder %s23, 1
        %s305 = scalar_select %p304, %s23, 1
        %s306 = scalar_lea.vmem %s3, %s305
        %s307 = smul.u32 32, %s24
        %p308 = scmp.lt.s32.totalorder %s23, 1
        %s309 = scalar_select %p308, %s23, 1
        %p310 = scmp.lt.s32.totalorder %s307, 31
        %s311 = scalar_select %p310, %s307, 31
        %s312 = smul.addr %s309, 32
        %s313 = sadd.s32 %s311, %s312
        %s314 = smul.addr %s313, 4
        %s315 = scalar_lea.vmem %s4, %s314
        %s316 = smul.u32 32, %s24
        %p317 = scmp.eq.s32.totalorder %s25, 0
        // Predicated region
        $region41: #{heco_forward.8} parent=35 // pred_check
          %p318 = pneg %p317
        $region42: #{heco_forward.8} parent=35 // pred_check_branch
          %320 = sbr.rel (%p318) target = $region44
        $region43: #{heco_forward.8} parent=35 // pred_region
          %321 = vst [vmem:[#allocation2] sm:$0xff] 0.0
          %322 = vst [vmem:[#allocation2 + $0x8] sm:$0xff] 0.0
          %323 = vst [vmem:[#allocation2 + $0x10] sm:$0xff] 0.0
          %324 = vst [vmem:[#allocation2 + $0x18] sm:$0xff] 0.0
          %325 = vst [vmem:[#allocation2 + $0x20] sm:$0xff] 0.0
          %326 = vst [vmem:[#allocation2 + $0x28] sm:$0xff] 0.0
          %327 = vst [vmem:[#allocation2 + $0x30] sm:$0xff] 0.0
          %328 = vst [vmem:[#allocation2 + $0x38] sm:$0xff] 0.0
          %329 = vst [vmem:[#allocation2 + $0x40] sm:$0xff] 0.0
          %330 = vst [vmem:[#allocation2 + $0x48] sm:$0xff] 0.0
          %331 = vst [vmem:[#allocation2 + $0x50] sm:$0xff] 0.0
          %332 = vst [vmem:[#allocation2 + $0x58] sm:$0xff] 0.0
          %333 = vst [vmem:[#allocation2 + $0x60] sm:$0xff] 0.0
          %334 = vst [vmem:[#allocation2 + $0x68] sm:$0xff] 0.0
          %335 = vst [vmem:[#allocation2 + $0x70] sm:$0xff] 0.0
          %336 = vst [vmem:[#allocation2 + $0x78] sm:$0xff] 0.0
          %337 = vst [vmem:[#allocation2 + $0x80] sm:$0xff] 0.0
          %338 = vst [vmem:[#allocation2 + $0x88] sm:$0xff] 0.0
          %339 = vst [vmem:[#allocation2 + $0x90] sm:$0xff] 0.0
          %340 = vst [vmem:[#allocation2 + $0x98] sm:$0xff] 0.0
          %341 = vst [vmem:[#allocation2 + $0xa0] sm:$0xff] 0.0
          %342 = vst [vmem:[#allocation2 + $0xa8] sm:$0xff] 0.0
          %343 = vst [vmem:[#allocation2 + $0xb0] sm:$0xff] 0.0
          %344 = vst [vmem:[#allocation2 + $0xb8] sm:$0xff] 0.0
          %345 = vst [vmem:[#allocation2 + $0xc0] sm:$0xff] 0.0
          %346 = vst [vmem:[#allocation2 + $0xc8] sm:$0xff] 0.0
          %347 = vst [vmem:[#allocation2 + $0xd0] sm:$0xff] 0.0
          %348 = vst [vmem:[#allocation2 + $0xd8] sm:$0xff] 0.0
          %349 = vst [vmem:[#allocation2 + $0xe0] sm:$0xff] 0.0
          %350 = vst [vmem:[#allocation2 + $0xe8] sm:$0xff] 0.0
          %351 = vst [vmem:[#allocation2 + $0xf0] sm:$0xff] 0.0
          %352 = vst [vmem:[#allocation2 + $0xf8] sm:$0xff] 0.0
        $region44: #{heco_forward.8} parent=35 // pred_fallthru
          _
        %v353 = vld [vmem:[%s248] sm:$0xff]
        %v354 = vld [vmem:[%s248 + $0x8] sm:$0xff]
        %v355 = vld [vmem:[%s248 + $0x10] sm:$0xff]
        %v356 = vld [vmem:[%s248 + $0x18] sm:$0xff]
        %v357 = vld [vmem:[%s248 + $0x20] sm:$0xff]
        %v358 = vld [vmem:[%s248 + $0x28] sm:$0xff]
        %v359 = vld [vmem:[%s248 + $0x30] sm:$0xff]
        %v360 = vld [vmem:[%s248 + $0x38] sm:$0xff]
        %v361 = vld [vmem:[%s248 + $0x40] sm:$0xff]
        %v362 = vld [vmem:[%s248 + $0x48] sm:$0xff]
        %v363 = vld [vmem:[%s248 + $0x50] sm:$0xff]
        %v364 = vld [vmem:[%s248 + $0x58] sm:$0xff]
        %v365 = vld [vmem:[%s248 + $0x60] sm:$0xff]
        %v366 = vld [vmem:[%s248 + $0x68] sm:$0xff]
        %v367 = vld [vmem:[%s248 + $0x70] sm:$0xff]
        %v368 = vld [vmem:[%s248 + $0x78] sm:$0xff]
        %v369 = vld [vmem:[%s248 + $0x80] sm:$0xff]
        %v370 = vld [vmem:[%s248 + $0x88] sm:$0xff]
        %v371 = vld [vmem:[%s248 + $0x90] sm:$0xff]
        %v372 = vld [vmem:[%s248 + $0x98] sm:$0xff]
        %v373 = vld [vmem:[%s248 + $0xa0] sm:$0xff]
        %v374 = vld [vmem:[%s248 + $0xa8] sm:$0xff]
        %v375 = vld [vmem:[%s248 + $0xb0] sm:$0xff]
        %v376 = vld [vmem:[%s248 + $0xb8] sm:$0xff]
        %v377 = vld [vmem:[%s248 + $0xc0] sm:$0xff]
        %v378 = vld [vmem:[%s248 + $0xc8] sm:$0xff]
        %v379 = vld [vmem:[%s248 + $0xd0] sm:$0xff]
        %v380 = vld [vmem:[%s248 + $0xd8] sm:$0xff]
        %v381 = vld [vmem:[%s248 + $0xe0] sm:$0xff]
        %v382 = vld [vmem:[%s248 + $0xe8] sm:$0xff]
        %v383 = vld [vmem:[%s248 + $0xf0] sm:$0xff]
        %v384 = vld [vmem:[%s248 + $0xf8] sm:$0xff]
        %v385 = vld [vmem:[#allocation2] sm:$0xff]
        %v386 = vld [vmem:[#allocation2 + $0x8] sm:$0xff]
        %v387 = vld [vmem:[#allocation2 + $0x10] sm:$0xff]
        %v388 = vld [vmem:[#allocation2 + $0x18] sm:$0xff]
        %v389 = vld [vmem:[#allocation2 + $0x20] sm:$0xff]
        %v390 = vld [vmem:[#allocation2 + $0x28] sm:$0xff]
        %v391 = vld [vmem:[#allocation2 + $0x30] sm:$0xff]
        %v392 = vld [vmem:[#allocation2 + $0x38] sm:$0xff]
        %v393 = vld [vmem:[#allocation2 + $0x40] sm:$0xff]
        %v394 = vld [vmem:[#allocation2 + $0x48] sm:$0xff]
        %v395 = vld [vmem:[#allocation2 + $0x50] sm:$0xff]
        %v396 = vld [vmem:[#allocation2 + $0x58] sm:$0xff]
        %v397 = vld [vmem:[#allocation2 + $0x60] sm:$0xff]
        %v398 = vld [vmem:[#allocation2 + $0x68] sm:$0xff]
        %v399 = vld [vmem:[#allocation2 + $0x70] sm:$0xff]
        %v400 = vld [vmem:[#allocation2 + $0x78] sm:$0xff]
        %v401 = vld [vmem:[#allocation2 + $0x80] sm:$0xff]
        %v402 = vld [vmem:[#allocation2 + $0x88] sm:$0xff]
        %v403 = vld [vmem:[#allocation2 + $0x90] sm:$0xff]
        %v404 = vld [vmem:[#allocation2 + $0x98] sm:$0xff]
        %v405 = vld [vmem:[#allocation2 + $0xa0] sm:$0xff]
        %v406 = vld [vmem:[#allocation2 + $0xa8] sm:$0xff]
        %v407 = vld [vmem:[#allocation2 + $0xb0] sm:$0xff]
        %v408 = vld [vmem:[#allocation2 + $0xb8] sm:$0xff]
        %v409 = vld [vmem:[#allocation2 + $0xc0] sm:$0xff]
        %v410 = vld [vmem:[#allocation2 + $0xc8] sm:$0xff]
        %v411 = vld [vmem:[#allocation2 + $0xd0] sm:$0xff]
        %v412 = vld [vmem:[#allocation2 + $0xd8] sm:$0xff]
        %v413 = vld [vmem:[#allocation2 + $0xe0] sm:$0xff]
        %v414 = vld [vmem:[#allocation2 + $0xe8] sm:$0xff]
        %v415 = vld [vmem:[#allocation2 + $0xf0] sm:$0xff]
        %v416 = vld [vmem:[#allocation2 + $0xf8] sm:$0xff]
        %v417 = vld [vmem:[%s297] sm:$0xf]
        %v418 = vld [vmem:[%s297 + $0x4] sm:$0xf]
        %v419 = vld [vmem:[%s297 + $0x8] sm:$0xf]
        %v420 = vld [vmem:[%s297 + $0xc] sm:$0xf]
        %v421 = vld [vmem:[%s297 + $0x10] sm:$0xf]
        %v422 = vld [vmem:[%s297 + $0x14] sm:$0xf]
        %v423 = vld [vmem:[%s297 + $0x18] sm:$0xf]
        %v424 = vld [vmem:[%s297 + $0x1c] sm:$0xf]
        %v425 = vld [vmem:[%s297 + $0x20] sm:$0xf]
        %v426 = vld [vmem:[%s297 + $0x24] sm:$0xf]
        %v427 = vld [vmem:[%s297 + $0x28] sm:$0xf]
        %v428 = vld [vmem:[%s297 + $0x2c] sm:$0xf]
        %v429 = vld [vmem:[%s297 + $0x30] sm:$0xf]
        %v430 = vld [vmem:[%s297 + $0x34] sm:$0xf]
        %v431 = vld [vmem:[%s297 + $0x38] sm:$0xf]
        %v432 = vld [vmem:[%s297 + $0x3c] sm:$0xf]
        %v433 = vld [vmem:[%s297 + $0x40] sm:$0xf]
        %v434 = vld [vmem:[%s297 + $0x44] sm:$0xf]
        %v435 = vld [vmem:[%s297 + $0x48] sm:$0xf]
        %v436 = vld [vmem:[%s297 + $0x4c] sm:$0xf]
        %v437 = vld [vmem:[%s297 + $0x50] sm:$0xf]
        %v438 = vld [vmem:[%s297 + $0x54] sm:$0xf]
        %v439 = vld [vmem:[%s297 + $0x58] sm:$0xf]
        %v440 = vld [vmem:[%s297 + $0x5c] sm:$0xf]
        %v441 = vld [vmem:[%s297 + $0x60] sm:$0xf]
        %v442 = vld [vmem:[%s297 + $0x64] sm:$0xf]
        %v443 = vld [vmem:[%s297 + $0x68] sm:$0xf]
        %v444 = vld [vmem:[%s297 + $0x6c] sm:$0xf]
        %v445 = vld [vmem:[%s297 + $0x70] sm:$0xf]
        %v446 = vld [vmem:[%s297 + $0x74] sm:$0xf]
        %v447 = vld [vmem:[%s297 + $0x78] sm:$0xf]
        %v448 = vld [vmem:[%s297 + $0x7c] sm:$0xf]
        %v481 = vunpack.c.l.b16 %v353
        %v482 = vunpack.c.h.b16 %v353
        %v483 = vunpack.c.l.b16 %v354
        %v484 = vunpack.c.h.b16 %v354
        %v485 = vunpack.c.l.b16 %v355
        %v486 = vunpack.c.h.b16 %v355
        %v487 = vunpack.c.l.b16 %v356
        %v488 = vunpack.c.h.b16 %v356
        %v489 = vunpack.c.l.b16 %v357
        %v490 = vunpack.c.h.b16 %v357
        %v491 = vunpack.c.l.b16 %v358
        %v492 = vunpack.c.h.b16 %v358
        %v493 = vunpack.c.l.b16 %v359
        %v494 = vunpack.c.h.b16 %v359
        %v495 = vunpack.c.l.b16 %v360
        %v496 = vunpack.c.h.b16 %v360
        %v497 = vunpack.c.l.b16 %v361
        %v498 = vunpack.c.h.b16 %v361
        %v499 = vunpack.c.l.b16 %v362
        %v500 = vunpack.c.h.b16 %v362
        %v501 = vunpack.c.l.b16 %v363
        %v502 = vunpack.c.h.b16 %v363
        %v503 = vunpack.c.l.b16 %v364
        %v504 = vunpack.c.h.b16 %v364
        %v505 = vunpack.c.l.b16 %v365
        %v506 = vunpack.c.h.b16 %v365
        %v507 = vunpack.c.l.b16 %v366
        %v508 = vunpack.c.h.b16 %v366
        %v509 = vunpack.c.l.b16 %v367
        %v510 = vunpack.c.h.b16 %v367
        %v511 = vunpack.c.l.b16 %v368
        %v512 = vunpack.c.h.b16 %v368
        %v513 = vunpack.c.l.b16 %v369
        %v514 = vunpack.c.h.b16 %v369
        %v515 = vunpack.c.l.b16 %v370
        %v516 = vunpack.c.h.b16 %v370
        %v517 = vunpack.c.l.b16 %v371
        %v518 = vunpack.c.h.b16 %v371
        %v519 = vunpack.c.l.b16 %v372
        %v520 = vunpack.c.h.b16 %v372
        %v521 = vunpack.c.l.b16 %v373
        %v522 = vunpack.c.h.b16 %v373
        %v523 = vunpack.c.l.b16 %v374
        %v524 = vunpack.c.h.b16 %v374
        %v525 = vunpack.c.l.b16 %v375
        %v526 = vunpack.c.h.b16 %v375
        %v527 = vunpack.c.l.b16 %v376
        %v528 = vunpack.c.h.b16 %v376
        %v529 = vunpack.c.l.b16 %v377
        %v530 = vunpack.c.h.b16 %v377
        %v531 = vunpack.c.l.b16 %v378
        %v532 = vunpack.c.h.b16 %v378
        %v533 = vunpack.c.l.b16 %v379
        %v534 = vunpack.c.h.b16 %v379
        %v535 = vunpack.c.l.b16 %v380
        %v536 = vunpack.c.h.b16 %v380
        %v537 = vunpack.c.l.b16 %v381
        %v538 = vunpack.c.h.b16 %v381
        %v539 = vunpack.c.l.b16 %v382
        %v540 = vunpack.c.h.b16 %v382
        %v541 = vunpack.c.l.b16 %v383
        %v542 = vunpack.c.h.b16 %v383
        %v543 = vunpack.c.l.b16 %v384
        %v544 = vunpack.c.h.b16 %v384
        %v545 = vpack.c.b16 %v483, %v481
        %v546 = vpack.c.b16 %v484, %v482
        %v547 = vpack.c.b16 %v487, %v485
        %v548 = vpack.c.b16 %v488, %v486
        %v549 = vpack.c.b16 %v491, %v489
        %v550 = vpack.c.b16 %v492, %v490
        %v551 = vpack.c.b16 %v495, %v493
        %v552 = vpack.c.b16 %v496, %v494
        %v553 = vpack.c.b16 %v499, %v497
        %v554 = vpack.c.b16 %v500, %v498
        %v555 = vpack.c.b16 %v503, %v501
        %v556 = vpack.c.b16 %v504, %v502
        %v557 = vpack.c.b16 %v507, %v505
        %v558 = vpack.c.b16 %v508, %v506
        %v559 = vpack.c.b16 %v511, %v509
        %v560 = vpack.c.b16 %v512, %v510
        %v561 = vpack.c.b16 %v515, %v513
        %v562 = vpack.c.b16 %v516, %v514
        %v563 = vpack.c.b16 %v519, %v517
        %v564 = vpack.c.b16 %v520, %v518
        %v565 = vpack.c.b16 %v523, %v521
        %v566 = vpack.c.b16 %v524, %v522
        %v567 = vpack.c.b16 %v527, %v525
        %v568 = vpack.c.b16 %v528, %v526
        %v569 = vpack.c.b16 %v531, %v529
        %v570 = vpack.c.b16 %v532, %v530
        %v571 = vpack.c.b16 %v535, %v533
        %v572 = vpack.c.b16 %v536, %v534
        %v573 = vpack.c.b16 %v539, %v537
        %v574 = vpack.c.b16 %v540, %v538
        %v575 = vpack.c.b16 %v543, %v541
        %v576 = vpack.c.b16 %v544, %v542
        %v641 = vunpack.c.l.b16 %v417
        %v642 = vunpack.c.l.b16 %v418
        %v643 = vunpack.c.l.b16 %v419
        %v644 = vunpack.c.l.b16 %v420
        %v645 = vunpack.c.l.b16 %v421
        %v646 = vunpack.c.l.b16 %v422
        %v647 = vunpack.c.l.b16 %v423
        %v648 = vunpack.c.l.b16 %v424
        %v649 = vunpack.c.l.b16 %v425
        %v650 = vunpack.c.l.b16 %v426
        %v651 = vunpack.c.l.b16 %v427
        %v652 = vunpack.c.l.b16 %v428
        %v653 = vunpack.c.l.b16 %v429
        %v654 = vunpack.c.l.b16 %v430
        %v655 = vunpack.c.l.b16 %v431
        %v656 = vunpack.c.l.b16 %v432
        %v657 = vunpack.c.l.b16 %v433
        %v658 = vunpack.c.l.b16 %v434
        %v659 = vunpack.c.l.b16 %v435
        %v660 = vunpack.c.l.b16 %v436
        %v661 = vunpack.c.l.b16 %v437
        %v662 = vunpack.c.l.b16 %v438
        %v663 = vunpack.c.l.b16 %v439
        %v664 = vunpack.c.l.b16 %v440
        %v665 = vunpack.c.l.b16 %v441
        %v666 = vunpack.c.l.b16 %v442
        %v667 = vunpack.c.l.b16 %v443
        %v668 = vunpack.c.l.b16 %v444
        %v669 = vunpack.c.l.b16 %v445
        %v670 = vunpack.c.l.b16 %v446
        %v671 = vunpack.c.l.b16 %v447
        %v672 = vunpack.c.l.b16 %v448
        %v673 = vpack.c.b16 %v642, %v641
        %v674 = vpack.c.b16 %v644, %v643
        %v675 = vpack.c.b16 %v646, %v645
        %v676 = vpack.c.b16 %v648, %v647
        %v677 = vpack.c.b16 %v650, %v649
        %v678 = vpack.c.b16 %v652, %v651
        %v679 = vpack.c.b16 %v654, %v653
        %v680 = vpack.c.b16 %v656, %v655
        %v681 = vpack.c.b16 %v658, %v657
        %v682 = vpack.c.b16 %v660, %v659
        %v683 = vpack.c.b16 %v662, %v661
        %v684 = vpack.c.b16 %v664, %v663
        %v685 = vpack.c.b16 %v666, %v665
        %v686 = vpack.c.b16 %v668, %v667
        %v687 = vpack.c.b16 %v670, %v669
        %v688 = vpack.c.b16 %v672, %v671
        %705 = vmatpush.bf16.msra.mxu0 %v680
        %706 = vmatpush.bf16.msra.mxu0 %v679
        %707 = vmatpush.bf16.msra.mxu0 %v678
        %708 = vmatpush.bf16.msra.mxu0 %v677
        %709 = vmatpush.bf16.msra.mxu0 %v676
        %710 = vmatpush.bf16.msra.mxu0 %v675
        %711 = vmatpush.bf16.msra.mxu0 %v674
        %712 = vmatpush.bf16.msra.mxu0 %v673
        %713 = vmatmul.bf16.gmra.mxu0 %v545
        %v714 = vpop.f32.mrf.mxu0
        %v715 = vadd.f32 0.0, %v714
        %v716 = vpop.f32.mrf.mxu0
        %v717 = vadd.f32 0.0, %v716
        %718 = vmatmul.bf16.gmra.mxu0 %v547
        %v719 = vpop.f32.mrf.mxu0
        %v720 = vadd.f32 0.0, %v719
        %v721 = vpop.f32.mrf.mxu0
        %v722 = vadd.f32 0.0, %v721
        %723 = vmatmul.bf16.gmra.mxu0 %v549
        %v724 = vpop.f32.mrf.mxu0
        %v725 = vadd.f32 0.0, %v724
        %v726 = vpop.f32.mrf.mxu0
        %v727 = vadd.f32 0.0, %v726
        %728 = vmatmul.bf16.gmra.mxu0 %v551
        %v729 = vpop.f32.mrf.mxu0
        %v730 = vadd.f32 0.0, %v729
        %v731 = vpop.f32.mrf.mxu0
        %v732 = vadd.f32 0.0, %v731
        %733 = vmatmul.bf16.gmra.mxu0 %v553
        %v734 = vpop.f32.mrf.mxu0
        %v735 = vadd.f32 0.0, %v734
        %v736 = vpop.f32.mrf.mxu0
        %v737 = vadd.f32 0.0, %v736
        %738 = vmatmul.bf16.gmra.mxu0 %v555
        %v739 = vpop.f32.mrf.mxu0
        %v740 = vadd.f32 0.0, %v739
        %v741 = vpop.f32.mrf.mxu0
        %v742 = vadd.f32 0.0, %v741
        %743 = vmatmul.bf16.gmra.mxu0 %v557
        %v744 = vpop.f32.mrf.mxu0
        %v745 = vadd.f32 0.0, %v744
        %v746 = vpop.f32.mrf.mxu0
        %v747 = vadd.f32 0.0, %v746
        %748 = vmatmul.bf16.gmra.mxu0 %v559
        %v749 = vpop.f32.mrf.mxu0
        %v750 = vadd.f32 0.0, %v749
        %v751 = vpop.f32.mrf.mxu0
        %v752 = vadd.f32 0.0, %v751
        %753 = vmatmul.bf16.gmra.mxu0 %v561
        %v754 = vpop.f32.mrf.mxu0
        %v755 = vadd.f32 0.0, %v754
        %v756 = vpop.f32.mrf.mxu0
        %v757 = vadd.f32 0.0, %v756
        %758 = vmatmul.bf16.gmra.mxu0 %v563
        %v759 = vpop.f32.mrf.mxu0
        %v760 = vadd.f32 0.0, %v759
        %v761 = vpop.f32.mrf.mxu0
        %v762 = vadd.f32 0.0, %v761
        %763 = vmatmul.bf16.gmra.mxu0 %v565
        %v764 = vpop.f32.mrf.mxu0
        %v765 = vadd.f32 0.0, %v764
        %v766 = vpop.f32.mrf.mxu0
        %v767 = vadd.f32 0.0, %v766
        %768 = vmatmul.bf16.gmra.mxu0 %v567
        %v769 = vpop.f32.mrf.mxu0
        %v770 = vadd.f32 0.0, %v769
        %v771 = vpop.f32.mrf.mxu0
        %v772 = vadd.f32 0.0, %v771
        %773 = vmatmul.bf16.gmra.mxu0 %v569
        %v774 = vpop.f32.mrf.mxu0
        %v775 = vadd.f32 0.0, %v774
        %v776 = vpop.f32.mrf.mxu0
        %v777 = vadd.f32 0.0, %v776
        %778 = vmatmul.bf16.gmra.mxu0 %v571
        %v779 = vpop.f32.mrf.mxu0
        %v780 = vadd.f32 0.0, %v779
        %v781 = vpop.f32.mrf.mxu0
        %v782 = vadd.f32 0.0, %v781
        %783 = vmatmul.bf16.gmra.mxu0 %v573
        %v784 = vpop.f32.mrf.mxu0
        %v785 = vadd.f32 0.0, %v784
        %v786 = vpop.f32.mrf.mxu0
        %v787 = vadd.f32 0.0, %v786
        %788 = vmatmul.bf16.gmra.mxu0 %v575
        %v789 = vpop.f32.mrf.mxu0
        %v790 = vadd.f32 0.0, %v789
        %v791 = vpop.f32.mrf.mxu0
        %v792 = vadd.f32 0.0, %v791
        %793 = vdwg.mxu0
        %794 = vmatpush.bf16.msra.mxu0 %v688
        %795 = vmatpush.bf16.msra.mxu0 %v687
        %796 = vmatpush.bf16.msra.mxu0 %v686
        %797 = vmatpush.bf16.msra.mxu0 %v685
        %798 = vmatpush.bf16.msra.mxu0 %v684
        %799 = vmatpush.bf16.msra.mxu0 %v683
        %800 = vmatpush.bf16.msra.mxu0 %v682
        %801 = vmatpush.bf16.msra.mxu0 %v681
        %802 = vmatmul.bf16.gmra.mxu0 %v546
        %v803 = vpop.f32.mrf.mxu0
        %v804 = vadd.f32 %v715, %v803
        %v805 = vpop.f32.mrf.mxu0
        %v806 = vadd.f32 %v717, %v805
        %807 = vmatmul.bf16.gmra.mxu0 %v548
        %v808 = vpop.f32.mrf.mxu0
        %v809 = vadd.f32 %v720, %v808
        %v810 = vpop.f32.mrf.mxu0
        %v811 = vadd.f32 %v722, %v810
        %812 = vmatmul.bf16.gmra.mxu0 %v550
        %v813 = vpop.f32.mrf.mxu0
        %v814 = vadd.f32 %v725, %v813
        %v815 = vpop.f32.mrf.mxu0
        %v816 = vadd.f32 %v727, %v815
        %817 = vmatmul.bf16.gmra.mxu0 %v552
        %v818 = vpop.f32.mrf.mxu0
        %v819 = vadd.f32 %v730, %v818
        %v820 = vpop.f32.mrf.mxu0
        %v821 = vadd.f32 %v732, %v820
        %822 = vmatmul.bf16.gmra.mxu0 %v554
        %v823 = vpop.f32.mrf.mxu0
        %v824 = vadd.f32 %v735, %v823
        %v825 = vpop.f32.mrf.mxu0
        %v826 = vadd.f32 %v737, %v825
        %827 = vmatmul.bf16.gmra.mxu0 %v556
        %v828 = vpop.f32.mrf.mxu0
        %v829 = vadd.f32 %v740, %v828
        %v830 = vpop.f32.mrf.mxu0
        %v831 = vadd.f32 %v742, %v830
        %832 = vmatmul.bf16.gmra.mxu0 %v558
        %v833 = vpop.f32.mrf.mxu0
        %v834 = vadd.f32 %v745, %v833
        %v835 = vpop.f32.mrf.mxu0
        %v836 = vadd.f32 %v747, %v835
        %837 = vmatmul.bf16.gmra.mxu0 %v560
        %v838 = vpop.f32.mrf.mxu0
        %v839 = vadd.f32 %v750, %v838
        %v840 = vpop.f32.mrf.mxu0
        %v841 = vadd.f32 %v752, %v840
        %842 = vmatmul.bf16.gmra.mxu0 %v562
        %v843 = vpop.f32.mrf.mxu0
        %v844 = vadd.f32 %v755, %v843
        %v845 = vpop.f32.mrf.mxu0
        %v846 = vadd.f32 %v757, %v845
        %847 = vmatmul.bf16.gmra.mxu0 %v564
        %v848 = vpop.f32.mrf.mxu0
        %v849 = vadd.f32 %v760, %v848
        %v850 = vpop.f32.mrf.mxu0
        %v851 = vadd.f32 %v762, %v850
        %852 = vmatmul.bf16.gmra.mxu0 %v566
        %v853 = vpop.f32.mrf.mxu0
        %v854 = vadd.f32 %v765, %v853
        %v855 = vpop.f32.mrf.mxu0
        %v856 = vadd.f32 %v767, %v855
        %857 = vmatmul.bf16.gmra.mxu0 %v568
        %v858 = vpop.f32.mrf.mxu0
        %v859 = vadd.f32 %v770, %v858
        %v860 = vpop.f32.mrf.mxu0
        %v861 = vadd.f32 %v772, %v860
        %862 = vmatmul.bf16.gmra.mxu0 %v570
        %v863 = vpop.f32.mrf.mxu0
        %v864 = vadd.f32 %v775, %v863
        %v865 = vpop.f32.mrf.mxu0
        %v866 = vadd.f32 %v777, %v865
        %867 = vmatmul.bf16.gmra.mxu0 %v572
        %v868 = vpop.f32.mrf.mxu0
        %v869 = vadd.f32 %v780, %v868
        %v870 = vpop.f32.mrf.mxu0
        %v871 = vadd.f32 %v782, %v870
        %872 = vmatmul.bf16.gmra.mxu0 %v574
        %v873 = vpop.f32.mrf.mxu0
        %v874 = vadd.f32 %v785, %v873
        %v875 = vpop.f32.mrf.mxu0
        %v876 = vadd.f32 %v787, %v875
        %877 = vmatmul.bf16.gmra.mxu0 %v576
        %v878 = vpop.f32.mrf.mxu0
        %v879 = vadd.f32 %v790, %v878
        %v880 = vpop.f32.mrf.mxu0
        %v881 = vadd.f32 %v792, %v880
        %882 = vdwg.mxu0
        %v883 = vadd.f32 %v385, %v804
        %v884 = vadd.f32 %v386, %v806
        %v885 = vadd.f32 %v387, %v809
        %v886 = vadd.f32 %v388, %v811
        %v887 = vadd.f32 %v389, %v814
        %v888 = vadd.f32 %v390, %v816
        %v889 = vadd.f32 %v391, %v819
        %v890 = vadd.f32 %v392, %v821
        %v891 = vadd.f32 %v393, %v824
        %v892 = vadd.f32 %v394, %v826
        %v893 = vadd.f32 %v395, %v829
        %v894 = vadd.f32 %v396, %v831
        %v895 = vadd.f32 %v397, %v834
        %v896 = vadd.f32 %v398, %v836
        %v897 = vadd.f32 %v399, %v839
        %v898 = vadd.f32 %v400, %v841
        %v899 = vadd.f32 %v401, %v844
        %v900 = vadd.f32 %v402, %v846
        %v901 = vadd.f32 %v403, %v849
        %v902 = vadd.f32 %v404, %v851
        %v903 = vadd.f32 %v405, %v854
        %v904 = vadd.f32 %v406, %v856
        %v905 = vadd.f32 %v407, %v859
        %v906 = vadd.f32 %v408, %v861
        %v907 = vadd.f32 %v409, %v864
        %v908 = vadd.f32 %v410, %v866
        %v909 = vadd.f32 %v411, %v869
        %v910 = vadd.f32 %v412, %v871
        %v911 = vadd.f32 %v413, %v874
        %v912 = vadd.f32 %v414, %v876
        %v913 = vadd.f32 %v415, %v879
        %v914 = vadd.f32 %v416, %v881
        %915 = vst [vmem:[#allocation2] sm:$0xff] %v883
        %916 = vst [vmem:[#allocation2 + $0x8] sm:$0xff] %v884
        %917 = vst [vmem:[#allocation2 + $0x10] sm:$0xff] %v885
        %918 = vst [vmem:[#allocation2 + $0x18] sm:$0xff] %v886
        %919 = vst [vmem:[#allocation2 + $0x20] sm:$0xff] %v887
        %920 = vst [vmem:[#allocation2 + $0x28] sm:$0xff] %v888
        %921 = vst [vmem:[#allocation2 + $0x30] sm:$0xff] %v889
        %922 = vst [vmem:[#allocation2 + $0x38] sm:$0xff] %v890
        %923 = vst [vmem:[#allocation2 + $0x40] sm:$0xff] %v891
        %924 = vst [vmem:[#allocation2 + $0x48] sm:$0xff] %v892
        %925 = vst [vmem:[#allocation2 + $0x50] sm:$0xff] %v893
        %926 = vst [vmem:[#allocation2 + $0x58] sm:$0xff] %v894
        %927 = vst [vmem:[#allocation2 + $0x60] sm:$0xff] %v895
        %928 = vst [vmem:[#allocation2 + $0x68] sm:$0xff] %v896
        %929 = vst [vmem:[#allocation2 + $0x70] sm:$0xff] %v897
        %930 = vst [vmem:[#allocation2 + $0x78] sm:$0xff] %v898
        %931 = vst [vmem:[#allocation2 + $0x80] sm:$0xff] %v899
        %932 = vst [vmem:[#allocation2 + $0x88] sm:$0xff] %v900
        %933 = vst [vmem:[#allocation2 + $0x90] sm:$0xff] %v901
        %934 = vst [vmem:[#allocation2 + $0x98] sm:$0xff] %v902
        %935 = vst [vmem:[#allocation2 + $0xa0] sm:$0xff] %v903
        %936 = vst [vmem:[#allocation2 + $0xa8] sm:$0xff] %v904
        %937 = vst [vmem:[#allocation2 + $0xb0] sm:$0xff] %v905
        %938 = vst [vmem:[#allocation2 + $0xb8] sm:$0xff] %v906
        %939 = vst [vmem:[#allocation2 + $0xc0] sm:$0xff] %v907
        %940 = vst [vmem:[#allocation2 + $0xc8] sm:$0xff] %v908
        %941 = vst [vmem:[#allocation2 + $0xd0] sm:$0xff] %v909
        %942 = vst [vmem:[#allocation2 + $0xd8] sm:$0xff] %v910
        %943 = vst [vmem:[#allocation2 + $0xe0] sm:$0xff] %v911
        %944 = vst [vmem:[#allocation2 + $0xe8] sm:$0xff] %v912
        %945 = vst [vmem:[#allocation2 + $0xf0] sm:$0xff] %v913
        %946 = vst [vmem:[#allocation2 + $0xf8] sm:$0xff] %v914
        // Predicated region
        $region45: #{heco_forward.8} parent=35 // pred_check
          %p947 = pneg %p317
        $region46: #{heco_forward.8} parent=35 // pred_check_branch
          %949 = sbr.rel (%p947) target = $region48
        $region47: #{heco_forward.8} parent=35 // pred_region
          %v950 = vld [vmem:[#allocation2] sm:$0xff]
          %v951 = vld [vmem:[#allocation2 + $0x8] sm:$0xff]
          %v952 = vld [vmem:[#allocation2 + $0x10] sm:$0xff]
          %v953 = vld [vmem:[#allocation2 + $0x18] sm:$0xff]
          %v954 = vld [vmem:[#allocation2 + $0x20] sm:$0xff]
          %v955 = vld [vmem:[#allocation2 + $0x28] sm:$0xff]
          %v956 = vld [vmem:[#allocation2 + $0x30] sm:$0xff]
          %v957 = vld [vmem:[#allocation2 + $0x38] sm:$0xff]
          %v958 = vld [vmem:[#allocation2 + $0x40] sm:$0xff]
          %v959 = vld [vmem:[#allocation2 + $0x48] sm:$0xff]
          %v960 = vld [vmem:[#allocation2 + $0x50] sm:$0xff]
          %v961 = vld [vmem:[#allocation2 + $0x58] sm:$0xff]
          %v962 = vld [vmem:[#allocation2 + $0x60] sm:$0xff]
          %v963 = vld [vmem:[#allocation2 + $0x68] sm:$0xff]
          %v964 = vld [vmem:[#allocation2 + $0x70] sm:$0xff]
          %v965 = vld [vmem:[#allocation2 + $0x78] sm:$0xff]
          %v966 = vld [vmem:[#allocation2 + $0x80] sm:$0xff]
          %v967 = vld [vmem:[#allocation2 + $0x88] sm:$0xff]
          %v968 = vld [vmem:[#allocation2 + $0x90] sm:$0xff]
          %v969 = vld [vmem:[#allocation2 + $0x98] sm:$0xff]
          %v970 = vld [vmem:[#allocation2 + $0xa0] sm:$0xff]
          %v971 = vld [vmem:[#allocation2 + $0xa8] sm:$0xff]
          %v972 = vld [vmem:[#allocation2 + $0xb0] sm:$0xff]
          %v973 = vld [vmem:[#allocation2 + $0xb8] sm:$0xff]
          %v974 = vld [vmem:[#allocation2 + $0xc0] sm:$0xff]
          %v975 = vld [vmem:[#allocation2 + $0xc8] sm:$0xff]
          %v976 = vld [vmem:[#allocation2 + $0xd0] sm:$0xff]
          %v977 = vld [vmem:[#allocation2 + $0xd8] sm:$0xff]
          %v978 = vld [vmem:[#allocation2 + $0xe0] sm:$0xff]
          %v979 = vld [vmem:[#allocation2 + $0xe8] sm:$0xff]
          %v980 = vld [vmem:[#allocation2 + $0xf0] sm:$0xff]
          %v981 = vld [vmem:[#allocation2 + $0xf8] sm:$0xff]
          %v982 = vpack.c.bf16 %v951, %v950
          %v983 = vpack.c.bf16 %v953, %v952
          %v984 = vpack.c.bf16 %v955, %v954
          %v985 = vpack.c.bf16 %v957, %v956
          %v986 = vpack.c.bf16 %v959, %v958
          %v987 = vpack.c.bf16 %v961, %v960
          %v988 = vpack.c.bf16 %v963, %v962
          %v989 = vpack.c.bf16 %v965, %v964
          %v990 = vpack.c.bf16 %v967, %v966
          %v991 = vpack.c.bf16 %v969, %v968
          %v992 = vpack.c.bf16 %v971, %v970
          %v993 = vpack.c.bf16 %v973, %v972
          %v994 = vpack.c.bf16 %v975, %v974
          %v995 = vpack.c.bf16 %v977, %v976
          %v996 = vpack.c.bf16 %v979, %v978
          %v997 = vpack.c.bf16 %v981, %v980
          %v998 = vld [vmem:[%s303] sm:$0xf]
          %v999 = vld [vmem:[%s303 + $0x4] sm:$0xf]
          %v1000 = vld [vmem:[%s303 + $0x8] sm:$0xf]
          %v1001 = vld [vmem:[%s303 + $0xc] sm:$0xf]
          %v1002 = vld [vmem:[%s303 + $0x10] sm:$0xf]
          %v1003 = vld [vmem:[%s303 + $0x14] sm:$0xf]
          %v1004 = vld [vmem:[%s303 + $0x18] sm:$0xf]
          %v1005 = vld [vmem:[%s303 + $0x1c] sm:$0xf]
          %v1006 = vld [vmem:[%s303 + $0x20] sm:$0xf]
          %v1007 = vld [vmem:[%s303 + $0x24] sm:$0xf]
          %v1008 = vld [vmem:[%s303 + $0x28] sm:$0xf]
          %v1009 = vld [vmem:[%s303 + $0x2c] sm:$0xf]
          %v1010 = vld [vmem:[%s303 + $0x30] sm:$0xf]
          %v1011 = vld [vmem:[%s303 + $0x34] sm:$0xf]
          %v1012 = vld [vmem:[%s303 + $0x38] sm:$0xf]
          %v1013 = vld [vmem:[%s303 + $0x3c] sm:$0xf]
          %v1014 = vld [vmem:[%s306] sm:$0x1]
          %v1016 = vperm.slane %v1014, 0
          %v1034 = vunpack.c.l.b16 %v998
          %v1035 = vunpack.c.l.b16 %v999
          %v1036 = vunpack.c.l.b16 %v1000
          %v1037 = vunpack.c.l.b16 %v1001
          %v1038 = vunpack.c.l.b16 %v1002
          %v1039 = vunpack.c.l.b16 %v1003
          %v1040 = vunpack.c.l.b16 %v1004
          %v1041 = vunpack.c.l.b16 %v1005
          %v1042 = vunpack.c.l.b16 %v1006
          %v1043 = vunpack.c.l.b16 %v1007
          %v1044 = vunpack.c.l.b16 %v1008
          %v1045 = vunpack.c.l.b16 %v1009
          %v1046 = vunpack.c.l.b16 %v1010
          %v1047 = vunpack.c.l.b16 %v1011
          %v1048 = vunpack.c.l.b16 %v1012
          %v1049 = vunpack.c.l.b16 %v1013
          %v1050 = vpack.c.b16 %v1035, %v1034
          %v1051 = vpack.c.b16 %v1037, %v1036
          %v1052 = vpack.c.b16 %v1039, %v1038
          %v1053 = vpack.c.b16 %v1041, %v1040
          %v1054 = vpack.c.b16 %v1043, %v1042
          %v1055 = vpack.c.b16 %v1045, %v1044
          %v1056 = vpack.c.b16 %v1047, %v1046
          %v1057 = vpack.c.b16 %v1049, %v1048
          %1066 = vmatpush.bf16.msra.mxu0 %v1057
          %1067 = vmatpush.bf16.msra.mxu0 %v1056
          %1068 = vmatpush.bf16.msra.mxu0 %v1055
          %1069 = vmatpush.bf16.msra.mxu0 %v1054
          %1070 = vmatpush.bf16.msra.mxu0 %v1053
          %1071 = vmatpush.bf16.msra.mxu0 %v1052
          %1072 = vmatpush.bf16.msra.mxu0 %v1051
          %1073 = vmatpush.bf16.msra.mxu0 %v1050
          %1074 = vmatmul.bf16.gmra.mxu0 %v982
          %v1075 = vpop.f32.mrf.mxu0
          %v1076 = vadd.f32 %v1016, %v1075
          %v1077 = vpop.f32.mrf.mxu0
          %v1078 = vadd.f32 %v1016, %v1077
          %1079 = vmatmul.bf16.gmra.mxu0 %v983
          %v1080 = vpop.f32.mrf.mxu0
          %v1081 = vadd.f32 %v1016, %v1080
          %v1082 = vpop.f32.mrf.mxu0
          %v1083 = vadd.f32 %v1016, %v1082
          %1084 = vmatmul.bf16.gmra.mxu0 %v984
          %v1085 = vpop.f32.mrf.mxu0
          %v1086 = vadd.f32 %v1016, %v1085
          %v1087 = vpop.f32.mrf.mxu0
          %v1088 = vadd.f32 %v1016, %v1087
          %1089 = vmatmul.bf16.gmra.mxu0 %v985
          %v1090 = vpop.f32.mrf.mxu0
          %v1091 = vadd.f32 %v1016, %v1090
          %v1092 = vpop.f32.mrf.mxu0
          %v1093 = vadd.f32 %v1016, %v1092
          %1094 = vmatmul.bf16.gmra.mxu0 %v986
          %v1095 = vpop.f32.mrf.mxu0
          %v1096 = vadd.f32 %v1016, %v1095
          %v1097 = vpop.f32.mrf.mxu0
          %v1098 = vadd.f32 %v1016, %v1097
          %1099 = vmatmul.bf16.gmra.mxu0 %v987
          %v1100 = vpop.f32.mrf.mxu0
          %v1101 = vadd.f32 %v1016, %v1100
          %v1102 = vpop.f32.mrf.mxu0
          %v1103 = vadd.f32 %v1016, %v1102
          %1104 = vmatmul.bf16.gmra.mxu0 %v988
          %v1105 = vpop.f32.mrf.mxu0
          %v1106 = vadd.f32 %v1016, %v1105
          %v1107 = vpop.f32.mrf.mxu0
          %v1108 = vadd.f32 %v1016, %v1107
          %1109 = vmatmul.bf16.gmra.mxu0 %v989
          %v1110 = vpop.f32.mrf.mxu0
          %v1111 = vadd.f32 %v1016, %v1110
          %v1112 = vpop.f32.mrf.mxu0
          %v1113 = vadd.f32 %v1016, %v1112
          %1114 = vmatmul.bf16.gmra.mxu0 %v990
          %v1115 = vpop.f32.mrf.mxu0
          %v1116 = vadd.f32 %v1016, %v1115
          %v1117 = vpop.f32.mrf.mxu0
          %v1118 = vadd.f32 %v1016, %v1117
          %1119 = vmatmul.bf16.gmra.mxu0 %v991
          %v1120 = vpop.f32.mrf.mxu0
          %v1121 = vadd.f32 %v1016, %v1120
          %v1122 = vpop.f32.mrf.mxu0
          %v1123 = vadd.f32 %v1016, %v1122
          %1124 = vmatmul.bf16.gmra.mxu0 %v992
          %v1125 = vpop.f32.mrf.mxu0
          %v1126 = vadd.f32 %v1016, %v1125
          %v1127 = vpop.f32.mrf.mxu0
          %v1128 = vadd.f32 %v1016, %v1127
          %1129 = vmatmul.bf16.gmra.mxu0 %v993
          %v1130 = vpop.f32.mrf.mxu0
          %v1131 = vadd.f32 %v1016, %v1130
          %v1132 = vpop.f32.mrf.mxu0
          %v1133 = vadd.f32 %v1016, %v1132
          %1134 = vmatmul.bf16.gmra.mxu0 %v994
          %v1135 = vpop.f32.mrf.mxu0
          %v1136 = vadd.f32 %v1016, %v1135
          %v1137 = vpop.f32.mrf.mxu0
          %v1138 = vadd.f32 %v1016, %v1137
          %1139 = vmatmul.bf16.gmra.mxu0 %v995
          %v1140 = vpop.f32.mrf.mxu0
          %v1141 = vadd.f32 %v1016, %v1140
          %v1142 = vpop.f32.mrf.mxu0
          %v1143 = vadd.f32 %v1016, %v1142
          %1144 = vmatmul.bf16.gmra.mxu0 %v996
          %v1145 = vpop.f32.mrf.mxu0
          %v1146 = vadd.f32 %v1016, %v1145
          %v1147 = vpop.f32.mrf.mxu0
          %v1148 = vadd.f32 %v1016, %v1147
          %1149 = vmatmul.bf16.gmra.mxu0 %v997
          %v1150 = vpop.f32.mrf.mxu0
          %v1151 = vadd.f32 %v1016, %v1150
          %v1152 = vpop.f32.mrf.mxu0
          %v1153 = vadd.f32 %v1016, %v1152
          %1154 = vdwg.mxu0
          %vm1155 = vcmp.gt.f32.partialorder %v1076, 0.0
          %vm1156 = vcmp.gt.f32.partialorder %v1078, 0.0
          %vm1157 = vcmp.gt.f32.partialorder %v1081, 0.0
          %vm1158 = vcmp.gt.f32.partialorder %v1083, 0.0
          %vm1159 = vcmp.gt.f32.partialorder %v1086, 0.0
          %vm1160 = vcmp.gt.f32.partialorder %v1088, 0.0
          %vm1161 = vcmp.gt.f32.partialorder %v1091, 0.0
          %vm1162 = vcmp.gt.f32.partialorder %v1093, 0.0
          %vm1163 = vcmp.gt.f32.partialorder %v1096, 0.0
          %vm1164 = vcmp.gt.f32.partialorder %v1098, 0.0
          %vm1165 = vcmp.gt.f32.partialorder %v1101, 0.0
          %vm1166 = vcmp.gt.f32.partialorder %v1103, 0.0
          %vm1167 = vcmp.gt.f32.partialorder %v1106, 0.0
          %vm1168 = vcmp.gt.f32.partialorder %v1108, 0.0
          %vm1169 = vcmp.gt.f32.partialorder %v1111, 0.0
          %vm1170 = vcmp.gt.f32.partialorder %v1113, 0.0
          %vm1171 = vcmp.gt.f32.partialorder %v1116, 0.0
          %vm1172 = vcmp.gt.f32.partialorder %v1118, 0.0
          %vm1173 = vcmp.gt.f32.partialorder %v1121, 0.0
          %vm1174 = vcmp.gt.f32.partialorder %v1123, 0.0
          %vm1175 = vcmp.gt.f32.partialorder %v1126, 0.0
          %vm1176 = vcmp.gt.f32.partialorder %v1128, 0.0
          %vm1177 = vcmp.gt.f32.partialorder %v1131, 0.0
          %vm1178 = vcmp.gt.f32.partialorder %v1133, 0.0
          %vm1179 = vcmp.gt.f32.partialorder %v1136, 0.0
          %vm1180 = vcmp.gt.f32.partialorder %v1138, 0.0
          %vm1181 = vcmp.gt.f32.partialorder %v1141, 0.0
          %vm1182 = vcmp.gt.f32.partialorder %v1143, 0.0
          %vm1183 = vcmp.gt.f32.partialorder %v1146, 0.0
          %vm1184 = vcmp.gt.f32.partialorder %v1148, 0.0
          %vm1185 = vcmp.gt.f32.partialorder %v1151, 0.0
          %vm1186 = vcmp.gt.f32.partialorder %v1153, 0.0
          %v1187 = vmin.f32 %v1076, 0.0
          %v1188 = vmin.f32 %v1078, 0.0
          %v1189 = vmin.f32 %v1081, 0.0
          %v1190 = vmin.f32 %v1083, 0.0
          %v1191 = vmin.f32 %v1086, 0.0
          %v1192 = vmin.f32 %v1088, 0.0
          %v1193 = vmin.f32 %v1091, 0.0
          %v1194 = vmin.f32 %v1093, 0.0
          %v1195 = vmin.f32 %v1096, 0.0
          %v1196 = vmin.f32 %v1098, 0.0
          %v1197 = vmin.f32 %v1101, 0.0
          %v1198 = vmin.f32 %v1103, 0.0
          %v1199 = vmin.f32 %v1106, 0.0
          %v1200 = vmin.f32 %v1108, 0.0
          %v1201 = vmin.f32 %v1111, 0.0
          %v1202 = vmin.f32 %v1113, 0.0
          %v1203 = vmin.f32 %v1116, 0.0
          %v1204 = vmin.f32 %v1118, 0.0
          %v1205 = vmin.f32 %v1121, 0.0
          %v1206 = vmin.f32 %v1123, 0.0
          %v1207 = vmin.f32 %v1126, 0.0
          %v1208 = vmin.f32 %v1128, 0.0
          %v1209 = vmin.f32 %v1131, 0.0
          %v1210 = vmin.f32 %v1133, 0.0
          %v1211 = vmin.f32 %v1136, 0.0
          %v1212 = vmin.f32 %v1138, 0.0
          %v1213 = vmin.f32 %v1141, 0.0
          %v1214 = vmin.f32 %v1143, 0.0
          %v1215 = vmin.f32 %v1146, 0.0
          %v1216 = vmin.f32 %v1148, 0.0
          %v1217 = vmin.f32 %v1151, 0.0
          %v1218 = vmin.f32 %v1153, 0.0
          %v1219 = vmul.f32 %v1187, 1.442695
          %v1220 = vpow.pop %v1219
          %v1221 = vmul.f32 %v1188, 1.442695
          %v1222 = vpow.pop %v1221
          %v1223 = vmul.f32 %v1189, 1.442695
          %v1224 = vpow.pop %v1223
          %v1225 = vmul.f32 %v1190, 1.442695
          %v1226 = vpow.pop %v1225
          %v1227 = vmul.f32 %v1191, 1.442695
          %v1228 = vpow.pop %v1227
          %v1229 = vmul.f32 %v1192, 1.442695
          %v1230 = vpow.pop %v1229
          %v1231 = vmul.f32 %v1193, 1.442695
          %v1232 = vpow.pop %v1231
          %v1233 = vmul.f32 %v1194, 1.442695
          %v1234 = vpow.pop %v1233
          %v1235 = vmul.f32 %v1195, 1.442695
          %v1236 = vpow.pop %v1235
          %v1237 = vmul.f32 %v1196, 1.442695
          %v1238 = vpow.pop %v1237
          %v1239 = vmul.f32 %v1197, 1.442695
          %v1240 = vpow.pop %v1239
          %v1241 = vmul.f32 %v1198, 1.442695
          %v1242 = vpow.pop %v1241
          %v1243 = vmul.f32 %v1199, 1.442695
          %v1244 = vpow.pop %v1243
          %v1245 = vmul.f32 %v1200, 1.442695
          %v1246 = vpow.pop %v1245
          %v1247 = vmul.f32 %v1201, 1.442695
          %v1248 = vpow.pop %v1247
          %v1249 = vmul.f32 %v1202, 1.442695
          %v1250 = vpow.pop %v1249
          %v1251 = vmul.f32 %v1203, 1.442695
          %v1252 = vpow.pop %v1251
          %v1253 = vmul.f32 %v1204, 1.442695
          %v1254 = vpow.pop %v1253
          %v1255 = vmul.f32 %v1205, 1.442695
          %v1256 = vpow.pop %v1255
          %v1257 = vmul.f32 %v1206, 1.442695
          %v1258 = vpow.pop %v1257
          %v1259 = vmul.f32 %v1207, 1.442695
          %v1260 = vpow.pop %v1259
          %v1261 = vmul.f32 %v1208, 1.442695
          %v1262 = vpow.pop %v1261
          %v1263 = vmul.f32 %v1209, 1.442695
          %v1264 = vpow.pop %v1263
          %v1265 = vmul.f32 %v1210, 1.442695
          %v1266 = vpow.pop %v1265
          %v1267 = vmul.f32 %v1211, 1.442695
          %v1268 = vpow.pop %v1267
          %v1269 = vmul.f32 %v1212, 1.442695
          %v1270 = vpow.pop %v1269
          %v1271 = vmul.f32 %v1213, 1.442695
          %v1272 = vpow.pop %v1271
          %v1273 = vmul.f32 %v1214, 1.442695
          %v1274 = vpow.pop %v1273
          %v1275 = vmul.f32 %v1215, 1.442695
          %v1276 = vpow.pop %v1275
          %v1277 = vmul.f32 %v1216, 1.442695
          %v1278 = vpow.pop %v1277
          %v1279 = vmul.f32 %v1217, 1.442695
          %v1280 = vpow.pop %v1279
          %v1281 = vmul.f32 %v1218, 1.442695
          %v1282 = vpow.pop %v1281
          %v1283 = vsub.f32 %v1220, 1.0
          %v1284 = vsub.f32 %v1222, 1.0
          %v1285 = vsub.f32 %v1224, 1.0
          %v1286 = vsub.f32 %v1226, 1.0
          %v1287 = vsub.f32 %v1228, 1.0
          %v1288 = vsub.f32 %v1230, 1.0
          %v1289 = vsub.f32 %v1232, 1.0
          %v1290 = vsub.f32 %v1234, 1.0
          %v1291 = vsub.f32 %v1236, 1.0
          %v1292 = vsub.f32 %v1238, 1.0
          %v1293 = vsub.f32 %v1240, 1.0
          %v1294 = vsub.f32 %v1242, 1.0
          %v1295 = vsub.f32 %v1244, 1.0
          %v1296 = vsub.f32 %v1246, 1.0
          %v1297 = vsub.f32 %v1248, 1.0
          %v1298 = vsub.f32 %v1250, 1.0
          %v1299 = vsub.f32 %v1252, 1.0
          %v1300 = vsub.f32 %v1254, 1.0
          %v1301 = vsub.f32 %v1256, 1.0
          %v1302 = vsub.f32 %v1258, 1.0
          %v1303 = vsub.f32 %v1260, 1.0
          %v1304 = vsub.f32 %v1262, 1.0
          %v1305 = vsub.f32 %v1264, 1.0
          %v1306 = vsub.f32 %v1266, 1.0
          %v1307 = vsub.f32 %v1268, 1.0
          %v1308 = vsub.f32 %v1270, 1.0
          %v1309 = vsub.f32 %v1272, 1.0
          %v1310 = vsub.f32 %v1274, 1.0
          %v1311 = vsub.f32 %v1276, 1.0
          %v1312 = vsub.f32 %v1278, 1.0
          %v1313 = vsub.f32 %v1280, 1.0
          %v1314 = vsub.f32 %v1282, 1.0
          %v1315 = vsel %vm1155, %v1076, %v1283
          %v1316 = vsel %vm1156, %v1078, %v1284
          %v1317 = vsel %vm1157, %v1081, %v1285
          %v1318 = vsel %vm1158, %v1083, %v1286
          %v1319 = vsel %vm1159, %v1086, %v1287
          %v1320 = vsel %vm1160, %v1088, %v1288
          %v1321 = vsel %vm1161, %v1091, %v1289
          %v1322 = vsel %vm1162, %v1093, %v1290
          %v1323 = vsel %vm1163, %v1096, %v1291
          %v1324 = vsel %vm1164, %v1098, %v1292
          %v1325 = vsel %vm1165, %v1101, %v1293
          %v1326 = vsel %vm1166, %v1103, %v1294
          %v1327 = vsel %vm1167, %v1106, %v1295
          %v1328 = vsel %vm1168, %v1108, %v1296
          %v1329 = vsel %vm1169, %v1111, %v1297
          %v1330 = vsel %vm1170, %v1113, %v1298
          %v1331 = vsel %vm1171, %v1116, %v1299
          %v1332 = vsel %vm1172, %v1118, %v1300
          %v1333 = vsel %vm1173, %v1121, %v1301
          %v1334 = vsel %vm1174, %v1123, %v1302
          %v1335 = vsel %vm1175, %v1126, %v1303
          %v1336 = vsel %vm1176, %v1128, %v1304
          %v1337 = vsel %vm1177, %v1131, %v1305
          %v1338 = vsel %vm1178, %v1133, %v1306
          %v1339 = vsel %vm1179, %v1136, %v1307
          %v1340 = vsel %vm1180, %v1138, %v1308
          %v1341 = vsel %vm1181, %v1141, %v1309
          %v1342 = vsel %vm1182, %v1143, %v1310
          %v1343 = vsel %vm1183, %v1146, %v1311
          %v1344 = vsel %vm1184, %v1148, %v1312
          %v1345 = vsel %vm1185, %v1151, %v1313
          %v1346 = vsel %vm1186, %v1153, %v1314
          %v1347 = vpack.c.bf16 %v1315, %v1315
          %v1348 = vpack.c.bf16 %v1316, %v1316
          %v1349 = vpack.c.bf16 %v1317, %v1317
          %v1350 = vpack.c.bf16 %v1318, %v1318
          %v1351 = vpack.c.bf16 %v1319, %v1319
          %v1352 = vpack.c.bf16 %v1320, %v1320
          %v1353 = vpack.c.bf16 %v1321, %v1321
          %v1354 = vpack.c.bf16 %v1322, %v1322
          %v1355 = vpack.c.bf16 %v1323, %v1323
          %v1356 = vpack.c.bf16 %v1324, %v1324
          %v1357 = vpack.c.bf16 %v1325, %v1325
          %v1358 = vpack.c.bf16 %v1326, %v1326
          %v1359 = vpack.c.bf16 %v1327, %v1327
          %v1360 = vpack.c.bf16 %v1328, %v1328
          %v1361 = vpack.c.bf16 %v1329, %v1329
          %v1362 = vpack.c.bf16 %v1330, %v1330
          %v1363 = vpack.c.bf16 %v1331, %v1331
          %v1364 = vpack.c.bf16 %v1332, %v1332
          %v1365 = vpack.c.bf16 %v1333, %v1333
          %v1366 = vpack.c.bf16 %v1334, %v1334
          %v1367 = vpack.c.bf16 %v1335, %v1335
          %v1368 = vpack.c.bf16 %v1336, %v1336
          %v1369 = vpack.c.bf16 %v1337, %v1337
          %v1370 = vpack.c.bf16 %v1338, %v1338
          %v1371 = vpack.c.bf16 %v1339, %v1339
          %v1372 = vpack.c.bf16 %v1340, %v1340
          %v1373 = vpack.c.bf16 %v1341, %v1341
          %v1374 = vpack.c.bf16 %v1342, %v1342
          %v1375 = vpack.c.bf16 %v1343, %v1343
          %v1376 = vpack.c.bf16 %v1344, %v1344
          %v1377 = vpack.c.bf16 %v1345, %v1345
          %v1378 = vpack.c.bf16 %v1346, %v1346
          %1379 = vst [vmem:[%s315] sm:$0xf] %v1347
          %1380 = vst [vmem:[%s315 + $0x4] sm:$0xf] %v1348
          %1381 = vst [vmem:[%s315 + $0x8] sm:$0xf] %v1349
          %1382 = vst [vmem:[%s315 + $0xc] sm:$0xf] %v1350
          %1383 = vst [vmem:[%s315 + $0x10] sm:$0xf] %v1351
          %1384 = vst [vmem:[%s315 + $0x14] sm:$0xf] %v1352
          %1385 = vst [vmem:[%s315 + $0x18] sm:$0xf] %v1353
          %1386 = vst [vmem:[%s315 + $0x1c] sm:$0xf] %v1354
          %1387 = vst [vmem:[%s315 + $0x20] sm:$0xf] %v1355
          %1388 = vst [vmem:[%s315 + $0x24] sm:$0xf] %v1356
          %1389 = vst [vmem:[%s315 + $0x28] sm:$0xf] %v1357
          %1390 = vst [vmem:[%s315 + $0x2c] sm:$0xf] %v1358
          %1391 = vst [vmem:[%s315 + $0x30] sm:$0xf] %v1359
          %1392 = vst [vmem:[%s315 + $0x34] sm:$0xf] %v1360
          %1393 = vst [vmem:[%s315 + $0x38] sm:$0xf] %v1361
          %1394 = vst [vmem:[%s315 + $0x3c] sm:$0xf] %v1362
          %1395 = vst [vmem:[%s315 + $0x40] sm:$0xf] %v1363
          %1396 = vst [vmem:[%s315 + $0x44] sm:$0xf] %v1364
          %1397 = vst [vmem:[%s315 + $0x48] sm:$0xf] %v1365
          %1398 = vst [vmem:[%s315 + $0x4c] sm:$0xf] %v1366
          %1399 = vst [vmem:[%s315 + $0x50] sm:$0xf] %v1367
          %1400 = vst [vmem:[%s315 + $0x54] sm:$0xf] %v1368
          %1401 = vst [vmem:[%s315 + $0x58] sm:$0xf] %v1369
          %1402 = vst [vmem:[%s315 + $0x5c] sm:$0xf] %v1370
          %1403 = vst [vmem:[%s315 + $0x60] sm:$0xf] %v1371
          %1404 = vst [vmem:[%s315 + $0x64] sm:$0xf] %v1372
          %1405 = vst [vmem:[%s315 + $0x68] sm:$0xf] %v1373
          %1406 = vst [vmem:[%s315 + $0x6c] sm:$0xf] %v1374
          %1407 = vst [vmem:[%s315 + $0x70] sm:$0xf] %v1375
          %1408 = vst [vmem:[%s315 + $0x74] sm:$0xf] %v1376
          %1409 = vst [vmem:[%s315 + $0x78] sm:$0xf] %v1377
          %1410 = vst [vmem:[%s315 + $0x7c] sm:$0xf] %v1378
        $region48: #{heco_forward.8} parent=35 // pred_fallthru
          _
        %s1411 = smul.u32 32, %s24
        %p1412 = scmp.lt.s32.totalorder %s23, 1
        %s1413 = scalar_select %p1412, %s23, 1
        %p1414 = scmp.lt.s32.totalorder %s1411, 31
        %s1415 = scalar_select %p1414, %s1411, 31
        %s1416 = smul.addr %s1413, 32
        %s1417 = sadd.s32 %s1415, %s1416
        %s1418 = smul.addr %s1417, 4
        %s1419 = scalar_lea.vmem %s4, %s1418
        // Predicated region
        $region49: #{heco_forward.8} parent=35 // pred_check
          %p1420 = pneg %p165
        $region50: #{heco_forward.8} parent=35 // pred_check_branch
          %1422 = sbr.rel (%p1420) target = $region52
        $region51: #{heco_forward.8} parent=35 // pred_region
          %s1423 = smul.u32 32, %s24
        $region52: #{heco_forward.8} parent=35 // pred_fallthru
          _
      $region36: #{heco_forward.8} parent=5 // pred_fallthru
        _
      %p1424 = scmp.le.s32.totalorder 2, %s13
      // Predicated region
      $region53: #{heco_forward.8} parent=5 // pred_check
        %p1425 = pneg %p1424
      $region54: #{heco_forward.8} parent=5 // pred_check_branch
        %1427 = sbr.rel (%p1425) target = $region56
      $region55: #{heco_forward.8} parent=5 // pred_region
        %s1428 = ssub.s32 %s13, 2
        // Predicated region
        $region57: #{heco_forward.8} parent=55 // pred_check
          %p1429 = pneg %p171
        $region58: #{heco_forward.8} parent=55 // pred_check_branch
          %1431 = sbr.rel (%p1429) target = $region60
        $region59: #{heco_forward.8} parent=55 // pred_region
          %s1432 = smul.u32 32, %s27
          %p1433 = scmp.lt.s32.totalorder %s26, 1
          %s1434 = scalar_select %p1433, %s26, 1
          %p1435 = scmp.lt.s32.totalorder %s1432, 31
          %s1436 = scalar_select %p1435, %s1432, 31
          %s1437 = smul.addr %s1434, 32
          %s1438 = sadd.s32 %s1436, %s1437
          %s1439 = smul.addr %s1438, 4
          %s1440 = scalar_lea.vmem %s4, %s1439
        $region60: #{heco_forward.8} parent=55 // pred_fallthru
          _
      $region56: #{heco_forward.8} parent=5 // pred_fallthru
        _
    $region6: #{heco_forward.8} parent=1 // loop_footer
      %s17 = sadd.s32 1, %s13
    $region7: #{heco_forward.8} parent=1 // loop_footer_branch
      %12 = sbr.rel target = $region3
    $region8: #{heco_forward.8} parent=1 // loop_exit
      _
    %1441 = vsyncpa [#allocation4], 1
    %s1442 = scalar_lea.sflag [#allocation4], 1
    %1443 = vsyncpa %s1442, 1

// kernel: heco_forward.7
$region0: #{heco_forward.7}
  #allocation0 [shape = 'u32[]', space=smem, size = 0x4, offset = 0x4, fixed_abs, tag = 'smem constant byte address 0x4 - core index']
  #allocation1 [shape = 'u32[72,128]{1,0:T(1,128)}', space=vmem, size = 0x9000, scoped, tag = 'internal scratch']
  #allocation2 [shape = 'f32[256,128]{1,0:T(8,128)}', space=vmem, size = 0x20000, scoped, tag = 'scratch operand']
  %s0 = inlined_call_operand.vmem [shape: bf16[256,256], index: 0, kind: input, shape index: {}]
  %s1 = inlined_call_operand.vmem [shape: bf16[256,256], index: 1, kind: input, shape index: {}]
  %s2 = inlined_call_operand.vmem [shape: bf16[256,128], index: 2, kind: input, shape index: {}]
  %s3 = inlined_call_operand.vmem [shape: bf16[128,128], index: 3, kind: input, shape index: {}]
  %s4 = inlined_call_operand.vmem [shape: f32[1,128], index: 4, kind: input, shape index: {}]
  %s5 = inlined_call_operand.vmem [shape: bf16[256,128], index: 5, kind: output, shape index: {}]
  %s6 = sld [smem:[#allocation0]]
  $region38: #{heco_forward.7} parent=0
    _
  %s8 = ssub.s32 1, %s6
  %s9 = scalar_select 0, %s8, %s6
  // Predicated region
  $region2: #{heco_forward.7} parent=0 // pred_check
    _
  $region3: #{heco_forward.7} parent=0 // pred_check_branch
    %11 = sbr.rel (0) target = $region5
  $region4: #{heco_forward.7} parent=0 // pred_region
    _
  $region5: #{heco_forward.7} parent=0 // pred_fallthru
    _
  // Predicated region
  $region6: #{heco_forward.7} parent=0 // pred_check
    _
  $region7: #{heco_forward.7} parent=0 // pred_check_branch
    %13 = sbr.rel (0) target = $region9
  $region8: #{heco_forward.7} parent=0 // pred_region
    _
  $region9: #{heco_forward.7} parent=0 // pred_fallthru
    _
  // Predicated region
  $region10: #{heco_forward.7} parent=0 // pred_check
    _
  $region11: #{heco_forward.7} parent=0 // pred_check_branch
    %15 = sbr.rel (0) target = $region13
  $region12: #{heco_forward.7} parent=0 // pred_region
    _
  $region13: #{heco_forward.7} parent=0 // pred_fallthru
    _
  // Predicated region
  $region14: #{heco_forward.7} parent=0 // pred_check
    _
  $region15: #{heco_forward.7} parent=0 // pred_check_branch
    %17 = sbr.rel (0) target = $region17
  $region16: #{heco_forward.7} parent=0 // pred_region
    _
  $region17: #{heco_forward.7} parent=0 // pred_fallthru
    _
  // Predicated region
  $region18: #{heco_forward.7} parent=0 // pred_check
    _
  $region19: #{heco_forward.7} parent=0 // pred_check_branch
    %19 = sbr.rel (0) target = $region21
  $region20: #{heco_forward.7} parent=0 // pred_region
    _
  $region21: #{heco_forward.7} parent=0 // pred_fallthru
    _
  %p20 = scmp.eq.s32.totalorder 0, 0
  // Predicated region
  $region22: #{heco_forward.7} parent=0 // pred_check
    %p21 = pneg %p20
  $region23: #{heco_forward.7} parent=0 // pred_check_branch
    %23 = sbr.rel (%p21) target = $region25
  $region24: #{heco_forward.7} parent=0 // pred_region
    %24 = vst [vmem:[#allocation2] sm:$0xff] 0.0
    %25 = vst [vmem:[#allocation2 + $0x8] sm:$0xff] 0.0
    %26 = vst [vmem:[#allocation2 + $0x10] sm:$0xff] 0.0
    %27 = vst [vmem:[#allocation2 + $0x18] sm:$0xff] 0.0
    %28 = vst [vmem:[#allocation2 + $0x20] sm:$0xff] 0.0
    %29 = vst [vmem:[#allocation2 + $0x28] sm:$0xff] 0.0
    %30 = vst [vmem:[#allocation2 + $0x30] sm:$0xff] 0.0
    %31 = vst [vmem:[#allocation2 + $0x38] sm:$0xff] 0.0
    %32 = vst [vmem:[#allocation2 + $0x40] sm:$0xff] 0.0
    %33 = vst [vmem:[#allocation2 + $0x48] sm:$0xff] 0.0
    %34 = vst [vmem:[#allocation2 + $0x50] sm:$0xff] 0.0
    %35 = vst [vmem:[#allocation2 + $0x58] sm:$0xff] 0.0
    %36 = vst [vmem:[#allocation2 + $0x60] sm:$0xff] 0.0
    %37 = vst [vmem:[#allocation2 + $0x68] sm:$0xff] 0.0
    %38 = vst [vmem:[#allocation2 + $0x70] sm:$0xff] 0.0
    %39 = vst [vmem:[#allocation2 + $0x78] sm:$0xff] 0.0
    %40 = vst [vmem:[#allocation2 + $0x80] sm:$0xff] 0.0
    %41 = vst [vmem:[#allocation2 + $0x88] sm:$0xff] 0.0
    %42 = vst [vmem:[#allocation2 + $0x90] sm:$0xff] 0.0
    %43 = vst [vmem:[#allocation2 + $0x98] sm:$0xff] 0.0
    %44 = vst [vmem:[#allocation2 + $0xa0] sm:$0xff] 0.0
    %45 = vst [vmem:[#allocation2 + $0xa8] sm:$0xff] 0.0
    %46 = vst [vmem:[#allocation2 + $0xb0] sm:$0xff] 0.0
    %47 = vst [vmem:[#allocation2 + $0xb8] sm:$0xff] 0.0
    %48 = vst [vmem:[#allocation2 + $0xc0] sm:$0xff] 0.0
    %49 = vst [vmem:[#allocation2 + $0xc8] sm:$0xff] 0.0
    %50 = vst [vmem:[#allocation2 + $0xd0] sm:$0xff] 0.0
    %51 = vst [vmem:[#allocation2 + $0xd8] sm:$0xff] 0.0
    %52 = vst [vmem:[#allocation2 + $0xe0] sm:$0xff] 0.0
    %53 = vst [vmem:[#allocation2 + $0xe8] sm:$0xff] 0.0
    %54 = vst [vmem:[#allocation2 + $0xf0] sm:$0xff] 0.0
    %55 = vst [vmem:[#allocation2 + $0xf8] sm:$0xff] 0.0
  $region25: #{heco_forward.7} parent=0 // pred_fallthru
    _
  %v56 = vld [vmem:[%s0] sm:$0xff]
  %v57 = vld [vmem:[%s0 + $0x8] sm:$0xff]
  %v58 = vld [vmem:[%s0 + $0x10] sm:$0xff]
  %v59 = vld [vmem:[%s0 + $0x18] sm:$0xff]
  %v60 = vld [vmem:[%s0 + $0x20] sm:$0xff]
  %v61 = vld [vmem:[%s0 + $0x28] sm:$0xff]
  %v62 = vld [vmem:[%s0 + $0x30] sm:$0xff]
  %v63 = vld [vmem:[%s0 + $0x38] sm:$0xff]
  %v64 = vld [vmem:[%s0 + $0x40] sm:$0xff]
  %v65 = vld [vmem:[%s0 + $0x48] sm:$0xff]
  %v66 = vld [vmem:[%s0 + $0x50] sm:$0xff]
  %v67 = vld [vmem:[%s0 + $0x58] sm:$0xff]
  %v68 = vld [vmem:[%s0 + $0x60] sm:$0xff]
  %v69 = vld [vmem:[%s0 + $0x68] sm:$0xff]
  %v70 = vld [vmem:[%s0 + $0x70] sm:$0xff]
  %v71 = vld [vmem:[%s0 + $0x78] sm:$0xff]
  %v72 = vld [vmem:[%s0 + $0x80] sm:$0xff]
  %v73 = vld [vmem:[%s0 + $0x88] sm:$0xff]
  %v74 = vld [vmem:[%s0 + $0x90] sm:$0xff]
  %v75 = vld [vmem:[%s0 + $0x98] sm:$0xff]
  %v76 = vld [vmem:[%s0 + $0xa0] sm:$0xff]
  %v77 = vld [vmem:[%s0 + $0xa8] sm:$0xff]
  %v78 = vld [vmem:[%s0 + $0xb0] sm:$0xff]
  %v79 = vld [vmem:[%s0 + $0xb8] sm:$0xff]
  %v80 = vld [vmem:[%s0 + $0xc0] sm:$0xff]
  %v81 = vld [vmem:[%s0 + $0xc8] sm:$0xff]
  %v82 = vld [vmem:[%s0 + $0xd0] sm:$0xff]
  %v83 = vld [vmem:[%s0 + $0xd8] sm:$0xff]
  %v84 = vld [vmem:[%s0 + $0xe0] sm:$0xff]
  %v85 = vld [vmem:[%s0 + $0xe8] sm:$0xff]
  %v86 = vld [vmem:[%s0 + $0xf0] sm:$0xff]
  %v87 = vld [vmem:[%s0 + $0xf8] sm:$0xff]
  %v88 = vld [vmem:[%s1] sm:$0xff]
  %v89 = vld [vmem:[%s1 + $0x8] sm:$0xff]
  %v90 = vld [vmem:[%s1 + $0x10] sm:$0xff]
  %v91 = vld [vmem:[%s1 + $0x18] sm:$0xff]
  %v92 = vld [vmem:[%s1 + $0x20] sm:$0xff]
  %v93 = vld [vmem:[%s1 + $0x28] sm:$0xff]
  %v94 = vld [vmem:[%s1 + $0x30] sm:$0xff]
  %v95 = vld [vmem:[%s1 + $0x38] sm:$0xff]
  %v96 = vld [vmem:[%s1 + $0x40] sm:$0xff]
  %v97 = vld [vmem:[%s1 + $0x48] sm:$0xff]
  %v98 = vld [vmem:[%s1 + $0x50] sm:$0xff]
  %v99 = vld [vmem:[%s1 + $0x58] sm:$0xff]
  %v100 = vld [vmem:[%s1 + $0x60] sm:$0xff]
  %v101 = vld [vmem:[%s1 + $0x68] sm:$0xff]
  %v102 = vld [vmem:[%s1 + $0x70] sm:$0xff]
  %v103 = vld [vmem:[%s1 + $0x78] sm:$0xff]
  %v104 = vld [vmem:[%s1 + $0x80] sm:$0xff]
  %v105 = vld [vmem:[%s1 + $0x88] sm:$0xff]
  %v106 = vld [vmem:[%s1 + $0x90] sm:$0xff]
  %v107 = vld [vmem:[%s1 + $0x98] sm:$0xff]
  %v108 = vld [vmem:[%s1 + $0xa0] sm:$0xff]
  %v109 = vld [vmem:[%s1 + $0xa8] sm:$0xff]
  %v110 = vld [vmem:[%s1 + $0xb0] sm:$0xff]
  %v111 = vld [vmem:[%s1 + $0xb8] sm:$0xff]
  %v112 = vld [vmem:[%s1 + $0xc0] sm:$0xff]
  %v113 = vld [vmem:[%s1 + $0xc8] sm:$0xff]
  %v114 = vld [vmem:[%s1 + $0xd0] sm:$0xff]
  %v115 = vld [vmem:[%s1 + $0xd8] sm:$0xff]
  %v116 = vld [vmem:[%s1 + $0xe0] sm:$0xff]
  %v117 = vld [vmem:[%s1 + $0xe8] sm:$0xff]
  %v118 = vld [vmem:[%s1 + $0xf0] sm:$0xff]
  %v119 = vld [vmem:[%s1 + $0xf8] sm:$0xff]
  %v120 = vunpack.c.l.bf16 %v56
  %v121 = vunpack.c.h.bf16 %v56
  %v122 = vunpack.c.l.bf16 %v57
  %v123 = vunpack.c.h.bf16 %v57
  %v124 = vunpack.c.l.bf16 %v58
  %v125 = vunpack.c.h.bf16 %v58
  %v126 = vunpack.c.l.bf16 %v59
  %v127 = vunpack.c.h.bf16 %v59
  %v128 = vunpack.c.l.bf16 %v60
  %v129 = vunpack.c.h.bf16 %v60
  %v130 = vunpack.c.l.bf16 %v61
  %v131 = vunpack.c.h.bf16 %v61
  %v132 = vunpack.c.l.bf16 %v62
  %v133 = vunpack.c.h.bf16 %v62
  %v134 = vunpack.c.l.bf16 %v63
  %v135 = vunpack.c.h.bf16 %v63
  %v136 = vunpack.c.l.bf16 %v64
  %v137 = vunpack.c.h.bf16 %v64
  %v138 = vunpack.c.l.bf16 %v65
  %v139 = vunpack.c.h.bf16 %v65
  %v140 = vunpack.c.l.bf16 %v66
  %v141 = vunpack.c.h.bf16 %v66
  %v142 = vunpack.c.l.bf16 %v67
  %v143 = vunpack.c.h.bf16 %v67
  %v144 = vunpack.c.l.bf16 %v68
  %v145 = vunpack.c.h.bf16 %v68
  %v146 = vunpack.c.l.bf16 %v69
  %v147 = vunpack.c.h.bf16 %v69
  %v148 = vunpack.c.l.bf16 %v70
  %v149 = vunpack.c.h.bf16 %v70
  %v150 = vunpack.c.l.bf16 %v71
  %v151 = vunpack.c.h.bf16 %v71
  %v152 = vunpack.c.l.bf16 %v72
  %v153 = vunpack.c.h.bf16 %v72
  %v154 = vunpack.c.l.bf16 %v73
  %v155 = vunpack.c.h.bf16 %v73
  %v156 = vunpack.c.l.bf16 %v74
  %v157 = vunpack.c.h.bf16 %v74
  %v158 = vunpack.c.l.bf16 %v75
  %v159 = vunpack.c.h.bf16 %v75
  %v160 = vunpack.c.l.bf16 %v76
  %v161 = vunpack.c.h.bf16 %v76
  %v162 = vunpack.c.l.bf16 %v77
  %v163 = vunpack.c.h.bf16 %v77
  %v164 = vunpack.c.l.bf16 %v78
  %v165 = vunpack.c.h.bf16 %v78
  %v166 = vunpack.c.l.bf16 %v79
  %v167 = vunpack.c.h.bf16 %v79
  %v168 = vunpack.c.l.bf16 %v80
  %v169 = vunpack.c.h.bf16 %v80
  %v170 = vunpack.c.l.bf16 %v81
  %v171 = vunpack.c.h.bf16 %v81
  %v172 = vunpack.c.l.bf16 %v82
  %v173 = vunpack.c.h.bf16 %v82
  %v174 = vunpack.c.l.bf16 %v83
  %v175 = vunpack.c.h.bf16 %v83
  %v176 = vunpack.c.l.bf16 %v84
  %v177 = vunpack.c.h.bf16 %v84
  %v178 = vunpack.c.l.bf16 %v85
  %v179 = vunpack.c.h.bf16 %v85
  %v180 = vunpack.c.l.bf16 %v86
  %v181 = vunpack.c.h.bf16 %v86
  %v182 = vunpack.c.l.bf16 %v87
  %v183 = vunpack.c.h.bf16 %v87
  %v184 = vunpack.c.l.bf16 %v88
  %v185 = vunpack.c.h.bf16 %v88
  %v186 = vunpack.c.l.bf16 %v89
  %v187 = vunpack.c.h.bf16 %v89
  %v188 = vunpack.c.l.bf16 %v90
  %v189 = vunpack.c.h.bf16 %v90
  %v190 = vunpack.c.l.bf16 %v91
  %v191 = vunpack.c.h.bf16 %v91
  %v192 = vunpack.c.l.bf16 %v92
  %v193 = vunpack.c.h.bf16 %v92
  %v194 = vunpack.c.l.bf16 %v93
  %v195 = vunpack.c.h.bf16 %v93
  %v196 = vunpack.c.l.bf16 %v94
  %v197 = vunpack.c.h.bf16 %v94
  %v198 = vunpack.c.l.bf16 %v95
  %v199 = vunpack.c.h.bf16 %v95
  %v200 = vunpack.c.l.bf16 %v96
  %v201 = vunpack.c.h.bf16 %v96
  %v202 = vunpack.c.l.bf16 %v97
  %v203 = vunpack.c.h.bf16 %v97
  %v204 = vunpack.c.l.bf16 %v98
  %v205 = vunpack.c.h.bf16 %v98
  %v206 = vunpack.c.l.bf16 %v99
  %v207 = vunpack.c.h.bf16 %v99
  %v208 = vunpack.c.l.bf16 %v100
  %v209 = vunpack.c.h.bf16 %v100
  %v210 = vunpack.c.l.bf16 %v101
  %v211 = vunpack.c.h.bf16 %v101
  %v212 = vunpack.c.l.bf16 %v102
  %v213 = vunpack.c.h.bf16 %v102
  %v214 = vunpack.c.l.bf16 %v103
  %v215 = vunpack.c.h.bf16 %v103
  %v216 = vunpack.c.l.bf16 %v104
  %v217 = vunpack.c.h.bf16 %v104
  %v218 = vunpack.c.l.bf16 %v105
  %v219 = vunpack.c.h.bf16 %v105
  %v220 = vunpack.c.l.bf16 %v106
  %v221 = vunpack.c.h.bf16 %v106
  %v222 = vunpack.c.l.bf16 %v107
  %v223 = vunpack.c.h.bf16 %v107
  %v224 = vunpack.c.l.bf16 %v108
  %v225 = vunpack.c.h.bf16 %v108
  %v226 = vunpack.c.l.bf16 %v109
  %v227 = vunpack.c.h.bf16 %v109
  %v228 = vunpack.c.l.bf16 %v110
  %v229 = vunpack.c.h.bf16 %v110
  %v230 = vunpack.c.l.bf16 %v111
  %v231 = vunpack.c.h.bf16 %v111
  %v232 = vunpack.c.l.bf16 %v112
  %v233 = vunpack.c.h.bf16 %v112
  %v234 = vunpack.c.l.bf16 %v113
  %v235 = vunpack.c.h.bf16 %v113
  %v236 = vunpack.c.l.bf16 %v114
  %v237 = vunpack.c.h.bf16 %v114
  %v238 = vunpack.c.l.bf16 %v115
  %v239 = vunpack.c.h.bf16 %v115
  %v240 = vunpack.c.l.bf16 %v116
  %v241 = vunpack.c.h.bf16 %v116
  %v242 = vunpack.c.l.bf16 %v117
  %v243 = vunpack.c.h.bf16 %v117
  %v244 = vunpack.c.l.bf16 %v118
  %v245 = vunpack.c.h.bf16 %v118
  %v246 = vunpack.c.l.bf16 %v119
  %v247 = vunpack.c.h.bf16 %v119
  %v248 = vmul.f32 %v120, %v184
  %v249 = vmul.f32 %v121, %v185
  %v250 = vmul.f32 %v122, %v186
  %v251 = vmul.f32 %v123, %v187
  %v252 = vmul.f32 %v124, %v188
  %v253 = vmul.f32 %v125, %v189
  %v254 = vmul.f32 %v126, %v190
  %v255 = vmul.f32 %v127, %v191
  %v256 = vmul.f32 %v128, %v192
  %v257 = vmul.f32 %v129, %v193
  %v258 = vmul.f32 %v130, %v194
  %v259 = vmul.f32 %v131, %v195
  %v260 = vmul.f32 %v132, %v196
  %v261 = vmul.f32 %v133, %v197
  %v262 = vmul.f32 %v134, %v198
  %v263 = vmul.f32 %v135, %v199
  %v264 = vmul.f32 %v136, %v200
  %v265 = vmul.f32 %v137, %v201
  %v266 = vmul.f32 %v138, %v202
  %v267 = vmul.f32 %v139, %v203
  %v268 = vmul.f32 %v140, %v204
  %v269 = vmul.f32 %v141, %v205
  %v270 = vmul.f32 %v142, %v206
  %v271 = vmul.f32 %v143, %v207
  %v272 = vmul.f32 %v144, %v208
  %v273 = vmul.f32 %v145, %v209
  %v274 = vmul.f32 %v146, %v210
  %v275 = vmul.f32 %v147, %v211
  %v276 = vmul.f32 %v148, %v212
  %v277 = vmul.f32 %v149, %v213
  %v278 = vmul.f32 %v150, %v214
  %v279 = vmul.f32 %v151, %v215
  %v280 = vmul.f32 %v152, %v216
  %v281 = vmul.f32 %v153, %v217
  %v282 = vmul.f32 %v154, %v218
  %v283 = vmul.f32 %v155, %v219
  %v284 = vmul.f32 %v156, %v220
  %v285 = vmul.f32 %v157, %v221
  %v286 = vmul.f32 %v158, %v222
  %v287 = vmul.f32 %v159, %v223
  %v288 = vmul.f32 %v160, %v224
  %v289 = vmul.f32 %v161, %v225
  %v290 = vmul.f32 %v162, %v226
  %v291 = vmul.f32 %v163, %v227
  %v292 = vmul.f32 %v164, %v228
  %v293 = vmul.f32 %v165, %v229
  %v294 = vmul.f32 %v166, %v230
  %v295 = vmul.f32 %v167, %v231
  %v296 = vmul.f32 %v168, %v232
  %v297 = vmul.f32 %v169, %v233
  %v298 = vmul.f32 %v170, %v234
  %v299 = vmul.f32 %v171, %v235
  %v300 = vmul.f32 %v172, %v236
  %v301 = vmul.f32 %v173, %v237
  %v302 = vmul.f32 %v174, %v238
  %v303 = vmul.f32 %v175, %v239
  %v304 = vmul.f32 %v176, %v240
  %v305 = vmul.f32 %v177, %v241
  %v306 = vmul.f32 %v178, %v242
  %v307 = vmul.f32 %v179, %v243
  %v308 = vmul.f32 %v180, %v244
  %v309 = vmul.f32 %v181, %v245
  %v310 = vmul.f32 %v182, %v246
  %v311 = vmul.f32 %v183, %v247
  %v312 = vpack.c.bf16 %v250, %v248
  %v313 = vpack.c.bf16 %v251, %v249
  %v314 = vpack.c.bf16 %v254, %v252
  %v315 = vpack.c.bf16 %v255, %v253
  %v316 = vpack.c.bf16 %v258, %v256
  %v317 = vpack.c.bf16 %v259, %v257
  %v318 = vpack.c.bf16 %v262, %v260
  %v319 = vpack.c.bf16 %v263, %v261
  %v320 = vpack.c.bf16 %v266, %v264
  %v321 = vpack.c.bf16 %v267, %v265
  %v322 = vpack.c.bf16 %v270, %v268
  %v323 = vpack.c.bf16 %v271, %v269
  %v324 = vpack.c.bf16 %v274, %v272
  %v325 = vpack.c.bf16 %v275, %v273
  %v326 = vpack.c.bf16 %v278, %v276
  %v327 = vpack.c.bf16 %v279, %v277
  %v328 = vpack.c.bf16 %v282, %v280
  %v329 = vpack.c.bf16 %v283, %v281
  %v330 = vpack.c.bf16 %v286, %v284
  %v331 = vpack.c.bf16 %v287, %v285
  %v332 = vpack.c.bf16 %v290, %v288
  %v333 = vpack.c.bf16 %v291, %v289
  %v334 = vpack.c.bf16 %v294, %v292
  %v335 = vpack.c.bf16 %v295, %v293
  %v336 = vpack.c.bf16 %v298, %v296
  %v337 = vpack.c.bf16 %v299, %v297
  %v338 = vpack.c.bf16 %v302, %v300
  %v339 = vpack.c.bf16 %v303, %v301
  %v340 = vpack.c.bf16 %v306, %v304
  %v341 = vpack.c.bf16 %v307, %v305
  %v342 = vpack.c.bf16 %v310, %v308
  %v343 = vpack.c.bf16 %v311, %v309
  %v344 = vld [vmem:[#allocation2] sm:$0xff]
  %v345 = vld [vmem:[#allocation2 + $0x8] sm:$0xff]
  %v346 = vld [vmem:[#allocation2 + $0x10] sm:$0xff]
  %v347 = vld [vmem:[#allocation2 + $0x18] sm:$0xff]
  %v348 = vld [vmem:[#allocation2 + $0x20] sm:$0xff]
  %v349 = vld [vmem:[#allocation2 + $0x28] sm:$0xff]
  %v350 = vld [vmem:[#allocation2 + $0x30] sm:$0xff]
  %v351 = vld [vmem:[#allocation2 + $0x38] sm:$0xff]
  %v352 = vld [vmem:[#allocation2 + $0x40] sm:$0xff]
  %v353 = vld [vmem:[#allocation2 + $0x48] sm:$0xff]
  %v354 = vld [vmem:[#allocation2 + $0x50] sm:$0xff]
  %v355 = vld [vmem:[#allocation2 + $0x58] sm:$0xff]
  %v356 = vld [vmem:[#allocation2 + $0x60] sm:$0xff]
  %v357 = vld [vmem:[#allocation2 + $0x68] sm:$0xff]
  %v358 = vld [vmem:[#allocation2 + $0x70] sm:$0xff]
  %v359 = vld [vmem:[#allocation2 + $0x78] sm:$0xff]
  %v360 = vld [vmem:[#allocation2 + $0x80] sm:$0xff]
  %v361 = vld [vmem:[#allocation2 + $0x88] sm:$0xff]
  %v362 = vld [vmem:[#allocation2 + $0x90] sm:$0xff]
  %v363 = vld [vmem:[#allocation2 + $0x98] sm:$0xff]
  %v364 = vld [vmem:[#allocation2 + $0xa0] sm:$0xff]
  %v365 = vld [vmem:[#allocation2 + $0xa8] sm:$0xff]
  %v366 = vld [vmem:[#allocation2 + $0xb0] sm:$0xff]
  %v367 = vld [vmem:[#allocation2 + $0xb8] sm:$0xff]
  %v368 = vld [vmem:[#allocation2 + $0xc0] sm:$0xff]
  %v369 = vld [vmem:[#allocation2 + $0xc8] sm:$0xff]
  %v370 = vld [vmem:[#allocation2 + $0xd0] sm:$0xff]
  %v371 = vld [vmem:[#allocation2 + $0xd8] sm:$0xff]
  %v372 = vld [vmem:[#allocation2 + $0xe0] sm:$0xff]
  %v373 = vld [vmem:[#allocation2 + $0xe8] sm:$0xff]
  %v374 = vld [vmem:[#allocation2 + $0xf0] sm:$0xff]
  %v375 = vld [vmem:[#allocation2 + $0xf8] sm:$0xff]
  %v376 = vld [vmem:[%s2] sm:$0xf]
  %v377 = vld [vmem:[%s2 + $0x4] sm:$0xf]
  %v378 = vld [vmem:[%s2 + $0x8] sm:$0xf]
  %v379 = vld [vmem:[%s2 + $0xc] sm:$0xf]
  %v380 = vld [vmem:[%s2 + $0x10] sm:$0xf]
  %v381 = vld [vmem:[%s2 + $0x14] sm:$0xf]
  %v382 = vld [vmem:[%s2 + $0x18] sm:$0xf]
  %v383 = vld [vmem:[%s2 + $0x1c] sm:$0xf]
  %v384 = vld [vmem:[%s2 + $0x20] sm:$0xf]
  %v385 = vld [vmem:[%s2 + $0x24] sm:$0xf]
  %v386 = vld [vmem:[%s2 + $0x28] sm:$0xf]
  %v387 = vld [vmem:[%s2 + $0x2c] sm:$0xf]
  %v388 = vld [vmem:[%s2 + $0x30] sm:$0xf]
  %v389 = vld [vmem:[%s2 + $0x34] sm:$0xf]
  %v390 = vld [vmem:[%s2 + $0x38] sm:$0xf]
  %v391 = vld [vmem:[%s2 + $0x3c] sm:$0xf]
  %v392 = vld [vmem:[%s2 + $0x40] sm:$0xf]
  %v393 = vld [vmem:[%s2 + $0x44] sm:$0xf]
  %v394 = vld [vmem:[%s2 + $0x48] sm:$0xf]
  %v395 = vld [vmem:[%s2 + $0x4c] sm:$0xf]
  %v396 = vld [vmem:[%s2 + $0x50] sm:$0xf]
  %v397 = vld [vmem:[%s2 + $0x54] sm:$0xf]
  %v398 = vld [vmem:[%s2 + $0x58] sm:$0xf]
  %v399 = vld [vmem:[%s2 + $0x5c] sm:$0xf]
  %v400 = vld [vmem:[%s2 + $0x60] sm:$0xf]
  %v401 = vld [vmem:[%s2 + $0x64] sm:$0xf]
  %v402 = vld [vmem:[%s2 + $0x68] sm:$0xf]
  %v403 = vld [vmem:[%s2 + $0x6c] sm:$0xf]
  %v404 = vld [vmem:[%s2 + $0x70] sm:$0xf]
  %v405 = vld [vmem:[%s2 + $0x74] sm:$0xf]
  %v406 = vld [vmem:[%s2 + $0x78] sm:$0xf]
  %v407 = vld [vmem:[%s2 + $0x7c] sm:$0xf]
  %v440 = vunpack.c.l.b16 %v376
  %v441 = vunpack.c.l.b16 %v377
  %v442 = vunpack.c.l.b16 %v378
  %v443 = vunpack.c.l.b16 %v379
  %v444 = vunpack.c.l.b16 %v380
  %v445 = vunpack.c.l.b16 %v381
  %v446 = vunpack.c.l.b16 %v382
  %v447 = vunpack.c.l.b16 %v383
  %v448 = vunpack.c.l.b16 %v384
  %v449 = vunpack.c.l.b16 %v385
  %v450 = vunpack.c.l.b16 %v386
  %v451 = vunpack.c.l.b16 %v387
  %v452 = vunpack.c.l.b16 %v388
  %v453 = vunpack.c.l.b16 %v389
  %v454 = vunpack.c.l.b16 %v390
  %v455 = vunpack.c.l.b16 %v391
  %v456 = vunpack.c.l.b16 %v392
  %v457 = vunpack.c.l.b16 %v393
  %v458 = vunpack.c.l.b16 %v394
  %v459 = vunpack.c.l.b16 %v395
  %v460 = vunpack.c.l.b16 %v396
  %v461 = vunpack.c.l.b16 %v397
  %v462 = vunpack.c.l.b16 %v398
  %v463 = vunpack.c.l.b16 %v399
  %v464 = vunpack.c.l.b16 %v400
  %v465 = vunpack.c.l.b16 %v401
  %v466 = vunpack.c.l.b16 %v402
  %v467 = vunpack.c.l.b16 %v403
  %v468 = vunpack.c.l.b16 %v404
  %v469 = vunpack.c.l.b16 %v405
  %v470 = vunpack.c.l.b16 %v406
  %v471 = vunpack.c.l.b16 %v407
  %v472 = vpack.c.b16 %v441, %v440
  %v473 = vpack.c.b16 %v443, %v442
  %v474 = vpack.c.b16 %v445, %v444
  %v475 = vpack.c.b16 %v447, %v446
  %v476 = vpack.c.b16 %v449, %v448
  %v477 = vpack.c.b16 %v451, %v450
  %v478 = vpack.c.b16 %v453, %v452
  %v479 = vpack.c.b16 %v455, %v454
  %v480 = vpack.c.b16 %v457, %v456
  %v481 = vpack.c.b16 %v459, %v458
  %v482 = vpack.c.b16 %v461, %v460
  %v483 = vpack.c.b16 %v463, %v462
  %v484 = vpack.c.b16 %v465, %v464
  %v485 = vpack.c.b16 %v467, %v466
  %v486 = vpack.c.b16 %v469, %v468
  %v487 = vpack.c.b16 %v471, %v470
  %504 = vmatpush.bf16.msra.mxu0 %v479
  %505 = vmatpush.bf16.msra.mxu0 %v478
  %506 = vmatpush.bf16.msra.mxu0 %v477
  %507 = vmatpush.bf16.msra.mxu0 %v476
  %508 = vmatpush.bf16.msra.mxu0 %v475
  %509 = vmatpush.bf16.msra.mxu0 %v474
  %510 = vmatpush.bf16.msra.mxu0 %v473
  %511 = vmatpush.bf16.msra.mxu0 %v472
  %512 = vmatmul.bf16.gmra.mxu0 %v312
  %v513 = vpop.f32.mrf.mxu0
  %v514 = vadd.f32 0.0, %v513
  %v515 = vpop.f32.mrf.mxu0
  %v516 = vadd.f32 0.0, %v515
  %517 = vmatmul.bf16.gmra.mxu0 %v314
  %v518 = vpop.f32.mrf.mxu0
  %v519 = vadd.f32 0.0, %v518
  %v520 = vpop.f32.mrf.mxu0
  %v521 = vadd.f32 0.0, %v520
  %522 = vmatmul.bf16.gmra.mxu0 %v316
  %v523 = vpop.f32.mrf.mxu0
  %v524 = vadd.f32 0.0, %v523
  %v525 = vpop.f32.mrf.mxu0
  %v526 = vadd.f32 0.0, %v525
  %527 = vmatmul.bf16.gmra.mxu0 %v318
  %v528 = vpop.f32.mrf.mxu0
  %v529 = vadd.f32 0.0, %v528
  %v530 = vpop.f32.mrf.mxu0
  %v531 = vadd.f32 0.0, %v530
  %532 = vmatmul.bf16.gmra.mxu0 %v320
  %v533 = vpop.f32.mrf.mxu0
  %v534 = vadd.f32 0.0, %v533
  %v535 = vpop.f32.mrf.mxu0
  %v536 = vadd.f32 0.0, %v535
  %537 = vmatmul.bf16.gmra.mxu0 %v322
  %v538 = vpop.f32.mrf.mxu0
  %v539 = vadd.f32 0.0, %v538
  %v540 = vpop.f32.mrf.mxu0
  %v541 = vadd.f32 0.0, %v540
  %542 = vmatmul.bf16.gmra.mxu0 %v324
  %v543 = vpop.f32.mrf.mxu0
  %v544 = vadd.f32 0.0, %v543
  %v545 = vpop.f32.mrf.mxu0
  %v546 = vadd.f32 0.0, %v545
  %547 = vmatmul.bf16.gmra.mxu0 %v326
  %v548 = vpop.f32.mrf.mxu0
  %v549 = vadd.f32 0.0, %v548
  %v550 = vpop.f32.mrf.mxu0
  %v551 = vadd.f32 0.0, %v550
  %552 = vmatmul.bf16.gmra.mxu0 %v328
  %v553 = vpop.f32.mrf.mxu0
  %v554 = vadd.f32 0.0, %v553
  %v555 = vpop.f32.mrf.mxu0
  %v556 = vadd.f32 0.0, %v555
  %557 = vmatmul.bf16.gmra.mxu0 %v330
  %v558 = vpop.f32.mrf.mxu0
  %v559 = vadd.f32 0.0, %v558
  %v560 = vpop.f32.mrf.mxu0
  %v561 = vadd.f32 0.0, %v560
  %562 = vmatmul.bf16.gmra.mxu0 %v332
  %v563 = vpop.f32.mrf.mxu0
  %v564 = vadd.f32 0.0, %v563
  %v565 = vpop.f32.mrf.mxu0
  %v566 = vadd.f32 0.0, %v565
  %567 = vmatmul.bf16.gmra.mxu0 %v334
  %v568 = vpop.f32.mrf.mxu0
  %v569 = vadd.f32 0.0, %v568
  %v570 = vpop.f32.mrf.mxu0
  %v571 = vadd.f32 0.0, %v570
  %572 = vmatmul.bf16.gmra.mxu0 %v336
  %v573 = vpop.f32.mrf.mxu0
  %v574 = vadd.f32 0.0, %v573
  %v575 = vpop.f32.mrf.mxu0
  %v576 = vadd.f32 0.0, %v575
  %577 = vmatmul.bf16.gmra.mxu0 %v338
  %v578 = vpop.f32.mrf.mxu0
  %v579 = vadd.f32 0.0, %v578
  %v580 = vpop.f32.mrf.mxu0
  %v581 = vadd.f32 0.0, %v580
  %582 = vmatmul.bf16.gmra.mxu0 %v340
  %v583 = vpop.f32.mrf.mxu0
  %v584 = vadd.f32 0.0, %v583
  %v585 = vpop.f32.mrf.mxu0
  %v586 = vadd.f32 0.0, %v585
  %587 = vmatmul.bf16.gmra.mxu0 %v342
  %v588 = vpop.f32.mrf.mxu0
  %v589 = vadd.f32 0.0, %v588
  %v590 = vpop.f32.mrf.mxu0
  %v591 = vadd.f32 0.0, %v590
  %592 = vdwg.mxu0
  %593 = vmatpush.bf16.msra.mxu0 %v487
  %594 = vmatpush.bf16.msra.mxu0 %v486
  %595 = vmatpush.bf16.msra.mxu0 %v485
  %596 = vmatpush.bf16.msra.mxu0 %v484
  %597 = vmatpush.bf16.msra.mxu0 %v483
  %598 = vmatpush.bf16.msra.mxu0 %v482
  %599 = vmatpush.bf16.msra.mxu0 %v481
  %600 = vmatpush.bf16.msra.mxu0 %v480
  %601 = vmatmul.bf16.gmra.mxu0 %v313
  %v602 = vpop.f32.mrf.mxu0
  %v603 = vadd.f32 %v514, %v602
  %v604 = vpop.f32.mrf.mxu0
  %v605 = vadd.f32 %v516, %v604
  %606 = vmatmul.bf16.gmra.mxu0 %v315
  %v607 = vpop.f32.mrf.mxu0
  %v608 = vadd.f32 %v519, %v607
  %v609 = vpop.f32.mrf.mxu0
  %v610 = vadd.f32 %v521, %v609
  %611 = vmatmul.bf16.gmra.mxu0 %v317
  %v612 = vpop.f32.mrf.mxu0
  %v613 = vadd.f32 %v524, %v612
  %v614 = vpop.f32.mrf.mxu0
  %v615 = vadd.f32 %v526, %v614
  %616 = vmatmul.bf16.gmra.mxu0 %v319
  %v617 = vpop.f32.mrf.mxu0
  %v618 = vadd.f32 %v529, %v617
  %v619 = vpop.f32.mrf.mxu0
  %v620 = vadd.f32 %v531, %v619
  %621 = vmatmul.bf16.gmra.mxu0 %v321
  %v622 = vpop.f32.mrf.mxu0
  %v623 = vadd.f32 %v534, %v622
  %v624 = vpop.f32.mrf.mxu0
  %v625 = vadd.f32 %v536, %v624
  %626 = vmatmul.bf16.gmra.mxu0 %v323
  %v627 = vpop.f32.mrf.mxu0
  %v628 = vadd.f32 %v539, %v627
  %v629 = vpop.f32.mrf.mxu0
  %v630 = vadd.f32 %v541, %v629
  %631 = vmatmul.bf16.gmra.mxu0 %v325
  %v632 = vpop.f32.mrf.mxu0
  %v633 = vadd.f32 %v544, %v632
  %v634 = vpop.f32.mrf.mxu0
  %v635 = vadd.f32 %v546, %v634
  %636 = vmatmul.bf16.gmra.mxu0 %v327
  %v637 = vpop.f32.mrf.mxu0
  %v638 = vadd.f32 %v549, %v637
  %v639 = vpop.f32.mrf.mxu0
  %v640 = vadd.f32 %v551, %v639
  %641 = vmatmul.bf16.gmra.mxu0 %v329
  %v642 = vpop.f32.mrf.mxu0
  %v643 = vadd.f32 %v554, %v642
  %v644 = vpop.f32.mrf.mxu0
  %v645 = vadd.f32 %v556, %v644
  %646 = vmatmul.bf16.gmra.mxu0 %v331
  %v647 = vpop.f32.mrf.mxu0
  %v648 = vadd.f32 %v559, %v647
  %v649 = vpop.f32.mrf.mxu0
  %v650 = vadd.f32 %v561, %v649
  %651 = vmatmul.bf16.gmra.mxu0 %v333
  %v652 = vpop.f32.mrf.mxu0
  %v653 = vadd.f32 %v564, %v652
  %v654 = vpop.f32.mrf.mxu0
  %v655 = vadd.f32 %v566, %v654
  %656 = vmatmul.bf16.gmra.mxu0 %v335
  %v657 = vpop.f32.mrf.mxu0
  %v658 = vadd.f32 %v569, %v657
  %v659 = vpop.f32.mrf.mxu0
  %v660 = vadd.f32 %v571, %v659
  %661 = vmatmul.bf16.gmra.mxu0 %v337
  %v662 = vpop.f32.mrf.mxu0
  %v663 = vadd.f32 %v574, %v662
  %v664 = vpop.f32.mrf.mxu0
  %v665 = vadd.f32 %v576, %v664
  %666 = vmatmul.bf16.gmra.mxu0 %v339
  %v667 = vpop.f32.mrf.mxu0
  %v668 = vadd.f32 %v579, %v667
  %v669 = vpop.f32.mrf.mxu0
  %v670 = vadd.f32 %v581, %v669
  %671 = vmatmul.bf16.gmra.mxu0 %v341
  %v672 = vpop.f32.mrf.mxu0
  %v673 = vadd.f32 %v584, %v672
  %v674 = vpop.f32.mrf.mxu0
  %v675 = vadd.f32 %v586, %v674
  %676 = vmatmul.bf16.gmra.mxu0 %v343
  %v677 = vpop.f32.mrf.mxu0
  %v678 = vadd.f32 %v589, %v677
  %v679 = vpop.f32.mrf.mxu0
  %v680 = vadd.f32 %v591, %v679
  %681 = vdwg.mxu0
  %v682 = vadd.f32 %v344, %v603
  %v683 = vadd.f32 %v345, %v605
  %v684 = vadd.f32 %v346, %v608
  %v685 = vadd.f32 %v347, %v610
  %v686 = vadd.f32 %v348, %v613
  %v687 = vadd.f32 %v349, %v615
  %v688 = vadd.f32 %v350, %v618
  %v689 = vadd.f32 %v351, %v620
  %v690 = vadd.f32 %v352, %v623
  %v691 = vadd.f32 %v353, %v625
  %v692 = vadd.f32 %v354, %v628
  %v693 = vadd.f32 %v355, %v630
  %v694 = vadd.f32 %v356, %v633
  %v695 = vadd.f32 %v357, %v635
  %v696 = vadd.f32 %v358, %v638
  %v697 = vadd.f32 %v359, %v640
  %v698 = vadd.f32 %v360, %v643
  %v699 = vadd.f32 %v361, %v645
  %v700 = vadd.f32 %v362, %v648
  %v701 = vadd.f32 %v363, %v650
  %v702 = vadd.f32 %v364, %v653
  %v703 = vadd.f32 %v365, %v655
  %v704 = vadd.f32 %v366, %v658
  %v705 = vadd.f32 %v367, %v660
  %v706 = vadd.f32 %v368, %v663
  %v707 = vadd.f32 %v369, %v665
  %v708 = vadd.f32 %v370, %v668
  %v709 = vadd.f32 %v371, %v670
  %v710 = vadd.f32 %v372, %v673
  %v711 = vadd.f32 %v373, %v675
  %v712 = vadd.f32 %v374, %v678
  %v713 = vadd.f32 %v375, %v680
  %714 = vst [vmem:[#allocation2] sm:$0xff] %v682
  %715 = vst [vmem:[#allocation2 + $0x8] sm:$0xff] %v683
  %716 = vst [vmem:[#allocation2 + $0x10] sm:$0xff] %v684
  %717 = vst [vmem:[#allocation2 + $0x18] sm:$0xff] %v685
  %718 = vst [vmem:[#allocation2 + $0x20] sm:$0xff] %v686
  %719 = vst [vmem:[#allocation2 + $0x28] sm:$0xff] %v687
  %720 = vst [vmem:[#allocation2 + $0x30] sm:$0xff] %v688
  %721 = vst [vmem:[#allocation2 + $0x38] sm:$0xff] %v689
  %722 = vst [vmem:[#allocation2 + $0x40] sm:$0xff] %v690
  %723 = vst [vmem:[#allocation2 + $0x48] sm:$0xff] %v691
  %724 = vst [vmem:[#allocation2 + $0x50] sm:$0xff] %v692
  %725 = vst [vmem:[#allocation2 + $0x58] sm:$0xff] %v693
  %726 = vst [vmem:[#allocation2 + $0x60] sm:$0xff] %v694
  %727 = vst [vmem:[#allocation2 + $0x68] sm:$0xff] %v695
  %728 = vst [vmem:[#allocation2 + $0x70] sm:$0xff] %v696
  %729 = vst [vmem:[#allocation2 + $0x78] sm:$0xff] %v697
  %730 = vst [vmem:[#allocation2 + $0x80] sm:$0xff] %v698
  %731 = vst [vmem:[#allocation2 + $0x88] sm:$0xff] %v699
  %732 = vst [vmem:[#allocation2 + $0x90] sm:$0xff] %v700
  %733 = vst [vmem:[#allocation2 + $0x98] sm:$0xff] %v701
  %734 = vst [vmem:[#allocation2 + $0xa0] sm:$0xff] %v702
  %735 = vst [vmem:[#allocation2 + $0xa8] sm:$0xff] %v703
  %736 = vst [vmem:[#allocation2 + $0xb0] sm:$0xff] %v704
  %737 = vst [vmem:[#allocation2 + $0xb8] sm:$0xff] %v705
  %738 = vst [vmem:[#allocation2 + $0xc0] sm:$0xff] %v706
  %739 = vst [vmem:[#allocation2 + $0xc8] sm:$0xff] %v707
  %740 = vst [vmem:[#allocation2 + $0xd0] sm:$0xff] %v708
  %741 = vst [vmem:[#allocation2 + $0xd8] sm:$0xff] %v709
  %742 = vst [vmem:[#allocation2 + $0xe0] sm:$0xff] %v710
  %743 = vst [vmem:[#allocation2 + $0xe8] sm:$0xff] %v711
  %744 = vst [vmem:[#allocation2 + $0xf0] sm:$0xff] %v712
  %745 = vst [vmem:[#allocation2 + $0xf8] sm:$0xff] %v713
  // Predicated region
  $region26: #{heco_forward.7} parent=0 // pred_check
    %p746 = pneg %p20
  $region27: #{heco_forward.7} parent=0 // pred_check_branch
    %748 = sbr.rel (%p746) target = $region29
  $region28: #{heco_forward.7} parent=0 // pred_region
    %v749 = vld [vmem:[#allocation2] sm:$0xff]
    %v750 = vld [vmem:[#allocation2 + $0x8] sm:$0xff]
    %v751 = vld [vmem:[#allocation2 + $0x10] sm:$0xff]
    %v752 = vld [vmem:[#allocation2 + $0x18] sm:$0xff]
    %v753 = vld [vmem:[#allocation2 + $0x20] sm:$0xff]
    %v754 = vld [vmem:[#allocation2 + $0x28] sm:$0xff]
    %v755 = vld [vmem:[#allocation2 + $0x30] sm:$0xff]
    %v756 = vld [vmem:[#allocation2 + $0x38] sm:$0xff]
    %v757 = vld [vmem:[#allocation2 + $0x40] sm:$0xff]
    %v758 = vld [vmem:[#allocation2 + $0x48] sm:$0xff]
    %v759 = vld [vmem:[#allocation2 + $0x50] sm:$0xff]
    %v760 = vld [vmem:[#allocation2 + $0x58] sm:$0xff]
    %v761 = vld [vmem:[#allocation2 + $0x60] sm:$0xff]
    %v762 = vld [vmem:[#allocation2 + $0x68] sm:$0xff]
    %v763 = vld [vmem:[#allocation2 + $0x70] sm:$0xff]
    %v764 = vld [vmem:[#allocation2 + $0x78] sm:$0xff]
    %v765 = vld [vmem:[#allocation2 + $0x80] sm:$0xff]
    %v766 = vld [vmem:[#allocation2 + $0x88] sm:$0xff]
    %v767 = vld [vmem:[#allocation2 + $0x90] sm:$0xff]
    %v768 = vld [vmem:[#allocation2 + $0x98] sm:$0xff]
    %v769 = vld [vmem:[#allocation2 + $0xa0] sm:$0xff]
    %v770 = vld [vmem:[#allocation2 + $0xa8] sm:$0xff]
    %v771 = vld [vmem:[#allocation2 + $0xb0] sm:$0xff]
    %v772 = vld [vmem:[#allocation2 + $0xb8] sm:$0xff]
    %v773 = vld [vmem:[#allocation2 + $0xc0] sm:$0xff]
    %v774 = vld [vmem:[#allocation2 + $0xc8] sm:$0xff]
    %v775 = vld [vmem:[#allocation2 + $0xd0] sm:$0xff]
    %v776 = vld [vmem:[#allocation2 + $0xd8] sm:$0xff]
    %v777 = vld [vmem:[#allocation2 + $0xe0] sm:$0xff]
    %v778 = vld [vmem:[#allocation2 + $0xe8] sm:$0xff]
    %v779 = vld [vmem:[#allocation2 + $0xf0] sm:$0xff]
    %v780 = vld [vmem:[#allocation2 + $0xf8] sm:$0xff]
    %v781 = vpack.c.bf16 %v750, %v749
    %v782 = vpack.c.bf16 %v752, %v751
    %v783 = vpack.c.bf16 %v754, %v753
    %v784 = vpack.c.bf16 %v756, %v755
    %v785 = vpack.c.bf16 %v758, %v757
    %v786 = vpack.c.bf16 %v760, %v759
    %v787 = vpack.c.bf16 %v762, %v761
    %v788 = vpack.c.bf16 %v764, %v763
    %v789 = vpack.c.bf16 %v766, %v765
    %v790 = vpack.c.bf16 %v768, %v767
    %v791 = vpack.c.bf16 %v770, %v769
    %v792 = vpack.c.bf16 %v772, %v771
    %v793 = vpack.c.bf16 %v774, %v773
    %v794 = vpack.c.bf16 %v776, %v775
    %v795 = vpack.c.bf16 %v778, %v777
    %v796 = vpack.c.bf16 %v780, %v779
    %v797 = vld [vmem:[%s3] sm:$0xf]
    %v798 = vld [vmem:[%s3 + $0x4] sm:$0xf]
    %v799 = vld [vmem:[%s3 + $0x8] sm:$0xf]
    %v800 = vld [vmem:[%s3 + $0xc] sm:$0xf]
    %v801 = vld [vmem:[%s3 + $0x10] sm:$0xf]
    %v802 = vld [vmem:[%s3 + $0x14] sm:$0xf]
    %v803 = vld [vmem:[%s3 + $0x18] sm:$0xf]
    %v804 = vld [vmem:[%s3 + $0x1c] sm:$0xf]
    %v805 = vld [vmem:[%s3 + $0x20] sm:$0xf]
    %v806 = vld [vmem:[%s3 + $0x24] sm:$0xf]
    %v807 = vld [vmem:[%s3 + $0x28] sm:$0xf]
    %v808 = vld [vmem:[%s3 + $0x2c] sm:$0xf]
    %v809 = vld [vmem:[%s3 + $0x30] sm:$0xf]
    %v810 = vld [vmem:[%s3 + $0x34] sm:$0xf]
    %v811 = vld [vmem:[%s3 + $0x38] sm:$0xf]
    %v812 = vld [vmem:[%s3 + $0x3c] sm:$0xf]
    %v813 = vld [vmem:[%s4] sm:$0x1]
    %v815 = vperm.slane %v813, 0
    %v833 = vunpack.c.l.b16 %v797
    %v834 = vunpack.c.l.b16 %v798
    %v835 = vunpack.c.l.b16 %v799
    %v836 = vunpack.c.l.b16 %v800
    %v837 = vunpack.c.l.b16 %v801
    %v838 = vunpack.c.l.b16 %v802
    %v839 = vunpack.c.l.b16 %v803
    %v840 = vunpack.c.l.b16 %v804
    %v841 = vunpack.c.l.b16 %v805
    %v842 = vunpack.c.l.b16 %v806
    %v843 = vunpack.c.l.b16 %v807
    %v844 = vunpack.c.l.b16 %v808
    %v845 = vunpack.c.l.b16 %v809
    %v846 = vunpack.c.l.b16 %v810
    %v847 = vunpack.c.l.b16 %v811
    %v848 = vunpack.c.l.b16 %v812
    %v849 = vpack.c.b16 %v834, %v833
    %v850 = vpack.c.b16 %v836, %v835
    %v851 = vpack.c.b16 %v838, %v837
    %v852 = vpack.c.b16 %v840, %v839
    %v853 = vpack.c.b16 %v842, %v841
    %v854 = vpack.c.b16 %v844, %v843
    %v855 = vpack.c.b16 %v846, %v845
    %v856 = vpack.c.b16 %v848, %v847
    %865 = vmatpush.bf16.msra.mxu0 %v856
    %866 = vmatpush.bf16.msra.mxu0 %v855
    %867 = vmatpush.bf16.msra.mxu0 %v854
    %868 = vmatpush.bf16.msra.mxu0 %v853
    %869 = vmatpush.bf16.msra.mxu0 %v852
    %870 = vmatpush.bf16.msra.mxu0 %v851
    %871 = vmatpush.bf16.msra.mxu0 %v850
    %872 = vmatpush.bf16.msra.mxu0 %v849
    %873 = vmatmul.bf16.gmra.mxu0 %v781
    %v874 = vpop.f32.mrf.mxu0
    %v875 = vadd.f32 %v815, %v874
    %v876 = vpop.f32.mrf.mxu0
    %v877 = vadd.f32 %v815, %v876
    %878 = vmatmul.bf16.gmra.mxu0 %v782
    %v879 = vpop.f32.mrf.mxu0
    %v880 = vadd.f32 %v815, %v879
    %v881 = vpop.f32.mrf.mxu0
    %v882 = vadd.f32 %v815, %v881
    %883 = vmatmul.bf16.gmra.mxu0 %v783
    %v884 = vpop.f32.mrf.mxu0
    %v885 = vadd.f32 %v815, %v884
    %v886 = vpop.f32.mrf.mxu0
    %v887 = vadd.f32 %v815, %v886
    %888 = vmatmul.bf16.gmra.mxu0 %v784
    %v889 = vpop.f32.mrf.mxu0
    %v890 = vadd.f32 %v815, %v889
    %v891 = vpop.f32.mrf.mxu0
    %v892 = vadd.f32 %v815, %v891
    %893 = vmatmul.bf16.gmra.mxu0 %v785
    %v894 = vpop.f32.mrf.mxu0
    %v895 = vadd.f32 %v815, %v894
    %v896 = vpop.f32.mrf.mxu0
    %v897 = vadd.f32 %v815, %v896
    %898 = vmatmul.bf16.gmra.mxu0 %v786
    %v899 = vpop.f32.mrf.mxu0
    %v900 = vadd.f32 %v815, %v899
    %v901 = vpop.f32.mrf.mxu0
    %v902 = vadd.f32 %v815, %v901
    %903 = vmatmul.bf16.gmra.mxu0 %v787
    %v904 = vpop.f32.mrf.mxu0
    %v905 = vadd.f32 %v815, %v904
    %v906 = vpop.f32.mrf.mxu0
    %v907 = vadd.f32 %v815, %v906
    %908 = vmatmul.bf16.gmra.mxu0 %v788
    %v909 = vpop.f32.mrf.mxu0
    %v910 = vadd.f32 %v815, %v909
    %v911 = vpop.f32.mrf.mxu0
    %v912 = vadd.f32 %v815, %v911
    %913 = vmatmul.bf16.gmra.mxu0 %v789
    %v914 = vpop.f32.mrf.mxu0
    %v915 = vadd.f32 %v815, %v914
    %v916 = vpop.f32.mrf.mxu0
    %v917 = vadd.f32 %v815, %v916
    %918 = vmatmul.bf16.gmra.mxu0 %v790
    %v919 = vpop.f32.mrf.mxu0
    %v920 = vadd.f32 %v815, %v919
    %v921 = vpop.f32.mrf.mxu0
    %v922 = vadd.f32 %v815, %v921
    %923 = vmatmul.bf16.gmra.mxu0 %v791
    %v924 = vpop.f32.mrf.mxu0
    %v925 = vadd.f32 %v815, %v924
    %v926 = vpop.f32.mrf.mxu0
    %v927 = vadd.f32 %v815, %v926
    %928 = vmatmul.bf16.gmra.mxu0 %v792
    %v929 = vpop.f32.mrf.mxu0
    %v930 = vadd.f32 %v815, %v929
    %v931 = vpop.f32.mrf.mxu0
    %v932 = vadd.f32 %v815, %v931
    %933 = vmatmul.bf16.gmra.mxu0 %v793
    %v934 = vpop.f32.mrf.mxu0
    %v935 = vadd.f32 %v815, %v934
    %v936 = vpop.f32.mrf.mxu0
    %v937 = vadd.f32 %v815, %v936
    %938 = vmatmul.bf16.gmra.mxu0 %v794
    %v939 = vpop.f32.mrf.mxu0
    %v940 = vadd.f32 %v815, %v939
    %v941 = vpop.f32.mrf.mxu0
    %v942 = vadd.f32 %v815, %v941
    %943 = vmatmul.bf16.gmra.mxu0 %v795
    %v944 = vpop.f32.mrf.mxu0
    %v945 = vadd.f32 %v815, %v944
    %v946 = vpop.f32.mrf.mxu0
    %v947 = vadd.f32 %v815, %v946
    %948 = vmatmul.bf16.gmra.mxu0 %v796
    %v949 = vpop.f32.mrf.mxu0
    %v950 = vadd.f32 %v815, %v949
    %v951 = vpop.f32.mrf.mxu0
    %v952 = vadd.f32 %v815, %v951
    %953 = vdwg.mxu0
    %vm954 = vcmp.gt.f32.partialorder %v875, 0.0
    %vm955 = vcmp.gt.f32.partialorder %v877, 0.0
    %vm956 = vcmp.gt.f32.partialorder %v880, 0.0
    %vm957 = vcmp.gt.f32.partialorder %v882, 0.0
    %vm958 = vcmp.gt.f32.partialorder %v885, 0.0
    %vm959 = vcmp.gt.f32.partialorder %v887, 0.0
    %vm960 = vcmp.gt.f32.partialorder %v890, 0.0
    %vm961 = vcmp.gt.f32.partialorder %v892, 0.0
    %vm962 = vcmp.gt.f32.partialorder %v895, 0.0
    %vm963 = vcmp.gt.f32.partialorder %v897, 0.0
    %vm964 = vcmp.gt.f32.partialorder %v900, 0.0
    %vm965 = vcmp.gt.f32.partialorder %v902, 0.0
    %vm966 = vcmp.gt.f32.partialorder %v905, 0.0
    %vm967 = vcmp.gt.f32.partialorder %v907, 0.0
    %vm968 = vcmp.gt.f32.partialorder %v910, 0.0
    %vm969 = vcmp.gt.f32.partialorder %v912, 0.0
    %vm970 = vcmp.gt.f32.partialorder %v915, 0.0
    %vm971 = vcmp.gt.f32.partialorder %v917, 0.0
    %vm972 = vcmp.gt.f32.partialorder %v920, 0.0
    %vm973 = vcmp.gt.f32.partialorder %v922, 0.0
    %vm974 = vcmp.gt.f32.partialorder %v925, 0.0
    %vm975 = vcmp.gt.f32.partialorder %v927, 0.0
    %vm976 = vcmp.gt.f32.partialorder %v930, 0.0
    %vm977 = vcmp.gt.f32.partialorder %v932, 0.0
    %vm978 = vcmp.gt.f32.partialorder %v935, 0.0
    %vm979 = vcmp.gt.f32.partialorder %v937, 0.0
    %vm980 = vcmp.gt.f32.partialorder %v940, 0.0
    %vm981 = vcmp.gt.f32.partialorder %v942, 0.0
    %vm982 = vcmp.gt.f32.partialorder %v945, 0.0
    %vm983 = vcmp.gt.f32.partialorder %v947, 0.0
    %vm984 = vcmp.gt.f32.partialorder %v950, 0.0
    %vm985 = vcmp.gt.f32.partialorder %v952, 0.0
    %v986 = vmin.f32 %v875, 0.0
    %v987 = vmin.f32 %v877, 0.0
    %v988 = vmin.f32 %v880, 0.0
    %v989 = vmin.f32 %v882, 0.0
    %v990 = vmin.f32 %v885, 0.0
    %v991 = vmin.f32 %v887, 0.0
    %v992 = vmin.f32 %v890, 0.0
    %v993 = vmin.f32 %v892, 0.0
    %v994 = vmin.f32 %v895, 0.0
    %v995 = vmin.f32 %v897, 0.0
    %v996 = vmin.f32 %v900, 0.0
    %v997 = vmin.f32 %v902, 0.0
    %v998 = vmin.f32 %v905, 0.0
    %v999 = vmin.f32 %v907, 0.0
    %v1000 = vmin.f32 %v910, 0.0
    %v1001 = vmin.f32 %v912, 0.0
    %v1002 = vmin.f32 %v915, 0.0
    %v1003 = vmin.f32 %v917, 0.0
    %v1004 = vmin.f32 %v920, 0.0
    %v1005 = vmin.f32 %v922, 0.0
    %v1006 = vmin.f32 %v925, 0.0
    %v1007 = vmin.f32 %v927, 0.0
    %v1008 = vmin.f32 %v930, 0.0
    %v1009 = vmin.f32 %v932, 0.0
    %v1010 = vmin.f32 %v935, 0.0
    %v1011 = vmin.f32 %v937, 0.0
    %v1012 = vmin.f32 %v940, 0.0
    %v1013 = vmin.f32 %v942, 0.0
    %v1014 = vmin.f32 %v945, 0.0
    %v1015 = vmin.f32 %v947, 0.0
    %v1016 = vmin.f32 %v950, 0.0
    %v1017 = vmin.f32 %v952, 0.0
    %v1018 = vmul.f32 %v986, 1.442695
    %v1019 = vpow.pop %v1018
    %v1020 = vmul.f32 %v987, 1.442695
    %v1021 = vpow.pop %v1020
    %v1022 = vmul.f32 %v988, 1.442695
    %v1023 = vpow.pop %v1022
    %v1024 = vmul.f32 %v989, 1.442695
    %v1025 = vpow.pop %v1024
    %v1026 = vmul.f32 %v990, 1.442695
    %v1027 = vpow.pop %v1026
    %v1028 = vmul.f32 %v991, 1.442695
    %v1029 = vpow.pop %v1028
    %v1030 = vmul.f32 %v992, 1.442695
    %v1031 = vpow.pop %v1030
    %v1032 = vmul.f32 %v993, 1.442695
    %v1033 = vpow.pop %v1032
    %v1034 = vmul.f32 %v994, 1.442695
    %v1035 = vpow.pop %v1034
    %v1036 = vmul.f32 %v995, 1.442695
    %v1037 = vpow.pop %v1036
    %v1038 = vmul.f32 %v996, 1.442695
    %v1039 = vpow.pop %v1038
    %v1040 = vmul.f32 %v997, 1.442695
    %v1041 = vpow.pop %v1040
    %v1042 = vmul.f32 %v998, 1.442695
    %v1043 = vpow.pop %v1042
    %v1044 = vmul.f32 %v999, 1.442695
    %v1045 = vpow.pop %v1044
    %v1046 = vmul.f32 %v1000, 1.442695
    %v1047 = vpow.pop %v1046
    %v1048 = vmul.f32 %v1001, 1.442695
    %v1049 = vpow.pop %v1048
    %v1050 = vmul.f32 %v1002, 1.442695
    %v1051 = vpow.pop %v1050
    %v1052 = vmul.f32 %v1003, 1.442695
    %v1053 = vpow.pop %v1052
    %v1054 = vmul.f32 %v1004, 1.442695
    %v1055 = vpow.pop %v1054
    %v1056 = vmul.f32 %v1005, 1.442695
    %v1057 = vpow.pop %v1056
    %v1058 = vmul.f32 %v1006, 1.442695
    %v1059 = vpow.pop %v1058
    %v1060 = vmul.f32 %v1007, 1.442695
    %v1061 = vpow.pop %v1060
    %v1062 = vmul.f32 %v1008, 1.442695
    %v1063 = vpow.pop %v1062
    %v1064 = vmul.f32 %v1009, 1.442695
    %v1065 = vpow.pop %v1064
    %v1066 = vmul.f32 %v1010, 1.442695
    %v1067 = vpow.pop %v1066
    %v1068 = vmul.f32 %v1011, 1.442695
    %v1069 = vpow.pop %v1068
    %v1070 = vmul.f32 %v1012, 1.442695
    %v1071 = vpow.pop %v1070
    %v1072 = vmul.f32 %v1013, 1.442695
    %v1073 = vpow.pop %v1072
    %v1074 = vmul.f32 %v1014, 1.442695
    %v1075 = vpow.pop %v1074
    %v1076 = vmul.f32 %v1015, 1.442695
    %v1077 = vpow.pop %v1076
    %v1078 = vmul.f32 %v1016, 1.442695
    %v1079 = vpow.pop %v1078
    %v1080 = vmul.f32 %v1017, 1.442695
    %v1081 = vpow.pop %v1080
    %v1082 = vsub.f32 %v1019, 1.0
    %v1083 = vsub.f32 %v1021, 1.0
    %v1084 = vsub.f32 %v1023, 1.0
    %v1085 = vsub.f32 %v1025, 1.0
    %v1086 = vsub.f32 %v1027, 1.0
    %v1087 = vsub.f32 %v1029, 1.0
    %v1088 = vsub.f32 %v1031, 1.0
    %v1089 = vsub.f32 %v1033, 1.0
    %v1090 = vsub.f32 %v1035, 1.0
    %v1091 = vsub.f32 %v1037, 1.0
    %v1092 = vsub.f32 %v1039, 1.0
    %v1093 = vsub.f32 %v1041, 1.0
    %v1094 = vsub.f32 %v1043, 1.0
    %v1095 = vsub.f32 %v1045, 1.0
    %v1096 = vsub.f32 %v1047, 1.0
    %v1097 = vsub.f32 %v1049, 1.0
    %v1098 = vsub.f32 %v1051, 1.0
    %v1099 = vsub.f32 %v1053, 1.0
    %v1100 = vsub.f32 %v1055, 1.0
    %v1101 = vsub.f32 %v1057, 1.0
    %v1102 = vsub.f32 %v1059, 1.0
    %v1103 = vsub.f32 %v1061, 1.0
    %v1104 = vsub.f32 %v1063, 1.0
    %v1105 = vsub.f32 %v1065, 1.0
    %v1106 = vsub.f32 %v1067, 1.0
    %v1107 = vsub.f32 %v1069, 1.0
    %v1108 = vsub.f32 %v1071, 1.0
    %v1109 = vsub.f32 %v1073, 1.0
    %v1110 = vsub.f32 %v1075, 1.0
    %v1111 = vsub.f32 %v1077, 1.0
    %v1112 = vsub.f32 %v1079, 1.0
    %v1113 = vsub.f32 %v1081, 1.0
    %v1114 = vsel %vm954, %v875, %v1082
    %v1115 = vsel %vm955, %v877, %v1083
    %v1116 = vsel %vm956, %v880, %v1084
    %v1117 = vsel %vm957, %v882, %v1085
    %v1118 = vsel %vm958, %v885, %v1086
    %v1119 = vsel %vm959, %v887, %v1087
    %v1120 = vsel %vm960, %v890, %v1088
    %v1121 = vsel %vm961, %v892, %v1089
    %v1122 = vsel %vm962, %v895, %v1090
    %v1123 = vsel %vm963, %v897, %v1091
    %v1124 = vsel %vm964, %v900, %v1092
    %v1125 = vsel %vm965, %v902, %v1093
    %v1126 = vsel %vm966, %v905, %v1094
    %v1127 = vsel %vm967, %v907, %v1095
    %v1128 = vsel %vm968, %v910, %v1096
    %v1129 = vsel %vm969, %v912, %v1097
    %v1130 = vsel %vm970, %v915, %v1098
    %v1131 = vsel %vm971, %v917, %v1099
    %v1132 = vsel %vm972, %v920, %v1100
    %v1133 = vsel %vm973, %v922, %v1101
    %v1134 = vsel %vm974, %v925, %v1102
    %v1135 = vsel %vm975, %v927, %v1103
    %v1136 = vsel %vm976, %v930, %v1104
    %v1137 = vsel %vm977, %v932, %v1105
    %v1138 = vsel %vm978, %v935, %v1106
    %v1139 = vsel %vm979, %v937, %v1107
    %v1140 = vsel %vm980, %v940, %v1108
    %v1141 = vsel %vm981, %v942, %v1109
    %v1142 = vsel %vm982, %v945, %v1110
    %v1143 = vsel %vm983, %v947, %v1111
    %v1144 = vsel %vm984, %v950, %v1112
    %v1145 = vsel %vm985, %v952, %v1113
    %v1146 = vpack.c.bf16 %v1114, %v1114
    %v1147 = vpack.c.bf16 %v1115, %v1115
    %v1148 = vpack.c.bf16 %v1116, %v1116
    %v1149 = vpack.c.bf16 %v1117, %v1117
    %v1150 = vpack.c.bf16 %v1118, %v1118
    %v1151 = vpack.c.bf16 %v1119, %v1119
    %v1152 = vpack.c.bf16 %v1120, %v1120
    %v1153 = vpack.c.bf16 %v1121, %v1121
    %v1154 = vpack.c.bf16 %v1122, %v1122
    %v1155 = vpack.c.bf16 %v1123, %v1123
    %v1156 = vpack.c.bf16 %v1124, %v1124
    %v1157 = vpack.c.bf16 %v1125, %v1125
    %v1158 = vpack.c.bf16 %v1126, %v1126
    %v1159 = vpack.c.bf16 %v1127, %v1127
    %v1160 = vpack.c.bf16 %v1128, %v1128
    %v1161 = vpack.c.bf16 %v1129, %v1129
    %v1162 = vpack.c.bf16 %v1130, %v1130
    %v1163 = vpack.c.bf16 %v1131, %v1131
    %v1164 = vpack.c.bf16 %v1132, %v1132
    %v1165 = vpack.c.bf16 %v1133, %v1133
    %v1166 = vpack.c.bf16 %v1134, %v1134
    %v1167 = vpack.c.bf16 %v1135, %v1135
    %v1168 = vpack.c.bf16 %v1136, %v1136
    %v1169 = vpack.c.bf16 %v1137, %v1137
    %v1170 = vpack.c.bf16 %v1138, %v1138
    %v1171 = vpack.c.bf16 %v1139, %v1139
    %v1172 = vpack.c.bf16 %v1140, %v1140
    %v1173 = vpack.c.bf16 %v1141, %v1141
    %v1174 = vpack.c.bf16 %v1142, %v1142
    %v1175 = vpack.c.bf16 %v1143, %v1143
    %v1176 = vpack.c.bf16 %v1144, %v1144
    %v1177 = vpack.c.bf16 %v1145, %v1145
    %1178 = vst [vmem:[%s5] sm:$0xf] %v1146
    %1179 = vst [vmem:[%s5 + $0x4] sm:$0xf] %v1147
    %1180 = vst [vmem:[%s5 + $0x8] sm:$0xf] %v1148
    %1181 = vst [vmem:[%s5 + $0xc] sm:$0xf] %v1149
    %1182 = vst [vmem:[%s5 + $0x10] sm:$0xf] %v1150
    %1183 = vst [vmem:[%s5 + $0x14] sm:$0xf] %v1151
    %1184 = vst [vmem:[%s5 + $0x18] sm:$0xf] %v1152
    %1185 = vst [vmem:[%s5 + $0x1c] sm:$0xf] %v1153
    %1186 = vst [vmem:[%s5 + $0x20] sm:$0xf] %v1154
    %1187 = vst [vmem:[%s5 + $0x24] sm:$0xf] %v1155
    %1188 = vst [vmem:[%s5 + $0x28] sm:$0xf] %v1156
    %1189 = vst [vmem:[%s5 + $0x2c] sm:$0xf] %v1157
    %1190 = vst [vmem:[%s5 + $0x30] sm:$0xf] %v1158
    %1191 = vst [vmem:[%s5 + $0x34] sm:$0xf] %v1159
    %1192 = vst [vmem:[%s5 + $0x38] sm:$0xf] %v1160
    %1193 = vst [vmem:[%s5 + $0x3c] sm:$0xf] %v1161
    %1194 = vst [vmem:[%s5 + $0x40] sm:$0xf] %v1162
    %1195 = vst [vmem:[%s5 + $0x44] sm:$0xf] %v1163
    %1196 = vst [vmem:[%s5 + $0x48] sm:$0xf] %v1164
    %1197 = vst [vmem:[%s5 + $0x4c] sm:$0xf] %v1165
    %1198 = vst [vmem:[%s5 + $0x50] sm:$0xf] %v1166
    %1199 = vst [vmem:[%s5 + $0x54] sm:$0xf] %v1167
    %1200 = vst [vmem:[%s5 + $0x58] sm:$0xf] %v1168
    %1201 = vst [vmem:[%s5 + $0x5c] sm:$0xf] %v1169
    %1202 = vst [vmem:[%s5 + $0x60] sm:$0xf] %v1170
    %1203 = vst [vmem:[%s5 + $0x64] sm:$0xf] %v1171
    %1204 = vst [vmem:[%s5 + $0x68] sm:$0xf] %v1172
    %1205 = vst [vmem:[%s5 + $0x6c] sm:$0xf] %v1173
    %1206 = vst [vmem:[%s5 + $0x70] sm:$0xf] %v1174
    %1207 = vst [vmem:[%s5 + $0x74] sm:$0xf] %v1175
    %1208 = vst [vmem:[%s5 + $0x78] sm:$0xf] %v1176
    %1209 = vst [vmem:[%s5 + $0x7c] sm:$0xf] %v1177
  $region29: #{heco_forward.7} parent=0 // pred_fallthru
    _
  // Predicated region
  $region30: #{heco_forward.7} parent=0 // pred_check
    _
  $region31: #{heco_forward.7} parent=0 // pred_check_branch
    %1211 = sbr.rel (0) target = $region33
  $region32: #{heco_forward.7} parent=0 // pred_region
    _
  $region33: #{heco_forward.7} parent=0 // pred_fallthru
    _
  // Predicated region
  $region34: #{heco_forward.7} parent=0 // pred_check
    _
  $region35: #{heco_forward.7} parent=0 // pred_check_branch
    %1213 = sbr.rel (0) target = $region37
  $region36: #{heco_forward.7} parent=0 // pred_region
    _
  $region37: #{heco_forward.7} parent=0 // pred_fallthru
    _

// kernel: heco_forward.10
$region0: #{heco_forward.10}
  #allocation0 [shape = 'u32[]', space=smem, size = 0x4, offset = 0x4, fixed_abs, tag = 'smem constant byte address 0x4 - core index']
  #allocation1 [shape = 'u32[72,128]{1,0:T(1,128)}', space=vmem, size = 0x9000, scoped, tag = 'internal scratch']
  %s0 = inlined_call_operand.vmem [shape: bf16[512,128], index: 0, kind: input, shape index: {}]
  %s1 = inlined_call_operand.vmem [shape: bf16[128,128], index: 1, kind: input, shape index: {}]
  %s2 = inlined_call_operand.vmem [shape: f32[1,128], index: 2, kind: input, shape index: {}]
  %s3 = inlined_call_operand.vmem [shape: bf16[128,128], index: 3, kind: input, shape index: {}]
  %s4 = inlined_call_operand.vmem [shape: f32[1,128], index: 4, kind: input, shape index: {}]
  %s5 = inlined_call_operand.vmem [shape: bf16[512,128], index: 5, kind: output, shape index: {}]
  %s6 = sld [smem:[#allocation0]]
  $region30: #{heco_forward.10} parent=0
    _
  %s8 = ssub.s32 1, %s6
  %s9 = scalar_select 0, %s8, %s6
  // Predicated region
  $region2: #{heco_forward.10} parent=0 // pred_check
    _
  $region3: #{heco_forward.10} parent=0 // pred_check_branch
    %11 = sbr.rel (0) target = $region5
  $region4: #{heco_forward.10} parent=0 // pred_region
    _
  $region5: #{heco_forward.10} parent=0 // pred_fallthru
    _
  // Predicated region
  $region6: #{heco_forward.10} parent=0 // pred_check
    _
  $region7: #{heco_forward.10} parent=0 // pred_check_branch
    %13 = sbr.rel (0) target = $region9
  $region8: #{heco_forward.10} parent=0 // pred_region
    _
  $region9: #{heco_forward.10} parent=0 // pred_fallthru
    _
  // Predicated region
  $region10: #{heco_forward.10} parent=0 // pred_check
    _
  $region11: #{heco_forward.10} parent=0 // pred_check_branch
    %15 = sbr.rel (0) target = $region13
  $region12: #{heco_forward.10} parent=0 // pred_region
    _
  $region13: #{heco_forward.10} parent=0 // pred_fallthru
    _
  // Predicated region
  $region14: #{heco_forward.10} parent=0 // pred_check
    _
  $region15: #{heco_forward.10} parent=0 // pred_check_branch
    %17 = sbr.rel (0) target = $region17
  $region16: #{heco_forward.10} parent=0 // pred_region
    _
  $region17: #{heco_forward.10} parent=0 // pred_fallthru
    _
  // Predicated region
  $region18: #{heco_forward.10} parent=0 // pred_check
    _
  $region19: #{heco_forward.10} parent=0 // pred_check_branch
    %19 = sbr.rel (0) target = $region21
  $region20: #{heco_forward.10} parent=0 // pred_region
    _
  $region21: #{heco_forward.10} parent=0 // pred_fallthru
    _
  %v20 = vld [vmem:[%s0] sm:$0xf]
  %v21 = vld [vmem:[%s0 + $0x4] sm:$0xf]
  %v22 = vld [vmem:[%s0 + $0x8] sm:$0xf]
  %v23 = vld [vmem:[%s0 + $0xc] sm:$0xf]
  %v24 = vld [vmem:[%s0 + $0x10] sm:$0xf]
  %v25 = vld [vmem:[%s0 + $0x14] sm:$0xf]
  %v26 = vld [vmem:[%s0 + $0x18] sm:$0xf]
  %v27 = vld [vmem:[%s0 + $0x1c] sm:$0xf]
  %v28 = vld [vmem:[%s0 + $0x20] sm:$0xf]
  %v29 = vld [vmem:[%s0 + $0x24] sm:$0xf]
  %v30 = vld [vmem:[%s0 + $0x28] sm:$0xf]
  %v31 = vld [vmem:[%s0 + $0x2c] sm:$0xf]
  %v32 = vld [vmem:[%s0 + $0x30] sm:$0xf]
  %v33 = vld [vmem:[%s0 + $0x34] sm:$0xf]
  %v34 = vld [vmem:[%s0 + $0x38] sm:$0xf]
  %v35 = vld [vmem:[%s0 + $0x3c] sm:$0xf]
  %v36 = vld [vmem:[%s0 + $0x40] sm:$0xf]
  %v37 = vld [vmem:[%s0 + $0x44] sm:$0xf]
  %v38 = vld [vmem:[%s0 + $0x48] sm:$0xf]
  %v39 = vld [vmem:[%s0 + $0x4c] sm:$0xf]
  %v40 = vld [vmem:[%s0 + $0x50] sm:$0xf]
  %v41 = vld [vmem:[%s0 + $0x54] sm:$0xf]
  %v42 = vld [vmem:[%s0 + $0x58] sm:$0xf]
  %v43 = vld [vmem:[%s0 + $0x5c] sm:$0xf]
  %v44 = vld [vmem:[%s0 + $0x60] sm:$0xf]
  %v45 = vld [vmem:[%s0 + $0x64] sm:$0xf]
  %v46 = vld [vmem:[%s0 + $0x68] sm:$0xf]
  %v47 = vld [vmem:[%s0 + $0x6c] sm:$0xf]
  %v48 = vld [vmem:[%s0 + $0x70] sm:$0xf]
  %v49 = vld [vmem:[%s0 + $0x74] sm:$0xf]
  %v50 = vld [vmem:[%s0 + $0x78] sm:$0xf]
  %v51 = vld [vmem:[%s0 + $0x7c] sm:$0xf]
  %v52 = vld [vmem:[%s0 + $0x80] sm:$0xf]
  %v53 = vld [vmem:[%s0 + $0x84] sm:$0xf]
  %v54 = vld [vmem:[%s0 + $0x88] sm:$0xf]
  %v55 = vld [vmem:[%s0 + $0x8c] sm:$0xf]
  %v56 = vld [vmem:[%s0 + $0x90] sm:$0xf]
  %v57 = vld [vmem:[%s0 + $0x94] sm:$0xf]
  %v58 = vld [vmem:[%s0 + $0x98] sm:$0xf]
  %v59 = vld [vmem:[%s0 + $0x9c] sm:$0xf]
  %v60 = vld [vmem:[%s0 + $0xa0] sm:$0xf]
  %v61 = vld [vmem:[%s0 + $0xa4] sm:$0xf]
  %v62 = vld [vmem:[%s0 + $0xa8] sm:$0xf]
  %v63 = vld [vmem:[%s0 + $0xac] sm:$0xf]
  %v64 = vld [vmem:[%s0 + $0xb0] sm:$0xf]
  %v65 = vld [vmem:[%s0 + $0xb4] sm:$0xf]
  %v66 = vld [vmem:[%s0 + $0xb8] sm:$0xf]
  %v67 = vld [vmem:[%s0 + $0xbc] sm:$0xf]
  %v68 = vld [vmem:[%s0 + $0xc0] sm:$0xf]
  %v69 = vld [vmem:[%s0 + $0xc4] sm:$0xf]
  %v70 = vld [vmem:[%s0 + $0xc8] sm:$0xf]
  %v71 = vld [vmem:[%s0 + $0xcc] sm:$0xf]
  %v72 = vld [vmem:[%s0 + $0xd0] sm:$0xf]
  %v73 = vld [vmem:[%s0 + $0xd4] sm:$0xf]
  %v74 = vld [vmem:[%s0 + $0xd8] sm:$0xf]
  %v75 = vld [vmem:[%s0 + $0xdc] sm:$0xf]
  %v76 = vld [vmem:[%s0 + $0xe0] sm:$0xf]
  %v77 = vld [vmem:[%s0 + $0xe4] sm:$0xf]
  %v78 = vld [vmem:[%s0 + $0xe8] sm:$0xf]
  %v79 = vld [vmem:[%s0 + $0xec] sm:$0xf]
  %v80 = vld [vmem:[%s0 + $0xf0] sm:$0xf]
  %v81 = vld [vmem:[%s0 + $0xf4] sm:$0xf]
  %v82 = vld [vmem:[%s0 + $0xf8] sm:$0xf]
  %v83 = vld [vmem:[%s0 + $0xfc] sm:$0xf]
  %v84 = vld [vmem:[%s1] sm:$0xf]
  %v85 = vld [vmem:[%s1 + $0x4] sm:$0xf]
  %v86 = vld [vmem:[%s1 + $0x8] sm:$0xf]
  %v87 = vld [vmem:[%s1 + $0xc] sm:$0xf]
  %v88 = vld [vmem:[%s1 + $0x10] sm:$0xf]
  %v89 = vld [vmem:[%s1 + $0x14] sm:$0xf]
  %v90 = vld [vmem:[%s1 + $0x18] sm:$0xf]
  %v91 = vld [vmem:[%s1 + $0x1c] sm:$0xf]
  %v92 = vld [vmem:[%s1 + $0x20] sm:$0xf]
  %v93 = vld [vmem:[%s1 + $0x24] sm:$0xf]
  %v94 = vld [vmem:[%s1 + $0x28] sm:$0xf]
  %v95 = vld [vmem:[%s1 + $0x2c] sm:$0xf]
  %v96 = vld [vmem:[%s1 + $0x30] sm:$0xf]
  %v97 = vld [vmem:[%s1 + $0x34] sm:$0xf]
  %v98 = vld [vmem:[%s1 + $0x38] sm:$0xf]
  %v99 = vld [vmem:[%s1 + $0x3c] sm:$0xf]
  %v100 = vld [vmem:[%s2] sm:$0x1]
  %v102 = vperm.slane %v100, 0
  %v168 = vunpack.c.l.b16 %v20
  %v169 = vunpack.c.l.b16 %v21
  %v170 = vunpack.c.l.b16 %v22
  %v171 = vunpack.c.l.b16 %v23
  %v172 = vunpack.c.l.b16 %v24
  %v173 = vunpack.c.l.b16 %v25
  %v174 = vunpack.c.l.b16 %v26
  %v175 = vunpack.c.l.b16 %v27
  %v176 = vunpack.c.l.b16 %v28
  %v177 = vunpack.c.l.b16 %v29
  %v178 = vunpack.c.l.b16 %v30
  %v179 = vunpack.c.l.b16 %v31
  %v180 = vunpack.c.l.b16 %v32
  %v181 = vunpack.c.l.b16 %v33
  %v182 = vunpack.c.l.b16 %v34
  %v183 = vunpack.c.l.b16 %v35
  %v184 = vunpack.c.l.b16 %v36
  %v185 = vunpack.c.l.b16 %v37
  %v186 = vunpack.c.l.b16 %v38
  %v187 = vunpack.c.l.b16 %v39
  %v188 = vunpack.c.l.b16 %v40
  %v189 = vunpack.c.l.b16 %v41
  %v190 = vunpack.c.l.b16 %v42
  %v191 = vunpack.c.l.b16 %v43
  %v192 = vunpack.c.l.b16 %v44
  %v193 = vunpack.c.l.b16 %v45
  %v194 = vunpack.c.l.b16 %v46
  %v195 = vunpack.c.l.b16 %v47
  %v196 = vunpack.c.l.b16 %v48
  %v197 = vunpack.c.l.b16 %v49
  %v198 = vunpack.c.l.b16 %v50
  %v199 = vunpack.c.l.b16 %v51
  %v200 = vunpack.c.l.b16 %v52
  %v201 = vunpack.c.l.b16 %v53
  %v202 = vunpack.c.l.b16 %v54
  %v203 = vunpack.c.l.b16 %v55
  %v204 = vunpack.c.l.b16 %v56
  %v205 = vunpack.c.l.b16 %v57
  %v206 = vunpack.c.l.b16 %v58
  %v207 = vunpack.c.l.b16 %v59
  %v208 = vunpack.c.l.b16 %v60
  %v209 = vunpack.c.l.b16 %v61
  %v210 = vunpack.c.l.b16 %v62
  %v211 = vunpack.c.l.b16 %v63
  %v212 = vunpack.c.l.b16 %v64
  %v213 = vunpack.c.l.b16 %v65
  %v214 = vunpack.c.l.b16 %v66
  %v215 = vunpack.c.l.b16 %v67
  %v216 = vunpack.c.l.b16 %v68
  %v217 = vunpack.c.l.b16 %v69
  %v218 = vunpack.c.l.b16 %v70
  %v219 = vunpack.c.l.b16 %v71
  %v220 = vunpack.c.l.b16 %v72
  %v221 = vunpack.c.l.b16 %v73
  %v222 = vunpack.c.l.b16 %v74
  %v223 = vunpack.c.l.b16 %v75
  %v224 = vunpack.c.l.b16 %v76
  %v225 = vunpack.c.l.b16 %v77
  %v226 = vunpack.c.l.b16 %v78
  %v227 = vunpack.c.l.b16 %v79
  %v228 = vunpack.c.l.b16 %v80
  %v229 = vunpack.c.l.b16 %v81
  %v230 = vunpack.c.l.b16 %v82
  %v231 = vunpack.c.l.b16 %v83
  %v232 = vpack.c.b16 %v169, %v168
  %v233 = vpack.c.b16 %v171, %v170
  %v234 = vpack.c.b16 %v173, %v172
  %v235 = vpack.c.b16 %v175, %v174
  %v236 = vpack.c.b16 %v177, %v176
  %v237 = vpack.c.b16 %v179, %v178
  %v238 = vpack.c.b16 %v181, %v180
  %v239 = vpack.c.b16 %v183, %v182
  %v240 = vpack.c.b16 %v185, %v184
  %v241 = vpack.c.b16 %v187, %v186
  %v242 = vpack.c.b16 %v189, %v188
  %v243 = vpack.c.b16 %v191, %v190
  %v244 = vpack.c.b16 %v193, %v192
  %v245 = vpack.c.b16 %v195, %v194
  %v246 = vpack.c.b16 %v197, %v196
  %v247 = vpack.c.b16 %v199, %v198
  %v248 = vpack.c.b16 %v201, %v200
  %v249 = vpack.c.b16 %v203, %v202
  %v250 = vpack.c.b16 %v205, %v204
  %v251 = vpack.c.b16 %v207, %v206
  %v252 = vpack.c.b16 %v209, %v208
  %v253 = vpack.c.b16 %v211, %v210
  %v254 = vpack.c.b16 %v213, %v212
  %v255 = vpack.c.b16 %v215, %v214
  %v256 = vpack.c.b16 %v217, %v216
  %v257 = vpack.c.b16 %v219, %v218
  %v258 = vpack.c.b16 %v221, %v220
  %v259 = vpack.c.b16 %v223, %v222
  %v260 = vpack.c.b16 %v225, %v224
  %v261 = vpack.c.b16 %v227, %v226
  %v262 = vpack.c.b16 %v229, %v228
  %v263 = vpack.c.b16 %v231, %v230
  %v312 = vunpack.c.l.b16 %v84
  %v313 = vunpack.c.l.b16 %v85
  %v314 = vunpack.c.l.b16 %v86
  %v315 = vunpack.c.l.b16 %v87
  %v316 = vunpack.c.l.b16 %v88
  %v317 = vunpack.c.l.b16 %v89
  %v318 = vunpack.c.l.b16 %v90
  %v319 = vunpack.c.l.b16 %v91
  %v320 = vunpack.c.l.b16 %v92
  %v321 = vunpack.c.l.b16 %v93
  %v322 = vunpack.c.l.b16 %v94
  %v323 = vunpack.c.l.b16 %v95
  %v324 = vunpack.c.l.b16 %v96
  %v325 = vunpack.c.l.b16 %v97
  %v326 = vunpack.c.l.b16 %v98
  %v327 = vunpack.c.l.b16 %v99
  %v328 = vpack.c.b16 %v313, %v312
  %v329 = vpack.c.b16 %v315, %v314
  %v330 = vpack.c.b16 %v317, %v316
  %v331 = vpack.c.b16 %v319, %v318
  %v332 = vpack.c.b16 %v321, %v320
  %v333 = vpack.c.b16 %v323, %v322
  %v334 = vpack.c.b16 %v325, %v324
  %v335 = vpack.c.b16 %v327, %v326
  %344 = vmatpush.bf16.msra.mxu0 %v335
  %345 = vmatpush.bf16.msra.mxu0 %v334
  %346 = vmatpush.bf16.msra.mxu0 %v333
  %347 = vmatpush.bf16.msra.mxu0 %v332
  %348 = vmatpush.bf16.msra.mxu0 %v331
  %349 = vmatpush.bf16.msra.mxu0 %v330
  %350 = vmatpush.bf16.msra.mxu0 %v329
  %351 = vmatpush.bf16.msra.mxu0 %v328
  %352 = vmatmul.bf16.gmra.mxu0 %v232
  %v353 = vpop.f32.mrf.mxu0
  %v354 = vadd.f32 %v102, %v353
  %v355 = vpop.f32.mrf.mxu0
  %v356 = vadd.f32 %v102, %v355
  %357 = vmatmul.bf16.gmra.mxu0 %v233
  %v358 = vpop.f32.mrf.mxu0
  %v359 = vadd.f32 %v102, %v358
  %v360 = vpop.f32.mrf.mxu0
  %v361 = vadd.f32 %v102, %v360
  %362 = vmatmul.bf16.gmra.mxu0 %v234
  %v363 = vpop.f32.mrf.mxu0
  %v364 = vadd.f32 %v102, %v363
  %v365 = vpop.f32.mrf.mxu0
  %v366 = vadd.f32 %v102, %v365
  %367 = vmatmul.bf16.gmra.mxu0 %v235
  %v368 = vpop.f32.mrf.mxu0
  %v369 = vadd.f32 %v102, %v368
  %v370 = vpop.f32.mrf.mxu0
  %v371 = vadd.f32 %v102, %v370
  %372 = vmatmul.bf16.gmra.mxu0 %v236
  %v373 = vpop.f32.mrf.mxu0
  %v374 = vadd.f32 %v102, %v373
  %v375 = vpop.f32.mrf.mxu0
  %v376 = vadd.f32 %v102, %v375
  %377 = vmatmul.bf16.gmra.mxu0 %v237
  %v378 = vpop.f32.mrf.mxu0
  %v379 = vadd.f32 %v102, %v378
  %v380 = vpop.f32.mrf.mxu0
  %v381 = vadd.f32 %v102, %v380
  %382 = vmatmul.bf16.gmra.mxu0 %v238
  %v383 = vpop.f32.mrf.mxu0
  %v384 = vadd.f32 %v102, %v383
  %v385 = vpop.f32.mrf.mxu0
  %v386 = vadd.f32 %v102, %v385
  %387 = vmatmul.bf16.gmra.mxu0 %v239
  %v388 = vpop.f32.mrf.mxu0
  %v389 = vadd.f32 %v102, %v388
  %v390 = vpop.f32.mrf.mxu0
  %v391 = vadd.f32 %v102, %v390
  %392 = vmatmul.bf16.gmra.mxu0 %v240
  %v393 = vpop.f32.mrf.mxu0
  %v394 = vadd.f32 %v102, %v393
  %v395 = vpop.f32.mrf.mxu0
  %v396 = vadd.f32 %v102, %v395
  %397 = vmatmul.bf16.gmra.mxu0 %v241
  %v398 = vpop.f32.mrf.mxu0
  %v399 = vadd.f32 %v102, %v398
  %v400 = vpop.f32.mrf.mxu0
  %v401 = vadd.f32 %v102, %v400
  %402 = vmatmul.bf16.gmra.mxu0 %v242
  %v403 = vpop.f32.mrf.mxu0
  %v404 = vadd.f32 %v102, %v403
  %v405 = vpop.f32.mrf.mxu0
  %v406 = vadd.f32 %v102, %v405
  %407 = vmatmul.bf16.gmra.mxu0 %v243
  %v408 = vpop.f32.mrf.mxu0
  %v409 = vadd.f32 %v102, %v408
  %v410 = vpop.f32.mrf.mxu0
  %v411 = vadd.f32 %v102, %v410
  %412 = vmatmul.bf16.gmra.mxu0 %v244
  %v413 = vpop.f32.mrf.mxu0
  %v414 = vadd.f32 %v102, %v413
  %v415 = vpop.f32.mrf.mxu0
  %v416 = vadd.f32 %v102, %v415
  %417 = vmatmul.bf16.gmra.mxu0 %v245
  %v418 = vpop.f32.mrf.mxu0
  %v419 = vadd.f32 %v102, %v418
  %v420 = vpop.f32.mrf.mxu0
  %v421 = vadd.f32 %v102, %v420
  %422 = vmatmul.bf16.gmra.mxu0 %v246
  %v423 = vpop.f32.mrf.mxu0
  %v424 = vadd.f32 %v102, %v423
  %v425 = vpop.f32.mrf.mxu0
  %v426 = vadd.f32 %v102, %v425
  %427 = vmatmul.bf16.gmra.mxu0 %v247
  %v428 = vpop.f32.mrf.mxu0
  %v429 = vadd.f32 %v102, %v428
  %v430 = vpop.f32.mrf.mxu0
  %v431 = vadd.f32 %v102, %v430
  %432 = vmatmul.bf16.gmra.mxu0 %v248
  %v433 = vpop.f32.mrf.mxu0
  %v434 = vadd.f32 %v102, %v433
  %v435 = vpop.f32.mrf.mxu0
  %v436 = vadd.f32 %v102, %v435
  %437 = vmatmul.bf16.gmra.mxu0 %v249
  %v438 = vpop.f32.mrf.mxu0
  %v439 = vadd.f32 %v102, %v438
  %v440 = vpop.f32.mrf.mxu0
  %v441 = vadd.f32 %v102, %v440
  %442 = vmatmul.bf16.gmra.mxu0 %v250
  %v443 = vpop.f32.mrf.mxu0
  %v444 = vadd.f32 %v102, %v443
  %v445 = vpop.f32.mrf.mxu0
  %v446 = vadd.f32 %v102, %v445
  %447 = vmatmul.bf16.gmra.mxu0 %v251
  %v448 = vpop.f32.mrf.mxu0
  %v449 = vadd.f32 %v102, %v448
  %v450 = vpop.f32.mrf.mxu0
  %v451 = vadd.f32 %v102, %v450
  %452 = vmatmul.bf16.gmra.mxu0 %v252
  %v453 = vpop.f32.mrf.mxu0
  %v454 = vadd.f32 %v102, %v453
  %v455 = vpop.f32.mrf.mxu0
  %v456 = vadd.f32 %v102, %v455
  %457 = vmatmul.bf16.gmra.mxu0 %v253
  %v458 = vpop.f32.mrf.mxu0
  %v459 = vadd.f32 %v102, %v458
  %v460 = vpop.f32.mrf.mxu0
  %v461 = vadd.f32 %v102, %v460
  %462 = vmatmul.bf16.gmra.mxu0 %v254
  %v463 = vpop.f32.mrf.mxu0
  %v464 = vadd.f32 %v102, %v463
  %v465 = vpop.f32.mrf.mxu0
  %v466 = vadd.f32 %v102, %v465
  %467 = vmatmul.bf16.gmra.mxu0 %v255
  %v468 = vpop.f32.mrf.mxu0
  %v469 = vadd.f32 %v102, %v468
  %v470 = vpop.f32.mrf.mxu0
  %v471 = vadd.f32 %v102, %v470
  %472 = vmatmul.bf16.gmra.mxu0 %v256
  %v473 = vpop.f32.mrf.mxu0
  %v474 = vadd.f32 %v102, %v473
  %v475 = vpop.f32.mrf.mxu0
  %v476 = vadd.f32 %v102, %v475
  %477 = vmatmul.bf16.gmra.mxu0 %v257
  %v478 = vpop.f32.mrf.mxu0
  %v479 = vadd.f32 %v102, %v478
  %v480 = vpop.f32.mrf.mxu0
  %v481 = vadd.f32 %v102, %v480
  %482 = vmatmul.bf16.gmra.mxu0 %v258
  %v483 = vpop.f32.mrf.mxu0
  %v484 = vadd.f32 %v102, %v483
  %v485 = vpop.f32.mrf.mxu0
  %v486 = vadd.f32 %v102, %v485
  %487 = vmatmul.bf16.gmra.mxu0 %v259
  %v488 = vpop.f32.mrf.mxu0
  %v489 = vadd.f32 %v102, %v488
  %v490 = vpop.f32.mrf.mxu0
  %v491 = vadd.f32 %v102, %v490
  %492 = vmatmul.bf16.gmra.mxu0 %v260
  %v493 = vpop.f32.mrf.mxu0
  %v494 = vadd.f32 %v102, %v493
  %v495 = vpop.f32.mrf.mxu0
  %v496 = vadd.f32 %v102, %v495
  %497 = vmatmul.bf16.gmra.mxu0 %v261
  %v498 = vpop.f32.mrf.mxu0
  %v499 = vadd.f32 %v102, %v498
  %v500 = vpop.f32.mrf.mxu0
  %v501 = vadd.f32 %v102, %v500
  %502 = vmatmul.bf16.gmra.mxu0 %v262
  %v503 = vpop.f32.mrf.mxu0
  %v504 = vadd.f32 %v102, %v503
  %v505 = vpop.f32.mrf.mxu0
  %v506 = vadd.f32 %v102, %v505
  %507 = vmatmul.bf16.gmra.mxu0 %v263
  %v508 = vpop.f32.mrf.mxu0
  %v509 = vadd.f32 %v102, %v508
  %v510 = vpop.f32.mrf.mxu0
  %v511 = vadd.f32 %v102, %v510
  %512 = vdwg.mxu0
  %vm513 = vcmp.gt.f32.partialorder %v354, 0.0
  %vm514 = vcmp.gt.f32.partialorder %v356, 0.0
  %vm515 = vcmp.gt.f32.partialorder %v359, 0.0
  %vm516 = vcmp.gt.f32.partialorder %v361, 0.0
  %vm517 = vcmp.gt.f32.partialorder %v364, 0.0
  %vm518 = vcmp.gt.f32.partialorder %v366, 0.0
  %vm519 = vcmp.gt.f32.partialorder %v369, 0.0
  %vm520 = vcmp.gt.f32.partialorder %v371, 0.0
  %vm521 = vcmp.gt.f32.partialorder %v374, 0.0
  %vm522 = vcmp.gt.f32.partialorder %v376, 0.0
  %vm523 = vcmp.gt.f32.partialorder %v379, 0.0
  %vm524 = vcmp.gt.f32.partialorder %v381, 0.0
  %vm525 = vcmp.gt.f32.partialorder %v384, 0.0
  %vm526 = vcmp.gt.f32.partialorder %v386, 0.0
  %vm527 = vcmp.gt.f32.partialorder %v389, 0.0
  %vm528 = vcmp.gt.f32.partialorder %v391, 0.0
  %vm529 = vcmp.gt.f32.partialorder %v394, 0.0
  %vm530 = vcmp.gt.f32.partialorder %v396, 0.0
  %vm531 = vcmp.gt.f32.partialorder %v399, 0.0
  %vm532 = vcmp.gt.f32.partialorder %v401, 0.0
  %vm533 = vcmp.gt.f32.partialorder %v404, 0.0
  %vm534 = vcmp.gt.f32.partialorder %v406, 0.0
  %vm535 = vcmp.gt.f32.partialorder %v409, 0.0
  %vm536 = vcmp.gt.f32.partialorder %v411, 0.0
  %vm537 = vcmp.gt.f32.partialorder %v414, 0.0
  %vm538 = vcmp.gt.f32.partialorder %v416, 0.0
  %vm539 = vcmp.gt.f32.partialorder %v419, 0.0
  %vm540 = vcmp.gt.f32.partialorder %v421, 0.0
  %vm541 = vcmp.gt.f32.partialorder %v424, 0.0
  %vm542 = vcmp.gt.f32.partialorder %v426, 0.0
  %vm543 = vcmp.gt.f32.partialorder %v429, 0.0
  %vm544 = vcmp.gt.f32.partialorder %v431, 0.0
  %vm545 = vcmp.gt.f32.partialorder %v434, 0.0
  %vm546 = vcmp.gt.f32.partialorder %v436, 0.0
  %vm547 = vcmp.gt.f32.partialorder %v439, 0.0
  %vm548 = vcmp.gt.f32.partialorder %v441, 0.0
  %vm549 = vcmp.gt.f32.partialorder %v444, 0.0
  %vm550 = vcmp.gt.f32.partialorder %v446, 0.0
  %vm551 = vcmp.gt.f32.partialorder %v449, 0.0
  %vm552 = vcmp.gt.f32.partialorder %v451, 0.0
  %vm553 = vcmp.gt.f32.partialorder %v454, 0.0
  %vm554 = vcmp.gt.f32.partialorder %v456, 0.0
  %vm555 = vcmp.gt.f32.partialorder %v459, 0.0
  %vm556 = vcmp.gt.f32.partialorder %v461, 0.0
  %vm557 = vcmp.gt.f32.partialorder %v464, 0.0
  %vm558 = vcmp.gt.f32.partialorder %v466, 0.0
  %vm559 = vcmp.gt.f32.partialorder %v469, 0.0
  %vm560 = vcmp.gt.f32.partialorder %v471, 0.0
  %vm561 = vcmp.gt.f32.partialorder %v474, 0.0
  %vm562 = vcmp.gt.f32.partialorder %v476, 0.0
  %vm563 = vcmp.gt.f32.partialorder %v479, 0.0
  %vm564 = vcmp.gt.f32.partialorder %v481, 0.0
  %vm565 = vcmp.gt.f32.partialorder %v484, 0.0
  %vm566 = vcmp.gt.f32.partialorder %v486, 0.0
  %vm567 = vcmp.gt.f32.partialorder %v489, 0.0
  %vm568 = vcmp.gt.f32.partialorder %v491, 0.0
  %vm569 = vcmp.gt.f32.partialorder %v494, 0.0
  %vm570 = vcmp.gt.f32.partialorder %v496, 0.0
  %vm571 = vcmp.gt.f32.partialorder %v499, 0.0
  %vm572 = vcmp.gt.f32.partialorder %v501, 0.0
  %vm573 = vcmp.gt.f32.partialorder %v504, 0.0
  %vm574 = vcmp.gt.f32.partialorder %v506, 0.0
  %vm575 = vcmp.gt.f32.partialorder %v509, 0.0
  %vm576 = vcmp.gt.f32.partialorder %v511, 0.0
  %v577 = vmin.f32 %v354, 0.0
  %v578 = vmin.f32 %v356, 0.0
  %v579 = vmin.f32 %v359, 0.0
  %v580 = vmin.f32 %v361, 0.0
  %v581 = vmin.f32 %v364, 0.0
  %v582 = vmin.f32 %v366, 0.0
  %v583 = vmin.f32 %v369, 0.0
  %v584 = vmin.f32 %v371, 0.0
  %v585 = vmin.f32 %v374, 0.0
  %v586 = vmin.f32 %v376, 0.0
  %v587 = vmin.f32 %v379, 0.0
  %v588 = vmin.f32 %v381, 0.0
  %v589 = vmin.f32 %v384, 0.0
  %v590 = vmin.f32 %v386, 0.0
  %v591 = vmin.f32 %v389, 0.0
  %v592 = vmin.f32 %v391, 0.0
  %v593 = vmin.f32 %v394, 0.0
  %v594 = vmin.f32 %v396, 0.0
  %v595 = vmin.f32 %v399, 0.0
  %v596 = vmin.f32 %v401, 0.0
  %v597 = vmin.f32 %v404, 0.0
  %v598 = vmin.f32 %v406, 0.0
  %v599 = vmin.f32 %v409, 0.0
  %v600 = vmin.f32 %v411, 0.0
  %v601 = vmin.f32 %v414, 0.0
  %v602 = vmin.f32 %v416, 0.0
  %v603 = vmin.f32 %v419, 0.0
  %v604 = vmin.f32 %v421, 0.0
  %v605 = vmin.f32 %v424, 0.0
  %v606 = vmin.f32 %v426, 0.0
  %v607 = vmin.f32 %v429, 0.0
  %v608 = vmin.f32 %v431, 0.0
  %v609 = vmin.f32 %v434, 0.0
  %v610 = vmin.f32 %v436, 0.0
  %v611 = vmin.f32 %v439, 0.0
  %v612 = vmin.f32 %v441, 0.0
  %v613 = vmin.f32 %v444, 0.0
  %v614 = vmin.f32 %v446, 0.0
  %v615 = vmin.f32 %v449, 0.0
  %v616 = vmin.f32 %v451, 0.0
  %v617 = vmin.f32 %v454, 0.0
  %v618 = vmin.f32 %v456, 0.0
  %v619 = vmin.f32 %v459, 0.0
  %v620 = vmin.f32 %v461, 0.0
  %v621 = vmin.f32 %v464, 0.0
  %v622 = vmin.f32 %v466, 0.0
  %v623 = vmin.f32 %v469, 0.0
  %v624 = vmin.f32 %v471, 0.0
  %v625 = vmin.f32 %v474, 0.0
  %v626 = vmin.f32 %v476, 0.0
  %v627 = vmin.f32 %v479, 0.0
  %v628 = vmin.f32 %v481, 0.0
  %v629 = vmin.f32 %v484, 0.0
  %v630 = vmin.f32 %v486, 0.0
  %v631 = vmin.f32 %v489, 0.0
  %v632 = vmin.f32 %v491, 0.0
  %v633 = vmin.f32 %v494, 0.0
  %v634 = vmin.f32 %v496, 0.0
  %v635 = vmin.f32 %v499, 0.0
  %v636 = vmin.f32 %v501, 0.0
  %v637 = vmin.f32 %v504, 0.0
  %v638 = vmin.f32 %v506, 0.0
  %v639 = vmin.f32 %v509, 0.0
  %v640 = vmin.f32 %v511, 0.0
  %v641 = vmul.f32 %v577, 1.442695
  %v642 = vpow.pop %v641
  %v643 = vmul.f32 %v578, 1.442695
  %v644 = vpow.pop %v643
  %v645 = vmul.f32 %v579, 1.442695
  %v646 = vpow.pop %v645
  %v647 = vmul.f32 %v580, 1.442695
  %v648 = vpow.pop %v647
  %v649 = vmul.f32 %v581, 1.442695
  %v650 = vpow.pop %v649
  %v651 = vmul.f32 %v582, 1.442695
  %v652 = vpow.pop %v651
  %v653 = vmul.f32 %v583, 1.442695
  %v654 = vpow.pop %v653
  %v655 = vmul.f32 %v584, 1.442695
  %v656 = vpow.pop %v655
  %v657 = vmul.f32 %v585, 1.442695
  %v658 = vpow.pop %v657
  %v659 = vmul.f32 %v586, 1.442695
  %v660 = vpow.pop %v659
  %v661 = vmul.f32 %v587, 1.442695
  %v662 = vpow.pop %v661
  %v663 = vmul.f32 %v588, 1.442695
  %v664 = vpow.pop %v663
  %v665 = vmul.f32 %v589, 1.442695
  %v666 = vpow.pop %v665
  %v667 = vmul.f32 %v590, 1.442695
  %v668 = vpow.pop %v667
  %v669 = vmul.f32 %v591, 1.442695
  %v670 = vpow.pop %v669
  %v671 = vmul.f32 %v592, 1.442695
  %v672 = vpow.pop %v671
  %v673 = vmul.f32 %v593, 1.442695
  %v674 = vpow.pop %v673
  %v675 = vmul.f32 %v594, 1.442695
  %v676 = vpow.pop %v675
  %v677 = vmul.f32 %v595, 1.442695
  %v678 = vpow.pop %v677
  %v679 = vmul.f32 %v596, 1.442695
  %v680 = vpow.pop %v679
  %v681 = vmul.f32 %v597, 1.442695
  %v682 = vpow.pop %v681
  %v683 = vmul.f32 %v598, 1.442695
  %v684 = vpow.pop %v683
  %v685 = vmul.f32 %v599, 1.442695
  %v686 = vpow.pop %v685
  %v687 = vmul.f32 %v600, 1.442695
  %v688 = vpow.pop %v687
  %v689 = vmul.f32 %v601, 1.442695
  %v690 = vpow.pop %v689
  %v691 = vmul.f32 %v602, 1.442695
  %v692 = vpow.pop %v691
  %v693 = vmul.f32 %v603, 1.442695
  %v694 = vpow.pop %v693
  %v695 = vmul.f32 %v604, 1.442695
  %v696 = vpow.pop %v695
  %v697 = vmul.f32 %v605, 1.442695
  %v698 = vpow.pop %v697
  %v699 = vmul.f32 %v606, 1.442695
  %v700 = vpow.pop %v699
  %v701 = vmul.f32 %v607, 1.442695
  %v702 = vpow.pop %v701
  %v703 = vmul.f32 %v608, 1.442695
  %v704 = vpow.pop %v703
  %v705 = vmul.f32 %v609, 1.442695
  %v706 = vpow.pop %v705
  %v707 = vmul.f32 %v610, 1.442695
  %v708 = vpow.pop %v707
  %v709 = vmul.f32 %v611, 1.442695
  %v710 = vpow.pop %v709
  %v711 = vmul.f32 %v612, 1.442695
  %v712 = vpow.pop %v711
  %v713 = vmul.f32 %v613, 1.442695
  %v714 = vpow.pop %v713
  %v715 = vmul.f32 %v614, 1.442695
  %v716 = vpow.pop %v715
  %v717 = vmul.f32 %v615, 1.442695
  %v718 = vpow.pop %v717
  %v719 = vmul.f32 %v616, 1.442695
  %v720 = vpow.pop %v719
  %v721 = vmul.f32 %v617, 1.442695
  %v722 = vpow.pop %v721
  %v723 = vmul.f32 %v618, 1.442695
  %v724 = vpow.pop %v723
  %v725 = vmul.f32 %v619, 1.442695
  %v726 = vpow.pop %v725
  %v727 = vmul.f32 %v620, 1.442695
  %v728 = vpow.pop %v727
  %v729 = vmul.f32 %v621, 1.442695
  %v730 = vpow.pop %v729
  %v731 = vmul.f32 %v622, 1.442695
  %v732 = vpow.pop %v731
  %v733 = vmul.f32 %v623, 1.442695
  %v734 = vpow.pop %v733
  %v735 = vmul.f32 %v624, 1.442695
  %v736 = vpow.pop %v735
  %v737 = vmul.f32 %v625, 1.442695
  %v738 = vpow.pop %v737
  %v739 = vmul.f32 %v626, 1.442695
  %v740 = vpow.pop %v739
  %v741 = vmul.f32 %v627, 1.442695
  %v742 = vpow.pop %v741
  %v743 = vmul.f32 %v628, 1.442695
  %v744 = vpow.pop %v743
  %v745 = vmul.f32 %v629, 1.442695
  %v746 = vpow.pop %v745
  %v747 = vmul.f32 %v630, 1.442695
  %v748 = vpow.pop %v747
  %v749 = vmul.f32 %v631, 1.442695
  %v750 = vpow.pop %v749
  %v751 = vmul.f32 %v632, 1.442695
  %v752 = vpow.pop %v751
  %v753 = vmul.f32 %v633, 1.442695
  %v754 = vpow.pop %v753
  %v755 = vmul.f32 %v634, 1.442695
  %v756 = vpow.pop %v755
  %v757 = vmul.f32 %v635, 1.442695
  %v758 = vpow.pop %v757
  %v759 = vmul.f32 %v636, 1.442695
  %v760 = vpow.pop %v759
  %v761 = vmul.f32 %v637, 1.442695
  %v762 = vpow.pop %v761
  %v763 = vmul.f32 %v638, 1.442695
  %v764 = vpow.pop %v763
  %v765 = vmul.f32 %v639, 1.442695
  %v766 = vpow.pop %v765
  %v767 = vmul.f32 %v640, 1.442695
  %v768 = vpow.pop %v767
  %v769 = vsub.f32 %v642, 1.0
  %v770 = vsub.f32 %v644, 1.0
  %v771 = vsub.f32 %v646, 1.0
  %v772 = vsub.f32 %v648, 1.0
  %v773 = vsub.f32 %v650, 1.0
  %v774 = vsub.f32 %v652, 1.0
  %v775 = vsub.f32 %v654, 1.0
  %v776 = vsub.f32 %v656, 1.0
  %v777 = vsub.f32 %v658, 1.0
  %v778 = vsub.f32 %v660, 1.0
  %v779 = vsub.f32 %v662, 1.0
  %v780 = vsub.f32 %v664, 1.0
  %v781 = vsub.f32 %v666, 1.0
  %v782 = vsub.f32 %v668, 1.0
  %v783 = vsub.f32 %v670, 1.0
  %v784 = vsub.f32 %v672, 1.0
  %v785 = vsub.f32 %v674, 1.0
  %v786 = vsub.f32 %v676, 1.0
  %v787 = vsub.f32 %v678, 1.0
  %v788 = vsub.f32 %v680, 1.0
  %v789 = vsub.f32 %v682, 1.0
  %v790 = vsub.f32 %v684, 1.0
  %v791 = vsub.f32 %v686, 1.0
  %v792 = vsub.f32 %v688, 1.0
  %v793 = vsub.f32 %v690, 1.0
  %v794 = vsub.f32 %v692, 1.0
  %v795 = vsub.f32 %v694, 1.0
  %v796 = vsub.f32 %v696, 1.0
  %v797 = vsub.f32 %v698, 1.0
  %v798 = vsub.f32 %v700, 1.0
  %v799 = vsub.f32 %v702, 1.0
  %v800 = vsub.f32 %v704, 1.0
  %v801 = vsub.f32 %v706, 1.0
  %v802 = vsub.f32 %v708, 1.0
  %v803 = vsub.f32 %v710, 1.0
  %v804 = vsub.f32 %v712, 1.0
  %v805 = vsub.f32 %v714, 1.0
  %v806 = vsub.f32 %v716, 1.0
  %v807 = vsub.f32 %v718, 1.0
  %v808 = vsub.f32 %v720, 1.0
  %v809 = vsub.f32 %v722, 1.0
  %v810 = vsub.f32 %v724, 1.0
  %v811 = vsub.f32 %v726, 1.0
  %v812 = vsub.f32 %v728, 1.0
  %v813 = vsub.f32 %v730, 1.0
  %v814 = vsub.f32 %v732, 1.0
  %v815 = vsub.f32 %v734, 1.0
  %v816 = vsub.f32 %v736, 1.0
  %v817 = vsub.f32 %v738, 1.0
  %v818 = vsub.f32 %v740, 1.0
  %v819 = vsub.f32 %v742, 1.0
  %v820 = vsub.f32 %v744, 1.0
  %v821 = vsub.f32 %v746, 1.0
  %v822 = vsub.f32 %v748, 1.0
  %v823 = vsub.f32 %v750, 1.0
  %v824 = vsub.f32 %v752, 1.0
  %v825 = vsub.f32 %v754, 1.0
  %v826 = vsub.f32 %v756, 1.0
  %v827 = vsub.f32 %v758, 1.0
  %v828 = vsub.f32 %v760, 1.0
  %v829 = vsub.f32 %v762, 1.0
  %v830 = vsub.f32 %v764, 1.0
  %v831 = vsub.f32 %v766, 1.0
  %v832 = vsub.f32 %v768, 1.0
  %v833 = vsel %vm513, %v354, %v769
  %v834 = vsel %vm514, %v356, %v770
  %v835 = vsel %vm515, %v359, %v771
  %v836 = vsel %vm516, %v361, %v772
  %v837 = vsel %vm517, %v364, %v773
  %v838 = vsel %vm518, %v366, %v774
  %v839 = vsel %vm519, %v369, %v775
  %v840 = vsel %vm520, %v371, %v776
  %v841 = vsel %vm521, %v374, %v777
  %v842 = vsel %vm522, %v376, %v778
  %v843 = vsel %vm523, %v379, %v779
  %v844 = vsel %vm524, %v381, %v780
  %v845 = vsel %vm525, %v384, %v781
  %v846 = vsel %vm526, %v386, %v782
  %v847 = vsel %vm527, %v389, %v783
  %v848 = vsel %vm528, %v391, %v784
  %v849 = vsel %vm529, %v394, %v785
  %v850 = vsel %vm530, %v396, %v786
  %v851 = vsel %vm531, %v399, %v787
  %v852 = vsel %vm532, %v401, %v788
  %v853 = vsel %vm533, %v404, %v789
  %v854 = vsel %vm534, %v406, %v790
  %v855 = vsel %vm535, %v409, %v791
  %v856 = vsel %vm536, %v411, %v792
  %v857 = vsel %vm537, %v414, %v793
  %v858 = vsel %vm538, %v416, %v794
  %v859 = vsel %vm539, %v419, %v795
  %v860 = vsel %vm540, %v421, %v796
  %v861 = vsel %vm541, %v424, %v797
  %v862 = vsel %vm542, %v426, %v798
  %v863 = vsel %vm543, %v429, %v799
  %v864 = vsel %vm544, %v431, %v800
  %v865 = vsel %vm545, %v434, %v801
  %v866 = vsel %vm546, %v436, %v802
  %v867 = vsel %vm547, %v439, %v803
  %v868 = vsel %vm548, %v441, %v804
  %v869 = vsel %vm549, %v444, %v805
  %v870 = vsel %vm550, %v446, %v806
  %v871 = vsel %vm551, %v449, %v807
  %v872 = vsel %vm552, %v451, %v808
  %v873 = vsel %vm553, %v454, %v809
  %v874 = vsel %vm554, %v456, %v810
  %v875 = vsel %vm555, %v459, %v811
  %v876 = vsel %vm556, %v461, %v812
  %v877 = vsel %vm557, %v464, %v813
  %v878 = vsel %vm558, %v466, %v814
  %v879 = vsel %vm559, %v469, %v815
  %v880 = vsel %vm560, %v471, %v816
  %v881 = vsel %vm561, %v474, %v817
  %v882 = vsel %vm562, %v476, %v818
  %v883 = vsel %vm563, %v479, %v819
  %v884 = vsel %vm564, %v481, %v820
  %v885 = vsel %vm565, %v484, %v821
  %v886 = vsel %vm566, %v486, %v822
  %v887 = vsel %vm567, %v489, %v823
  %v888 = vsel %vm568, %v491, %v824
  %v889 = vsel %vm569, %v494, %v825
  %v890 = vsel %vm570, %v496, %v826
  %v891 = vsel %vm571, %v499, %v827
  %v892 = vsel %vm572, %v501, %v828
  %v893 = vsel %vm573, %v504, %v829
  %v894 = vsel %vm574, %v506, %v830
  %v895 = vsel %vm575, %v509, %v831
  %v896 = vsel %vm576, %v511, %v832
  %v897 = vpack.c.bf16 %v834, %v833
  %v898 = vpack.c.bf16 %v836, %v835
  %v899 = vpack.c.bf16 %v838, %v837
  %v900 = vpack.c.bf16 %v840, %v839
  %v901 = vpack.c.bf16 %v842, %v841
  %v902 = vpack.c.bf16 %v844, %v843
  %v903 = vpack.c.bf16 %v846, %v845
  %v904 = vpack.c.bf16 %v848, %v847
  %v905 = vpack.c.bf16 %v850, %v849
  %v906 = vpack.c.bf16 %v852, %v851
  %v907 = vpack.c.bf16 %v854, %v853
  %v908 = vpack.c.bf16 %v856, %v855
  %v909 = vpack.c.bf16 %v858, %v857
  %v910 = vpack.c.bf16 %v860, %v859
  %v911 = vpack.c.bf16 %v862, %v861
  %v912 = vpack.c.bf16 %v864, %v863
  %v913 = vpack.c.bf16 %v866, %v865
  %v914 = vpack.c.bf16 %v868, %v867
  %v915 = vpack.c.bf16 %v870, %v869
  %v916 = vpack.c.bf16 %v872, %v871
  %v917 = vpack.c.bf16 %v874, %v873
  %v918 = vpack.c.bf16 %v876, %v875
  %v919 = vpack.c.bf16 %v878, %v877
  %v920 = vpack.c.bf16 %v880, %v879
  %v921 = vpack.c.bf16 %v882, %v881
  %v922 = vpack.c.bf16 %v884, %v883
  %v923 = vpack.c.bf16 %v886, %v885
  %v924 = vpack.c.bf16 %v888, %v887
  %v925 = vpack.c.bf16 %v890, %v889
  %v926 = vpack.c.bf16 %v892, %v891
  %v927 = vpack.c.bf16 %v894, %v893
  %v928 = vpack.c.bf16 %v896, %v895
  %v929 = vld [vmem:[%s3] sm:$0xf]
  %v930 = vld [vmem:[%s3 + $0x4] sm:$0xf]
  %v931 = vld [vmem:[%s3 + $0x8] sm:$0xf]
  %v932 = vld [vmem:[%s3 + $0xc] sm:$0xf]
  %v933 = vld [vmem:[%s3 + $0x10] sm:$0xf]
  %v934 = vld [vmem:[%s3 + $0x14] sm:$0xf]
  %v935 = vld [vmem:[%s3 + $0x18] sm:$0xf]
  %v936 = vld [vmem:[%s3 + $0x1c] sm:$0xf]
  %v937 = vld [vmem:[%s3 + $0x20] sm:$0xf]
  %v938 = vld [vmem:[%s3 + $0x24] sm:$0xf]
  %v939 = vld [vmem:[%s3 + $0x28] sm:$0xf]
  %v940 = vld [vmem:[%s3 + $0x2c] sm:$0xf]
  %v941 = vld [vmem:[%s3 + $0x30] sm:$0xf]
  %v942 = vld [vmem:[%s3 + $0x34] sm:$0xf]
  %v943 = vld [vmem:[%s3 + $0x38] sm:$0xf]
  %v944 = vld [vmem:[%s3 + $0x3c] sm:$0xf]
  %v945 = vld [vmem:[%s4] sm:$0x1]
  %v947 = vperm.slane %v945, 0
  %v965 = vunpack.c.l.b16 %v929
  %v966 = vunpack.c.l.b16 %v930
  %v967 = vunpack.c.l.b16 %v931
  %v968 = vunpack.c.l.b16 %v932
  %v969 = vunpack.c.l.b16 %v933
  %v970 = vunpack.c.l.b16 %v934
  %v971 = vunpack.c.l.b16 %v935
  %v972 = vunpack.c.l.b16 %v936
  %v973 = vunpack.c.l.b16 %v937
  %v974 = vunpack.c.l.b16 %v938
  %v975 = vunpack.c.l.b16 %v939
  %v976 = vunpack.c.l.b16 %v940
  %v977 = vunpack.c.l.b16 %v941
  %v978 = vunpack.c.l.b16 %v942
  %v979 = vunpack.c.l.b16 %v943
  %v980 = vunpack.c.l.b16 %v944
  %v981 = vpack.c.b16 %v966, %v965
  %v982 = vpack.c.b16 %v968, %v967
  %v983 = vpack.c.b16 %v970, %v969
  %v984 = vpack.c.b16 %v972, %v971
  %v985 = vpack.c.b16 %v974, %v973
  %v986 = vpack.c.b16 %v976, %v975
  %v987 = vpack.c.b16 %v978, %v977
  %v988 = vpack.c.b16 %v980, %v979
  %997 = vmatpush.bf16.msra.mxu0 %v988
  %998 = vmatpush.bf16.msra.mxu0 %v987
  %999 = vmatpush.bf16.msra.mxu0 %v986
  %1000 = vmatpush.bf16.msra.mxu0 %v985
  %1001 = vmatpush.bf16.msra.mxu0 %v984
  %1002 = vmatpush.bf16.msra.mxu0 %v983
  %1003 = vmatpush.bf16.msra.mxu0 %v982
  %1004 = vmatpush.bf16.msra.mxu0 %v981
  %1005 = vmatmul.bf16.gmra.mxu0 %v897
  %v1006 = vpop.f32.mrf.mxu0
  %v1007 = vadd.f32 %v947, %v1006
  %v1008 = vpop.f32.mrf.mxu0
  %v1009 = vadd.f32 %v947, %v1008
  %1010 = vmatmul.bf16.gmra.mxu0 %v898
  %v1011 = vpop.f32.mrf.mxu0
  %v1012 = vadd.f32 %v947, %v1011
  %v1013 = vpop.f32.mrf.mxu0
  %v1014 = vadd.f32 %v947, %v1013
  %1015 = vmatmul.bf16.gmra.mxu0 %v899
  %v1016 = vpop.f32.mrf.mxu0
  %v1017 = vadd.f32 %v947, %v1016
  %v1018 = vpop.f32.mrf.mxu0
  %v1019 = vadd.f32 %v947, %v1018
  %1020 = vmatmul.bf16.gmra.mxu0 %v900
  %v1021 = vpop.f32.mrf.mxu0
  %v1022 = vadd.f32 %v947, %v1021
  %v1023 = vpop.f32.mrf.mxu0
  %v1024 = vadd.f32 %v947, %v1023
  %1025 = vmatmul.bf16.gmra.mxu0 %v901
  %v1026 = vpop.f32.mrf.mxu0
  %v1027 = vadd.f32 %v947, %v1026
  %v1028 = vpop.f32.mrf.mxu0
  %v1029 = vadd.f32 %v947, %v1028
  %1030 = vmatmul.bf16.gmra.mxu0 %v902
  %v1031 = vpop.f32.mrf.mxu0
  %v1032 = vadd.f32 %v947, %v1031
  %v1033 = vpop.f32.mrf.mxu0
  %v1034 = vadd.f32 %v947, %v1033
  %1035 = vmatmul.bf16.gmra.mxu0 %v903
  %v1036 = vpop.f32.mrf.mxu0
  %v1037 = vadd.f32 %v947, %v1036
  %v1038 = vpop.f32.mrf.mxu0
  %v1039 = vadd.f32 %v947, %v1038
  %1040 = vmatmul.bf16.gmra.mxu0 %v904
  %v1041 = vpop.f32.mrf.mxu0
  %v1042 = vadd.f32 %v947, %v1041
  %v1043 = vpop.f32.mrf.mxu0
  %v1044 = vadd.f32 %v947, %v1043
  %1045 = vmatmul.bf16.gmra.mxu0 %v905
  %v1046 = vpop.f32.mrf.mxu0
  %v1047 = vadd.f32 %v947, %v1046
  %v1048 = vpop.f32.mrf.mxu0
  %v1049 = vadd.f32 %v947, %v1048
  %1050 = vmatmul.bf16.gmra.mxu0 %v906
  %v1051 = vpop.f32.mrf.mxu0
  %v1052 = vadd.f32 %v947, %v1051
  %v1053 = vpop.f32.mrf.mxu0
  %v1054 = vadd.f32 %v947, %v1053
  %1055 = vmatmul.bf16.gmra.mxu0 %v907
  %v1056 = vpop.f32.mrf.mxu0
  %v1057 = vadd.f32 %v947, %v1056
  %v1058 = vpop.f32.mrf.mxu0
  %v1059 = vadd.f32 %v947, %v1058
  %1060 = vmatmul.bf16.gmra.mxu0 %v908
  %v1061 = vpop.f32.mrf.mxu0
  %v1062 = vadd.f32 %v947, %v1061
  %v1063 = vpop.f32.mrf.mxu0
  %v1064 = vadd.f32 %v947, %v1063
  %1065 = vmatmul.bf16.gmra.mxu0 %v909
  %v1066 = vpop.f32.mrf.mxu0
  %v1067 = vadd.f32 %v947, %v1066
  %v1068 = vpop.f32.mrf.mxu0
  %v1069 = vadd.f32 %v947, %v1068
  %1070 = vmatmul.bf16.gmra.mxu0 %v910
  %v1071 = vpop.f32.mrf.mxu0
  %v1072 = vadd.f32 %v947, %v1071
  %v1073 = vpop.f32.mrf.mxu0
  %v1074 = vadd.f32 %v947, %v1073
  %1075 = vmatmul.bf16.gmra.mxu0 %v911
  %v1076 = vpop.f32.mrf.mxu0
  %v1077 = vadd.f32 %v947, %v1076
  %v1078 = vpop.f32.mrf.mxu0
  %v1079 = vadd.f32 %v947, %v1078
  %1080 = vmatmul.bf16.gmra.mxu0 %v912
  %v1081 = vpop.f32.mrf.mxu0
  %v1082 = vadd.f32 %v947, %v1081
  %v1083 = vpop.f32.mrf.mxu0
  %v1084 = vadd.f32 %v947, %v1083
  %1085 = vmatmul.bf16.gmra.mxu0 %v913
  %v1086 = vpop.f32.mrf.mxu0
  %v1087 = vadd.f32 %v947, %v1086
  %v1088 = vpop.f32.mrf.mxu0
  %v1089 = vadd.f32 %v947, %v1088
  %1090 = vmatmul.bf16.gmra.mxu0 %v914
  %v1091 = vpop.f32.mrf.mxu0
  %v1092 = vadd.f32 %v947, %v1091
  %v1093 = vpop.f32.mrf.mxu0
  %v1094 = vadd.f32 %v947, %v1093
  %1095 = vmatmul.bf16.gmra.mxu0 %v915
  %v1096 = vpop.f32.mrf.mxu0
  %v1097 = vadd.f32 %v947, %v1096
  %v1098 = vpop.f32.mrf.mxu0
  %v1099 = vadd.f32 %v947, %v1098
  %1100 = vmatmul.bf16.gmra.mxu0 %v916
  %v1101 = vpop.f32.mrf.mxu0
  %v1102 = vadd.f32 %v947, %v1101
  %v1103 = vpop.f32.mrf.mxu0
  %v1104 = vadd.f32 %v947, %v1103
  %1105 = vmatmul.bf16.gmra.mxu0 %v917
  %v1106 = vpop.f32.mrf.mxu0
  %v1107 = vadd.f32 %v947, %v1106
  %v1108 = vpop.f32.mrf.mxu0
  %v1109 = vadd.f32 %v947, %v1108
  %1110 = vmatmul.bf16.gmra.mxu0 %v918
  %v1111 = vpop.f32.mrf.mxu0
  %v1112 = vadd.f32 %v947, %v1111
  %v1113 = vpop.f32.mrf.mxu0
  %v1114 = vadd.f32 %v947, %v1113
  %1115 = vmatmul.bf16.gmra.mxu0 %v919
  %v1116 = vpop.f32.mrf.mxu0
  %v1117 = vadd.f32 %v947, %v1116
  %v1118 = vpop.f32.mrf.mxu0
  %v1119 = vadd.f32 %v947, %v1118
  %1120 = vmatmul.bf16.gmra.mxu0 %v920
  %v1121 = vpop.f32.mrf.mxu0
  %v1122 = vadd.f32 %v947, %v1121
  %v1123 = vpop.f32.mrf.mxu0
  %v1124 = vadd.f32 %v947, %v1123
  %1125 = vmatmul.bf16.gmra.mxu0 %v921
  %v1126 = vpop.f32.mrf.mxu0
  %v1127 = vadd.f32 %v947, %v1126
  %v1128 = vpop.f32.mrf.mxu0
  %v1129 = vadd.f32 %v947, %v1128
  %1130 = vmatmul.bf16.gmra.mxu0 %v922
  %v1131 = vpop.f32.mrf.mxu0
  %v1132 = vadd.f32 %v947, %v1131
  %v1133 = vpop.f32.mrf.mxu0
  %v1134 = vadd.f32 %v947, %v1133
  %1135 = vmatmul.bf16.gmra.mxu0 %v923
  %v1136 = vpop.f32.mrf.mxu0
  %v1137 = vadd.f32 %v947, %v1136
  %v1138 = vpop.f32.mrf.mxu0
  %v1139 = vadd.f32 %v947, %v1138
  %1140 = vmatmul.bf16.gmra.mxu0 %v924
  %v1141 = vpop.f32.mrf.mxu0
  %v1142 = vadd.f32 %v947, %v1141
  %v1143 = vpop.f32.mrf.mxu0
  %v1144 = vadd.f32 %v947, %v1143
  %1145 = vmatmul.bf16.gmra.mxu0 %v925
  %v1146 = vpop.f32.mrf.mxu0
  %v1147 = vadd.f32 %v947, %v1146
  %v1148 = vpop.f32.mrf.mxu0
  %v1149 = vadd.f32 %v947, %v1148
  %1150 = vmatmul.bf16.gmra.mxu0 %v926
  %v1151 = vpop.f32.mrf.mxu0
  %v1152 = vadd.f32 %v947, %v1151
  %v1153 = vpop.f32.mrf.mxu0
  %v1154 = vadd.f32 %v947, %v1153
  %1155 = vmatmul.bf16.gmra.mxu0 %v927
  %v1156 = vpop.f32.mrf.mxu0
  %v1157 = vadd.f32 %v947, %v1156
  %v1158 = vpop.f32.mrf.mxu0
  %v1159 = vadd.f32 %v947, %v1158
  %1160 = vmatmul.bf16.gmra.mxu0 %v928
  %v1161 = vpop.f32.mrf.mxu0
  %v1162 = vadd.f32 %v947, %v1161
  %v1163 = vpop.f32.mrf.mxu0
  %v1164 = vadd.f32 %v947, %v1163
  %1165 = vdwg.mxu0
  %v1166 = vmul.f32 %v1007, %v1007
  %v1167 = vmul.f32 %v1009, %v1009
  %v1168 = vmul.f32 %v1012, %v1012
  %v1169 = vmul.f32 %v1014, %v1014
  %v1170 = vmul.f32 %v1017, %v1017
  %v1171 = vmul.f32 %v1019, %v1019
  %v1172 = vmul.f32 %v1022, %v1022
  %v1173 = vmul.f32 %v1024, %v1024
  %v1174 = vmul.f32 %v1027, %v1027
  %v1175 = vmul.f32 %v1029, %v1029
  %v1176 = vmul.f32 %v1032, %v1032
  %v1177 = vmul.f32 %v1034, %v1034
  %v1178 = vmul.f32 %v1037, %v1037
  %v1179 = vmul.f32 %v1039, %v1039
  %v1180 = vmul.f32 %v1042, %v1042
  %v1181 = vmul.f32 %v1044, %v1044
  %v1182 = vmul.f32 %v1047, %v1047
  %v1183 = vmul.f32 %v1049, %v1049
  %v1184 = vmul.f32 %v1052, %v1052
  %v1185 = vmul.f32 %v1054, %v1054
  %v1186 = vmul.f32 %v1057, %v1057
  %v1187 = vmul.f32 %v1059, %v1059
  %v1188 = vmul.f32 %v1062, %v1062
  %v1189 = vmul.f32 %v1064, %v1064
  %v1190 = vmul.f32 %v1067, %v1067
  %v1191 = vmul.f32 %v1069, %v1069
  %v1192 = vmul.f32 %v1072, %v1072
  %v1193 = vmul.f32 %v1074, %v1074
  %v1194 = vmul.f32 %v1077, %v1077
  %v1195 = vmul.f32 %v1079, %v1079
  %v1196 = vmul.f32 %v1082, %v1082
  %v1197 = vmul.f32 %v1084, %v1084
  %v1198 = vmul.f32 %v1087, %v1087
  %v1199 = vmul.f32 %v1089, %v1089
  %v1200 = vmul.f32 %v1092, %v1092
  %v1201 = vmul.f32 %v1094, %v1094
  %v1202 = vmul.f32 %v1097, %v1097
  %v1203 = vmul.f32 %v1099, %v1099
  %v1204 = vmul.f32 %v1102, %v1102
  %v1205 = vmul.f32 %v1104, %v1104
  %v1206 = vmul.f32 %v1107, %v1107
  %v1207 = vmul.f32 %v1109, %v1109
  %v1208 = vmul.f32 %v1112, %v1112
  %v1209 = vmul.f32 %v1114, %v1114
  %v1210 = vmul.f32 %v1117, %v1117
  %v1211 = vmul.f32 %v1119, %v1119
  %v1212 = vmul.f32 %v1122, %v1122
  %v1213 = vmul.f32 %v1124, %v1124
  %v1214 = vmul.f32 %v1127, %v1127
  %v1215 = vmul.f32 %v1129, %v1129
  %v1216 = vmul.f32 %v1132, %v1132
  %v1217 = vmul.f32 %v1134, %v1134
  %v1218 = vmul.f32 %v1137, %v1137
  %v1219 = vmul.f32 %v1139, %v1139
  %v1220 = vmul.f32 %v1142, %v1142
  %v1221 = vmul.f32 %v1144, %v1144
  %v1222 = vmul.f32 %v1147, %v1147
  %v1223 = vmul.f32 %v1149, %v1149
  %v1224 = vmul.f32 %v1152, %v1152
  %v1225 = vmul.f32 %v1154, %v1154
  %v1226 = vmul.f32 %v1157, %v1157
  %v1227 = vmul.f32 %v1159, %v1159
  %v1228 = vmul.f32 %v1162, %v1162
  %v1229 = vmul.f32 %v1164, %v1164
  %1230 = vadd.xlane.f32.xlu0 %v1166
  %v1231 = vpop.xlane.xlu0 %1230
  %1232 = vadd.xlane.f32.xlu0 %v1167
  %v1233 = vpop.xlane.xlu0 %1232
  %1234 = vadd.xlane.f32.xlu0 %v1168
  %v1235 = vpop.xlane.xlu0 %1234
  %1236 = vadd.xlane.f32.xlu0 %v1169
  %v1237 = vpop.xlane.xlu0 %1236
  %1238 = vadd.xlane.f32.xlu0 %v1170
  %v1239 = vpop.xlane.xlu0 %1238
  %1240 = vadd.xlane.f32.xlu0 %v1171
  %v1241 = vpop.xlane.xlu0 %1240
  %1242 = vadd.xlane.f32.xlu0 %v1172
  %v1243 = vpop.xlane.xlu0 %1242
  %1244 = vadd.xlane.f32.xlu0 %v1173
  %v1245 = vpop.xlane.xlu0 %1244
  %1246 = vadd.xlane.f32.xlu0 %v1174
  %v1247 = vpop.xlane.xlu0 %1246
  %1248 = vadd.xlane.f32.xlu0 %v1175
  %v1249 = vpop.xlane.xlu0 %1248
  %1250 = vadd.xlane.f32.xlu0 %v1176
  %v1251 = vpop.xlane.xlu0 %1250
  %1252 = vadd.xlane.f32.xlu0 %v1177
  %v1253 = vpop.xlane.xlu0 %1252
  %1254 = vadd.xlane.f32.xlu0 %v1178
  %v1255 = vpop.xlane.xlu0 %1254
  %1256 = vadd.xlane.f32.xlu0 %v1179
  %v1257 = vpop.xlane.xlu0 %1256
  %1258 = vadd.xlane.f32.xlu0 %v1180
  %v1259 = vpop.xlane.xlu0 %1258
  %1260 = vadd.xlane.f32.xlu0 %v1181
  %v1261 = vpop.xlane.xlu0 %1260
  %1262 = vadd.xlane.f32.xlu0 %v1182
  %v1263 = vpop.xlane.xlu0 %1262
  %1264 = vadd.xlane.f32.xlu0 %v1183
  %v1265 = vpop.xlane.xlu0 %1264
  %1266 = vadd.xlane.f32.xlu0 %v1184
  %v1267 = vpop.xlane.xlu0 %1266
  %1268 = vadd.xlane.f32.xlu0 %v1185
  %v1269 = vpop.xlane.xlu0 %1268
  %1270 = vadd.xlane.f32.xlu0 %v1186
  %v1271 = vpop.xlane.xlu0 %1270
  %1272 = vadd.xlane.f32.xlu0 %v1187
  %v1273 = vpop.xlane.xlu0 %1272
  %1274 = vadd.xlane.f32.xlu0 %v1188
  %v1275 = vpop.xlane.xlu0 %1274
  %1276 = vadd.xlane.f32.xlu0 %v1189
  %v1277 = vpop.xlane.xlu0 %1276
  %1278 = vadd.xlane.f32.xlu0 %v1190
  %v1279 = vpop.xlane.xlu0 %1278
  %1280 = vadd.xlane.f32.xlu0 %v1191
  %v1281 = vpop.xlane.xlu0 %1280
  %1282 = vadd.xlane.f32.xlu0 %v1192
  %v1283 = vpop.xlane.xlu0 %1282
  %1284 = vadd.xlane.f32.xlu0 %v1193
  %v1285 = vpop.xlane.xlu0 %1284
  %1286 = vadd.xlane.f32.xlu0 %v1194
  %v1287 = vpop.xlane.xlu0 %1286
  %1288 = vadd.xlane.f32.xlu0 %v1195
  %v1289 = vpop.xlane.xlu0 %1288
  %1290 = vadd.xlane.f32.xlu0 %v1196
  %v1291 = vpop.xlane.xlu0 %1290
  %1292 = vadd.xlane.f32.xlu0 %v1197
  %v1293 = vpop.xlane.xlu0 %1292
  %1294 = vadd.xlane.f32.xlu0 %v1198
  %v1295 = vpop.xlane.xlu0 %1294
  %1296 = vadd.xlane.f32.xlu0 %v1199
  %v1297 = vpop.xlane.xlu0 %1296
  %1298 = vadd.xlane.f32.xlu0 %v1200
  %v1299 = vpop.xlane.xlu0 %1298
  %1300 = vadd.xlane.f32.xlu0 %v1201
  %v1301 = vpop.xlane.xlu0 %1300
  %1302 = vadd.xlane.f32.xlu0 %v1202
  %v1303 = vpop.xlane.xlu0 %1302
  %1304 = vadd.xlane.f32.xlu0 %v1203
  %v1305 = vpop.xlane.xlu0 %1304
  %1306 = vadd.xlane.f32.xlu0 %v1204
  %v1307 = vpop.xlane.xlu0 %1306
  %1308 = vadd.xlane.f32.xlu0 %v1205
  %v1309 = vpop.xlane.xlu0 %1308
  %1310 = vadd.xlane.f32.xlu0 %v1206
  %v1311 = vpop.xlane.xlu0 %1310
  %1312 = vadd.xlane.f32.xlu0 %v1207
  %v1313 = vpop.xlane.xlu0 %1312
  %1314 = vadd.xlane.f32.xlu0 %v1208
  %v1315 = vpop.xlane.xlu0 %1314
  %1316 = vadd.xlane.f32.xlu0 %v1209
  %v1317 = vpop.xlane.xlu0 %1316
  %1318 = vadd.xlane.f32.xlu0 %v1210
  %v1319 = vpop.xlane.xlu0 %1318
  %1320 = vadd.xlane.f32.xlu0 %v1211
  %v1321 = vpop.xlane.xlu0 %1320
  %1322 = vadd.xlane.f32.xlu0 %v1212
  %v1323 = vpop.xlane.xlu0 %1322
  %1324 = vadd.xlane.f32.xlu0 %v1213
  %v1325 = vpop.xlane.xlu0 %1324
  %1326 = vadd.xlane.f32.xlu0 %v1214
  %v1327 = vpop.xlane.xlu0 %1326
  %1328 = vadd.xlane.f32.xlu0 %v1215
  %v1329 = vpop.xlane.xlu0 %1328
  %1330 = vadd.xlane.f32.xlu0 %v1216
  %v1331 = vpop.xlane.xlu0 %1330
  %1332 = vadd.xlane.f32.xlu0 %v1217
  %v1333 = vpop.xlane.xlu0 %1332
  %1334 = vadd.xlane.f32.xlu0 %v1218
  %v1335 = vpop.xlane.xlu0 %1334
  %1336 = vadd.xlane.f32.xlu0 %v1219
  %v1337 = vpop.xlane.xlu0 %1336
  %1338 = vadd.xlane.f32.xlu0 %v1220
  %v1339 = vpop.xlane.xlu0 %1338
  %1340 = vadd.xlane.f32.xlu0 %v1221
  %v1341 = vpop.xlane.xlu0 %1340
  %1342 = vadd.xlane.f32.xlu0 %v1222
  %v1343 = vpop.xlane.xlu0 %1342
  %1344 = vadd.xlane.f32.xlu0 %v1223
  %v1345 = vpop.xlane.xlu0 %1344
  %1346 = vadd.xlane.f32.xlu0 %v1224
  %v1347 = vpop.xlane.xlu0 %1346
  %1348 = vadd.xlane.f32.xlu0 %v1225
  %v1349 = vpop.xlane.xlu0 %1348
  %1350 = vadd.xlane.f32.xlu0 %v1226
  %v1351 = vpop.xlane.xlu0 %1350
  %1352 = vadd.xlane.f32.xlu0 %v1227
  %v1353 = vpop.xlane.xlu0 %1352
  %1354 = vadd.xlane.f32.xlu0 %v1228
  %v1355 = vpop.xlane.xlu0 %1354
  %1356 = vadd.xlane.f32.xlu0 %v1229
  %v1357 = vpop.xlane.xlu0 %1356
  %v1358 = vadd.f32 %v1231, 1e-12
  %v1359 = vadd.f32 %v1233, 1e-12
  %v1360 = vadd.f32 %v1235, 1e-12
  %v1361 = vadd.f32 %v1237, 1e-12
  %v1362 = vadd.f32 %v1239, 1e-12
  %v1363 = vadd.f32 %v1241, 1e-12
  %v1364 = vadd.f32 %v1243, 1e-12
  %v1365 = vadd.f32 %v1245, 1e-12
  %v1366 = vadd.f32 %v1247, 1e-12
  %v1367 = vadd.f32 %v1249, 1e-12
  %v1368 = vadd.f32 %v1251, 1e-12
  %v1369 = vadd.f32 %v1253, 1e-12
  %v1370 = vadd.f32 %v1255, 1e-12
  %v1371 = vadd.f32 %v1257, 1e-12
  %v1372 = vadd.f32 %v1259, 1e-12
  %v1373 = vadd.f32 %v1261, 1e-12
  %v1374 = vadd.f32 %v1263, 1e-12
  %v1375 = vadd.f32 %v1265, 1e-12
  %v1376 = vadd.f32 %v1267, 1e-12
  %v1377 = vadd.f32 %v1269, 1e-12
  %v1378 = vadd.f32 %v1271, 1e-12
  %v1379 = vadd.f32 %v1273, 1e-12
  %v1380 = vadd.f32 %v1275, 1e-12
  %v1381 = vadd.f32 %v1277, 1e-12
  %v1382 = vadd.f32 %v1279, 1e-12
  %v1383 = vadd.f32 %v1281, 1e-12
  %v1384 = vadd.f32 %v1283, 1e-12
  %v1385 = vadd.f32 %v1285, 1e-12
  %v1386 = vadd.f32 %v1287, 1e-12
  %v1387 = vadd.f32 %v1289, 1e-12
  %v1388 = vadd.f32 %v1291, 1e-12
  %v1389 = vadd.f32 %v1293, 1e-12
  %v1390 = vadd.f32 %v1295, 1e-12
  %v1391 = vadd.f32 %v1297, 1e-12
  %v1392 = vadd.f32 %v1299, 1e-12
  %v1393 = vadd.f32 %v1301, 1e-12
  %v1394 = vadd.f32 %v1303, 1e-12
  %v1395 = vadd.f32 %v1305, 1e-12
  %v1396 = vadd.f32 %v1307, 1e-12
  %v1397 = vadd.f32 %v1309, 1e-12
  %v1398 = vadd.f32 %v1311, 1e-12
  %v1399 = vadd.f32 %v1313, 1e-12
  %v1400 = vadd.f32 %v1315, 1e-12
  %v1401 = vadd.f32 %v1317, 1e-12
  %v1402 = vadd.f32 %v1319, 1e-12
  %v1403 = vadd.f32 %v1321, 1e-12
  %v1404 = vadd.f32 %v1323, 1e-12
  %v1405 = vadd.f32 %v1325, 1e-12
  %v1406 = vadd.f32 %v1327, 1e-12
  %v1407 = vadd.f32 %v1329, 1e-12
  %v1408 = vadd.f32 %v1331, 1e-12
  %v1409 = vadd.f32 %v1333, 1e-12
  %v1410 = vadd.f32 %v1335, 1e-12
  %v1411 = vadd.f32 %v1337, 1e-12
  %v1412 = vadd.f32 %v1339, 1e-12
  %v1413 = vadd.f32 %v1341, 1e-12
  %v1414 = vadd.f32 %v1343, 1e-12
  %v1415 = vadd.f32 %v1345, 1e-12
  %v1416 = vadd.f32 %v1347, 1e-12
  %v1417 = vadd.f32 %v1349, 1e-12
  %v1418 = vadd.f32 %v1351, 1e-12
  %v1419 = vadd.f32 %v1353, 1e-12
  %v1420 = vadd.f32 %v1355, 1e-12
  %v1421 = vadd.f32 %v1357, 1e-12
  %v1422 = vrsqrt.pop %v1358
  %v1423 = vmul.f32 %v1422, %v1358
  %v1424 = vmul.f32 %v1423, %v1422
  %v1425 = vmul.f32 0.5, %v1424
  %v1426 = vsub.f32 1.5, %v1425
  %v1427 = vmul.f32 %v1422, %v1426
  %vm1428 = vweird.f32 %v1358
  %vm1429 = vweird.f32 %v1422
  %vm1430 = vmor %vm1428, %vm1429
  %v1431 = vsel %vm1430, %v1422, %v1427
  %v1432 = vrsqrt.pop %v1359
  %v1433 = vmul.f32 %v1432, %v1359
  %v1434 = vmul.f32 %v1433, %v1432
  %v1435 = vmul.f32 0.5, %v1434
  %v1436 = vsub.f32 1.5, %v1435
  %v1437 = vmul.f32 %v1432, %v1436
  %vm1438 = vweird.f32 %v1359
  %vm1439 = vweird.f32 %v1432
  %vm1440 = vmor %vm1438, %vm1439
  %v1441 = vsel %vm1440, %v1432, %v1437
  %v1442 = vrsqrt.pop %v1360
  %v1443 = vmul.f32 %v1442, %v1360
  %v1444 = vmul.f32 %v1443, %v1442
  %v1445 = vmul.f32 0.5, %v1444
  %v1446 = vsub.f32 1.5, %v1445
  %v1447 = vmul.f32 %v1442, %v1446
  %vm1448 = vweird.f32 %v1360
  %vm1449 = vweird.f32 %v1442
  %vm1450 = vmor %vm1448, %vm1449
  %v1451 = vsel %vm1450, %v1442, %v1447
  %v1452 = vrsqrt.pop %v1361
  %v1453 = vmul.f32 %v1452, %v1361
  %v1454 = vmul.f32 %v1453, %v1452
  %v1455 = vmul.f32 0.5, %v1454
  %v1456 = vsub.f32 1.5, %v1455
  %v1457 = vmul.f32 %v1452, %v1456
  %vm1458 = vweird.f32 %v1361
  %vm1459 = vweird.f32 %v1452
  %vm1460 = vmor %vm1458, %vm1459
  %v1461 = vsel %vm1460, %v1452, %v1457
  %v1462 = vrsqrt.pop %v1362
  %v1463 = vmul.f32 %v1462, %v1362
  %v1464 = vmul.f32 %v1463, %v1462
  %v1465 = vmul.f32 0.5, %v1464
  %v1466 = vsub.f32 1.5, %v1465
  %v1467 = vmul.f32 %v1462, %v1466
  %vm1468 = vweird.f32 %v1362
  %vm1469 = vweird.f32 %v1462
  %vm1470 = vmor %vm1468, %vm1469
  %v1471 = vsel %vm1470, %v1462, %v1467
  %v1472 = vrsqrt.pop %v1363
  %v1473 = vmul.f32 %v1472, %v1363
  %v1474 = vmul.f32 %v1473, %v1472
  %v1475 = vmul.f32 0.5, %v1474
  %v1476 = vsub.f32 1.5, %v1475
  %v1477 = vmul.f32 %v1472, %v1476
  %vm1478 = vweird.f32 %v1363
  %vm1479 = vweird.f32 %v1472
  %vm1480 = vmor %vm1478, %vm1479
  %v1481 = vsel %vm1480, %v1472, %v1477
  %v1482 = vrsqrt.pop %v1364
  %v1483 = vmul.f32 %v1482, %v1364
  %v1484 = vmul.f32 %v1483, %v1482
  %v1485 = vmul.f32 0.5, %v1484
  %v1486 = vsub.f32 1.5, %v1485
  %v1487 = vmul.f32 %v1482, %v1486
  %vm1488 = vweird.f32 %v1364
  %vm1489 = vweird.f32 %v1482
  %vm1490 = vmor %vm1488, %vm1489
  %v1491 = vsel %vm1490, %v1482, %v1487
  %v1492 = vrsqrt.pop %v1365
  %v1493 = vmul.f32 %v1492, %v1365
  %v1494 = vmul.f32 %v1493, %v1492
  %v1495 = vmul.f32 0.5, %v1494
  %v1496 = vsub.f32 1.5, %v1495
  %v1497 = vmul.f32 %v1492, %v1496
  %vm1498 = vweird.f32 %v1365
  %vm1499 = vweird.f32 %v1492
  %vm1500 = vmor %vm1498, %vm1499
  %v1501 = vsel %vm1500, %v1492, %v1497
  %v1502 = vrsqrt.pop %v1366
  %v1503 = vmul.f32 %v1502, %v1366
  %v1504 = vmul.f32 %v1503, %v1502
  %v1505 = vmul.f32 0.5, %v1504
  %v1506 = vsub.f32 1.5, %v1505
  %v1507 = vmul.f32 %v1502, %v1506
  %vm1508 = vweird.f32 %v1366
  %vm1509 = vweird.f32 %v1502
  %vm1510 = vmor %vm1508, %vm1509
  %v1511 = vsel %vm1510, %v1502, %v1507
  %v1512 = vrsqrt.pop %v1367
  %v1513 = vmul.f32 %v1512, %v1367
  %v1514 = vmul.f32 %v1513, %v1512
  %v1515 = vmul.f32 0.5, %v1514
  %v1516 = vsub.f32 1.5, %v1515
  %v1517 = vmul.f32 %v1512, %v1516
  %vm1518 = vweird.f32 %v1367
  %vm1519 = vweird.f32 %v1512
  %vm1520 = vmor %vm1518, %vm1519
  %v1521 = vsel %vm1520, %v1512, %v1517
  %v1522 = vrsqrt.pop %v1368
  %v1523 = vmul.f32 %v1522, %v1368
  %v1524 = vmul.f32 %v1523, %v1522
  %v1525 = vmul.f32 0.5, %v1524
  %v1526 = vsub.f32 1.5, %v1525
  %v1527 = vmul.f32 %v1522, %v1526
  %vm1528 = vweird.f32 %v1368
  %vm1529 = vweird.f32 %v1522
  %vm1530 = vmor %vm1528, %vm1529
  %v1531 = vsel %vm1530, %v1522, %v1527
  %v1532 = vrsqrt.pop %v1369
  %v1533 = vmul.f32 %v1532, %v1369
  %v1534 = vmul.f32 %v1533, %v1532
  %v1535 = vmul.f32 0.5, %v1534
  %v1536 = vsub.f32 1.5, %v1535
  %v1537 = vmul.f32 %v1532, %v1536
  %vm1538 = vweird.f32 %v1369
  %vm1539 = vweird.f32 %v1532
  %vm1540 = vmor %vm1538, %vm1539
  %v1541 = vsel %vm1540, %v1532, %v1537
  %v1542 = vrsqrt.pop %v1370
  %v1543 = vmul.f32 %v1542, %v1370
  %v1544 = vmul.f32 %v1543, %v1542
  %v1545 = vmul.f32 0.5, %v1544
  %v1546 = vsub.f32 1.5, %v1545
  %v1547 = vmul.f32 %v1542, %v1546
  %vm1548 = vweird.f32 %v1370
  %vm1549 = vweird.f32 %v1542
  %vm1550 = vmor %vm1548, %vm1549
  %v1551 = vsel %vm1550, %v1542, %v1547
  %v1552 = vrsqrt.pop %v1371
  %v1553 = vmul.f32 %v1552, %v1371
  %v1554 = vmul.f32 %v1553, %v1552
  %v1555 = vmul.f32 0.5, %v1554
  %v1556 = vsub.f32 1.5, %v1555
  %v1557 = vmul.f32 %v1552, %v1556
  %vm1558 = vweird.f32 %v1371
  %vm1559 = vweird.f32 %v1552
  %vm1560 = vmor %vm1558, %vm1559
  %v1561 = vsel %vm1560, %v1552, %v1557
  %v1562 = vrsqrt.pop %v1372
  %v1563 = vmul.f32 %v1562, %v1372
  %v1564 = vmul.f32 %v1563, %v1562
  %v1565 = vmul.f32 0.5, %v1564
  %v1566 = vsub.f32 1.5, %v1565
  %v1567 = vmul.f32 %v1562, %v1566
  %vm1568 = vweird.f32 %v1372
  %vm1569 = vweird.f32 %v1562
  %vm1570 = vmor %vm1568, %vm1569
  %v1571 = vsel %vm1570, %v1562, %v1567
  %v1572 = vrsqrt.pop %v1373
  %v1573 = vmul.f32 %v1572, %v1373
  %v1574 = vmul.f32 %v1573, %v1572
  %v1575 = vmul.f32 0.5, %v1574
  %v1576 = vsub.f32 1.5, %v1575
  %v1577 = vmul.f32 %v1572, %v1576
  %vm1578 = vweird.f32 %v1373
  %vm1579 = vweird.f32 %v1572
  %vm1580 = vmor %vm1578, %vm1579
  %v1581 = vsel %vm1580, %v1572, %v1577
  %v1582 = vrsqrt.pop %v1374
  %v1583 = vmul.f32 %v1582, %v1374
  %v1584 = vmul.f32 %v1583, %v1582
  %v1585 = vmul.f32 0.5, %v1584
  %v1586 = vsub.f32 1.5, %v1585
  %v1587 = vmul.f32 %v1582, %v1586
  %vm1588 = vweird.f32 %v1374
  %vm1589 = vweird.f32 %v1582
  %vm1590 = vmor %vm1588, %vm1589
  %v1591 = vsel %vm1590, %v1582, %v1587
  %v1592 = vrsqrt.pop %v1375
  %v1593 = vmul.f32 %v1592, %v1375
  %v1594 = vmul.f32 %v1593, %v1592
  %v1595 = vmul.f32 0.5, %v1594
  %v1596 = vsub.f32 1.5, %v1595
  %v1597 = vmul.f32 %v1592, %v1596
  %vm1598 = vweird.f32 %v1375
  %vm1599 = vweird.f32 %v1592
  %vm1600 = vmor %vm1598, %vm1599
  %v1601 = vsel %vm1600, %v1592, %v1597
  %v1602 = vrsqrt.pop %v1376
  %v1603 = vmul.f32 %v1602, %v1376
  %v1604 = vmul.f32 %v1603, %v1602
  %v1605 = vmul.f32 0.5, %v1604
  %v1606 = vsub.f32 1.5, %v1605
  %v1607 = vmul.f32 %v1602, %v1606
  %vm1608 = vweird.f32 %v1376
  %vm1609 = vweird.f32 %v1602
  %vm1610 = vmor %vm1608, %vm1609
  %v1611 = vsel %vm1610, %v1602, %v1607
  %v1612 = vrsqrt.pop %v1377
  %v1613 = vmul.f32 %v1612, %v1377
  %v1614 = vmul.f32 %v1613, %v1612
  %v1615 = vmul.f32 0.5, %v1614
  %v1616 = vsub.f32 1.5, %v1615
  %v1617 = vmul.f32 %v1612, %v1616
  %vm1618 = vweird.f32 %v1377
  %vm1619 = vweird.f32 %v1612
  %vm1620 = vmor %vm1618, %vm1619
  %v1621 = vsel %vm1620, %v1612, %v1617
  %v1622 = vrsqrt.pop %v1378
  %v1623 = vmul.f32 %v1622, %v1378
  %v1624 = vmul.f32 %v1623, %v1622
  %v1625 = vmul.f32 0.5, %v1624
  %v1626 = vsub.f32 1.5, %v1625
  %v1627 = vmul.f32 %v1622, %v1626
  %vm1628 = vweird.f32 %v1378
  %vm1629 = vweird.f32 %v1622
  %vm1630 = vmor %vm1628, %vm1629
  %v1631 = vsel %vm1630, %v1622, %v1627
  %v1632 = vrsqrt.pop %v1379
  %v1633 = vmul.f32 %v1632, %v1379
  %v1634 = vmul.f32 %v1633, %v1632
  %v1635 = vmul.f32 0.5, %v1634
  %v1636 = vsub.f32 1.5, %v1635
  %v1637 = vmul.f32 %v1632, %v1636
  %vm1638 = vweird.f32 %v1379
  %vm1639 = vweird.f32 %v1632
  %vm1640 = vmor %vm1638, %vm1639
  %v1641 = vsel %vm1640, %v1632, %v1637
  %v1642 = vrsqrt.pop %v1380
  %v1643 = vmul.f32 %v1642, %v1380
  %v1644 = vmul.f32 %v1643, %v1642
  %v1645 = vmul.f32 0.5, %v1644
  %v1646 = vsub.f32 1.5, %v1645
  %v1647 = vmul.f32 %v1642, %v1646
  %vm1648 = vweird.f32 %v1380
  %vm1649 = vweird.f32 %v1642
  %vm1650 = vmor %vm1648, %vm1649
  %v1651 = vsel %vm1650, %v1642, %v1647
  %v1652 = vrsqrt.pop %v1381
  %v1653 = vmul.f32 %v1652, %v1381
  %v1654 = vmul.f32 %v1653, %v1652
  %v1655 = vmul.f32 0.5, %v1654
  %v1656 = vsub.f32 1.5, %v1655
  %v1657 = vmul.f32 %v1652, %v1656
  %vm1658 = vweird.f32 %v1381
  %vm1659 = vweird.f32 %v1652
  %vm1660 = vmor %vm1658, %vm1659
  %v1661 = vsel %vm1660, %v1652, %v1657
  %v1662 = vrsqrt.pop %v1382
  %v1663 = vmul.f32 %v1662, %v1382
  %v1664 = vmul.f32 %v1663, %v1662
  %v1665 = vmul.f32 0.5, %v1664
  %v1666 = vsub.f32 1.5, %v1665
  %v1667 = vmul.f32 %v1662, %v1666
  %vm1668 = vweird.f32 %v1382
  %vm1669 = vweird.f32 %v1662
  %vm1670 = vmor %vm1668, %vm1669
  %v1671 = vsel %vm1670, %v1662, %v1667
  %v1672 = vrsqrt.pop %v1383
  %v1673 = vmul.f32 %v1672, %v1383
  %v1674 = vmul.f32 %v1673, %v1672
  %v1675 = vmul.f32 0.5, %v1674
  %v1676 = vsub.f32 1.5, %v1675
  %v1677 = vmul.f32 %v1672, %v1676
  %vm1678 = vweird.f32 %v1383
  %vm1679 = vweird.f32 %v1672
  %vm1680 = vmor %vm1678, %vm1679
  %v1681 = vsel %vm1680, %v1672, %v1677
  %v1682 = vrsqrt.pop %v1384
  %v1683 = vmul.f32 %v1682, %v1384
  %v1684 = vmul.f32 %v1683, %v1682
  %v1685 = vmul.f32 0.5, %v1684
  %v1686 = vsub.f32 1.5, %v1685
  %v1687 = vmul.f32 %v1682, %v1686
  %vm1688 = vweird.f32 %v1384
  %vm1689 = vweird.f32 %v1682
  %vm1690 = vmor %vm1688, %vm1689
  %v1691 = vsel %vm1690, %v1682, %v1687
  %v1692 = vrsqrt.pop %v1385
  %v1693 = vmul.f32 %v1692, %v1385
  %v1694 = vmul.f32 %v1693, %v1692
  %v1695 = vmul.f32 0.5, %v1694
  %v1696 = vsub.f32 1.5, %v1695
  %v1697 = vmul.f32 %v1692, %v1696
  %vm1698 = vweird.f32 %v1385
  %vm1699 = vweird.f32 %v1692
  %vm1700 = vmor %vm1698, %vm1699
  %v1701 = vsel %vm1700, %v1692, %v1697
  %v1702 = vrsqrt.pop %v1386
  %v1703 = vmul.f32 %v1702, %v1386
  %v1704 = vmul.f32 %v1703, %v1702
  %v1705 = vmul.f32 0.5, %v1704
  %v1706 = vsub.f32 1.5, %v1705
  %v1707 = vmul.f32 %v1702, %v1706
  %vm1708 = vweird.f32 %v1386
  %vm1709 = vweird.f32 %v1702
  %vm1710 = vmor %vm1708, %vm1709
  %v1711 = vsel %vm1710, %v1702, %v1707
  %v1712 = vrsqrt.pop %v1387
  %v1713 = vmul.f32 %v1712, %v1387
  %v1714 = vmul.f32 %v1713, %v1712
  %v1715 = vmul.f32 0.5, %v1714
  %v1716 = vsub.f32 1.5, %v1715
  %v1717 = vmul.f32 %v1712, %v1716
  %vm1718 = vweird.f32 %v1387
  %vm1719 = vweird.f32 %v1712
  %vm1720 = vmor %vm1718, %vm1719
  %v1721 = vsel %vm1720, %v1712, %v1717
  %v1722 = vrsqrt.pop %v1388
  %v1723 = vmul.f32 %v1722, %v1388
  %v1724 = vmul.f32 %v1723, %v1722
  %v1725 = vmul.f32 0.5, %v1724
  %v1726 = vsub.f32 1.5, %v1725
  %v1727 = vmul.f32 %v1722, %v1726
  %vm1728 = vweird.f32 %v1388
  %vm1729 = vweird.f32 %v1722
  %vm1730 = vmor %vm1728, %vm1729
  %v1731 = vsel %vm1730, %v1722, %v1727
  %v1732 = vrsqrt.pop %v1389
  %v1733 = vmul.f32 %v1732, %v1389
  %v1734 = vmul.f32 %v1733, %v1732
  %v1735 = vmul.f32 0.5, %v1734
  %v1736 = vsub.f32 1.5, %v1735
  %v1737 = vmul.f32 %v1732, %v1736
  %vm1738 = vweird.f32 %v1389
  %vm1739 = vweird.f32 %v1732
  %vm1740 = vmor %vm1738, %vm1739
  %v1741 = vsel %vm1740, %v1732, %v1737
  %v1742 = vrsqrt.pop %v1390
  %v1743 = vmul.f32 %v1742, %v1390
  %v1744 = vmul.f32 %v1743, %v1742
  %v1745 = vmul.f32 0.5, %v1744
  %v1746 = vsub.f32 1.5, %v1745
  %v1747 = vmul.f32 %v1742, %v1746
  %vm1748 = vweird.f32 %v1390
  %vm1749 = vweird.f32 %v1742
  %vm1750 = vmor %vm1748, %vm1749
  %v1751 = vsel %vm1750, %v1742, %v1747
  %v1752 = vrsqrt.pop %v1391
  %v1753 = vmul.f32 %v1752, %v1391
  %v1754 = vmul.f32 %v1753, %v1752
  %v1755 = vmul.f32 0.5, %v1754
  %v1756 = vsub.f32 1.5, %v1755
  %v1757 = vmul.f32 %v1752, %v1756
  %vm1758 = vweird.f32 %v1391
  %vm1759 = vweird.f32 %v1752
  %vm1760 = vmor %vm1758, %vm1759
  %v1761 = vsel %vm1760, %v1752, %v1757
  %v1762 = vrsqrt.pop %v1392
  %v1763 = vmul.f32 %v1762, %v1392
  %v1764 = vmul.f32 %v1763, %v1762
  %v1765 = vmul.f32 0.5, %v1764
  %v1766 = vsub.f32 1.5, %v1765
  %v1767 = vmul.f32 %v1762, %v1766
  %vm1768 = vweird.f32 %v1392
  %vm1769 = vweird.f32 %v1762
  %vm1770 = vmor %vm1768, %vm1769
  %v1771 = vsel %vm1770, %v1762, %v1767
  %v1772 = vrsqrt.pop %v1393
  %v1773 = vmul.f32 %v1772, %v1393
  %v1774 = vmul.f32 %v1773, %v1772
  %v1775 = vmul.f32 0.5, %v1774
  %v1776 = vsub.f32 1.5, %v1775
  %v1777 = vmul.f32 %v1772, %v1776
  %vm1778 = vweird.f32 %v1393
  %vm1779 = vweird.f32 %v1772
  %vm1780 = vmor %vm1778, %vm1779
  %v1781 = vsel %vm1780, %v1772, %v1777
  %v1782 = vrsqrt.pop %v1394
  %v1783 = vmul.f32 %v1782, %v1394
  %v1784 = vmul.f32 %v1783, %v1782
  %v1785 = vmul.f32 0.5, %v1784
  %v1786 = vsub.f32 1.5, %v1785
  %v1787 = vmul.f32 %v1782, %v1786
  %vm1788 = vweird.f32 %v1394
  %vm1789 = vweird.f32 %v1782
  %vm1790 = vmor %vm1788, %vm1789
  %v1791 = vsel %vm1790, %v1782, %v1787
  %v1792 = vrsqrt.pop %v1395
  %v1793 = vmul.f32 %v1792, %v1395
  %v1794 = vmul.f32 %v1793, %v1792
  %v1795 = vmul.f32 0.5, %v1794
  %v1796 = vsub.f32 1.5, %v1795
  %v1797 = vmul.f32 %v1792, %v1796
  %vm1798 = vweird.f32 %v1395
  %vm1799 = vweird.f32 %v1792
  %vm1800 = vmor %vm1798, %vm1799
  %v1801 = vsel %vm1800, %v1792, %v1797
  %v1802 = vrsqrt.pop %v1396
  %v1803 = vmul.f32 %v1802, %v1396
  %v1804 = vmul.f32 %v1803, %v1802
  %v1805 = vmul.f32 0.5, %v1804
  %v1806 = vsub.f32 1.5, %v1805
  %v1807 = vmul.f32 %v1802, %v1806
  %vm1808 = vweird.f32 %v1396
  %vm1809 = vweird.f32 %v1802
  %vm1810 = vmor %vm1808, %vm1809
  %v1811 = vsel %vm1810, %v1802, %v1807
  %v1812 = vrsqrt.pop %v1397
  %v1813 = vmul.f32 %v1812, %v1397
  %v1814 = vmul.f32 %v1813, %v1812
  %v1815 = vmul.f32 0.5, %v1814
  %v1816 = vsub.f32 1.5, %v1815
  %v1817 = vmul.f32 %v1812, %v1816
  %vm1818 = vweird.f32 %v1397
  %vm1819 = vweird.f32 %v1812
  %vm1820 = vmor %vm1818, %vm1819
  %v1821 = vsel %vm1820, %v1812, %v1817
  %v1822 = vrsqrt.pop %v1398
  %v1823 = vmul.f32 %v1822, %v1398
  %v1824 = vmul.f32 %v1823, %v1822
  %v1825 = vmul.f32 0.5, %v1824
  %v1826 = vsub.f32 1.5, %v1825
  %v1827 = vmul.f32 %v1822, %v1826
  %vm1828 = vweird.f32 %v1398
  %vm1829 = vweird.f32 %v1822
  %vm1830 = vmor %vm1828, %vm1829
  %v1831 = vsel %vm1830, %v1822, %v1827
  %v1832 = vrsqrt.pop %v1399
  %v1833 = vmul.f32 %v1832, %v1399
  %v1834 = vmul.f32 %v1833, %v1832
  %v1835 = vmul.f32 0.5, %v1834
  %v1836 = vsub.f32 1.5, %v1835
  %v1837 = vmul.f32 %v1832, %v1836
  %vm1838 = vweird.f32 %v1399
  %vm1839 = vweird.f32 %v1832
  %vm1840 = vmor %vm1838, %vm1839
  %v1841 = vsel %vm1840, %v1832, %v1837
  %v1842 = vrsqrt.pop %v1400
  %v1843 = vmul.f32 %v1842, %v1400
  %v1844 = vmul.f32 %v1843, %v1842
  %v1845 = vmul.f32 0.5, %v1844
  %v1846 = vsub.f32 1.5, %v1845
  %v1847 = vmul.f32 %v1842, %v1846
  %vm1848 = vweird.f32 %v1400
  %vm1849 = vweird.f32 %v1842
  %vm1850 = vmor %vm1848, %vm1849
  %v1851 = vsel %vm1850, %v1842, %v1847
  %v1852 = vrsqrt.pop %v1401
  %v1853 = vmul.f32 %v1852, %v1401
  %v1854 = vmul.f32 %v1853, %v1852
  %v1855 = vmul.f32 0.5, %v1854
  %v1856 = vsub.f32 1.5, %v1855
  %v1857 = vmul.f32 %v1852, %v1856
  %vm1858 = vweird.f32 %v1401
  %vm1859 = vweird.f32 %v1852
  %vm1860 = vmor %vm1858, %vm1859
  %v1861 = vsel %vm1860, %v1852, %v1857
  %v1862 = vrsqrt.pop %v1402
  %v1863 = vmul.f32 %v1862, %v1402
  %v1864 = vmul.f32 %v1863, %v1862
  %v1865 = vmul.f32 0.5, %v1864
  %v1866 = vsub.f32 1.5, %v1865
  %v1867 = vmul.f32 %v1862, %v1866
  %vm1868 = vweird.f32 %v1402
  %vm1869 = vweird.f32 %v1862
  %vm1870 = vmor %vm1868, %vm1869
  %v1871 = vsel %vm1870, %v1862, %v1867
  %v1872 = vrsqrt.pop %v1403
  %v1873 = vmul.f32 %v1872, %v1403
  %v1874 = vmul.f32 %v1873, %v1872
  %v1875 = vmul.f32 0.5, %v1874
  %v1876 = vsub.f32 1.5, %v1875
  %v1877 = vmul.f32 %v1872, %v1876
  %vm1878 = vweird.f32 %v1403
  %vm1879 = vweird.f32 %v1872
  %vm1880 = vmor %vm1878, %vm1879
  %v1881 = vsel %vm1880, %v1872, %v1877
  %v1882 = vrsqrt.pop %v1404
  %v1883 = vmul.f32 %v1882, %v1404
  %v1884 = vmul.f32 %v1883, %v1882
  %v1885 = vmul.f32 0.5, %v1884
  %v1886 = vsub.f32 1.5, %v1885
  %v1887 = vmul.f32 %v1882, %v1886
  %vm1888 = vweird.f32 %v1404
  %vm1889 = vweird.f32 %v1882
  %vm1890 = vmor %vm1888, %vm1889
  %v1891 = vsel %vm1890, %v1882, %v1887
  %v1892 = vrsqrt.pop %v1405
  %v1893 = vmul.f32 %v1892, %v1405
  %v1894 = vmul.f32 %v1893, %v1892
  %v1895 = vmul.f32 0.5, %v1894
  %v1896 = vsub.f32 1.5, %v1895
  %v1897 = vmul.f32 %v1892, %v1896
  %vm1898 = vweird.f32 %v1405
  %vm1899 = vweird.f32 %v1892
  %vm1900 = vmor %vm1898, %vm1899
  %v1901 = vsel %vm1900, %v1892, %v1897
  %v1902 = vrsqrt.pop %v1406
  %v1903 = vmul.f32 %v1902, %v1406
  %v1904 = vmul.f32 %v1903, %v1902
  %v1905 = vmul.f32 0.5, %v1904
  %v1906 = vsub.f32 1.5, %v1905
  %v1907 = vmul.f32 %v1902, %v1906
  %vm1908 = vweird.f32 %v1406
  %vm1909 = vweird.f32 %v1902
  %vm1910 = vmor %vm1908, %vm1909
  %v1911 = vsel %vm1910, %v1902, %v1907
  %v1912 = vrsqrt.pop %v1407
  %v1913 = vmul.f32 %v1912, %v1407
  %v1914 = vmul.f32 %v1913, %v1912
  %v1915 = vmul.f32 0.5, %v1914
  %v1916 = vsub.f32 1.5, %v1915
  %v1917 = vmul.f32 %v1912, %v1916
  %vm1918 = vweird.f32 %v1407
  %vm1919 = vweird.f32 %v1912
  %vm1920 = vmor %vm1918, %vm1919
  %v1921 = vsel %vm1920, %v1912, %v1917
  %v1922 = vrsqrt.pop %v1408
  %v1923 = vmul.f32 %v1922, %v1408
  %v1924 = vmul.f32 %v1923, %v1922
  %v1925 = vmul.f32 0.5, %v1924
  %v1926 = vsub.f32 1.5, %v1925
  %v1927 = vmul.f32 %v1922, %v1926
  %vm1928 = vweird.f32 %v1408
  %vm1929 = vweird.f32 %v1922
  %vm1930 = vmor %vm1928, %vm1929
  %v1931 = vsel %vm1930, %v1922, %v1927
  %v1932 = vrsqrt.pop %v1409
  %v1933 = vmul.f32 %v1932, %v1409
  %v1934 = vmul.f32 %v1933, %v1932
  %v1935 = vmul.f32 0.5, %v1934
  %v1936 = vsub.f32 1.5, %v1935
  %v1937 = vmul.f32 %v1932, %v1936
  %vm1938 = vweird.f32 %v1409
  %vm1939 = vweird.f32 %v1932
  %vm1940 = vmor %vm1938, %vm1939
  %v1941 = vsel %vm1940, %v1932, %v1937
  %v1942 = vrsqrt.pop %v1410
  %v1943 = vmul.f32 %v1942, %v1410
  %v1944 = vmul.f32 %v1943, %v1942
  %v1945 = vmul.f32 0.5, %v1944
  %v1946 = vsub.f32 1.5, %v1945
  %v1947 = vmul.f32 %v1942, %v1946
  %vm1948 = vweird.f32 %v1410
  %vm1949 = vweird.f32 %v1942
  %vm1950 = vmor %vm1948, %vm1949
  %v1951 = vsel %vm1950, %v1942, %v1947
  %v1952 = vrsqrt.pop %v1411
  %v1953 = vmul.f32 %v1952, %v1411
  %v1954 = vmul.f32 %v1953, %v1952
  %v1955 = vmul.f32 0.5, %v1954
  %v1956 = vsub.f32 1.5, %v1955
  %v1957 = vmul.f32 %v1952, %v1956
  %vm1958 = vweird.f32 %v1411
  %vm1959 = vweird.f32 %v1952
  %vm1960 = vmor %vm1958, %vm1959
  %v1961 = vsel %vm1960, %v1952, %v1957
  %v1962 = vrsqrt.pop %v1412
  %v1963 = vmul.f32 %v1962, %v1412
  %v1964 = vmul.f32 %v1963, %v1962
  %v1965 = vmul.f32 0.5, %v1964
  %v1966 = vsub.f32 1.5, %v1965
  %v1967 = vmul.f32 %v1962, %v1966
  %vm1968 = vweird.f32 %v1412
  %vm1969 = vweird.f32 %v1962
  %vm1970 = vmor %vm1968, %vm1969
  %v1971 = vsel %vm1970, %v1962, %v1967
  %v1972 = vrsqrt.pop %v1413
  %v1973 = vmul.f32 %v1972, %v1413
  %v1974 = vmul.f32 %v1973, %v1972
  %v1975 = vmul.f32 0.5, %v1974
  %v1976 = vsub.f32 1.5, %v1975
  %v1977 = vmul.f32 %v1972, %v1976
  %vm1978 = vweird.f32 %v1413
  %vm1979 = vweird.f32 %v1972
  %vm1980 = vmor %vm1978, %vm1979
  %v1981 = vsel %vm1980, %v1972, %v1977
  %v1982 = vrsqrt.pop %v1414
  %v1983 = vmul.f32 %v1982, %v1414
  %v1984 = vmul.f32 %v1983, %v1982
  %v1985 = vmul.f32 0.5, %v1984
  %v1986 = vsub.f32 1.5, %v1985
  %v1987 = vmul.f32 %v1982, %v1986
  %vm1988 = vweird.f32 %v1414
  %vm1989 = vweird.f32 %v1982
  %vm1990 = vmor %vm1988, %vm1989
  %v1991 = vsel %vm1990, %v1982, %v1987
  %v1992 = vrsqrt.pop %v1415
  %v1993 = vmul.f32 %v1992, %v1415
  %v1994 = vmul.f32 %v1993, %v1992
  %v1995 = vmul.f32 0.5, %v1994
  %v1996 = vsub.f32 1.5, %v1995
  %v1997 = vmul.f32 %v1992, %v1996
  %vm1998 = vweird.f32 %v1415
  %vm1999 = vweird.f32 %v1992
  %vm2000 = vmor %vm1998, %vm1999
  %v2001 = vsel %vm2000, %v1992, %v1997
  %v2002 = vrsqrt.pop %v1416
  %v2003 = vmul.f32 %v2002, %v1416
  %v2004 = vmul.f32 %v2003, %v2002
  %v2005 = vmul.f32 0.5, %v2004
  %v2006 = vsub.f32 1.5, %v2005
  %v2007 = vmul.f32 %v2002, %v2006
  %vm2008 = vweird.f32 %v1416
  %vm2009 = vweird.f32 %v2002
  %vm2010 = vmor %vm2008, %vm2009
  %v2011 = vsel %vm2010, %v2002, %v2007
  %v2012 = vrsqrt.pop %v1417
  %v2013 = vmul.f32 %v2012, %v1417
  %v2014 = vmul.f32 %v2013, %v2012
  %v2015 = vmul.f32 0.5, %v2014
  %v2016 = vsub.f32 1.5, %v2015
  %v2017 = vmul.f32 %v2012, %v2016
  %vm2018 = vweird.f32 %v1417
  %vm2019 = vweird.f32 %v2012
  %vm2020 = vmor %vm2018, %vm2019
  %v2021 = vsel %vm2020, %v2012, %v2017
  %v2022 = vrsqrt.pop %v1418
  %v2023 = vmul.f32 %v2022, %v1418
  %v2024 = vmul.f32 %v2023, %v2022
  %v2025 = vmul.f32 0.5, %v2024
  %v2026 = vsub.f32 1.5, %v2025
  %v2027 = vmul.f32 %v2022, %v2026
  %vm2028 = vweird.f32 %v1418
  %vm2029 = vweird.f32 %v2022
  %vm2030 = vmor %vm2028, %vm2029
  %v2031 = vsel %vm2030, %v2022, %v2027
  %v2032 = vrsqrt.pop %v1419
  %v2033 = vmul.f32 %v2032, %v1419
  %v2034 = vmul.f32 %v2033, %v2032
  %v2035 = vmul.f32 0.5, %v2034
  %v2036 = vsub.f32 1.5, %v2035
  %v2037 = vmul.f32 %v2032, %v2036
  %vm2038 = vweird.f32 %v1419
  %vm2039 = vweird.f32 %v2032
  %vm2040 = vmor %vm2038, %vm2039
  %v2041 = vsel %vm2040, %v2032, %v2037
  %v2042 = vrsqrt.pop %v1420
  %v2043 = vmul.f32 %v2042, %v1420
  %v2044 = vmul.f32 %v2043, %v2042
  %v2045 = vmul.f32 0.5, %v2044
  %v2046 = vsub.f32 1.5, %v2045
  %v2047 = vmul.f32 %v2042, %v2046
  %vm2048 = vweird.f32 %v1420
  %vm2049 = vweird.f32 %v2042
  %vm2050 = vmor %vm2048, %vm2049
  %v2051 = vsel %vm2050, %v2042, %v2047
  %v2052 = vrsqrt.pop %v1421
  %v2053 = vmul.f32 %v2052, %v1421
  %v2054 = vmul.f32 %v2053, %v2052
  %v2055 = vmul.f32 0.5, %v2054
  %v2056 = vsub.f32 1.5, %v2055
  %v2057 = vmul.f32 %v2052, %v2056
  %vm2058 = vweird.f32 %v1421
  %vm2059 = vweird.f32 %v2052
  %vm2060 = vmor %vm2058, %vm2059
  %v2061 = vsel %vm2060, %v2052, %v2057
  %v2062 = vmul.f32 %v1007, %v1431
  %v2063 = vmul.f32 %v1009, %v1441
  %v2064 = vmul.f32 %v1012, %v1451
  %v2065 = vmul.f32 %v1014, %v1461
  %v2066 = vmul.f32 %v1017, %v1471
  %v2067 = vmul.f32 %v1019, %v1481
  %v2068 = vmul.f32 %v1022, %v1491
  %v2069 = vmul.f32 %v1024, %v1501
  %v2070 = vmul.f32 %v1027, %v1511
  %v2071 = vmul.f32 %v1029, %v1521
  %v2072 = vmul.f32 %v1032, %v1531
  %v2073 = vmul.f32 %v1034, %v1541
  %v2074 = vmul.f32 %v1037, %v1551
  %v2075 = vmul.f32 %v1039, %v1561
  %v2076 = vmul.f32 %v1042, %v1571
  %v2077 = vmul.f32 %v1044, %v1581
  %v2078 = vmul.f32 %v1047, %v1591
  %v2079 = vmul.f32 %v1049, %v1601
  %v2080 = vmul.f32 %v1052, %v1611
  %v2081 = vmul.f32 %v1054, %v1621
  %v2082 = vmul.f32 %v1057, %v1631
  %v2083 = vmul.f32 %v1059, %v1641
  %v2084 = vmul.f32 %v1062, %v1651
  %v2085 = vmul.f32 %v1064, %v1661
  %v2086 = vmul.f32 %v1067, %v1671
  %v2087 = vmul.f32 %v1069, %v1681
  %v2088 = vmul.f32 %v1072, %v1691
  %v2089 = vmul.f32 %v1074, %v1701
  %v2090 = vmul.f32 %v1077, %v1711
  %v2091 = vmul.f32 %v1079, %v1721
  %v2092 = vmul.f32 %v1082, %v1731
  %v2093 = vmul.f32 %v1084, %v1741
  %v2094 = vmul.f32 %v1087, %v1751
  %v2095 = vmul.f32 %v1089, %v1761
  %v2096 = vmul.f32 %v1092, %v1771
  %v2097 = vmul.f32 %v1094, %v1781
  %v2098 = vmul.f32 %v1097, %v1791
  %v2099 = vmul.f32 %v1099, %v1801
  %v2100 = vmul.f32 %v1102, %v1811
  %v2101 = vmul.f32 %v1104, %v1821
  %v2102 = vmul.f32 %v1107, %v1831
  %v2103 = vmul.f32 %v1109, %v1841
  %v2104 = vmul.f32 %v1112, %v1851
  %v2105 = vmul.f32 %v1114, %v1861
  %v2106 = vmul.f32 %v1117, %v1871
  %v2107 = vmul.f32 %v1119, %v1881
  %v2108 = vmul.f32 %v1122, %v1891
  %v2109 = vmul.f32 %v1124, %v1901
  %v2110 = vmul.f32 %v1127, %v1911
  %v2111 = vmul.f32 %v1129, %v1921
  %v2112 = vmul.f32 %v1132, %v1931
  %v2113 = vmul.f32 %v1134, %v1941
  %v2114 = vmul.f32 %v1137, %v1951
  %v2115 = vmul.f32 %v1139, %v1961
  %v2116 = vmul.f32 %v1142, %v1971
  %v2117 = vmul.f32 %v1144, %v1981
  %v2118 = vmul.f32 %v1147, %v1991
  %v2119 = vmul.f32 %v1149, %v2001
  %v2120 = vmul.f32 %v1152, %v2011
  %v2121 = vmul.f32 %v1154, %v2021
  %v2122 = vmul.f32 %v1157, %v2031
  %v2123 = vmul.f32 %v1159, %v2041
  %v2124 = vmul.f32 %v1162, %v2051
  %v2125 = vmul.f32 %v1164, %v2061
  %v2126 = vpack.c.bf16 %v2062, %v2062
  %v2127 = vpack.c.bf16 %v2063, %v2063
  %v2128 = vpack.c.bf16 %v2064, %v2064
  %v2129 = vpack.c.bf16 %v2065, %v2065
  %v2130 = vpack.c.bf16 %v2066, %v2066
  %v2131 = vpack.c.bf16 %v2067, %v2067
  %v2132 = vpack.c.bf16 %v2068, %v2068
  %v2133 = vpack.c.bf16 %v2069, %v2069
  %v2134 = vpack.c.bf16 %v2070, %v2070
  %v2135 = vpack.c.bf16 %v2071, %v2071
  %v2136 = vpack.c.bf16 %v2072, %v2072
  %v2137 = vpack.c.bf16 %v2073, %v2073
  %v2138 = vpack.c.bf16 %v2074, %v2074
  %v2139 = vpack.c.bf16 %v2075, %v2075
  %v2140 = vpack.c.bf16 %v2076, %v2076
  %v2141 = vpack.c.bf16 %v2077, %v2077
  %v2142 = vpack.c.bf16 %v2078, %v2078
  %v2143 = vpack.c.bf16 %v2079, %v2079
  %v2144 = vpack.c.bf16 %v2080, %v2080
  %v2145 = vpack.c.bf16 %v2081, %v2081
  %v2146 = vpack.c.bf16 %v2082, %v2082
  %v2147 = vpack.c.bf16 %v2083, %v2083
  %v2148 = vpack.c.bf16 %v2084, %v2084
  %v2149 = vpack.c.bf16 %v2085, %v2085
  %v2150 = vpack.c.bf16 %v2086, %v2086
  %v2151 = vpack.c.bf16 %v2087, %v2087
  %v2152 = vpack.c.bf16 %v2088, %v2088
  %v2153 = vpack.c.bf16 %v2089, %v2089
  %v2154 = vpack.c.bf16 %v2090, %v2090
  %v2155 = vpack.c.bf16 %v2091, %v2091
  %v2156 = vpack.c.bf16 %v2092, %v2092
  %v2157 = vpack.c.bf16 %v2093, %v2093
  %v2158 = vpack.c.bf16 %v2094, %v2094
  %v2159 = vpack.c.bf16 %v2095, %v2095
  %v2160 = vpack.c.bf16 %v2096, %v2096
  %v2161 = vpack.c.bf16 %v2097, %v2097
  %v2162 = vpack.c.bf16 %v2098, %v2098
  %v2163 = vpack.c.bf16 %v2099, %v2099
  %v2164 = vpack.c.bf16 %v2100, %v2100
  %v2165 = vpack.c.bf16 %v2101, %v2101
  %v2166 = vpack.c.bf16 %v2102, %v2102
  %v2167 = vpack.c.bf16 %v2103, %v2103
  %v2168 = vpack.c.bf16 %v2104, %v2104
  %v2169 = vpack.c.bf16 %v2105, %v2105
  %v2170 = vpack.c.bf16 %v2106, %v2106
  %v2171 = vpack.c.bf16 %v2107, %v2107
  %v2172 = vpack.c.bf16 %v2108, %v2108
  %v2173 = vpack.c.bf16 %v2109, %v2109
  %v2174 = vpack.c.bf16 %v2110, %v2110
  %v2175 = vpack.c.bf16 %v2111, %v2111
  %v2176 = vpack.c.bf16 %v2112, %v2112
  %v2177 = vpack.c.bf16 %v2113, %v2113
  %v2178 = vpack.c.bf16 %v2114, %v2114
  %v2179 = vpack.c.bf16 %v2115, %v2115
  %v2180 = vpack.c.bf16 %v2116, %v2116
  %v2181 = vpack.c.bf16 %v2117, %v2117
  %v2182 = vpack.c.bf16 %v2118, %v2118
  %v2183 = vpack.c.bf16 %v2119, %v2119
  %v2184 = vpack.c.bf16 %v2120, %v2120
  %v2185 = vpack.c.bf16 %v2121, %v2121
  %v2186 = vpack.c.bf16 %v2122, %v2122
  %v2187 = vpack.c.bf16 %v2123, %v2123
  %v2188 = vpack.c.bf16 %v2124, %v2124
  %v2189 = vpack.c.bf16 %v2125, %v2125
  %2190 = vst [vmem:[%s5] sm:$0xf] %v2126
  %2191 = vst [vmem:[%s5 + $0x4] sm:$0xf] %v2127
  %2192 = vst [vmem:[%s5 + $0x8] sm:$0xf] %v2128
  %2193 = vst [vmem:[%s5 + $0xc] sm:$0xf] %v2129
  %2194 = vst [vmem:[%s5 + $0x10] sm:$0xf] %v2130
  %2195 = vst [vmem:[%s5 + $0x14] sm:$0xf] %v2131
  %2196 = vst [vmem:[%s5 + $0x18] sm:$0xf] %v2132
  %2197 = vst [vmem:[%s5 + $0x1c] sm:$0xf] %v2133
  %2198 = vst [vmem:[%s5 + $0x20] sm:$0xf] %v2134
  %2199 = vst [vmem:[%s5 + $0x24] sm:$0xf] %v2135
  %2200 = vst [vmem:[%s5 + $0x28] sm:$0xf] %v2136
  %2201 = vst [vmem:[%s5 + $0x2c] sm:$0xf] %v2137
  %2202 = vst [vmem:[%s5 + $0x30] sm:$0xf] %v2138
  %2203 = vst [vmem:[%s5 + $0x34] sm:$0xf] %v2139
  %2204 = vst [vmem:[%s5 + $0x38] sm:$0xf] %v2140
  %2205 = vst [vmem:[%s5 + $0x3c] sm:$0xf] %v2141
  %2206 = vst [vmem:[%s5 + $0x40] sm:$0xf] %v2142
  %2207 = vst [vmem:[%s5 + $0x44] sm:$0xf] %v2143
  %2208 = vst [vmem:[%s5 + $0x48] sm:$0xf] %v2144
  %2209 = vst [vmem:[%s5 + $0x4c] sm:$0xf] %v2145
  %2210 = vst [vmem:[%s5 + $0x50] sm:$0xf] %v2146
  %2211 = vst [vmem:[%s5 + $0x54] sm:$0xf] %v2147
  %2212 = vst [vmem:[%s5 + $0x58] sm:$0xf] %v2148
  %2213 = vst [vmem:[%s5 + $0x5c] sm:$0xf] %v2149
  %2214 = vst [vmem:[%s5 + $0x60] sm:$0xf] %v2150
  %2215 = vst [vmem:[%s5 + $0x64] sm:$0xf] %v2151
  %2216 = vst [vmem:[%s5 + $0x68] sm:$0xf] %v2152
  %2217 = vst [vmem:[%s5 + $0x6c] sm:$0xf] %v2153
  %2218 = vst [vmem:[%s5 + $0x70] sm:$0xf] %v2154
  %2219 = vst [vmem:[%s5 + $0x74] sm:$0xf] %v2155
  %2220 = vst [vmem:[%s5 + $0x78] sm:$0xf] %v2156
  %2221 = vst [vmem:[%s5 + $0x7c] sm:$0xf] %v2157
  %2222 = vst [vmem:[%s5 + $0x80] sm:$0xf] %v2158
  %2223 = vst [vmem:[%s5 + $0x84] sm:$0xf] %v2159
  %2224 = vst [vmem:[%s5 + $0x88] sm:$0xf] %v2160
  %2225 = vst [vmem:[%s5 + $0x8c] sm:$0xf] %v2161
  %2226 = vst [vmem:[%s5 + $0x90] sm:$0xf] %v2162
  %2227 = vst [vmem:[%s5 + $0x94] sm:$0xf] %v2163
  %2228 = vst [vmem:[%s5 + $0x98] sm:$0xf] %v2164
  %2229 = vst [vmem:[%s5 + $0x9c] sm:$0xf] %v2165
  %2230 = vst [vmem:[%s5 + $0xa0] sm:$0xf] %v2166
  %2231 = vst [vmem:[%s5 + $0xa4] sm:$0xf] %v2167
  %2232 = vst [vmem:[%s5 + $0xa8] sm:$0xf] %v2168
  %2233 = vst [vmem:[%s5 + $0xac] sm:$0xf] %v2169
  %2234 = vst [vmem:[%s5 + $0xb0] sm:$0xf] %v2170
  %2235 = vst [vmem:[%s5 + $0xb4] sm:$0xf] %v2171
  %2236 = vst [vmem:[%s5 + $0xb8] sm:$0xf] %v2172
  %2237 = vst [vmem:[%s5 + $0xbc] sm:$0xf] %v2173
  %2238 = vst [vmem:[%s5 + $0xc0] sm:$0xf] %v2174
  %2239 = vst [vmem:[%s5 + $0xc4] sm:$0xf] %v2175
  %2240 = vst [vmem:[%s5 + $0xc8] sm:$0xf] %v2176
  %2241 = vst [vmem:[%s5 + $0xcc] sm:$0xf] %v2177
  %2242 = vst [vmem:[%s5 + $0xd0] sm:$0xf] %v2178
  %2243 = vst [vmem:[%s5 + $0xd4] sm:$0xf] %v2179
  %2244 = vst [vmem:[%s5 + $0xd8] sm:$0xf] %v2180
  %2245 = vst [vmem:[%s5 + $0xdc] sm:$0xf] %v2181
  %2246 = vst [vmem:[%s5 + $0xe0] sm:$0xf] %v2182
  %2247 = vst [vmem:[%s5 + $0xe4] sm:$0xf] %v2183
  %2248 = vst [vmem:[%s5 + $0xe8] sm:$0xf] %v2184
  %2249 = vst [vmem:[%s5 + $0xec] sm:$0xf] %v2185
  %2250 = vst [vmem:[%s5 + $0xf0] sm:$0xf] %v2186
  %2251 = vst [vmem:[%s5 + $0xf4] sm:$0xf] %v2187
  %2252 = vst [vmem:[%s5 + $0xf8] sm:$0xf] %v2188
  %2253 = vst [vmem:[%s5 + $0xfc] sm:$0xf] %v2189
  // Predicated region
  $region22: #{heco_forward.10} parent=0 // pred_check
    _
  $region23: #{heco_forward.10} parent=0 // pred_check_branch
    %2255 = sbr.rel (0) target = $region25
  $region24: #{heco_forward.10} parent=0 // pred_region
    _
  $region25: #{heco_forward.10} parent=0 // pred_fallthru
    _
  // Predicated region
  $region26: #{heco_forward.10} parent=0 // pred_check
    _
  $region27: #{heco_forward.10} parent=0 // pred_check_branch
    %2257 = sbr.rel (0) target = $region29
  $region28: #{heco_forward.10} parent=0 // pred_region
    _
  $region29: #{heco_forward.10} parent=0 // pred_fallthru
    _

// kernel: heco_forward.11
$region0: #{heco_forward.11}
  #allocation0 [shape = 'u32[]', space=smem, size = 0x4, offset = 0x4, fixed_abs, tag = 'smem constant byte address 0x4 - core index']
  #allocation1 [shape = 'u32[72,128]{1,0:T(1,128)}', space=vmem, size = 0x9000, scoped, tag = 'internal scratch']
  #allocation2 [shape = 'f32[256,1]{1,0:T(8,128)}', space=vmem, size = 0x20000, scoped, tag = 'scratch operand']
  #allocation3 [shape = 'f32[256,1]{1,0:T(8,128)}', space=vmem, size = 0x20000, scoped, tag = 'scratch operand']
  %s0 = inlined_call_operand.vmem [shape: bf16[256,128], index: 0, kind: input, shape index: {}]
  %s1 = inlined_call_operand.vmem [shape: bf16[256,128], index: 1, kind: input, shape index: {}]
  %s2 = inlined_call_operand.vmem [shape: bf16[256,256], index: 2, kind: input, shape index: {}, may-alias: {2,3}]
  %s3 = inlined_call_operand.vmem [shape: bf16[256,256], index: 3, kind: input, shape index: {}, may-alias: {2,3}]
  %s4 = inlined_call_operand.vmem [shape: f32[256,1], index: 4, kind: output, shape index: {0}]
  %s5 = inlined_call_operand.vmem [shape: f32[1,1,256], index: 5, kind: output, shape index: {1}]
  %s6 = inlined_call_operand.vmem [shape: f32[1,1,256], index: 6, kind: output, shape index: {2}]
  %7 = xla_tuple %s4, %s5, %s6
  %s8 = sld [smem:[#allocation0]]
  $region50: #{heco_forward.11} parent=0
    _
  %s10 = ssub.s32 1, %s8
  %s11 = scalar_select 0, %s10, %s8
  // Predicated region
  $region2: #{heco_forward.11} parent=0 // pred_check
    _
  $region3: #{heco_forward.11} parent=0 // pred_check_branch
    %13 = sbr.rel (0) target = $region5
  $region4: #{heco_forward.11} parent=0 // pred_region
    _
  $region5: #{heco_forward.11} parent=0 // pred_fallthru
    _
  // Predicated region
  $region6: #{heco_forward.11} parent=0 // pred_check
    _
  $region7: #{heco_forward.11} parent=0 // pred_check_branch
    %15 = sbr.rel (0) target = $region9
  $region8: #{heco_forward.11} parent=0 // pred_region
    _
  $region9: #{heco_forward.11} parent=0 // pred_fallthru
    _
  // Predicated region
  $region10: #{heco_forward.11} parent=0 // pred_check
    _
  $region11: #{heco_forward.11} parent=0 // pred_check_branch
    %17 = sbr.rel (0) target = $region13
  $region12: #{heco_forward.11} parent=0 // pred_region
    _
  $region13: #{heco_forward.11} parent=0 // pred_fallthru
    _
  // Predicated region
  $region14: #{heco_forward.11} parent=0 // pred_check
    _
  $region15: #{heco_forward.11} parent=0 // pred_check_branch
    %19 = sbr.rel (0) target = $region17
  $region16: #{heco_forward.11} parent=0 // pred_region
    _
  $region17: #{heco_forward.11} parent=0 // pred_fallthru
    _
  %p20 = scmp.eq.s32.totalorder 0, 0
  // Predicated region
  $region18: #{heco_forward.11} parent=0 // pred_check
    %p21 = pneg %p20
  $region19: #{heco_forward.11} parent=0 // pred_check_branch
    %23 = sbr.rel (%p21) target = $region21
  $region20: #{heco_forward.11} parent=0 // pred_region
    %vm24 = vcmask 7168
    %25 = vst.msk [vmem:[#allocation2] sm:$0xff] %vm24, 0.0
    %26 = vst.msk [vmem:[#allocation2 + $0x8] sm:$0xff] %vm24, 0.0
    %27 = vst.msk [vmem:[#allocation2 + $0x10] sm:$0xff] %vm24, 0.0
    %28 = vst.msk [vmem:[#allocation2 + $0x18] sm:$0xff] %vm24, 0.0
    %29 = vst.msk [vmem:[#allocation2 + $0x20] sm:$0xff] %vm24, 0.0
    %30 = vst.msk [vmem:[#allocation2 + $0x28] sm:$0xff] %vm24, 0.0
    %31 = vst.msk [vmem:[#allocation2 + $0x30] sm:$0xff] %vm24, 0.0
    %32 = vst.msk [vmem:[#allocation2 + $0x38] sm:$0xff] %vm24, 0.0
    %33 = vst.msk [vmem:[#allocation2 + $0x40] sm:$0xff] %vm24, 0.0
    %34 = vst.msk [vmem:[#allocation2 + $0x48] sm:$0xff] %vm24, 0.0
    %35 = vst.msk [vmem:[#allocation2 + $0x50] sm:$0xff] %vm24, 0.0
    %36 = vst.msk [vmem:[#allocation2 + $0x58] sm:$0xff] %vm24, 0.0
    %37 = vst.msk [vmem:[#allocation2 + $0x60] sm:$0xff] %vm24, 0.0
    %38 = vst.msk [vmem:[#allocation2 + $0x68] sm:$0xff] %vm24, 0.0
    %39 = vst.msk [vmem:[#allocation2 + $0x70] sm:$0xff] %vm24, 0.0
    %40 = vst.msk [vmem:[#allocation2 + $0x78] sm:$0xff] %vm24, 0.0
    %41 = vst.msk [vmem:[#allocation2 + $0x80] sm:$0xff] %vm24, 0.0
    %42 = vst.msk [vmem:[#allocation2 + $0x88] sm:$0xff] %vm24, 0.0
    %43 = vst.msk [vmem:[#allocation2 + $0x90] sm:$0xff] %vm24, 0.0
    %44 = vst.msk [vmem:[#allocation2 + $0x98] sm:$0xff] %vm24, 0.0
    %45 = vst.msk [vmem:[#allocation2 + $0xa0] sm:$0xff] %vm24, 0.0
    %46 = vst.msk [vmem:[#allocation2 + $0xa8] sm:$0xff] %vm24, 0.0
    %47 = vst.msk [vmem:[#allocation2 + $0xb0] sm:$0xff] %vm24, 0.0
    %48 = vst.msk [vmem:[#allocation2 + $0xb8] sm:$0xff] %vm24, 0.0
    %49 = vst.msk [vmem:[#allocation2 + $0xc0] sm:$0xff] %vm24, 0.0
    %50 = vst.msk [vmem:[#allocation2 + $0xc8] sm:$0xff] %vm24, 0.0
    %51 = vst.msk [vmem:[#allocation2 + $0xd0] sm:$0xff] %vm24, 0.0
    %52 = vst.msk [vmem:[#allocation2 + $0xd8] sm:$0xff] %vm24, 0.0
    %53 = vst.msk [vmem:[#allocation2 + $0xe0] sm:$0xff] %vm24, 0.0
    %54 = vst.msk [vmem:[#allocation2 + $0xe8] sm:$0xff] %vm24, 0.0
    %55 = vst.msk [vmem:[#allocation2 + $0xf0] sm:$0xff] %vm24, 0.0
    %56 = vst.msk [vmem:[#allocation2 + $0xf8] sm:$0xff] %vm24, 0.0
    %57 = vst.msk [vmem:[#allocation3] sm:$0xff] %vm24, 0.0
    %58 = vst.msk [vmem:[#allocation3 + $0x8] sm:$0xff] %vm24, 0.0
    %59 = vst.msk [vmem:[#allocation3 + $0x10] sm:$0xff] %vm24, 0.0
    %60 = vst.msk [vmem:[#allocation3 + $0x18] sm:$0xff] %vm24, 0.0
    %61 = vst.msk [vmem:[#allocation3 + $0x20] sm:$0xff] %vm24, 0.0
    %62 = vst.msk [vmem:[#allocation3 + $0x28] sm:$0xff] %vm24, 0.0
    %63 = vst.msk [vmem:[#allocation3 + $0x30] sm:$0xff] %vm24, 0.0
    %64 = vst.msk [vmem:[#allocation3 + $0x38] sm:$0xff] %vm24, 0.0
    %65 = vst.msk [vmem:[#allocation3 + $0x40] sm:$0xff] %vm24, 0.0
    %66 = vst.msk [vmem:[#allocation3 + $0x48] sm:$0xff] %vm24, 0.0
    %67 = vst.msk [vmem:[#allocation3 + $0x50] sm:$0xff] %vm24, 0.0
    %68 = vst.msk [vmem:[#allocation3 + $0x58] sm:$0xff] %vm24, 0.0
    %69 = vst.msk [vmem:[#allocation3 + $0x60] sm:$0xff] %vm24, 0.0
    %70 = vst.msk [vmem:[#allocation3 + $0x68] sm:$0xff] %vm24, 0.0
    %71 = vst.msk [vmem:[#allocation3 + $0x70] sm:$0xff] %vm24, 0.0
    %72 = vst.msk [vmem:[#allocation3 + $0x78] sm:$0xff] %vm24, 0.0
    %73 = vst.msk [vmem:[#allocation3 + $0x80] sm:$0xff] %vm24, 0.0
    %74 = vst.msk [vmem:[#allocation3 + $0x88] sm:$0xff] %vm24, 0.0
    %75 = vst.msk [vmem:[#allocation3 + $0x90] sm:$0xff] %vm24, 0.0
    %76 = vst.msk [vmem:[#allocation3 + $0x98] sm:$0xff] %vm24, 0.0
    %77 = vst.msk [vmem:[#allocation3 + $0xa0] sm:$0xff] %vm24, 0.0
    %78 = vst.msk [vmem:[#allocation3 + $0xa8] sm:$0xff] %vm24, 0.0
    %79 = vst.msk [vmem:[#allocation3 + $0xb0] sm:$0xff] %vm24, 0.0
    %80 = vst.msk [vmem:[#allocation3 + $0xb8] sm:$0xff] %vm24, 0.0
    %81 = vst.msk [vmem:[#allocation3 + $0xc0] sm:$0xff] %vm24, 0.0
    %82 = vst.msk [vmem:[#allocation3 + $0xc8] sm:$0xff] %vm24, 0.0
    %83 = vst.msk [vmem:[#allocation3 + $0xd0] sm:$0xff] %vm24, 0.0
    %84 = vst.msk [vmem:[#allocation3 + $0xd8] sm:$0xff] %vm24, 0.0
    %85 = vst.msk [vmem:[#allocation3 + $0xe0] sm:$0xff] %vm24, 0.0
    %86 = vst.msk [vmem:[#allocation3 + $0xe8] sm:$0xff] %vm24, 0.0
    %87 = vst.msk [vmem:[#allocation3 + $0xf0] sm:$0xff] %vm24, 0.0
    %88 = vst.msk [vmem:[#allocation3 + $0xf8] sm:$0xff] %vm24, 0.0
  $region21: #{heco_forward.11} parent=0 // pred_fallthru
    _
  %v89 = vld [vmem:[%s0] sm:$0xf]
  %v90 = vld [vmem:[%s0 + $0x4] sm:$0xf]
  %v91 = vld [vmem:[%s0 + $0x8] sm:$0xf]
  %v92 = vld [vmem:[%s0 + $0xc] sm:$0xf]
  %v93 = vld [vmem:[%s0 + $0x10] sm:$0xf]
  %v94 = vld [vmem:[%s0 + $0x14] sm:$0xf]
  %v95 = vld [vmem:[%s0 + $0x18] sm:$0xf]
  %v96 = vld [vmem:[%s0 + $0x1c] sm:$0xf]
  %v97 = vld [vmem:[%s0 + $0x20] sm:$0xf]
  %v98 = vld [vmem:[%s0 + $0x24] sm:$0xf]
  %v99 = vld [vmem:[%s0 + $0x28] sm:$0xf]
  %v100 = vld [vmem:[%s0 + $0x2c] sm:$0xf]
  %v101 = vld [vmem:[%s0 + $0x30] sm:$0xf]
  %v102 = vld [vmem:[%s0 + $0x34] sm:$0xf]
  %v103 = vld [vmem:[%s0 + $0x38] sm:$0xf]
  %v104 = vld [vmem:[%s0 + $0x3c] sm:$0xf]
  %v105 = vld [vmem:[%s0 + $0x40] sm:$0xf]
  %v106 = vld [vmem:[%s0 + $0x44] sm:$0xf]
  %v107 = vld [vmem:[%s0 + $0x48] sm:$0xf]
  %v108 = vld [vmem:[%s0 + $0x4c] sm:$0xf]
  %v109 = vld [vmem:[%s0 + $0x50] sm:$0xf]
  %v110 = vld [vmem:[%s0 + $0x54] sm:$0xf]
  %v111 = vld [vmem:[%s0 + $0x58] sm:$0xf]
  %v112 = vld [vmem:[%s0 + $0x5c] sm:$0xf]
  %v113 = vld [vmem:[%s0 + $0x60] sm:$0xf]
  %v114 = vld [vmem:[%s0 + $0x64] sm:$0xf]
  %v115 = vld [vmem:[%s0 + $0x68] sm:$0xf]
  %v116 = vld [vmem:[%s0 + $0x6c] sm:$0xf]
  %v117 = vld [vmem:[%s0 + $0x70] sm:$0xf]
  %v118 = vld [vmem:[%s0 + $0x74] sm:$0xf]
  %v119 = vld [vmem:[%s0 + $0x78] sm:$0xf]
  %v120 = vld [vmem:[%s0 + $0x7c] sm:$0xf]
  %v121 = vld [vmem:[%s1] sm:$0xf]
  %v122 = vld [vmem:[%s1 + $0x4] sm:$0xf]
  %v123 = vld [vmem:[%s1 + $0x8] sm:$0xf]
  %v124 = vld [vmem:[%s1 + $0xc] sm:$0xf]
  %v125 = vld [vmem:[%s1 + $0x10] sm:$0xf]
  %v126 = vld [vmem:[%s1 + $0x14] sm:$0xf]
  %v127 = vld [vmem:[%s1 + $0x18] sm:$0xf]
  %v128 = vld [vmem:[%s1 + $0x1c] sm:$0xf]
  %v129 = vld [vmem:[%s1 + $0x20] sm:$0xf]
  %v130 = vld [vmem:[%s1 + $0x24] sm:$0xf]
  %v131 = vld [vmem:[%s1 + $0x28] sm:$0xf]
  %v132 = vld [vmem:[%s1 + $0x2c] sm:$0xf]
  %v133 = vld [vmem:[%s1 + $0x30] sm:$0xf]
  %v134 = vld [vmem:[%s1 + $0x34] sm:$0xf]
  %v135 = vld [vmem:[%s1 + $0x38] sm:$0xf]
  %v136 = vld [vmem:[%s1 + $0x3c] sm:$0xf]
  %v137 = vld [vmem:[%s1 + $0x40] sm:$0xf]
  %v138 = vld [vmem:[%s1 + $0x44] sm:$0xf]
  %v139 = vld [vmem:[%s1 + $0x48] sm:$0xf]
  %v140 = vld [vmem:[%s1 + $0x4c] sm:$0xf]
  %v141 = vld [vmem:[%s1 + $0x50] sm:$0xf]
  %v142 = vld [vmem:[%s1 + $0x54] sm:$0xf]
  %v143 = vld [vmem:[%s1 + $0x58] sm:$0xf]
  %v144 = vld [vmem:[%s1 + $0x5c] sm:$0xf]
  %v145 = vld [vmem:[%s1 + $0x60] sm:$0xf]
  %v146 = vld [vmem:[%s1 + $0x64] sm:$0xf]
  %v147 = vld [vmem:[%s1 + $0x68] sm:$0xf]
  %v148 = vld [vmem:[%s1 + $0x6c] sm:$0xf]
  %v149 = vld [vmem:[%s1 + $0x70] sm:$0xf]
  %v150 = vld [vmem:[%s1 + $0x74] sm:$0xf]
  %v151 = vld [vmem:[%s1 + $0x78] sm:$0xf]
  %v152 = vld [vmem:[%s1 + $0x7c] sm:$0xf]
  %v185 = vunpack.c.l.b16 %v89
  %v186 = vunpack.c.l.b16 %v90
  %v187 = vunpack.c.l.b16 %v91
  %v188 = vunpack.c.l.b16 %v92
  %v189 = vunpack.c.l.b16 %v93
  %v190 = vunpack.c.l.b16 %v94
  %v191 = vunpack.c.l.b16 %v95
  %v192 = vunpack.c.l.b16 %v96
  %v193 = vunpack.c.l.b16 %v97
  %v194 = vunpack.c.l.b16 %v98
  %v195 = vunpack.c.l.b16 %v99
  %v196 = vunpack.c.l.b16 %v100
  %v197 = vunpack.c.l.b16 %v101
  %v198 = vunpack.c.l.b16 %v102
  %v199 = vunpack.c.l.b16 %v103
  %v200 = vunpack.c.l.b16 %v104
  %v201 = vunpack.c.l.b16 %v105
  %v202 = vunpack.c.l.b16 %v106
  %v203 = vunpack.c.l.b16 %v107
  %v204 = vunpack.c.l.b16 %v108
  %v205 = vunpack.c.l.b16 %v109
  %v206 = vunpack.c.l.b16 %v110
  %v207 = vunpack.c.l.b16 %v111
  %v208 = vunpack.c.l.b16 %v112
  %v209 = vunpack.c.l.b16 %v113
  %v210 = vunpack.c.l.b16 %v114
  %v211 = vunpack.c.l.b16 %v115
  %v212 = vunpack.c.l.b16 %v116
  %v213 = vunpack.c.l.b16 %v117
  %v214 = vunpack.c.l.b16 %v118
  %v215 = vunpack.c.l.b16 %v119
  %v216 = vunpack.c.l.b16 %v120
  %v217 = vpack.c.b16 %v186, %v185
  %v218 = vpack.c.b16 %v188, %v187
  %v219 = vpack.c.b16 %v190, %v189
  %v220 = vpack.c.b16 %v192, %v191
  %v221 = vpack.c.b16 %v194, %v193
  %v222 = vpack.c.b16 %v196, %v195
  %v223 = vpack.c.b16 %v198, %v197
  %v224 = vpack.c.b16 %v200, %v199
  %v225 = vpack.c.b16 %v202, %v201
  %v226 = vpack.c.b16 %v204, %v203
  %v227 = vpack.c.b16 %v206, %v205
  %v228 = vpack.c.b16 %v208, %v207
  %v229 = vpack.c.b16 %v210, %v209
  %v230 = vpack.c.b16 %v212, %v211
  %v231 = vpack.c.b16 %v214, %v213
  %v232 = vpack.c.b16 %v216, %v215
  %v281 = vunpack.c.l.b16 %v121
  %v282 = vunpack.c.l.b16 %v122
  %v283 = vunpack.c.l.b16 %v123
  %v284 = vunpack.c.l.b16 %v124
  %v285 = vunpack.c.l.b16 %v125
  %v286 = vunpack.c.l.b16 %v126
  %v287 = vunpack.c.l.b16 %v127
  %v288 = vunpack.c.l.b16 %v128
  %v289 = vunpack.c.l.b16 %v129
  %v290 = vunpack.c.l.b16 %v130
  %v291 = vunpack.c.l.b16 %v131
  %v292 = vunpack.c.l.b16 %v132
  %v293 = vunpack.c.l.b16 %v133
  %v294 = vunpack.c.l.b16 %v134
  %v295 = vunpack.c.l.b16 %v135
  %v296 = vunpack.c.l.b16 %v136
  %v297 = vunpack.c.l.b16 %v137
  %v298 = vunpack.c.l.b16 %v138
  %v299 = vunpack.c.l.b16 %v139
  %v300 = vunpack.c.l.b16 %v140
  %v301 = vunpack.c.l.b16 %v141
  %v302 = vunpack.c.l.b16 %v142
  %v303 = vunpack.c.l.b16 %v143
  %v304 = vunpack.c.l.b16 %v144
  %v305 = vunpack.c.l.b16 %v145
  %v306 = vunpack.c.l.b16 %v146
  %v307 = vunpack.c.l.b16 %v147
  %v308 = vunpack.c.l.b16 %v148
  %v309 = vunpack.c.l.b16 %v149
  %v310 = vunpack.c.l.b16 %v150
  %v311 = vunpack.c.l.b16 %v151
  %v312 = vunpack.c.l.b16 %v152
  %v313 = vpack.c.b16 %v282, %v281
  %v314 = vpack.c.b16 %v284, %v283
  %v315 = vpack.c.b16 %v286, %v285
  %v316 = vpack.c.b16 %v288, %v287
  %v317 = vpack.c.b16 %v290, %v289
  %v318 = vpack.c.b16 %v292, %v291
  %v319 = vpack.c.b16 %v294, %v293
  %v320 = vpack.c.b16 %v296, %v295
  %v321 = vpack.c.b16 %v298, %v297
  %v322 = vpack.c.b16 %v300, %v299
  %v323 = vpack.c.b16 %v302, %v301
  %v324 = vpack.c.b16 %v304, %v303
  %v325 = vpack.c.b16 %v306, %v305
  %v326 = vpack.c.b16 %v308, %v307
  %v327 = vpack.c.b16 %v310, %v309
  %v328 = vpack.c.b16 %v312, %v311
  %345 = vmatpush.bf16.xpose.msra.mxu0 %v320
  %346 = vmatpush.bf16.xpose.msra.mxu0 %v319
  %347 = vmatpush.bf16.xpose.msra.mxu0 %v318
  %348 = vmatpush.bf16.xpose.msra.mxu0 %v317
  %349 = vmatpush.bf16.xpose.msra.mxu0 %v316
  %350 = vmatpush.bf16.xpose.msra.mxu0 %v315
  %351 = vmatpush.bf16.xpose.msra.mxu0 %v314
  %352 = vmatpush.bf16.xpose.msra.mxu0 %v313
  %353 = vmatmul.bf16.gmra.mxu0 %v217
  %v354 = vpop.f32.mrf.mxu0
  %v355 = vadd.f32 0.0, %v354
  %v356 = vpop.f32.mrf.mxu0
  %v357 = vadd.f32 0.0, %v356
  %358 = vmatmul.bf16.gmra.mxu0 %v218
  %v359 = vpop.f32.mrf.mxu0
  %v360 = vadd.f32 0.0, %v359
  %v361 = vpop.f32.mrf.mxu0
  %v362 = vadd.f32 0.0, %v361
  %363 = vmatmul.bf16.gmra.mxu0 %v219
  %v364 = vpop.f32.mrf.mxu0
  %v365 = vadd.f32 0.0, %v364
  %v366 = vpop.f32.mrf.mxu0
  %v367 = vadd.f32 0.0, %v366
  %368 = vmatmul.bf16.gmra.mxu0 %v220
  %v369 = vpop.f32.mrf.mxu0
  %v370 = vadd.f32 0.0, %v369
  %v371 = vpop.f32.mrf.mxu0
  %v372 = vadd.f32 0.0, %v371
  %373 = vmatmul.bf16.gmra.mxu0 %v221
  %v374 = vpop.f32.mrf.mxu0
  %v375 = vadd.f32 0.0, %v374
  %v376 = vpop.f32.mrf.mxu0
  %v377 = vadd.f32 0.0, %v376
  %378 = vmatmul.bf16.gmra.mxu0 %v222
  %v379 = vpop.f32.mrf.mxu0
  %v380 = vadd.f32 0.0, %v379
  %v381 = vpop.f32.mrf.mxu0
  %v382 = vadd.f32 0.0, %v381
  %383 = vmatmul.bf16.gmra.mxu0 %v223
  %v384 = vpop.f32.mrf.mxu0
  %v385 = vadd.f32 0.0, %v384
  %v386 = vpop.f32.mrf.mxu0
  %v387 = vadd.f32 0.0, %v386
  %388 = vmatmul.bf16.gmra.mxu0 %v224
  %v389 = vpop.f32.mrf.mxu0
  %v390 = vadd.f32 0.0, %v389
  %v391 = vpop.f32.mrf.mxu0
  %v392 = vadd.f32 0.0, %v391
  %393 = vmatmul.bf16.gmra.mxu0 %v225
  %v394 = vpop.f32.mrf.mxu0
  %v395 = vadd.f32 0.0, %v394
  %v396 = vpop.f32.mrf.mxu0
  %v397 = vadd.f32 0.0, %v396
  %398 = vmatmul.bf16.gmra.mxu0 %v226
  %v399 = vpop.f32.mrf.mxu0
  %v400 = vadd.f32 0.0, %v399
  %v401 = vpop.f32.mrf.mxu0
  %v402 = vadd.f32 0.0, %v401
  %403 = vmatmul.bf16.gmra.mxu0 %v227
  %v404 = vpop.f32.mrf.mxu0
  %v405 = vadd.f32 0.0, %v404
  %v406 = vpop.f32.mrf.mxu0
  %v407 = vadd.f32 0.0, %v406
  %408 = vmatmul.bf16.gmra.mxu0 %v228
  %v409 = vpop.f32.mrf.mxu0
  %v410 = vadd.f32 0.0, %v409
  %v411 = vpop.f32.mrf.mxu0
  %v412 = vadd.f32 0.0, %v411
  %413 = vmatmul.bf16.gmra.mxu0 %v229
  %v414 = vpop.f32.mrf.mxu0
  %v415 = vadd.f32 0.0, %v414
  %v416 = vpop.f32.mrf.mxu0
  %v417 = vadd.f32 0.0, %v416
  %418 = vmatmul.bf16.gmra.mxu0 %v230
  %v419 = vpop.f32.mrf.mxu0
  %v420 = vadd.f32 0.0, %v419
  %v421 = vpop.f32.mrf.mxu0
  %v422 = vadd.f32 0.0, %v421
  %423 = vmatmul.bf16.gmra.mxu0 %v231
  %v424 = vpop.f32.mrf.mxu0
  %v425 = vadd.f32 0.0, %v424
  %v426 = vpop.f32.mrf.mxu0
  %v427 = vadd.f32 0.0, %v426
  %428 = vmatmul.bf16.gmra.mxu0 %v232
  %v429 = vpop.f32.mrf.mxu0
  %v430 = vadd.f32 0.0, %v429
  %v431 = vpop.f32.mrf.mxu0
  %v432 = vadd.f32 0.0, %v431
  %433 = vdwg.mxu0
  %434 = vmatpush.bf16.xpose.msra.mxu0 %v328
  %435 = vmatpush.bf16.xpose.msra.mxu0 %v327
  %436 = vmatpush.bf16.xpose.msra.mxu0 %v326
  %437 = vmatpush.bf16.xpose.msra.mxu0 %v325
  %438 = vmatpush.bf16.xpose.msra.mxu0 %v324
  %439 = vmatpush.bf16.xpose.msra.mxu0 %v323
  %440 = vmatpush.bf16.xpose.msra.mxu0 %v322
  %441 = vmatpush.bf16.xpose.msra.mxu0 %v321
  %442 = vmatmul.bf16.gmra.mxu0 %v217
  %v443 = vpop.f32.mrf.mxu0
  %v444 = vadd.f32 0.0, %v443
  %v445 = vpop.f32.mrf.mxu0
  %v446 = vadd.f32 0.0, %v445
  %447 = vmatmul.bf16.gmra.mxu0 %v218
  %v448 = vpop.f32.mrf.mxu0
  %v449 = vadd.f32 0.0, %v448
  %v450 = vpop.f32.mrf.mxu0
  %v451 = vadd.f32 0.0, %v450
  %452 = vmatmul.bf16.gmra.mxu0 %v219
  %v453 = vpop.f32.mrf.mxu0
  %v454 = vadd.f32 0.0, %v453
  %v455 = vpop.f32.mrf.mxu0
  %v456 = vadd.f32 0.0, %v455
  %457 = vmatmul.bf16.gmra.mxu0 %v220
  %v458 = vpop.f32.mrf.mxu0
  %v459 = vadd.f32 0.0, %v458
  %v460 = vpop.f32.mrf.mxu0
  %v461 = vadd.f32 0.0, %v460
  %462 = vmatmul.bf16.gmra.mxu0 %v221
  %v463 = vpop.f32.mrf.mxu0
  %v464 = vadd.f32 0.0, %v463
  %v465 = vpop.f32.mrf.mxu0
  %v466 = vadd.f32 0.0, %v465
  %467 = vmatmul.bf16.gmra.mxu0 %v222
  %v468 = vpop.f32.mrf.mxu0
  %v469 = vadd.f32 0.0, %v468
  %v470 = vpop.f32.mrf.mxu0
  %v471 = vadd.f32 0.0, %v470
  %472 = vmatmul.bf16.gmra.mxu0 %v223
  %v473 = vpop.f32.mrf.mxu0
  %v474 = vadd.f32 0.0, %v473
  %v475 = vpop.f32.mrf.mxu0
  %v476 = vadd.f32 0.0, %v475
  %477 = vmatmul.bf16.gmra.mxu0 %v224
  %v478 = vpop.f32.mrf.mxu0
  %v479 = vadd.f32 0.0, %v478
  %v480 = vpop.f32.mrf.mxu0
  %v481 = vadd.f32 0.0, %v480
  %482 = vmatmul.bf16.gmra.mxu0 %v225
  %v483 = vpop.f32.mrf.mxu0
  %v484 = vadd.f32 0.0, %v483
  %v485 = vpop.f32.mrf.mxu0
  %v486 = vadd.f32 0.0, %v485
  %487 = vmatmul.bf16.gmra.mxu0 %v226
  %v488 = vpop.f32.mrf.mxu0
  %v489 = vadd.f32 0.0, %v488
  %v490 = vpop.f32.mrf.mxu0
  %v491 = vadd.f32 0.0, %v490
  %492 = vmatmul.bf16.gmra.mxu0 %v227
  %v493 = vpop.f32.mrf.mxu0
  %v494 = vadd.f32 0.0, %v493
  %v495 = vpop.f32.mrf.mxu0
  %v496 = vadd.f32 0.0, %v495
  %497 = vmatmul.bf16.gmra.mxu0 %v228
  %v498 = vpop.f32.mrf.mxu0
  %v499 = vadd.f32 0.0, %v498
  %v500 = vpop.f32.mrf.mxu0
  %v501 = vadd.f32 0.0, %v500
  %502 = vmatmul.bf16.gmra.mxu0 %v229
  %v503 = vpop.f32.mrf.mxu0
  %v504 = vadd.f32 0.0, %v503
  %v505 = vpop.f32.mrf.mxu0
  %v506 = vadd.f32 0.0, %v505
  %507 = vmatmul.bf16.gmra.mxu0 %v230
  %v508 = vpop.f32.mrf.mxu0
  %v509 = vadd.f32 0.0, %v508
  %v510 = vpop.f32.mrf.mxu0
  %v511 = vadd.f32 0.0, %v510
  %512 = vmatmul.bf16.gmra.mxu0 %v231
  %v513 = vpop.f32.mrf.mxu0
  %v514 = vadd.f32 0.0, %v513
  %v515 = vpop.f32.mrf.mxu0
  %v516 = vadd.f32 0.0, %v515
  %517 = vmatmul.bf16.gmra.mxu0 %v232
  %v518 = vpop.f32.mrf.mxu0
  %v519 = vadd.f32 0.0, %v518
  %v520 = vpop.f32.mrf.mxu0
  %v521 = vadd.f32 0.0, %v520
  %522 = vdwg.mxu0
  %v523 = vmul.f32 %v355, 1.25
  %v524 = vmul.f32 %v444, 1.25
  %v525 = vmul.f32 %v357, 1.25
  %v526 = vmul.f32 %v446, 1.25
  %v527 = vmul.f32 %v360, 1.25
  %v528 = vmul.f32 %v449, 1.25
  %v529 = vmul.f32 %v362, 1.25
  %v530 = vmul.f32 %v451, 1.25
  %v531 = vmul.f32 %v365, 1.25
  %v532 = vmul.f32 %v454, 1.25
  %v533 = vmul.f32 %v367, 1.25
  %v534 = vmul.f32 %v456, 1.25
  %v535 = vmul.f32 %v370, 1.25
  %v536 = vmul.f32 %v459, 1.25
  %v537 = vmul.f32 %v372, 1.25
  %v538 = vmul.f32 %v461, 1.25
  %v539 = vmul.f32 %v375, 1.25
  %v540 = vmul.f32 %v464, 1.25
  %v541 = vmul.f32 %v377, 1.25
  %v542 = vmul.f32 %v466, 1.25
  %v543 = vmul.f32 %v380, 1.25
  %v544 = vmul.f32 %v469, 1.25
  %v545 = vmul.f32 %v382, 1.25
  %v546 = vmul.f32 %v471, 1.25
  %v547 = vmul.f32 %v385, 1.25
  %v548 = vmul.f32 %v474, 1.25
  %v549 = vmul.f32 %v387, 1.25
  %v550 = vmul.f32 %v476, 1.25
  %v551 = vmul.f32 %v390, 1.25
  %v552 = vmul.f32 %v479, 1.25
  %v553 = vmul.f32 %v392, 1.25
  %v554 = vmul.f32 %v481, 1.25
  %v555 = vmul.f32 %v395, 1.25
  %v556 = vmul.f32 %v484, 1.25
  %v557 = vmul.f32 %v397, 1.25
  %v558 = vmul.f32 %v486, 1.25
  %v559 = vmul.f32 %v400, 1.25
  %v560 = vmul.f32 %v489, 1.25
  %v561 = vmul.f32 %v402, 1.25
  %v562 = vmul.f32 %v491, 1.25
  %v563 = vmul.f32 %v405, 1.25
  %v564 = vmul.f32 %v494, 1.25
  %v565 = vmul.f32 %v407, 1.25
  %v566 = vmul.f32 %v496, 1.25
  %v567 = vmul.f32 %v410, 1.25
  %v568 = vmul.f32 %v499, 1.25
  %v569 = vmul.f32 %v412, 1.25
  %v570 = vmul.f32 %v501, 1.25
  %v571 = vmul.f32 %v415, 1.25
  %v572 = vmul.f32 %v504, 1.25
  %v573 = vmul.f32 %v417, 1.25
  %v574 = vmul.f32 %v506, 1.25
  %v575 = vmul.f32 %v420, 1.25
  %v576 = vmul.f32 %v509, 1.25
  %v577 = vmul.f32 %v422, 1.25
  %v578 = vmul.f32 %v511, 1.25
  %v579 = vmul.f32 %v425, 1.25
  %v580 = vmul.f32 %v514, 1.25
  %v581 = vmul.f32 %v427, 1.25
  %v582 = vmul.f32 %v516, 1.25
  %v583 = vmul.f32 %v430, 1.25
  %v584 = vmul.f32 %v519, 1.25
  %v585 = vmul.f32 %v432, 1.25
  %v586 = vmul.f32 %v521, 1.25
  %v587 = vmul.f32 %v523, 1.442695
  %v588 = vpow.pop %v587
  %v589 = vmul.f32 %v524, 1.442695
  %v590 = vpow.pop %v589
  %v591 = vmul.f32 %v525, 1.442695
  %v592 = vpow.pop %v591
  %v593 = vmul.f32 %v526, 1.442695
  %v594 = vpow.pop %v593
  %v595 = vmul.f32 %v527, 1.442695
  %v596 = vpow.pop %v595
  %v597 = vmul.f32 %v528, 1.442695
  %v598 = vpow.pop %v597
  %v599 = vmul.f32 %v529, 1.442695
  %v600 = vpow.pop %v599
  %v601 = vmul.f32 %v530, 1.442695
  %v602 = vpow.pop %v601
  %v603 = vmul.f32 %v531, 1.442695
  %v604 = vpow.pop %v603
  %v605 = vmul.f32 %v532, 1.442695
  %v606 = vpow.pop %v605
  %v607 = vmul.f32 %v533, 1.442695
  %v608 = vpow.pop %v607
  %v609 = vmul.f32 %v534, 1.442695
  %v610 = vpow.pop %v609
  %v611 = vmul.f32 %v535, 1.442695
  %v612 = vpow.pop %v611
  %v613 = vmul.f32 %v536, 1.442695
  %v614 = vpow.pop %v613
  %v615 = vmul.f32 %v537, 1.442695
  %v616 = vpow.pop %v615
  %v617 = vmul.f32 %v538, 1.442695
  %v618 = vpow.pop %v617
  %v619 = vmul.f32 %v539, 1.442695
  %v620 = vpow.pop %v619
  %v621 = vmul.f32 %v540, 1.442695
  %v622 = vpow.pop %v621
  %v623 = vmul.f32 %v541, 1.442695
  %v624 = vpow.pop %v623
  %v625 = vmul.f32 %v542, 1.442695
  %v626 = vpow.pop %v625
  %v627 = vmul.f32 %v543, 1.442695
  %v628 = vpow.pop %v627
  %v629 = vmul.f32 %v544, 1.442695
  %v630 = vpow.pop %v629
  %v631 = vmul.f32 %v545, 1.442695
  %v632 = vpow.pop %v631
  %v633 = vmul.f32 %v546, 1.442695
  %v634 = vpow.pop %v633
  %v635 = vmul.f32 %v547, 1.442695
  %v636 = vpow.pop %v635
  %v637 = vmul.f32 %v548, 1.442695
  %v638 = vpow.pop %v637
  %v639 = vmul.f32 %v549, 1.442695
  %v640 = vpow.pop %v639
  %v641 = vmul.f32 %v550, 1.442695
  %v642 = vpow.pop %v641
  %v643 = vmul.f32 %v551, 1.442695
  %v644 = vpow.pop %v643
  %v645 = vmul.f32 %v552, 1.442695
  %v646 = vpow.pop %v645
  %v647 = vmul.f32 %v553, 1.442695
  %v648 = vpow.pop %v647
  %v649 = vmul.f32 %v554, 1.442695
  %v650 = vpow.pop %v649
  %v651 = vmul.f32 %v555, 1.442695
  %v652 = vpow.pop %v651
  %v653 = vmul.f32 %v556, 1.442695
  %v654 = vpow.pop %v653
  %v655 = vmul.f32 %v557, 1.442695
  %v656 = vpow.pop %v655
  %v657 = vmul.f32 %v558, 1.442695
  %v658 = vpow.pop %v657
  %v659 = vmul.f32 %v559, 1.442695
  %v660 = vpow.pop %v659
  %v661 = vmul.f32 %v560, 1.442695
  %v662 = vpow.pop %v661
  %v663 = vmul.f32 %v561, 1.442695
  %v664 = vpow.pop %v663
  %v665 = vmul.f32 %v562, 1.442695
  %v666 = vpow.pop %v665
  %v667 = vmul.f32 %v563, 1.442695
  %v668 = vpow.pop %v667
  %v669 = vmul.f32 %v564, 1.442695
  %v670 = vpow.pop %v669
  %v671 = vmul.f32 %v565, 1.442695
  %v672 = vpow.pop %v671
  %v673 = vmul.f32 %v566, 1.442695
  %v674 = vpow.pop %v673
  %v675 = vmul.f32 %v567, 1.442695
  %v676 = vpow.pop %v675
  %v677 = vmul.f32 %v568, 1.442695
  %v678 = vpow.pop %v677
  %v679 = vmul.f32 %v569, 1.442695
  %v680 = vpow.pop %v679
  %v681 = vmul.f32 %v570, 1.442695
  %v682 = vpow.pop %v681
  %v683 = vmul.f32 %v571, 1.442695
  %v684 = vpow.pop %v683
  %v685 = vmul.f32 %v572, 1.442695
  %v686 = vpow.pop %v685
  %v687 = vmul.f32 %v573, 1.442695
  %v688 = vpow.pop %v687
  %v689 = vmul.f32 %v574, 1.442695
  %v690 = vpow.pop %v689
  %v691 = vmul.f32 %v575, 1.442695
  %v692 = vpow.pop %v691
  %v693 = vmul.f32 %v576, 1.442695
  %v694 = vpow.pop %v693
  %v695 = vmul.f32 %v577, 1.442695
  %v696 = vpow.pop %v695
  %v697 = vmul.f32 %v578, 1.442695
  %v698 = vpow.pop %v697
  %v699 = vmul.f32 %v579, 1.442695
  %v700 = vpow.pop %v699
  %v701 = vmul.f32 %v580, 1.442695
  %v702 = vpow.pop %v701
  %v703 = vmul.f32 %v581, 1.442695
  %v704 = vpow.pop %v703
  %v705 = vmul.f32 %v582, 1.442695
  %v706 = vpow.pop %v705
  %v707 = vmul.f32 %v583, 1.442695
  %v708 = vpow.pop %v707
  %v709 = vmul.f32 %v584, 1.442695
  %v710 = vpow.pop %v709
  %v711 = vmul.f32 %v585, 1.442695
  %v712 = vpow.pop %v711
  %v713 = vmul.f32 %v586, 1.442695
  %v714 = vpow.pop %v713
  %v715 = vld [vmem:[%s2] sm:$0xff]
  %v716 = vld [vmem:[%s2 + $0x8] sm:$0xff]
  %v717 = vld [vmem:[%s2 + $0x10] sm:$0xff]
  %v718 = vld [vmem:[%s2 + $0x18] sm:$0xff]
  %v719 = vld [vmem:[%s2 + $0x20] sm:$0xff]
  %v720 = vld [vmem:[%s2 + $0x28] sm:$0xff]
  %v721 = vld [vmem:[%s2 + $0x30] sm:$0xff]
  %v722 = vld [vmem:[%s2 + $0x38] sm:$0xff]
  %v723 = vld [vmem:[%s2 + $0x40] sm:$0xff]
  %v724 = vld [vmem:[%s2 + $0x48] sm:$0xff]
  %v725 = vld [vmem:[%s2 + $0x50] sm:$0xff]
  %v726 = vld [vmem:[%s2 + $0x58] sm:$0xff]
  %v727 = vld [vmem:[%s2 + $0x60] sm:$0xff]
  %v728 = vld [vmem:[%s2 + $0x68] sm:$0xff]
  %v729 = vld [vmem:[%s2 + $0x70] sm:$0xff]
  %v730 = vld [vmem:[%s2 + $0x78] sm:$0xff]
  %v731 = vld [vmem:[%s2 + $0x80] sm:$0xff]
  %v732 = vld [vmem:[%s2 + $0x88] sm:$0xff]
  %v733 = vld [vmem:[%s2 + $0x90] sm:$0xff]
  %v734 = vld [vmem:[%s2 + $0x98] sm:$0xff]
  %v735 = vld [vmem:[%s2 + $0xa0] sm:$0xff]
  %v736 = vld [vmem:[%s2 + $0xa8] sm:$0xff]
  %v737 = vld [vmem:[%s2 + $0xb0] sm:$0xff]
  %v738 = vld [vmem:[%s2 + $0xb8] sm:$0xff]
  %v739 = vld [vmem:[%s2 + $0xc0] sm:$0xff]
  %v740 = vld [vmem:[%s2 + $0xc8] sm:$0xff]
  %v741 = vld [vmem:[%s2 + $0xd0] sm:$0xff]
  %v742 = vld [vmem:[%s2 + $0xd8] sm:$0xff]
  %v743 = vld [vmem:[%s2 + $0xe0] sm:$0xff]
  %v744 = vld [vmem:[%s2 + $0xe8] sm:$0xff]
  %v745 = vld [vmem:[%s2 + $0xf0] sm:$0xff]
  %v746 = vld [vmem:[%s2 + $0xf8] sm:$0xff]
  %v747 = vunpack.c.l.bf16 %v715
  %v748 = vunpack.c.h.bf16 %v715
  %v749 = vunpack.c.l.bf16 %v716
  %v750 = vunpack.c.h.bf16 %v716
  %v751 = vunpack.c.l.bf16 %v717
  %v752 = vunpack.c.h.bf16 %v717
  %v753 = vunpack.c.l.bf16 %v718
  %v754 = vunpack.c.h.bf16 %v718
  %v755 = vunpack.c.l.bf16 %v719
  %v756 = vunpack.c.h.bf16 %v719
  %v757 = vunpack.c.l.bf16 %v720
  %v758 = vunpack.c.h.bf16 %v720
  %v759 = vunpack.c.l.bf16 %v721
  %v760 = vunpack.c.h.bf16 %v721
  %v761 = vunpack.c.l.bf16 %v722
  %v762 = vunpack.c.h.bf16 %v722
  %v763 = vunpack.c.l.bf16 %v723
  %v764 = vunpack.c.h.bf16 %v723
  %v765 = vunpack.c.l.bf16 %v724
  %v766 = vunpack.c.h.bf16 %v724
  %v767 = vunpack.c.l.bf16 %v725
  %v768 = vunpack.c.h.bf16 %v725
  %v769 = vunpack.c.l.bf16 %v726
  %v770 = vunpack.c.h.bf16 %v726
  %v771 = vunpack.c.l.bf16 %v727
  %v772 = vunpack.c.h.bf16 %v727
  %v773 = vunpack.c.l.bf16 %v728
  %v774 = vunpack.c.h.bf16 %v728
  %v775 = vunpack.c.l.bf16 %v729
  %v776 = vunpack.c.h.bf16 %v729
  %v777 = vunpack.c.l.bf16 %v730
  %v778 = vunpack.c.h.bf16 %v730
  %v779 = vunpack.c.l.bf16 %v731
  %v780 = vunpack.c.h.bf16 %v731
  %v781 = vunpack.c.l.bf16 %v732
  %v782 = vunpack.c.h.bf16 %v732
  %v783 = vunpack.c.l.bf16 %v733
  %v784 = vunpack.c.h.bf16 %v733
  %v785 = vunpack.c.l.bf16 %v734
  %v786 = vunpack.c.h.bf16 %v734
  %v787 = vunpack.c.l.bf16 %v735
  %v788 = vunpack.c.h.bf16 %v735
  %v789 = vunpack.c.l.bf16 %v736
  %v790 = vunpack.c.h.bf16 %v736
  %v791 = vunpack.c.l.bf16 %v737
  %v792 = vunpack.c.h.bf16 %v737
  %v793 = vunpack.c.l.bf16 %v738
  %v794 = vunpack.c.h.bf16 %v738
  %v795 = vunpack.c.l.bf16 %v739
  %v796 = vunpack.c.h.bf16 %v739
  %v797 = vunpack.c.l.bf16 %v740
  %v798 = vunpack.c.h.bf16 %v740
  %v799 = vunpack.c.l.bf16 %v741
  %v800 = vunpack.c.h.bf16 %v741
  %v801 = vunpack.c.l.bf16 %v742
  %v802 = vunpack.c.h.bf16 %v742
  %v803 = vunpack.c.l.bf16 %v743
  %v804 = vunpack.c.h.bf16 %v743
  %v805 = vunpack.c.l.bf16 %v744
  %v806 = vunpack.c.h.bf16 %v744
  %v807 = vunpack.c.l.bf16 %v745
  %v808 = vunpack.c.h.bf16 %v745
  %v809 = vunpack.c.l.bf16 %v746
  %v810 = vunpack.c.h.bf16 %v746
  %v811 = vld [vmem:[%s3] sm:$0xff]
  %v812 = vld [vmem:[%s3 + $0x8] sm:$0xff]
  %v813 = vld [vmem:[%s3 + $0x10] sm:$0xff]
  %v814 = vld [vmem:[%s3 + $0x18] sm:$0xff]
  %v815 = vld [vmem:[%s3 + $0x20] sm:$0xff]
  %v816 = vld [vmem:[%s3 + $0x28] sm:$0xff]
  %v817 = vld [vmem:[%s3 + $0x30] sm:$0xff]
  %v818 = vld [vmem:[%s3 + $0x38] sm:$0xff]
  %v819 = vld [vmem:[%s3 + $0x40] sm:$0xff]
  %v820 = vld [vmem:[%s3 + $0x48] sm:$0xff]
  %v821 = vld [vmem:[%s3 + $0x50] sm:$0xff]
  %v822 = vld [vmem:[%s3 + $0x58] sm:$0xff]
  %v823 = vld [vmem:[%s3 + $0x60] sm:$0xff]
  %v824 = vld [vmem:[%s3 + $0x68] sm:$0xff]
  %v825 = vld [vmem:[%s3 + $0x70] sm:$0xff]
  %v826 = vld [vmem:[%s3 + $0x78] sm:$0xff]
  %v827 = vld [vmem:[%s3 + $0x80] sm:$0xff]
  %v828 = vld [vmem:[%s3 + $0x88] sm:$0xff]
  %v829 = vld [vmem:[%s3 + $0x90] sm:$0xff]
  %v830 = vld [vmem:[%s3 + $0x98] sm:$0xff]
  %v831 = vld [vmem:[%s3 + $0xa0] sm:$0xff]
  %v832 = vld [vmem:[%s3 + $0xa8] sm:$0xff]
  %v833 = vld [vmem:[%s3 + $0xb0] sm:$0xff]
  %v834 = vld [vmem:[%s3 + $0xb8] sm:$0xff]
  %v835 = vld [vmem:[%s3 + $0xc0] sm:$0xff]
  %v836 = vld [vmem:[%s3 + $0xc8] sm:$0xff]
  %v837 = vld [vmem:[%s3 + $0xd0] sm:$0xff]
  %v838 = vld [vmem:[%s3 + $0xd8] sm:$0xff]
  %v839 = vld [vmem:[%s3 + $0xe0] sm:$0xff]
  %v840 = vld [vmem:[%s3 + $0xe8] sm:$0xff]
  %v841 = vld [vmem:[%s3 + $0xf0] sm:$0xff]
  %v842 = vld [vmem:[%s3 + $0xf8] sm:$0xff]
  %v843 = vunpack.c.l.bf16 %v811
  %v844 = vunpack.c.h.bf16 %v811
  %v845 = vunpack.c.l.bf16 %v812
  %v846 = vunpack.c.h.bf16 %v812
  %v847 = vunpack.c.l.bf16 %v813
  %v848 = vunpack.c.h.bf16 %v813
  %v849 = vunpack.c.l.bf16 %v814
  %v850 = vunpack.c.h.bf16 %v814
  %v851 = vunpack.c.l.bf16 %v815
  %v852 = vunpack.c.h.bf16 %v815
  %v853 = vunpack.c.l.bf16 %v816
  %v854 = vunpack.c.h.bf16 %v816
  %v855 = vunpack.c.l.bf16 %v817
  %v856 = vunpack.c.h.bf16 %v817
  %v857 = vunpack.c.l.bf16 %v818
  %v858 = vunpack.c.h.bf16 %v818
  %v859 = vunpack.c.l.bf16 %v819
  %v860 = vunpack.c.h.bf16 %v819
  %v861 = vunpack.c.l.bf16 %v820
  %v862 = vunpack.c.h.bf16 %v820
  %v863 = vunpack.c.l.bf16 %v821
  %v864 = vunpack.c.h.bf16 %v821
  %v865 = vunpack.c.l.bf16 %v822
  %v866 = vunpack.c.h.bf16 %v822
  %v867 = vunpack.c.l.bf16 %v823
  %v868 = vunpack.c.h.bf16 %v823
  %v869 = vunpack.c.l.bf16 %v824
  %v870 = vunpack.c.h.bf16 %v824
  %v871 = vunpack.c.l.bf16 %v825
  %v872 = vunpack.c.h.bf16 %v825
  %v873 = vunpack.c.l.bf16 %v826
  %v874 = vunpack.c.h.bf16 %v826
  %v875 = vunpack.c.l.bf16 %v827
  %v876 = vunpack.c.h.bf16 %v827
  %v877 = vunpack.c.l.bf16 %v828
  %v878 = vunpack.c.h.bf16 %v828
  %v879 = vunpack.c.l.bf16 %v829
  %v880 = vunpack.c.h.bf16 %v829
  %v881 = vunpack.c.l.bf16 %v830
  %v882 = vunpack.c.h.bf16 %v830
  %v883 = vunpack.c.l.bf16 %v831
  %v884 = vunpack.c.h.bf16 %v831
  %v885 = vunpack.c.l.bf16 %v832
  %v886 = vunpack.c.h.bf16 %v832
  %v887 = vunpack.c.l.bf16 %v833
  %v888 = vunpack.c.h.bf16 %v833
  %v889 = vunpack.c.l.bf16 %v834
  %v890 = vunpack.c.h.bf16 %v834
  %v891 = vunpack.c.l.bf16 %v835
  %v892 = vunpack.c.h.bf16 %v835
  %v893 = vunpack.c.l.bf16 %v836
  %v894 = vunpack.c.h.bf16 %v836
  %v895 = vunpack.c.l.bf16 %v837
  %v896 = vunpack.c.h.bf16 %v837
  %v897 = vunpack.c.l.bf16 %v838
  %v898 = vunpack.c.h.bf16 %v838
  %v899 = vunpack.c.l.bf16 %v839
  %v900 = vunpack.c.h.bf16 %v839
  %v901 = vunpack.c.l.bf16 %v840
  %v902 = vunpack.c.h.bf16 %v840
  %v903 = vunpack.c.l.bf16 %v841
  %v904 = vunpack.c.h.bf16 %v841
  %v905 = vunpack.c.l.bf16 %v842
  %v906 = vunpack.c.h.bf16 %v842
  %907 = vxpose.xlu0.b32.start [1/16] %v843, 128
  %908 = vxpose.xlu0.b32.cont [2/16] %v845, 128
  %909 = vxpose.xlu0.b32.cont [3/16] %v847, 128
  %910 = vxpose.xlu0.b32.cont [4/16] %v849, 128
  %911 = vxpose.xlu0.b32.cont [5/16] %v851, 128
  %912 = vxpose.xlu0.b32.cont [6/16] %v853, 128
  %913 = vxpose.xlu0.b32.cont [7/16] %v855, 128
  %914 = vxpose.xlu0.b32.cont [8/16] %v857, 128
  %915 = vxpose.xlu0.b32.cont [9/16] %v859, 128
  %916 = vxpose.xlu0.b32.cont [10/16] %v861, 128
  %917 = vxpose.xlu0.b32.cont [11/16] %v863, 128
  %918 = vxpose.xlu0.b32.cont [12/16] %v865, 128
  %919 = vxpose.xlu0.b32.cont [13/16] %v867, 128
  %920 = vxpose.xlu0.b32.cont [14/16] %v869, 128
  %921 = vxpose.xlu0.b32.cont [15/16] %v871, 128
  %922 = vxpose.xlu0.b32.end [16/16] %v873, 128
  %v923 = vpop.trf.xlu0
  %v924 = vpop.trf.xlu0
  %v925 = vpop.trf.xlu0
  %v926 = vpop.trf.xlu0
  %v927 = vpop.trf.xlu0
  %v928 = vpop.trf.xlu0
  %v929 = vpop.trf.xlu0
  %v930 = vpop.trf.xlu0
  %v931 = vpop.trf.xlu0
  %v932 = vpop.trf.xlu0
  %v933 = vpop.trf.xlu0
  %v934 = vpop.trf.xlu0
  %v935 = vpop.trf.xlu0
  %v936 = vpop.trf.xlu0
  %v937 = vpop.trf.xlu0
  %v938 = vpop.trf.xlu0
  %939 = vxpose.xlu0.b32.start [1/16] %v844, 128
  %940 = vxpose.xlu0.b32.cont [2/16] %v846, 128
  %941 = vxpose.xlu0.b32.cont [3/16] %v848, 128
  %942 = vxpose.xlu0.b32.cont [4/16] %v850, 128
  %943 = vxpose.xlu0.b32.cont [5/16] %v852, 128
  %944 = vxpose.xlu0.b32.cont [6/16] %v854, 128
  %945 = vxpose.xlu0.b32.cont [7/16] %v856, 128
  %946 = vxpose.xlu0.b32.cont [8/16] %v858, 128
  %947 = vxpose.xlu0.b32.cont [9/16] %v860, 128
  %948 = vxpose.xlu0.b32.cont [10/16] %v862, 128
  %949 = vxpose.xlu0.b32.cont [11/16] %v864, 128
  %950 = vxpose.xlu0.b32.cont [12/16] %v866, 128
  %951 = vxpose.xlu0.b32.cont [13/16] %v868, 128
  %952 = vxpose.xlu0.b32.cont [14/16] %v870, 128
  %953 = vxpose.xlu0.b32.cont [15/16] %v872, 128
  %954 = vxpose.xlu0.b32.end [16/16] %v874, 128
  %v955 = vpop.trf.xlu0
  %v956 = vpop.trf.xlu0
  %v957 = vpop.trf.xlu0
  %v958 = vpop.trf.xlu0
  %v959 = vpop.trf.xlu0
  %v960 = vpop.trf.xlu0
  %v961 = vpop.trf.xlu0
  %v962 = vpop.trf.xlu0
  %v963 = vpop.trf.xlu0
  %v964 = vpop.trf.xlu0
  %v965 = vpop.trf.xlu0
  %v966 = vpop.trf.xlu0
  %v967 = vpop.trf.xlu0
  %v968 = vpop.trf.xlu0
  %v969 = vpop.trf.xlu0
  %v970 = vpop.trf.xlu0
  %971 = vxpose.xlu0.b32.start [1/16] %v875, 128
  %972 = vxpose.xlu0.b32.cont [2/16] %v877, 128
  %973 = vxpose.xlu0.b32.cont [3/16] %v879, 128
  %974 = vxpose.xlu0.b32.cont [4/16] %v881, 128
  %975 = vxpose.xlu0.b32.cont [5/16] %v883, 128
  %976 = vxpose.xlu0.b32.cont [6/16] %v885, 128
  %977 = vxpose.xlu0.b32.cont [7/16] %v887, 128
  %978 = vxpose.xlu0.b32.cont [8/16] %v889, 128
  %979 = vxpose.xlu0.b32.cont [9/16] %v891, 128
  %980 = vxpose.xlu0.b32.cont [10/16] %v893, 128
  %981 = vxpose.xlu0.b32.cont [11/16] %v895, 128
  %982 = vxpose.xlu0.b32.cont [12/16] %v897, 128
  %983 = vxpose.xlu0.b32.cont [13/16] %v899, 128
  %984 = vxpose.xlu0.b32.cont [14/16] %v901, 128
  %985 = vxpose.xlu0.b32.cont [15/16] %v903, 128
  %986 = vxpose.xlu0.b32.end [16/16] %v905, 128
  %v987 = vpop.trf.xlu0
  %v988 = vpop.trf.xlu0
  %v989 = vpop.trf.xlu0
  %v990 = vpop.trf.xlu0
  %v991 = vpop.trf.xlu0
  %v992 = vpop.trf.xlu0
  %v993 = vpop.trf.xlu0
  %v994 = vpop.trf.xlu0
  %v995 = vpop.trf.xlu0
  %v996 = vpop.trf.xlu0
  %v997 = vpop.trf.xlu0
  %v998 = vpop.trf.xlu0
  %v999 = vpop.trf.xlu0
  %v1000 = vpop.trf.xlu0
  %v1001 = vpop.trf.xlu0
  %v1002 = vpop.trf.xlu0
  %1003 = vxpose.xlu0.b32.start [1/16] %v876, 128
  %1004 = vxpose.xlu0.b32.cont [2/16] %v878, 128
  %1005 = vxpose.xlu0.b32.cont [3/16] %v880, 128
  %1006 = vxpose.xlu0.b32.cont [4/16] %v882, 128
  %1007 = vxpose.xlu0.b32.cont [5/16] %v884, 128
  %1008 = vxpose.xlu0.b32.cont [6/16] %v886, 128
  %1009 = vxpose.xlu0.b32.cont [7/16] %v888, 128
  %1010 = vxpose.xlu0.b32.cont [8/16] %v890, 128
  %1011 = vxpose.xlu0.b32.cont [9/16] %v892, 128
  %1012 = vxpose.xlu0.b32.cont [10/16] %v894, 128
  %1013 = vxpose.xlu0.b32.cont [11/16] %v896, 128
  %1014 = vxpose.xlu0.b32.cont [12/16] %v898, 128
  %1015 = vxpose.xlu0.b32.cont [13/16] %v900, 128
  %1016 = vxpose.xlu0.b32.cont [14/16] %v902, 128
  %1017 = vxpose.xlu0.b32.cont [15/16] %v904, 128
  %1018 = vxpose.xlu0.b32.end [16/16] %v906, 128
  %v1019 = vpop.trf.xlu0
  %v1020 = vpop.trf.xlu0
  %v1021 = vpop.trf.xlu0
  %v1022 = vpop.trf.xlu0
  %v1023 = vpop.trf.xlu0
  %v1024 = vpop.trf.xlu0
  %v1025 = vpop.trf.xlu0
  %v1026 = vpop.trf.xlu0
  %v1027 = vpop.trf.xlu0
  %v1028 = vpop.trf.xlu0
  %v1029 = vpop.trf.xlu0
  %v1030 = vpop.trf.xlu0
  %v1031 = vpop.trf.xlu0
  %v1032 = vpop.trf.xlu0
  %v1033 = vpop.trf.xlu0
  %v1034 = vpop.trf.xlu0
  %v1035 = vld [vmem:[#allocation2] sm:$0xff]
  %v1036 = vld [vmem:[#allocation2 + $0x8] sm:$0xff]
  %v1037 = vld [vmem:[#allocation2 + $0x10] sm:$0xff]
  %v1038 = vld [vmem:[#allocation2 + $0x18] sm:$0xff]
  %v1039 = vld [vmem:[#allocation2 + $0x20] sm:$0xff]
  %v1040 = vld [vmem:[#allocation2 + $0x28] sm:$0xff]
  %v1041 = vld [vmem:[#allocation2 + $0x30] sm:$0xff]
  %v1042 = vld [vmem:[#allocation2 + $0x38] sm:$0xff]
  %v1043 = vld [vmem:[#allocation2 + $0x40] sm:$0xff]
  %v1044 = vld [vmem:[#allocation2 + $0x48] sm:$0xff]
  %v1045 = vld [vmem:[#allocation2 + $0x50] sm:$0xff]
  %v1046 = vld [vmem:[#allocation2 + $0x58] sm:$0xff]
  %v1047 = vld [vmem:[#allocation2 + $0x60] sm:$0xff]
  %v1048 = vld [vmem:[#allocation2 + $0x68] sm:$0xff]
  %v1049 = vld [vmem:[#allocation2 + $0x70] sm:$0xff]
  %v1050 = vld [vmem:[#allocation2 + $0x78] sm:$0xff]
  %v1051 = vld [vmem:[#allocation2 + $0x80] sm:$0xff]
  %v1052 = vld [vmem:[#allocation2 + $0x88] sm:$0xff]
  %v1053 = vld [vmem:[#allocation2 + $0x90] sm:$0xff]
  %v1054 = vld [vmem:[#allocation2 + $0x98] sm:$0xff]
  %v1055 = vld [vmem:[#allocation2 + $0xa0] sm:$0xff]
  %v1056 = vld [vmem:[#allocation2 + $0xa8] sm:$0xff]
  %v1057 = vld [vmem:[#allocation2 + $0xb0] sm:$0xff]
  %v1058 = vld [vmem:[#allocation2 + $0xb8] sm:$0xff]
  %v1059 = vld [vmem:[#allocation2 + $0xc0] sm:$0xff]
  %v1060 = vld [vmem:[#allocation2 + $0xc8] sm:$0xff]
  %v1061 = vld [vmem:[#allocation2 + $0xd0] sm:$0xff]
  %v1062 = vld [vmem:[#allocation2 + $0xd8] sm:$0xff]
  %v1063 = vld [vmem:[#allocation2 + $0xe0] sm:$0xff]
  %v1064 = vld [vmem:[#allocation2 + $0xe8] sm:$0xff]
  %v1065 = vld [vmem:[#allocation2 + $0xf0] sm:$0xff]
  %v1066 = vld [vmem:[#allocation2 + $0xf8] sm:$0xff]
  %v1067 = vadd.f32 %v588, %v590
  %1068 = vadd.xlane.f32.xlu0 %v1067
  %v1069 = vpop.xlane.xlu0 %1068
  %v1070 = vadd.f32 %v592, %v594
  %1071 = vadd.xlane.f32.xlu0 %v1070
  %v1072 = vpop.xlane.xlu0 %1071
  %v1073 = vadd.f32 %v596, %v598
  %1074 = vadd.xlane.f32.xlu0 %v1073
  %v1075 = vpop.xlane.xlu0 %1074
  %v1076 = vadd.f32 %v600, %v602
  %1077 = vadd.xlane.f32.xlu0 %v1076
  %v1078 = vpop.xlane.xlu0 %1077
  %v1079 = vadd.f32 %v604, %v606
  %1080 = vadd.xlane.f32.xlu0 %v1079
  %v1081 = vpop.xlane.xlu0 %1080
  %v1082 = vadd.f32 %v608, %v610
  %1083 = vadd.xlane.f32.xlu0 %v1082
  %v1084 = vpop.xlane.xlu0 %1083
  %v1085 = vadd.f32 %v612, %v614
  %1086 = vadd.xlane.f32.xlu0 %v1085
  %v1087 = vpop.xlane.xlu0 %1086
  %v1088 = vadd.f32 %v616, %v618
  %1089 = vadd.xlane.f32.xlu0 %v1088
  %v1090 = vpop.xlane.xlu0 %1089
  %v1091 = vadd.f32 %v620, %v622
  %1092 = vadd.xlane.f32.xlu0 %v1091
  %v1093 = vpop.xlane.xlu0 %1092
  %v1094 = vadd.f32 %v624, %v626
  %1095 = vadd.xlane.f32.xlu0 %v1094
  %v1096 = vpop.xlane.xlu0 %1095
  %v1097 = vadd.f32 %v628, %v630
  %1098 = vadd.xlane.f32.xlu0 %v1097
  %v1099 = vpop.xlane.xlu0 %1098
  %v1100 = vadd.f32 %v632, %v634
  %1101 = vadd.xlane.f32.xlu0 %v1100
  %v1102 = vpop.xlane.xlu0 %1101
  %v1103 = vadd.f32 %v636, %v638
  %1104 = vadd.xlane.f32.xlu0 %v1103
  %v1105 = vpop.xlane.xlu0 %1104
  %v1106 = vadd.f32 %v640, %v642
  %1107 = vadd.xlane.f32.xlu0 %v1106
  %v1108 = vpop.xlane.xlu0 %1107
  %v1109 = vadd.f32 %v644, %v646
  %1110 = vadd.xlane.f32.xlu0 %v1109
  %v1111 = vpop.xlane.xlu0 %1110
  %v1112 = vadd.f32 %v648, %v650
  %1113 = vadd.xlane.f32.xlu0 %v1112
  %v1114 = vpop.xlane.xlu0 %1113
  %v1115 = vadd.f32 %v652, %v654
  %1116 = vadd.xlane.f32.xlu0 %v1115
  %v1117 = vpop.xlane.xlu0 %1116
  %v1118 = vadd.f32 %v656, %v658
  %1119 = vadd.xlane.f32.xlu0 %v1118
  %v1120 = vpop.xlane.xlu0 %1119
  %v1121 = vadd.f32 %v660, %v662
  %1122 = vadd.xlane.f32.xlu0 %v1121
  %v1123 = vpop.xlane.xlu0 %1122
  %v1124 = vadd.f32 %v664, %v666
  %1125 = vadd.xlane.f32.xlu0 %v1124
  %v1126 = vpop.xlane.xlu0 %1125
  %v1127 = vadd.f32 %v668, %v670
  %1128 = vadd.xlane.f32.xlu0 %v1127
  %v1129 = vpop.xlane.xlu0 %1128
  %v1130 = vadd.f32 %v672, %v674
  %1131 = vadd.xlane.f32.xlu0 %v1130
  %v1132 = vpop.xlane.xlu0 %1131
  %v1133 = vadd.f32 %v676, %v678
  %1134 = vadd.xlane.f32.xlu0 %v1133
  %v1135 = vpop.xlane.xlu0 %1134
  %v1136 = vadd.f32 %v680, %v682
  %1137 = vadd.xlane.f32.xlu0 %v1136
  %v1138 = vpop.xlane.xlu0 %1137
  %v1139 = vadd.f32 %v684, %v686
  %1140 = vadd.xlane.f32.xlu0 %v1139
  %v1141 = vpop.xlane.xlu0 %1140
  %v1142 = vadd.f32 %v688, %v690
  %1143 = vadd.xlane.f32.xlu0 %v1142
  %v1144 = vpop.xlane.xlu0 %1143
  %v1145 = vadd.f32 %v692, %v694
  %1146 = vadd.xlane.f32.xlu0 %v1145
  %v1147 = vpop.xlane.xlu0 %1146
  %v1148 = vadd.f32 %v696, %v698
  %1149 = vadd.xlane.f32.xlu0 %v1148
  %v1150 = vpop.xlane.xlu0 %1149
  %v1151 = vadd.f32 %v700, %v702
  %1152 = vadd.xlane.f32.xlu0 %v1151
  %v1153 = vpop.xlane.xlu0 %1152
  %v1154 = vadd.f32 %v704, %v706
  %1155 = vadd.xlane.f32.xlu0 %v1154
  %v1156 = vpop.xlane.xlu0 %1155
  %v1157 = vadd.f32 %v708, %v710
  %1158 = vadd.xlane.f32.xlu0 %v1157
  %v1159 = vpop.xlane.xlu0 %1158
  %v1160 = vadd.f32 %v712, %v714
  %1161 = vadd.xlane.f32.xlu0 %v1160
  %v1162 = vpop.xlane.xlu0 %1161
  %v1163 = vadd.f32 %v1035, %v1069
  %v1164 = vadd.f32 %v1036, %v1072
  %v1165 = vadd.f32 %v1037, %v1075
  %v1166 = vadd.f32 %v1038, %v1078
  %v1167 = vadd.f32 %v1039, %v1081
  %v1168 = vadd.f32 %v1040, %v1084
  %v1169 = vadd.f32 %v1041, %v1087
  %v1170 = vadd.f32 %v1042, %v1090
  %v1171 = vadd.f32 %v1043, %v1093
  %v1172 = vadd.f32 %v1044, %v1096
  %v1173 = vadd.f32 %v1045, %v1099
  %v1174 = vadd.f32 %v1046, %v1102
  %v1175 = vadd.f32 %v1047, %v1105
  %v1176 = vadd.f32 %v1048, %v1108
  %v1177 = vadd.f32 %v1049, %v1111
  %v1178 = vadd.f32 %v1050, %v1114
  %v1179 = vadd.f32 %v1051, %v1117
  %v1180 = vadd.f32 %v1052, %v1120
  %v1181 = vadd.f32 %v1053, %v1123
  %v1182 = vadd.f32 %v1054, %v1126
  %v1183 = vadd.f32 %v1055, %v1129
  %v1184 = vadd.f32 %v1056, %v1132
  %v1185 = vadd.f32 %v1057, %v1135
  %v1186 = vadd.f32 %v1058, %v1138
  %v1187 = vadd.f32 %v1059, %v1141
  %v1188 = vadd.f32 %v1060, %v1144
  %v1189 = vadd.f32 %v1061, %v1147
  %v1190 = vadd.f32 %v1062, %v1150
  %v1191 = vadd.f32 %v1063, %v1153
  %v1192 = vadd.f32 %v1064, %v1156
  %v1193 = vadd.f32 %v1065, %v1159
  %v1194 = vadd.f32 %v1066, %v1162
  %vm1195 = vcmask 7168
  %1196 = vst.msk [vmem:[#allocation2] sm:$0xff] %vm1195, %v1163
  %1197 = vst.msk [vmem:[#allocation2 + $0x8] sm:$0xff] %vm1195, %v1164
  %1198 = vst.msk [vmem:[#allocation2 + $0x10] sm:$0xff] %vm1195, %v1165
  %1199 = vst.msk [vmem:[#allocation2 + $0x18] sm:$0xff] %vm1195, %v1166
  %1200 = vst.msk [vmem:[#allocation2 + $0x20] sm:$0xff] %vm1195, %v1167
  %1201 = vst.msk [vmem:[#allocation2 + $0x28] sm:$0xff] %vm1195, %v1168
  %1202 = vst.msk [vmem:[#allocation2 + $0x30] sm:$0xff] %vm1195, %v1169
  %1203 = vst.msk [vmem:[#allocation2 + $0x38] sm:$0xff] %vm1195, %v1170
  %1204 = vst.msk [vmem:[#allocation2 + $0x40] sm:$0xff] %vm1195, %v1171
  %1205 = vst.msk [vmem:[#allocation2 + $0x48] sm:$0xff] %vm1195, %v1172
  %1206 = vst.msk [vmem:[#allocation2 + $0x50] sm:$0xff] %vm1195, %v1173
  %1207 = vst.msk [vmem:[#allocation2 + $0x58] sm:$0xff] %vm1195, %v1174
  %1208 = vst.msk [vmem:[#allocation2 + $0x60] sm:$0xff] %vm1195, %v1175
  %1209 = vst.msk [vmem:[#allocation2 + $0x68] sm:$0xff] %vm1195, %v1176
  %1210 = vst.msk [vmem:[#allocation2 + $0x70] sm:$0xff] %vm1195, %v1177
  %1211 = vst.msk [vmem:[#allocation2 + $0x78] sm:$0xff] %vm1195, %v1178
  %1212 = vst.msk [vmem:[#allocation2 + $0x80] sm:$0xff] %vm1195, %v1179
  %1213 = vst.msk [vmem:[#allocation2 + $0x88] sm:$0xff] %vm1195, %v1180
  %1214 = vst.msk [vmem:[#allocation2 + $0x90] sm:$0xff] %vm1195, %v1181
  %1215 = vst.msk [vmem:[#allocation2 + $0x98] sm:$0xff] %vm1195, %v1182
  %1216 = vst.msk [vmem:[#allocation2 + $0xa0] sm:$0xff] %vm1195, %v1183
  %1217 = vst.msk [vmem:[#allocation2 + $0xa8] sm:$0xff] %vm1195, %v1184
  %1218 = vst.msk [vmem:[#allocation2 + $0xb0] sm:$0xff] %vm1195, %v1185
  %1219 = vst.msk [vmem:[#allocation2 + $0xb8] sm:$0xff] %vm1195, %v1186
  %1220 = vst.msk [vmem:[#allocation2 + $0xc0] sm:$0xff] %vm1195, %v1187
  %1221 = vst.msk [vmem:[#allocation2 + $0xc8] sm:$0xff] %vm1195, %v1188
  %1222 = vst.msk [vmem:[#allocation2 + $0xd0] sm:$0xff] %vm1195, %v1189
  %1223 = vst.msk [vmem:[#allocation2 + $0xd8] sm:$0xff] %vm1195, %v1190
  %1224 = vst.msk [vmem:[#allocation2 + $0xe0] sm:$0xff] %vm1195, %v1191
  %1225 = vst.msk [vmem:[#allocation2 + $0xe8] sm:$0xff] %vm1195, %v1192
  %1226 = vst.msk [vmem:[#allocation2 + $0xf0] sm:$0xff] %vm1195, %v1193
  %1227 = vst.msk [vmem:[#allocation2 + $0xf8] sm:$0xff] %vm1195, %v1194
  %v1228 = vld [vmem:[#allocation3] sm:$0xff]
  %v1229 = vld [vmem:[#allocation3 + $0x8] sm:$0xff]
  %v1230 = vld [vmem:[#allocation3 + $0x10] sm:$0xff]
  %v1231 = vld [vmem:[#allocation3 + $0x18] sm:$0xff]
  %v1232 = vld [vmem:[#allocation3 + $0x20] sm:$0xff]
  %v1233 = vld [vmem:[#allocation3 + $0x28] sm:$0xff]
  %v1234 = vld [vmem:[#allocation3 + $0x30] sm:$0xff]
  %v1235 = vld [vmem:[#allocation3 + $0x38] sm:$0xff]
  %v1236 = vld [vmem:[#allocation3 + $0x40] sm:$0xff]
  %v1237 = vld [vmem:[#allocation3 + $0x48] sm:$0xff]
  %v1238 = vld [vmem:[#allocation3 + $0x50] sm:$0xff]
  %v1239 = vld [vmem:[#allocation3 + $0x58] sm:$0xff]
  %v1240 = vld [vmem:[#allocation3 + $0x60] sm:$0xff]
  %v1241 = vld [vmem:[#allocation3 + $0x68] sm:$0xff]
  %v1242 = vld [vmem:[#allocation3 + $0x70] sm:$0xff]
  %v1243 = vld [vmem:[#allocation3 + $0x78] sm:$0xff]
  %v1244 = vld [vmem:[#allocation3 + $0x80] sm:$0xff]
  %v1245 = vld [vmem:[#allocation3 + $0x88] sm:$0xff]
  %v1246 = vld [vmem:[#allocation3 + $0x90] sm:$0xff]
  %v1247 = vld [vmem:[#allocation3 + $0x98] sm:$0xff]
  %v1248 = vld [vmem:[#allocation3 + $0xa0] sm:$0xff]
  %v1249 = vld [vmem:[#allocation3 + $0xa8] sm:$0xff]
  %v1250 = vld [vmem:[#allocation3 + $0xb0] sm:$0xff]
  %v1251 = vld [vmem:[#allocation3 + $0xb8] sm:$0xff]
  %v1252 = vld [vmem:[#allocation3 + $0xc0] sm:$0xff]
  %v1253 = vld [vmem:[#allocation3 + $0xc8] sm:$0xff]
  %v1254 = vld [vmem:[#allocation3 + $0xd0] sm:$0xff]
  %v1255 = vld [vmem:[#allocation3 + $0xd8] sm:$0xff]
  %v1256 = vld [vmem:[#allocation3 + $0xe0] sm:$0xff]
  %v1257 = vld [vmem:[#allocation3 + $0xe8] sm:$0xff]
  %v1258 = vld [vmem:[#allocation3 + $0xf0] sm:$0xff]
  %v1259 = vld [vmem:[#allocation3 + $0xf8] sm:$0xff]
  %v1260 = vmul.f32 %v588, %v747
  %v1261 = vmul.f32 %v590, %v748
  %v1262 = vmul.f32 %v592, %v749
  %v1263 = vmul.f32 %v594, %v750
  %v1264 = vmul.f32 %v596, %v751
  %v1265 = vmul.f32 %v598, %v752
  %v1266 = vmul.f32 %v600, %v753
  %v1267 = vmul.f32 %v602, %v754
  %v1268 = vmul.f32 %v604, %v755
  %v1269 = vmul.f32 %v606, %v756
  %v1270 = vmul.f32 %v608, %v757
  %v1271 = vmul.f32 %v610, %v758
  %v1272 = vmul.f32 %v612, %v759
  %v1273 = vmul.f32 %v614, %v760
  %v1274 = vmul.f32 %v616, %v761
  %v1275 = vmul.f32 %v618, %v762
  %v1276 = vmul.f32 %v620, %v763
  %v1277 = vmul.f32 %v622, %v764
  %v1278 = vmul.f32 %v624, %v765
  %v1279 = vmul.f32 %v626, %v766
  %v1280 = vmul.f32 %v628, %v767
  %v1281 = vmul.f32 %v630, %v768
  %v1282 = vmul.f32 %v632, %v769
  %v1283 = vmul.f32 %v634, %v770
  %v1284 = vmul.f32 %v636, %v771
  %v1285 = vmul.f32 %v638, %v772
  %v1286 = vmul.f32 %v640, %v773
  %v1287 = vmul.f32 %v642, %v774
  %v1288 = vmul.f32 %v644, %v775
  %v1289 = vmul.f32 %v646, %v776
  %v1290 = vmul.f32 %v648, %v777
  %v1291 = vmul.f32 %v650, %v778
  %v1292 = vmul.f32 %v652, %v779
  %v1293 = vmul.f32 %v654, %v780
  %v1294 = vmul.f32 %v656, %v781
  %v1295 = vmul.f32 %v658, %v782
  %v1296 = vmul.f32 %v660, %v783
  %v1297 = vmul.f32 %v662, %v784
  %v1298 = vmul.f32 %v664, %v785
  %v1299 = vmul.f32 %v666, %v786
  %v1300 = vmul.f32 %v668, %v787
  %v1301 = vmul.f32 %v670, %v788
  %v1302 = vmul.f32 %v672, %v789
  %v1303 = vmul.f32 %v674, %v790
  %v1304 = vmul.f32 %v676, %v791
  %v1305 = vmul.f32 %v678, %v792
  %v1306 = vmul.f32 %v680, %v793
  %v1307 = vmul.f32 %v682, %v794
  %v1308 = vmul.f32 %v684, %v795
  %v1309 = vmul.f32 %v686, %v796
  %v1310 = vmul.f32 %v688, %v797
  %v1311 = vmul.f32 %v690, %v798
  %v1312 = vmul.f32 %v692, %v799
  %v1313 = vmul.f32 %v694, %v800
  %v1314 = vmul.f32 %v696, %v801
  %v1315 = vmul.f32 %v698, %v802
  %v1316 = vmul.f32 %v700, %v803
  %v1317 = vmul.f32 %v702, %v804
  %v1318 = vmul.f32 %v704, %v805
  %v1319 = vmul.f32 %v706, %v806
  %v1320 = vmul.f32 %v708, %v807
  %v1321 = vmul.f32 %v710, %v808
  %v1322 = vmul.f32 %v712, %v809
  %v1323 = vmul.f32 %v714, %v810
  %v1324 = vadd.f32 %v1260, %v1261
  %1325 = vadd.xlane.f32.xlu0 %v1324
  %v1326 = vpop.xlane.xlu0 %1325
  %v1327 = vadd.f32 %v1262, %v1263
  %1328 = vadd.xlane.f32.xlu0 %v1327
  %v1329 = vpop.xlane.xlu0 %1328
  %v1330 = vadd.f32 %v1264, %v1265
  %1331 = vadd.xlane.f32.xlu0 %v1330
  %v1332 = vpop.xlane.xlu0 %1331
  %v1333 = vadd.f32 %v1266, %v1267
  %1334 = vadd.xlane.f32.xlu0 %v1333
  %v1335 = vpop.xlane.xlu0 %1334
  %v1336 = vadd.f32 %v1268, %v1269
  %1337 = vadd.xlane.f32.xlu0 %v1336
  %v1338 = vpop.xlane.xlu0 %1337
  %v1339 = vadd.f32 %v1270, %v1271
  %1340 = vadd.xlane.f32.xlu0 %v1339
  %v1341 = vpop.xlane.xlu0 %1340
  %v1342 = vadd.f32 %v1272, %v1273
  %1343 = vadd.xlane.f32.xlu0 %v1342
  %v1344 = vpop.xlane.xlu0 %1343
  %v1345 = vadd.f32 %v1274, %v1275
  %1346 = vadd.xlane.f32.xlu0 %v1345
  %v1347 = vpop.xlane.xlu0 %1346
  %v1348 = vadd.f32 %v1276, %v1277
  %1349 = vadd.xlane.f32.xlu0 %v1348
  %v1350 = vpop.xlane.xlu0 %1349
  %v1351 = vadd.f32 %v1278, %v1279
  %1352 = vadd.xlane.f32.xlu0 %v1351
  %v1353 = vpop.xlane.xlu0 %1352
  %v1354 = vadd.f32 %v1280, %v1281
  %1355 = vadd.xlane.f32.xlu0 %v1354
  %v1356 = vpop.xlane.xlu0 %1355
  %v1357 = vadd.f32 %v1282, %v1283
  %1358 = vadd.xlane.f32.xlu0 %v1357
  %v1359 = vpop.xlane.xlu0 %1358
  %v1360 = vadd.f32 %v1284, %v1285
  %1361 = vadd.xlane.f32.xlu0 %v1360
  %v1362 = vpop.xlane.xlu0 %1361
  %v1363 = vadd.f32 %v1286, %v1287
  %1364 = vadd.xlane.f32.xlu0 %v1363
  %v1365 = vpop.xlane.xlu0 %1364
  %v1366 = vadd.f32 %v1288, %v1289
  %1367 = vadd.xlane.f32.xlu0 %v1366
  %v1368 = vpop.xlane.xlu0 %1367
  %v1369 = vadd.f32 %v1290, %v1291
  %1370 = vadd.xlane.f32.xlu0 %v1369
  %v1371 = vpop.xlane.xlu0 %1370
  %v1372 = vadd.f32 %v1292, %v1293
  %1373 = vadd.xlane.f32.xlu0 %v1372
  %v1374 = vpop.xlane.xlu0 %1373
  %v1375 = vadd.f32 %v1294, %v1295
  %1376 = vadd.xlane.f32.xlu0 %v1375
  %v1377 = vpop.xlane.xlu0 %1376
  %v1378 = vadd.f32 %v1296, %v1297
  %1379 = vadd.xlane.f32.xlu0 %v1378
  %v1380 = vpop.xlane.xlu0 %1379
  %v1381 = vadd.f32 %v1298, %v1299
  %1382 = vadd.xlane.f32.xlu0 %v1381
  %v1383 = vpop.xlane.xlu0 %1382
  %v1384 = vadd.f32 %v1300, %v1301
  %1385 = vadd.xlane.f32.xlu0 %v1384
  %v1386 = vpop.xlane.xlu0 %1385
  %v1387 = vadd.f32 %v1302, %v1303
  %1388 = vadd.xlane.f32.xlu0 %v1387
  %v1389 = vpop.xlane.xlu0 %1388
  %v1390 = vadd.f32 %v1304, %v1305
  %1391 = vadd.xlane.f32.xlu0 %v1390
  %v1392 = vpop.xlane.xlu0 %1391
  %v1393 = vadd.f32 %v1306, %v1307
  %1394 = vadd.xlane.f32.xlu0 %v1393
  %v1395 = vpop.xlane.xlu0 %1394
  %v1396 = vadd.f32 %v1308, %v1309
  %1397 = vadd.xlane.f32.xlu0 %v1396
  %v1398 = vpop.xlane.xlu0 %1397
  %v1399 = vadd.f32 %v1310, %v1311
  %1400 = vadd.xlane.f32.xlu0 %v1399
  %v1401 = vpop.xlane.xlu0 %1400
  %v1402 = vadd.f32 %v1312, %v1313
  %1403 = vadd.xlane.f32.xlu0 %v1402
  %v1404 = vpop.xlane.xlu0 %1403
  %v1405 = vadd.f32 %v1314, %v1315
  %1406 = vadd.xlane.f32.xlu0 %v1405
  %v1407 = vpop.xlane.xlu0 %1406
  %v1408 = vadd.f32 %v1316, %v1317
  %1409 = vadd.xlane.f32.xlu0 %v1408
  %v1410 = vpop.xlane.xlu0 %1409
  %v1411 = vadd.f32 %v1318, %v1319
  %1412 = vadd.xlane.f32.xlu0 %v1411
  %v1413 = vpop.xlane.xlu0 %1412
  %v1414 = vadd.f32 %v1320, %v1321
  %1415 = vadd.xlane.f32.xlu0 %v1414
  %v1416 = vpop.xlane.xlu0 %1415
  %v1417 = vadd.f32 %v1322, %v1323
  %1418 = vadd.xlane.f32.xlu0 %v1417
  %v1419 = vpop.xlane.xlu0 %1418
  %v1420 = vadd.f32 %v1228, %v1326
  %v1421 = vadd.f32 %v1229, %v1329
  %v1422 = vadd.f32 %v1230, %v1332
  %v1423 = vadd.f32 %v1231, %v1335
  %v1424 = vadd.f32 %v1232, %v1338
  %v1425 = vadd.f32 %v1233, %v1341
  %v1426 = vadd.f32 %v1234, %v1344
  %v1427 = vadd.f32 %v1235, %v1347
  %v1428 = vadd.f32 %v1236, %v1350
  %v1429 = vadd.f32 %v1237, %v1353
  %v1430 = vadd.f32 %v1238, %v1356
  %v1431 = vadd.f32 %v1239, %v1359
  %v1432 = vadd.f32 %v1240, %v1362
  %v1433 = vadd.f32 %v1241, %v1365
  %v1434 = vadd.f32 %v1242, %v1368
  %v1435 = vadd.f32 %v1243, %v1371
  %v1436 = vadd.f32 %v1244, %v1374
  %v1437 = vadd.f32 %v1245, %v1377
  %v1438 = vadd.f32 %v1246, %v1380
  %v1439 = vadd.f32 %v1247, %v1383
  %v1440 = vadd.f32 %v1248, %v1386
  %v1441 = vadd.f32 %v1249, %v1389
  %v1442 = vadd.f32 %v1250, %v1392
  %v1443 = vadd.f32 %v1251, %v1395
  %v1444 = vadd.f32 %v1252, %v1398
  %v1445 = vadd.f32 %v1253, %v1401
  %v1446 = vadd.f32 %v1254, %v1404
  %v1447 = vadd.f32 %v1255, %v1407
  %v1448 = vadd.f32 %v1256, %v1410
  %v1449 = vadd.f32 %v1257, %v1413
  %v1450 = vadd.f32 %v1258, %v1416
  %v1451 = vadd.f32 %v1259, %v1419
  %1452 = vst.msk [vmem:[#allocation3] sm:$0xff] %vm1195, %v1420
  %1453 = vst.msk [vmem:[#allocation3 + $0x8] sm:$0xff] %vm1195, %v1421
  %1454 = vst.msk [vmem:[#allocation3 + $0x10] sm:$0xff] %vm1195, %v1422
  %1455 = vst.msk [vmem:[#allocation3 + $0x18] sm:$0xff] %vm1195, %v1423
  %1456 = vst.msk [vmem:[#allocation3 + $0x20] sm:$0xff] %vm1195, %v1424
  %1457 = vst.msk [vmem:[#allocation3 + $0x28] sm:$0xff] %vm1195, %v1425
  %1458 = vst.msk [vmem:[#allocation3 + $0x30] sm:$0xff] %vm1195, %v1426
  %1459 = vst.msk [vmem:[#allocation3 + $0x38] sm:$0xff] %vm1195, %v1427
  %1460 = vst.msk [vmem:[#allocation3 + $0x40] sm:$0xff] %vm1195, %v1428
  %1461 = vst.msk [vmem:[#allocation3 + $0x48] sm:$0xff] %vm1195, %v1429
  %1462 = vst.msk [vmem:[#allocation3 + $0x50] sm:$0xff] %vm1195, %v1430
  %1463 = vst.msk [vmem:[#allocation3 + $0x58] sm:$0xff] %vm1195, %v1431
  %1464 = vst.msk [vmem:[#allocation3 + $0x60] sm:$0xff] %vm1195, %v1432
  %1465 = vst.msk [vmem:[#allocation3 + $0x68] sm:$0xff] %vm1195, %v1433
  %1466 = vst.msk [vmem:[#allocation3 + $0x70] sm:$0xff] %vm1195, %v1434
  %1467 = vst.msk [vmem:[#allocation3 + $0x78] sm:$0xff] %vm1195, %v1435
  %1468 = vst.msk [vmem:[#allocation3 + $0x80] sm:$0xff] %vm1195, %v1436
  %1469 = vst.msk [vmem:[#allocation3 + $0x88] sm:$0xff] %vm1195, %v1437
  %1470 = vst.msk [vmem:[#allocation3 + $0x90] sm:$0xff] %vm1195, %v1438
  %1471 = vst.msk [vmem:[#allocation3 + $0x98] sm:$0xff] %vm1195, %v1439
  %1472 = vst.msk [vmem:[#allocation3 + $0xa0] sm:$0xff] %vm1195, %v1440
  %1473 = vst.msk [vmem:[#allocation3 + $0xa8] sm:$0xff] %vm1195, %v1441
  %1474 = vst.msk [vmem:[#allocation3 + $0xb0] sm:$0xff] %vm1195, %v1442
  %1475 = vst.msk [vmem:[#allocation3 + $0xb8] sm:$0xff] %vm1195, %v1443
  %1476 = vst.msk [vmem:[#allocation3 + $0xc0] sm:$0xff] %vm1195, %v1444
  %1477 = vst.msk [vmem:[#allocation3 + $0xc8] sm:$0xff] %vm1195, %v1445
  %1478 = vst.msk [vmem:[#allocation3 + $0xd0] sm:$0xff] %vm1195, %v1446
  %1479 = vst.msk [vmem:[#allocation3 + $0xd8] sm:$0xff] %vm1195, %v1447
  %1480 = vst.msk [vmem:[#allocation3 + $0xe0] sm:$0xff] %vm1195, %v1448
  %1481 = vst.msk [vmem:[#allocation3 + $0xe8] sm:$0xff] %vm1195, %v1449
  %1482 = vst.msk [vmem:[#allocation3 + $0xf0] sm:$0xff] %vm1195, %v1450
  %1483 = vst.msk [vmem:[#allocation3 + $0xf8] sm:$0xff] %vm1195, %v1451
  %v1484 = vadd.f32 %v588, %v592
  %v1485 = vadd.f32 %v1484, %v596
  %v1486 = vadd.f32 %v1485, %v600
  %v1487 = vadd.f32 %v1486, %v604
  %v1488 = vadd.f32 %v1487, %v608
  %v1489 = vadd.f32 %v1488, %v612
  %v1490 = vadd.f32 %v1489, %v616
  %v1491 = vadd.f32 %v1490, %v620
  %v1492 = vadd.f32 %v1491, %v624
  %v1493 = vadd.f32 %v1492, %v628
  %v1494 = vadd.f32 %v1493, %v632
  %v1495 = vadd.f32 %v1494, %v636
  %v1496 = vadd.f32 %v1495, %v640
  %v1497 = vadd.f32 %v1496, %v644
  %v1498 = vadd.f32 %v1497, %v648
  %v1499 = vadd.f32 %v1498, %v652
  %v1500 = vadd.f32 %v1499, %v656
  %v1501 = vadd.f32 %v1500, %v660
  %v1502 = vadd.f32 %v1501, %v664
  %v1503 = vadd.f32 %v1502, %v668
  %v1504 = vadd.f32 %v1503, %v672
  %v1505 = vadd.f32 %v1504, %v676
  %v1506 = vadd.f32 %v1505, %v680
  %v1507 = vadd.f32 %v1506, %v684
  %v1508 = vadd.f32 %v1507, %v688
  %v1509 = vadd.f32 %v1508, %v692
  %v1510 = vadd.f32 %v1509, %v696
  %v1511 = vadd.f32 %v1510, %v700
  %v1512 = vadd.f32 %v1511, %v704
  %v1513 = vadd.f32 %v1512, %v708
  %v1514 = vadd.f32 %v1513, %v712
  %v1515 = vrot.slane %v1514, 4
  %v1516 = vadd.f32 %v1514, %v1515
  %v1517 = vrot.slane %v1516, 2
  %v1518 = vadd.f32 %v1516, %v1517
  %v1519 = vrot.slane %v1518, 1
  %v1520 = vadd.f32 %v1518, %v1519
  %v1521 = vadd.f32 %v590, %v594
  %v1522 = vadd.f32 %v1521, %v598
  %v1523 = vadd.f32 %v1522, %v602
  %v1524 = vadd.f32 %v1523, %v606
  %v1525 = vadd.f32 %v1524, %v610
  %v1526 = vadd.f32 %v1525, %v614
  %v1527 = vadd.f32 %v1526, %v618
  %v1528 = vadd.f32 %v1527, %v622
  %v1529 = vadd.f32 %v1528, %v626
  %v1530 = vadd.f32 %v1529, %v630
  %v1531 = vadd.f32 %v1530, %v634
  %v1532 = vadd.f32 %v1531, %v638
  %v1533 = vadd.f32 %v1532, %v642
  %v1534 = vadd.f32 %v1533, %v646
  %v1535 = vadd.f32 %v1534, %v650
  %v1536 = vadd.f32 %v1535, %v654
  %v1537 = vadd.f32 %v1536, %v658
  %v1538 = vadd.f32 %v1537, %v662
  %v1539 = vadd.f32 %v1538, %v666
  %v1540 = vadd.f32 %v1539, %v670
  %v1541 = vadd.f32 %v1540, %v674
  %v1542 = vadd.f32 %v1541, %v678
  %v1543 = vadd.f32 %v1542, %v682
  %v1544 = vadd.f32 %v1543, %v686
  %v1545 = vadd.f32 %v1544, %v690
  %v1546 = vadd.f32 %v1545, %v694
  %v1547 = vadd.f32 %v1546, %v698
  %v1548 = vadd.f32 %v1547, %v702
  %v1549 = vadd.f32 %v1548, %v706
  %v1550 = vadd.f32 %v1549, %v710
  %v1551 = vadd.f32 %v1550, %v714
  %v1552 = vrot.slane %v1551, 4
  %v1553 = vadd.f32 %v1551, %v1552
  %v1554 = vrot.slane %v1553, 2
  %v1555 = vadd.f32 %v1553, %v1554
  %v1556 = vrot.slane %v1555, 1
  %v1557 = vadd.f32 %v1555, %v1556
  %v1560 = vrot.slane %v1557, 7
  %vm1561 = vcmask 1040384
  %v1562 = vsel %vm1561, %v1520, %v1560
  %v1564 = vlaneseq
  %vm1565 = vcmp.ge.s32.totalorder %v1564, 0
  %vm1566 = vcmp.lt.s32.totalorder %v1564, 256
  %vm1567 = vmand %vm1565, %vm1566
  %1568 = vst.msk [vmem:[%s5] sm:$0x3] %vm1567, %v1562
  %v1569 = vmul.f32 %v588, %v923
  %v1570 = vmul.f32 %v590, %v987
  %v1571 = vmul.f32 %v592, %v924
  %v1572 = vmul.f32 %v594, %v988
  %v1573 = vmul.f32 %v596, %v925
  %v1574 = vmul.f32 %v598, %v989
  %v1575 = vmul.f32 %v600, %v926
  %v1576 = vmul.f32 %v602, %v990
  %v1577 = vmul.f32 %v604, %v927
  %v1578 = vmul.f32 %v606, %v991
  %v1579 = vmul.f32 %v608, %v928
  %v1580 = vmul.f32 %v610, %v992
  %v1581 = vmul.f32 %v612, %v929
  %v1582 = vmul.f32 %v614, %v993
  %v1583 = vmul.f32 %v616, %v930
  %v1584 = vmul.f32 %v618, %v994
  %v1585 = vmul.f32 %v620, %v931
  %v1586 = vmul.f32 %v622, %v995
  %v1587 = vmul.f32 %v624, %v932
  %v1588 = vmul.f32 %v626, %v996
  %v1589 = vmul.f32 %v628, %v933
  %v1590 = vmul.f32 %v630, %v997
  %v1591 = vmul.f32 %v632, %v934
  %v1592 = vmul.f32 %v634, %v998
  %v1593 = vmul.f32 %v636, %v935
  %v1594 = vmul.f32 %v638, %v999
  %v1595 = vmul.f32 %v640, %v936
  %v1596 = vmul.f32 %v642, %v1000
  %v1597 = vmul.f32 %v644, %v937
  %v1598 = vmul.f32 %v646, %v1001
  %v1599 = vmul.f32 %v648, %v938
  %v1600 = vmul.f32 %v650, %v1002
  %v1601 = vmul.f32 %v652, %v955
  %v1602 = vmul.f32 %v654, %v1019
  %v1603 = vmul.f32 %v656, %v956
  %v1604 = vmul.f32 %v658, %v1020
  %v1605 = vmul.f32 %v660, %v957
  %v1606 = vmul.f32 %v662, %v1021
  %v1607 = vmul.f32 %v664, %v958
  %v1608 = vmul.f32 %v666, %v1022
  %v1609 = vmul.f32 %v668, %v959
  %v1610 = vmul.f32 %v670, %v1023
  %v1611 = vmul.f32 %v672, %v960
  %v1612 = vmul.f32 %v674, %v1024
  %v1613 = vmul.f32 %v676, %v961
  %v1614 = vmul.f32 %v678, %v1025
  %v1615 = vmul.f32 %v680, %v962
  %v1616 = vmul.f32 %v682, %v1026
  %v1617 = vmul.f32 %v684, %v963
  %v1618 = vmul.f32 %v686, %v1027
  %v1619 = vmul.f32 %v688, %v964
  %v1620 = vmul.f32 %v690, %v1028
  %v1621 = vmul.f32 %v692, %v965
  %v1622 = vmul.f32 %v694, %v1029
  %v1623 = vmul.f32 %v696, %v966
  %v1624 = vmul.f32 %v698, %v1030
  %v1625 = vmul.f32 %v700, %v967
  %v1626 = vmul.f32 %v702, %v1031
  %v1627 = vmul.f32 %v704, %v968
  %v1628 = vmul.f32 %v706, %v1032
  %v1629 = vmul.f32 %v708, %v969
  %v1630 = vmul.f32 %v710, %v1033
  %v1631 = vmul.f32 %v712, %v970
  %v1632 = vmul.f32 %v714, %v1034
  %v1633 = vadd.f32 %v1569, %v1571
  %v1634 = vadd.f32 %v1633, %v1573
  %v1635 = vadd.f32 %v1634, %v1575
  %v1636 = vadd.f32 %v1635, %v1577
  %v1637 = vadd.f32 %v1636, %v1579
  %v1638 = vadd.f32 %v1637, %v1581
  %v1639 = vadd.f32 %v1638, %v1583
  %v1640 = vadd.f32 %v1639, %v1585
  %v1641 = vadd.f32 %v1640, %v1587
  %v1642 = vadd.f32 %v1641, %v1589
  %v1643 = vadd.f32 %v1642, %v1591
  %v1644 = vadd.f32 %v1643, %v1593
  %v1645 = vadd.f32 %v1644, %v1595
  %v1646 = vadd.f32 %v1645, %v1597
  %v1647 = vadd.f32 %v1646, %v1599
  %v1648 = vadd.f32 %v1647, %v1601
  %v1649 = vadd.f32 %v1648, %v1603
  %v1650 = vadd.f32 %v1649, %v1605
  %v1651 = vadd.f32 %v1650, %v1607
  %v1652 = vadd.f32 %v1651, %v1609
  %v1653 = vadd.f32 %v1652, %v1611
  %v1654 = vadd.f32 %v1653, %v1613
  %v1655 = vadd.f32 %v1654, %v1615
  %v1656 = vadd.f32 %v1655, %v1617
  %v1657 = vadd.f32 %v1656, %v1619
  %v1658 = vadd.f32 %v1657, %v1621
  %v1659 = vadd.f32 %v1658, %v1623
  %v1660 = vadd.f32 %v1659, %v1625
  %v1661 = vadd.f32 %v1660, %v1627
  %v1662 = vadd.f32 %v1661, %v1629
  %v1663 = vadd.f32 %v1662, %v1631
  %v1664 = vrot.slane %v1663, 4
  %v1665 = vadd.f32 %v1663, %v1664
  %v1666 = vrot.slane %v1665, 2
  %v1667 = vadd.f32 %v1665, %v1666
  %v1668 = vrot.slane %v1667, 1
  %v1669 = vadd.f32 %v1667, %v1668
  %v1670 = vadd.f32 %v1570, %v1572
  %v1671 = vadd.f32 %v1670, %v1574
  %v1672 = vadd.f32 %v1671, %v1576
  %v1673 = vadd.f32 %v1672, %v1578
  %v1674 = vadd.f32 %v1673, %v1580
  %v1675 = vadd.f32 %v1674, %v1582
  %v1676 = vadd.f32 %v1675, %v1584
  %v1677 = vadd.f32 %v1676, %v1586
  %v1678 = vadd.f32 %v1677, %v1588
  %v1679 = vadd.f32 %v1678, %v1590
  %v1680 = vadd.f32 %v1679, %v1592
  %v1681 = vadd.f32 %v1680, %v1594
  %v1682 = vadd.f32 %v1681, %v1596
  %v1683 = vadd.f32 %v1682, %v1598
  %v1684 = vadd.f32 %v1683, %v1600
  %v1685 = vadd.f32 %v1684, %v1602
  %v1686 = vadd.f32 %v1685, %v1604
  %v1687 = vadd.f32 %v1686, %v1606
  %v1688 = vadd.f32 %v1687, %v1608
  %v1689 = vadd.f32 %v1688, %v1610
  %v1690 = vadd.f32 %v1689, %v1612
  %v1691 = vadd.f32 %v1690, %v1614
  %v1692 = vadd.f32 %v1691, %v1616
  %v1693 = vadd.f32 %v1692, %v1618
  %v1694 = vadd.f32 %v1693, %v1620
  %v1695 = vadd.f32 %v1694, %v1622
  %v1696 = vadd.f32 %v1695, %v1624
  %v1697 = vadd.f32 %v1696, %v1626
  %v1698 = vadd.f32 %v1697, %v1628
  %v1699 = vadd.f32 %v1698, %v1630
  %v1700 = vadd.f32 %v1699, %v1632
  %v1701 = vrot.slane %v1700, 4
  %v1702 = vadd.f32 %v1700, %v1701
  %v1703 = vrot.slane %v1702, 2
  %v1704 = vadd.f32 %v1702, %v1703
  %v1705 = vrot.slane %v1704, 1
  %v1706 = vadd.f32 %v1704, %v1705
  %v1709 = vrot.slane %v1706, 7
  %v1710 = vsel %vm1561, %v1669, %v1709
  %1712 = vst.msk [vmem:[%s6] sm:$0x3] %vm1567, %v1710
  // Predicated region
  $region22: #{heco_forward.11} parent=0 // pred_check
    %p1713 = pneg %p20
  $region23: #{heco_forward.11} parent=0 // pred_check_branch
    %1715 = sbr.rel (%p1713) target = $region25
  $region24: #{heco_forward.11} parent=0 // pred_region
    %v1716 = vld [vmem:[#allocation3] sm:$0xff]
    %v1717 = vld [vmem:[#allocation3 + $0x8] sm:$0xff]
    %v1718 = vld [vmem:[#allocation3 + $0x10] sm:$0xff]
    %v1719 = vld [vmem:[#allocation3 + $0x18] sm:$0xff]
    %v1720 = vld [vmem:[#allocation3 + $0x20] sm:$0xff]
    %v1721 = vld [vmem:[#allocation3 + $0x28] sm:$0xff]
    %v1722 = vld [vmem:[#allocation3 + $0x30] sm:$0xff]
    %v1723 = vld [vmem:[#allocation3 + $0x38] sm:$0xff]
    %v1724 = vld [vmem:[#allocation3 + $0x40] sm:$0xff]
    %v1725 = vld [vmem:[#allocation3 + $0x48] sm:$0xff]
    %v1726 = vld [vmem:[#allocation3 + $0x50] sm:$0xff]
    %v1727 = vld [vmem:[#allocation3 + $0x58] sm:$0xff]
    %v1728 = vld [vmem:[#allocation3 + $0x60] sm:$0xff]
    %v1729 = vld [vmem:[#allocation3 + $0x68] sm:$0xff]
    %v1730 = vld [vmem:[#allocation3 + $0x70] sm:$0xff]
    %v1731 = vld [vmem:[#allocation3 + $0x78] sm:$0xff]
    %v1732 = vld [vmem:[#allocation3 + $0x80] sm:$0xff]
    %v1733 = vld [vmem:[#allocation3 + $0x88] sm:$0xff]
    %v1734 = vld [vmem:[#allocation3 + $0x90] sm:$0xff]
    %v1735 = vld [vmem:[#allocation3 + $0x98] sm:$0xff]
    %v1736 = vld [vmem:[#allocation3 + $0xa0] sm:$0xff]
    %v1737 = vld [vmem:[#allocation3 + $0xa8] sm:$0xff]
    %v1738 = vld [vmem:[#allocation3 + $0xb0] sm:$0xff]
    %v1739 = vld [vmem:[#allocation3 + $0xb8] sm:$0xff]
    %v1740 = vld [vmem:[#allocation3 + $0xc0] sm:$0xff]
    %v1741 = vld [vmem:[#allocation3 + $0xc8] sm:$0xff]
    %v1742 = vld [vmem:[#allocation3 + $0xd0] sm:$0xff]
    %v1743 = vld [vmem:[#allocation3 + $0xd8] sm:$0xff]
    %v1744 = vld [vmem:[#allocation3 + $0xe0] sm:$0xff]
    %v1745 = vld [vmem:[#allocation3 + $0xe8] sm:$0xff]
    %v1746 = vld [vmem:[#allocation3 + $0xf0] sm:$0xff]
    %v1747 = vld [vmem:[#allocation3 + $0xf8] sm:$0xff]
    %v1748 = vld [vmem:[#allocation2] sm:$0xff]
    %v1749 = vld [vmem:[#allocation2 + $0x8] sm:$0xff]
    %v1750 = vld [vmem:[#allocation2 + $0x10] sm:$0xff]
    %v1751 = vld [vmem:[#allocation2 + $0x18] sm:$0xff]
    %v1752 = vld [vmem:[#allocation2 + $0x20] sm:$0xff]
    %v1753 = vld [vmem:[#allocation2 + $0x28] sm:$0xff]
    %v1754 = vld [vmem:[#allocation2 + $0x30] sm:$0xff]
    %v1755 = vld [vmem:[#allocation2 + $0x38] sm:$0xff]
    %v1756 = vld [vmem:[#allocation2 + $0x40] sm:$0xff]
    %v1757 = vld [vmem:[#allocation2 + $0x48] sm:$0xff]
    %v1758 = vld [vmem:[#allocation2 + $0x50] sm:$0xff]
    %v1759 = vld [vmem:[#allocation2 + $0x58] sm:$0xff]
    %v1760 = vld [vmem:[#allocation2 + $0x60] sm:$0xff]
    %v1761 = vld [vmem:[#allocation2 + $0x68] sm:$0xff]
    %v1762 = vld [vmem:[#allocation2 + $0x70] sm:$0xff]
    %v1763 = vld [vmem:[#allocation2 + $0x78] sm:$0xff]
    %v1764 = vld [vmem:[#allocation2 + $0x80] sm:$0xff]
    %v1765 = vld [vmem:[#allocation2 + $0x88] sm:$0xff]
    %v1766 = vld [vmem:[#allocation2 + $0x90] sm:$0xff]
    %v1767 = vld [vmem:[#allocation2 + $0x98] sm:$0xff]
    %v1768 = vld [vmem:[#allocation2 + $0xa0] sm:$0xff]
    %v1769 = vld [vmem:[#allocation2 + $0xa8] sm:$0xff]
    %v1770 = vld [vmem:[#allocation2 + $0xb0] sm:$0xff]
    %v1771 = vld [vmem:[#allocation2 + $0xb8] sm:$0xff]
    %v1772 = vld [vmem:[#allocation2 + $0xc0] sm:$0xff]
    %v1773 = vld [vmem:[#allocation2 + $0xc8] sm:$0xff]
    %v1774 = vld [vmem:[#allocation2 + $0xd0] sm:$0xff]
    %v1775 = vld [vmem:[#allocation2 + $0xd8] sm:$0xff]
    %v1776 = vld [vmem:[#allocation2 + $0xe0] sm:$0xff]
    %v1777 = vld [vmem:[#allocation2 + $0xe8] sm:$0xff]
    %v1778 = vld [vmem:[#allocation2 + $0xf0] sm:$0xff]
    %v1779 = vld [vmem:[#allocation2 + $0xf8] sm:$0xff]
    %v1780 = vadd.f32 %v1748, 1e-08
    %v1781 = vadd.f32 %v1749, 1e-08
    %v1782 = vadd.f32 %v1750, 1e-08
    %v1783 = vadd.f32 %v1751, 1e-08
    %v1784 = vadd.f32 %v1752, 1e-08
    %v1785 = vadd.f32 %v1753, 1e-08
    %v1786 = vadd.f32 %v1754, 1e-08
    %v1787 = vadd.f32 %v1755, 1e-08
    %v1788 = vadd.f32 %v1756, 1e-08
    %v1789 = vadd.f32 %v1757, 1e-08
    %v1790 = vadd.f32 %v1758, 1e-08
    %v1791 = vadd.f32 %v1759, 1e-08
    %v1792 = vadd.f32 %v1760, 1e-08
    %v1793 = vadd.f32 %v1761, 1e-08
    %v1794 = vadd.f32 %v1762, 1e-08
    %v1795 = vadd.f32 %v1763, 1e-08
    %v1796 = vadd.f32 %v1764, 1e-08
    %v1797 = vadd.f32 %v1765, 1e-08
    %v1798 = vadd.f32 %v1766, 1e-08
    %v1799 = vadd.f32 %v1767, 1e-08
    %v1800 = vadd.f32 %v1768, 1e-08
    %v1801 = vadd.f32 %v1769, 1e-08
    %v1802 = vadd.f32 %v1770, 1e-08
    %v1803 = vadd.f32 %v1771, 1e-08
    %v1804 = vadd.f32 %v1772, 1e-08
    %v1805 = vadd.f32 %v1773, 1e-08
    %v1806 = vadd.f32 %v1774, 1e-08
    %v1807 = vadd.f32 %v1775, 1e-08
    %v1808 = vadd.f32 %v1776, 1e-08
    %v1809 = vadd.f32 %v1777, 1e-08
    %v1810 = vadd.f32 %v1778, 1e-08
    %v1811 = vadd.f32 %v1779, 1e-08
    %v1812 = vrcp.pop %v1780
    %v1813 = vmul.f32 %v1780, %v1812
    %v1814 = vsub.f32 1.0, %v1813
    %v1815 = vmul.f32 %v1812, %v1814
    %v1816 = vadd.f32 %v1812, %v1815
    %vm1817 = vweird.f32 %v1780
    %vm1818 = vweird.f32 %v1812
    %vm1819 = vmor %vm1817, %vm1818
    %v1820 = vsel %vm1819, %v1812, %v1816
    %v1821 = vand.u32 2147483647, %v1780
    %vm1822 = vcmp.eq.f32.partialorder %v1821, 8.507059e+37
    %v1823 = vand.u32 %v1780, 2147483648
    %v1824 = vor.u32 1.1754944e-38, %v1823
    %v1825 = vsel %vm1822, %v1824, %v1820
    %v1826 = vmul.f32 %v1716, %v1825
    %v1827 = vrcp.pop %v1781
    %v1828 = vmul.f32 %v1781, %v1827
    %v1829 = vsub.f32 1.0, %v1828
    %v1830 = vmul.f32 %v1827, %v1829
    %v1831 = vadd.f32 %v1827, %v1830
    %vm1832 = vweird.f32 %v1781
    %vm1833 = vweird.f32 %v1827
    %vm1834 = vmor %vm1832, %vm1833
    %v1835 = vsel %vm1834, %v1827, %v1831
    %v1836 = vand.u32 2147483647, %v1781
    %vm1837 = vcmp.eq.f32.partialorder %v1836, 8.507059e+37
    %v1838 = vand.u32 %v1781, 2147483648
    %v1839 = vor.u32 1.1754944e-38, %v1838
    %v1840 = vsel %vm1837, %v1839, %v1835
    %v1841 = vmul.f32 %v1717, %v1840
    %v1842 = vrcp.pop %v1782
    %v1843 = vmul.f32 %v1782, %v1842
    %v1844 = vsub.f32 1.0, %v1843
    %v1845 = vmul.f32 %v1842, %v1844
    %v1846 = vadd.f32 %v1842, %v1845
    %vm1847 = vweird.f32 %v1782
    %vm1848 = vweird.f32 %v1842
    %vm1849 = vmor %vm1847, %vm1848
    %v1850 = vsel %vm1849, %v1842, %v1846
    %v1851 = vand.u32 2147483647, %v1782
    %vm1852 = vcmp.eq.f32.partialorder %v1851, 8.507059e+37
    %v1853 = vand.u32 %v1782, 2147483648
    %v1854 = vor.u32 1.1754944e-38, %v1853
    %v1855 = vsel %vm1852, %v1854, %v1850
    %v1856 = vmul.f32 %v1718, %v1855
    %v1857 = vrcp.pop %v1783
    %v1858 = vmul.f32 %v1783, %v1857
    %v1859 = vsub.f32 1.0, %v1858
    %v1860 = vmul.f32 %v1857, %v1859
    %v1861 = vadd.f32 %v1857, %v1860
    %vm1862 = vweird.f32 %v1783
    %vm1863 = vweird.f32 %v1857
    %vm1864 = vmor %vm1862, %vm1863
    %v1865 = vsel %vm1864, %v1857, %v1861
    %v1866 = vand.u32 2147483647, %v1783
    %vm1867 = vcmp.eq.f32.partialorder %v1866, 8.507059e+37
    %v1868 = vand.u32 %v1783, 2147483648
    %v1869 = vor.u32 1.1754944e-38, %v1868
    %v1870 = vsel %vm1867, %v1869, %v1865
    %v1871 = vmul.f32 %v1719, %v1870
    %v1872 = vrcp.pop %v1784
    %v1873 = vmul.f32 %v1784, %v1872
    %v1874 = vsub.f32 1.0, %v1873
    %v1875 = vmul.f32 %v1872, %v1874
    %v1876 = vadd.f32 %v1872, %v1875
    %vm1877 = vweird.f32 %v1784
    %vm1878 = vweird.f32 %v1872
    %vm1879 = vmor %vm1877, %vm1878
    %v1880 = vsel %vm1879, %v1872, %v1876
    %v1881 = vand.u32 2147483647, %v1784
    %vm1882 = vcmp.eq.f32.partialorder %v1881, 8.507059e+37
    %v1883 = vand.u32 %v1784, 2147483648
    %v1884 = vor.u32 1.1754944e-38, %v1883
    %v1885 = vsel %vm1882, %v1884, %v1880
    %v1886 = vmul.f32 %v1720, %v1885
    %v1887 = vrcp.pop %v1785
    %v1888 = vmul.f32 %v1785, %v1887
    %v1889 = vsub.f32 1.0, %v1888
    %v1890 = vmul.f32 %v1887, %v1889
    %v1891 = vadd.f32 %v1887, %v1890
    %vm1892 = vweird.f32 %v1785
    %vm1893 = vweird.f32 %v1887
    %vm1894 = vmor %vm1892, %vm1893
    %v1895 = vsel %vm1894, %v1887, %v1891
    %v1896 = vand.u32 2147483647, %v1785
    %vm1897 = vcmp.eq.f32.partialorder %v1896, 8.507059e+37
    %v1898 = vand.u32 %v1785, 2147483648
    %v1899 = vor.u32 1.1754944e-38, %v1898
    %v1900 = vsel %vm1897, %v1899, %v1895
    %v1901 = vmul.f32 %v1721, %v1900
    %v1902 = vrcp.pop %v1786
    %v1903 = vmul.f32 %v1786, %v1902
    %v1904 = vsub.f32 1.0, %v1903
    %v1905 = vmul.f32 %v1902, %v1904
    %v1906 = vadd.f32 %v1902, %v1905
    %vm1907 = vweird.f32 %v1786
    %vm1908 = vweird.f32 %v1902
    %vm1909 = vmor %vm1907, %vm1908
    %v1910 = vsel %vm1909, %v1902, %v1906
    %v1911 = vand.u32 2147483647, %v1786
    %vm1912 = vcmp.eq.f32.partialorder %v1911, 8.507059e+37
    %v1913 = vand.u32 %v1786, 2147483648
    %v1914 = vor.u32 1.1754944e-38, %v1913
    %v1915 = vsel %vm1912, %v1914, %v1910
    %v1916 = vmul.f32 %v1722, %v1915
    %v1917 = vrcp.pop %v1787
    %v1918 = vmul.f32 %v1787, %v1917
    %v1919 = vsub.f32 1.0, %v1918
    %v1920 = vmul.f32 %v1917, %v1919
    %v1921 = vadd.f32 %v1917, %v1920
    %vm1922 = vweird.f32 %v1787
    %vm1923 = vweird.f32 %v1917
    %vm1924 = vmor %vm1922, %vm1923
    %v1925 = vsel %vm1924, %v1917, %v1921
    %v1926 = vand.u32 2147483647, %v1787
    %vm1927 = vcmp.eq.f32.partialorder %v1926, 8.507059e+37
    %v1928 = vand.u32 %v1787, 2147483648
    %v1929 = vor.u32 1.1754944e-38, %v1928
    %v1930 = vsel %vm1927, %v1929, %v1925
    %v1931 = vmul.f32 %v1723, %v1930
    %v1932 = vrcp.pop %v1788
    %v1933 = vmul.f32 %v1788, %v1932
    %v1934 = vsub.f32 1.0, %v1933
    %v1935 = vmul.f32 %v1932, %v1934
    %v1936 = vadd.f32 %v1932, %v1935
    %vm1937 = vweird.f32 %v1788
    %vm1938 = vweird.f32 %v1932
    %vm1939 = vmor %vm1937, %vm1938
    %v1940 = vsel %vm1939, %v1932, %v1936
    %v1941 = vand.u32 2147483647, %v1788
    %vm1942 = vcmp.eq.f32.partialorder %v1941, 8.507059e+37
    %v1943 = vand.u32 %v1788, 2147483648
    %v1944 = vor.u32 1.1754944e-38, %v1943
    %v1945 = vsel %vm1942, %v1944, %v1940
    %v1946 = vmul.f32 %v1724, %v1945
    %v1947 = vrcp.pop %v1789
    %v1948 = vmul.f32 %v1789, %v1947
    %v1949 = vsub.f32 1.0, %v1948
    %v1950 = vmul.f32 %v1947, %v1949
    %v1951 = vadd.f32 %v1947, %v1950
    %vm1952 = vweird.f32 %v1789
    %vm1953 = vweird.f32 %v1947
    %vm1954 = vmor %vm1952, %vm1953
    %v1955 = vsel %vm1954, %v1947, %v1951
    %v1956 = vand.u32 2147483647, %v1789
    %vm1957 = vcmp.eq.f32.partialorder %v1956, 8.507059e+37
    %v1958 = vand.u32 %v1789, 2147483648
    %v1959 = vor.u32 1.1754944e-38, %v1958
    %v1960 = vsel %vm1957, %v1959, %v1955
    %v1961 = vmul.f32 %v1725, %v1960
    %v1962 = vrcp.pop %v1790
    %v1963 = vmul.f32 %v1790, %v1962
    %v1964 = vsub.f32 1.0, %v1963
    %v1965 = vmul.f32 %v1962, %v1964
    %v1966 = vadd.f32 %v1962, %v1965
    %vm1967 = vweird.f32 %v1790
    %vm1968 = vweird.f32 %v1962
    %vm1969 = vmor %vm1967, %vm1968
    %v1970 = vsel %vm1969, %v1962, %v1966
    %v1971 = vand.u32 2147483647, %v1790
    %vm1972 = vcmp.eq.f32.partialorder %v1971, 8.507059e+37
    %v1973 = vand.u32 %v1790, 2147483648
    %v1974 = vor.u32 1.1754944e-38, %v1973
    %v1975 = vsel %vm1972, %v1974, %v1970
    %v1976 = vmul.f32 %v1726, %v1975
    %v1977 = vrcp.pop %v1791
    %v1978 = vmul.f32 %v1791, %v1977
    %v1979 = vsub.f32 1.0, %v1978
    %v1980 = vmul.f32 %v1977, %v1979
    %v1981 = vadd.f32 %v1977, %v1980
    %vm1982 = vweird.f32 %v1791
    %vm1983 = vweird.f32 %v1977
    %vm1984 = vmor %vm1982, %vm1983
    %v1985 = vsel %vm1984, %v1977, %v1981
    %v1986 = vand.u32 2147483647, %v1791
    %vm1987 = vcmp.eq.f32.partialorder %v1986, 8.507059e+37
    %v1988 = vand.u32 %v1791, 2147483648
    %v1989 = vor.u32 1.1754944e-38, %v1988
    %v1990 = vsel %vm1987, %v1989, %v1985
    %v1991 = vmul.f32 %v1727, %v1990
    %v1992 = vrcp.pop %v1792
    %v1993 = vmul.f32 %v1792, %v1992
    %v1994 = vsub.f32 1.0, %v1993
    %v1995 = vmul.f32 %v1992, %v1994
    %v1996 = vadd.f32 %v1992, %v1995
    %vm1997 = vweird.f32 %v1792
    %vm1998 = vweird.f32 %v1992
    %vm1999 = vmor %vm1997, %vm1998
    %v2000 = vsel %vm1999, %v1992, %v1996
    %v2001 = vand.u32 2147483647, %v1792
    %vm2002 = vcmp.eq.f32.partialorder %v2001, 8.507059e+37
    %v2003 = vand.u32 %v1792, 2147483648
    %v2004 = vor.u32 1.1754944e-38, %v2003
    %v2005 = vsel %vm2002, %v2004, %v2000
    %v2006 = vmul.f32 %v1728, %v2005
    %v2007 = vrcp.pop %v1793
    %v2008 = vmul.f32 %v1793, %v2007
    %v2009 = vsub.f32 1.0, %v2008
    %v2010 = vmul.f32 %v2007, %v2009
    %v2011 = vadd.f32 %v2007, %v2010
    %vm2012 = vweird.f32 %v1793
    %vm2013 = vweird.f32 %v2007
    %vm2014 = vmor %vm2012, %vm2013
    %v2015 = vsel %vm2014, %v2007, %v2011
    %v2016 = vand.u32 2147483647, %v1793
    %vm2017 = vcmp.eq.f32.partialorder %v2016, 8.507059e+37
    %v2018 = vand.u32 %v1793, 2147483648
    %v2019 = vor.u32 1.1754944e-38, %v2018
    %v2020 = vsel %vm2017, %v2019, %v2015
    %v2021 = vmul.f32 %v1729, %v2020
    %v2022 = vrcp.pop %v1794
    %v2023 = vmul.f32 %v1794, %v2022
    %v2024 = vsub.f32 1.0, %v2023
    %v2025 = vmul.f32 %v2022, %v2024
    %v2026 = vadd.f32 %v2022, %v2025
    %vm2027 = vweird.f32 %v1794
    %vm2028 = vweird.f32 %v2022
    %vm2029 = vmor %vm2027, %vm2028
    %v2030 = vsel %vm2029, %v2022, %v2026
    %v2031 = vand.u32 2147483647, %v1794
    %vm2032 = vcmp.eq.f32.partialorder %v2031, 8.507059e+37
    %v2033 = vand.u32 %v1794, 2147483648
    %v2034 = vor.u32 1.1754944e-38, %v2033
    %v2035 = vsel %vm2032, %v2034, %v2030
    %v2036 = vmul.f32 %v1730, %v2035
    %v2037 = vrcp.pop %v1795
    %v2038 = vmul.f32 %v1795, %v2037
    %v2039 = vsub.f32 1.0, %v2038
    %v2040 = vmul.f32 %v2037, %v2039
    %v2041 = vadd.f32 %v2037, %v2040
    %vm2042 = vweird.f32 %v1795
    %vm2043 = vweird.f32 %v2037
    %vm2044 = vmor %vm2042, %vm2043
    %v2045 = vsel %vm2044, %v2037, %v2041
    %v2046 = vand.u32 2147483647, %v1795
    %vm2047 = vcmp.eq.f32.partialorder %v2046, 8.507059e+37
    %v2048 = vand.u32 %v1795, 2147483648
    %v2049 = vor.u32 1.1754944e-38, %v2048
    %v2050 = vsel %vm2047, %v2049, %v2045
    %v2051 = vmul.f32 %v1731, %v2050
    %v2052 = vrcp.pop %v1796
    %v2053 = vmul.f32 %v1796, %v2052
    %v2054 = vsub.f32 1.0, %v2053
    %v2055 = vmul.f32 %v2052, %v2054
    %v2056 = vadd.f32 %v2052, %v2055
    %vm2057 = vweird.f32 %v1796
    %vm2058 = vweird.f32 %v2052
    %vm2059 = vmor %vm2057, %vm2058
    %v2060 = vsel %vm2059, %v2052, %v2056
    %v2061 = vand.u32 2147483647, %v1796
    %vm2062 = vcmp.eq.f32.partialorder %v2061, 8.507059e+37
    %v2063 = vand.u32 %v1796, 2147483648
    %v2064 = vor.u32 1.1754944e-38, %v2063
    %v2065 = vsel %vm2062, %v2064, %v2060
    %v2066 = vmul.f32 %v1732, %v2065
    %v2067 = vrcp.pop %v1797
    %v2068 = vmul.f32 %v1797, %v2067
    %v2069 = vsub.f32 1.0, %v2068
    %v2070 = vmul.f32 %v2067, %v2069
    %v2071 = vadd.f32 %v2067, %v2070
    %vm2072 = vweird.f32 %v1797
    %vm2073 = vweird.f32 %v2067
    %vm2074 = vmor %vm2072, %vm2073
    %v2075 = vsel %vm2074, %v2067, %v2071
    %v2076 = vand.u32 2147483647, %v1797
    %vm2077 = vcmp.eq.f32.partialorder %v2076, 8.507059e+37
    %v2078 = vand.u32 %v1797, 2147483648
    %v2079 = vor.u32 1.1754944e-38, %v2078
    %v2080 = vsel %vm2077, %v2079, %v2075
    %v2081 = vmul.f32 %v1733, %v2080
    %v2082 = vrcp.pop %v1798
    %v2083 = vmul.f32 %v1798, %v2082
    %v2084 = vsub.f32 1.0, %v2083
    %v2085 = vmul.f32 %v2082, %v2084
    %v2086 = vadd.f32 %v2082, %v2085
    %vm2087 = vweird.f32 %v1798
    %vm2088 = vweird.f32 %v2082
    %vm2089 = vmor %vm2087, %vm2088
    %v2090 = vsel %vm2089, %v2082, %v2086
    %v2091 = vand.u32 2147483647, %v1798
    %vm2092 = vcmp.eq.f32.partialorder %v2091, 8.507059e+37
    %v2093 = vand.u32 %v1798, 2147483648
    %v2094 = vor.u32 1.1754944e-38, %v2093
    %v2095 = vsel %vm2092, %v2094, %v2090
    %v2096 = vmul.f32 %v1734, %v2095
    %v2097 = vrcp.pop %v1799
    %v2098 = vmul.f32 %v1799, %v2097
    %v2099 = vsub.f32 1.0, %v2098
    %v2100 = vmul.f32 %v2097, %v2099
    %v2101 = vadd.f32 %v2097, %v2100
    %vm2102 = vweird.f32 %v1799
    %vm2103 = vweird.f32 %v2097
    %vm2104 = vmor %vm2102, %vm2103
    %v2105 = vsel %vm2104, %v2097, %v2101
    %v2106 = vand.u32 2147483647, %v1799
    %vm2107 = vcmp.eq.f32.partialorder %v2106, 8.507059e+37
    %v2108 = vand.u32 %v1799, 2147483648
    %v2109 = vor.u32 1.1754944e-38, %v2108
    %v2110 = vsel %vm2107, %v2109, %v2105
    %v2111 = vmul.f32 %v1735, %v2110
    %v2112 = vrcp.pop %v1800
    %v2113 = vmul.f32 %v1800, %v2112
    %v2114 = vsub.f32 1.0, %v2113
    %v2115 = vmul.f32 %v2112, %v2114
    %v2116 = vadd.f32 %v2112, %v2115
    %vm2117 = vweird.f32 %v1800
    %vm2118 = vweird.f32 %v2112
    %vm2119 = vmor %vm2117, %vm2118
    %v2120 = vsel %vm2119, %v2112, %v2116
    %v2121 = vand.u32 2147483647, %v1800
    %vm2122 = vcmp.eq.f32.partialorder %v2121, 8.507059e+37
    %v2123 = vand.u32 %v1800, 2147483648
    %v2124 = vor.u32 1.1754944e-38, %v2123
    %v2125 = vsel %vm2122, %v2124, %v2120
    %v2126 = vmul.f32 %v1736, %v2125
    %v2127 = vrcp.pop %v1801
    %v2128 = vmul.f32 %v1801, %v2127
    %v2129 = vsub.f32 1.0, %v2128
    %v2130 = vmul.f32 %v2127, %v2129
    %v2131 = vadd.f32 %v2127, %v2130
    %vm2132 = vweird.f32 %v1801
    %vm2133 = vweird.f32 %v2127
    %vm2134 = vmor %vm2132, %vm2133
    %v2135 = vsel %vm2134, %v2127, %v2131
    %v2136 = vand.u32 2147483647, %v1801
    %vm2137 = vcmp.eq.f32.partialorder %v2136, 8.507059e+37
    %v2138 = vand.u32 %v1801, 2147483648
    %v2139 = vor.u32 1.1754944e-38, %v2138
    %v2140 = vsel %vm2137, %v2139, %v2135
    %v2141 = vmul.f32 %v1737, %v2140
    %v2142 = vrcp.pop %v1802
    %v2143 = vmul.f32 %v1802, %v2142
    %v2144 = vsub.f32 1.0, %v2143
    %v2145 = vmul.f32 %v2142, %v2144
    %v2146 = vadd.f32 %v2142, %v2145
    %vm2147 = vweird.f32 %v1802
    %vm2148 = vweird.f32 %v2142
    %vm2149 = vmor %vm2147, %vm2148
    %v2150 = vsel %vm2149, %v2142, %v2146
    %v2151 = vand.u32 2147483647, %v1802
    %vm2152 = vcmp.eq.f32.partialorder %v2151, 8.507059e+37
    %v2153 = vand.u32 %v1802, 2147483648
    %v2154 = vor.u32 1.1754944e-38, %v2153
    %v2155 = vsel %vm2152, %v2154, %v2150
    %v2156 = vmul.f32 %v1738, %v2155
    %v2157 = vrcp.pop %v1803
    %v2158 = vmul.f32 %v1803, %v2157
    %v2159 = vsub.f32 1.0, %v2158
    %v2160 = vmul.f32 %v2157, %v2159
    %v2161 = vadd.f32 %v2157, %v2160
    %vm2162 = vweird.f32 %v1803
    %vm2163 = vweird.f32 %v2157
    %vm2164 = vmor %vm2162, %vm2163
    %v2165 = vsel %vm2164, %v2157, %v2161
    %v2166 = vand.u32 2147483647, %v1803
    %vm2167 = vcmp.eq.f32.partialorder %v2166, 8.507059e+37
    %v2168 = vand.u32 %v1803, 2147483648
    %v2169 = vor.u32 1.1754944e-38, %v2168
    %v2170 = vsel %vm2167, %v2169, %v2165
    %v2171 = vmul.f32 %v1739, %v2170
    %v2172 = vrcp.pop %v1804
    %v2173 = vmul.f32 %v1804, %v2172
    %v2174 = vsub.f32 1.0, %v2173
    %v2175 = vmul.f32 %v2172, %v2174
    %v2176 = vadd.f32 %v2172, %v2175
    %vm2177 = vweird.f32 %v1804
    %vm2178 = vweird.f32 %v2172
    %vm2179 = vmor %vm2177, %vm2178
    %v2180 = vsel %vm2179, %v2172, %v2176
    %v2181 = vand.u32 2147483647, %v1804
    %vm2182 = vcmp.eq.f32.partialorder %v2181, 8.507059e+37
    %v2183 = vand.u32 %v1804, 2147483648
    %v2184 = vor.u32 1.1754944e-38, %v2183
    %v2185 = vsel %vm2182, %v2184, %v2180
    %v2186 = vmul.f32 %v1740, %v2185
    %v2187 = vrcp.pop %v1805
    %v2188 = vmul.f32 %v1805, %v2187
    %v2189 = vsub.f32 1.0, %v2188
    %v2190 = vmul.f32 %v2187, %v2189
    %v2191 = vadd.f32 %v2187, %v2190
    %vm2192 = vweird.f32 %v1805
    %vm2193 = vweird.f32 %v2187
    %vm2194 = vmor %vm2192, %vm2193
    %v2195 = vsel %vm2194, %v2187, %v2191
    %v2196 = vand.u32 2147483647, %v1805
    %vm2197 = vcmp.eq.f32.partialorder %v2196, 8.507059e+37
    %v2198 = vand.u32 %v1805, 2147483648
    %v2199 = vor.u32 1.1754944e-38, %v2198
    %v2200 = vsel %vm2197, %v2199, %v2195
    %v2201 = vmul.f32 %v1741, %v2200
    %v2202 = vrcp.pop %v1806
    %v2203 = vmul.f32 %v1806, %v2202
    %v2204 = vsub.f32 1.0, %v2203
    %v2205 = vmul.f32 %v2202, %v2204
    %v2206 = vadd.f32 %v2202, %v2205
    %vm2207 = vweird.f32 %v1806
    %vm2208 = vweird.f32 %v2202
    %vm2209 = vmor %vm2207, %vm2208
    %v2210 = vsel %vm2209, %v2202, %v2206
    %v2211 = vand.u32 2147483647, %v1806
    %vm2212 = vcmp.eq.f32.partialorder %v2211, 8.507059e+37
    %v2213 = vand.u32 %v1806, 2147483648
    %v2214 = vor.u32 1.1754944e-38, %v2213
    %v2215 = vsel %vm2212, %v2214, %v2210
    %v2216 = vmul.f32 %v1742, %v2215
    %v2217 = vrcp.pop %v1807
    %v2218 = vmul.f32 %v1807, %v2217
    %v2219 = vsub.f32 1.0, %v2218
    %v2220 = vmul.f32 %v2217, %v2219
    %v2221 = vadd.f32 %v2217, %v2220
    %vm2222 = vweird.f32 %v1807
    %vm2223 = vweird.f32 %v2217
    %vm2224 = vmor %vm2222, %vm2223
    %v2225 = vsel %vm2224, %v2217, %v2221
    %v2226 = vand.u32 2147483647, %v1807
    %vm2227 = vcmp.eq.f32.partialorder %v2226, 8.507059e+37
    %v2228 = vand.u32 %v1807, 2147483648
    %v2229 = vor.u32 1.1754944e-38, %v2228
    %v2230 = vsel %vm2227, %v2229, %v2225
    %v2231 = vmul.f32 %v1743, %v2230
    %v2232 = vrcp.pop %v1808
    %v2233 = vmul.f32 %v1808, %v2232
    %v2234 = vsub.f32 1.0, %v2233
    %v2235 = vmul.f32 %v2232, %v2234
    %v2236 = vadd.f32 %v2232, %v2235
    %vm2237 = vweird.f32 %v1808
    %vm2238 = vweird.f32 %v2232
    %vm2239 = vmor %vm2237, %vm2238
    %v2240 = vsel %vm2239, %v2232, %v2236
    %v2241 = vand.u32 2147483647, %v1808
    %vm2242 = vcmp.eq.f32.partialorder %v2241, 8.507059e+37
    %v2243 = vand.u32 %v1808, 2147483648
    %v2244 = vor.u32 1.1754944e-38, %v2243
    %v2245 = vsel %vm2242, %v2244, %v2240
    %v2246 = vmul.f32 %v1744, %v2245
    %v2247 = vrcp.pop %v1809
    %v2248 = vmul.f32 %v1809, %v2247
    %v2249 = vsub.f32 1.0, %v2248
    %v2250 = vmul.f32 %v2247, %v2249
    %v2251 = vadd.f32 %v2247, %v2250
    %vm2252 = vweird.f32 %v1809
    %vm2253 = vweird.f32 %v2247
    %vm2254 = vmor %vm2252, %vm2253
    %v2255 = vsel %vm2254, %v2247, %v2251
    %v2256 = vand.u32 2147483647, %v1809
    %vm2257 = vcmp.eq.f32.partialorder %v2256, 8.507059e+37
    %v2258 = vand.u32 %v1809, 2147483648
    %v2259 = vor.u32 1.1754944e-38, %v2258
    %v2260 = vsel %vm2257, %v2259, %v2255
    %v2261 = vmul.f32 %v1745, %v2260
    %v2262 = vrcp.pop %v1810
    %v2263 = vmul.f32 %v1810, %v2262
    %v2264 = vsub.f32 1.0, %v2263
    %v2265 = vmul.f32 %v2262, %v2264
    %v2266 = vadd.f32 %v2262, %v2265
    %vm2267 = vweird.f32 %v1810
    %vm2268 = vweird.f32 %v2262
    %vm2269 = vmor %vm2267, %vm2268
    %v2270 = vsel %vm2269, %v2262, %v2266
    %v2271 = vand.u32 2147483647, %v1810
    %vm2272 = vcmp.eq.f32.partialorder %v2271, 8.507059e+37
    %v2273 = vand.u32 %v1810, 2147483648
    %v2274 = vor.u32 1.1754944e-38, %v2273
    %v2275 = vsel %vm2272, %v2274, %v2270
    %v2276 = vmul.f32 %v1746, %v2275
    %v2277 = vrcp.pop %v1811
    %v2278 = vmul.f32 %v1811, %v2277
    %v2279 = vsub.f32 1.0, %v2278
    %v2280 = vmul.f32 %v2277, %v2279
    %v2281 = vadd.f32 %v2277, %v2280
    %vm2282 = vweird.f32 %v1811
    %vm2283 = vweird.f32 %v2277
    %vm2284 = vmor %vm2282, %vm2283
    %v2285 = vsel %vm2284, %v2277, %v2281
    %v2286 = vand.u32 2147483647, %v1811
    %vm2287 = vcmp.eq.f32.partialorder %v2286, 8.507059e+37
    %v2288 = vand.u32 %v1811, 2147483648
    %v2289 = vor.u32 1.1754944e-38, %v2288
    %v2290 = vsel %vm2287, %v2289, %v2285
    %v2291 = vmul.f32 %v1747, %v2290
    %v2292 = vlog2.pop %v1826
    %v2293 = vmul.f32 %v2292, 0.6931472
    %v2294 = vlog2.pop %v1841
    %v2295 = vmul.f32 %v2294, 0.6931472
    %v2296 = vlog2.pop %v1856
    %v2297 = vmul.f32 %v2296, 0.6931472
    %v2298 = vlog2.pop %v1871
    %v2299 = vmul.f32 %v2298, 0.6931472
    %v2300 = vlog2.pop %v1886
    %v2301 = vmul.f32 %v2300, 0.6931472
    %v2302 = vlog2.pop %v1901
    %v2303 = vmul.f32 %v2302, 0.6931472
    %v2304 = vlog2.pop %v1916
    %v2305 = vmul.f32 %v2304, 0.6931472
    %v2306 = vlog2.pop %v1931
    %v2307 = vmul.f32 %v2306, 0.6931472
    %v2308 = vlog2.pop %v1946
    %v2309 = vmul.f32 %v2308, 0.6931472
    %v2310 = vlog2.pop %v1961
    %v2311 = vmul.f32 %v2310, 0.6931472
    %v2312 = vlog2.pop %v1976
    %v2313 = vmul.f32 %v2312, 0.6931472
    %v2314 = vlog2.pop %v1991
    %v2315 = vmul.f32 %v2314, 0.6931472
    %v2316 = vlog2.pop %v2006
    %v2317 = vmul.f32 %v2316, 0.6931472
    %v2318 = vlog2.pop %v2021
    %v2319 = vmul.f32 %v2318, 0.6931472
    %v2320 = vlog2.pop %v2036
    %v2321 = vmul.f32 %v2320, 0.6931472
    %v2322 = vlog2.pop %v2051
    %v2323 = vmul.f32 %v2322, 0.6931472
    %v2324 = vlog2.pop %v2066
    %v2325 = vmul.f32 %v2324, 0.6931472
    %v2326 = vlog2.pop %v2081
    %v2327 = vmul.f32 %v2326, 0.6931472
    %v2328 = vlog2.pop %v2096
    %v2329 = vmul.f32 %v2328, 0.6931472
    %v2330 = vlog2.pop %v2111
    %v2331 = vmul.f32 %v2330, 0.6931472
    %v2332 = vlog2.pop %v2126
    %v2333 = vmul.f32 %v2332, 0.6931472
    %v2334 = vlog2.pop %v2141
    %v2335 = vmul.f32 %v2334, 0.6931472
    %v2336 = vlog2.pop %v2156
    %v2337 = vmul.f32 %v2336, 0.6931472
    %v2338 = vlog2.pop %v2171
    %v2339 = vmul.f32 %v2338, 0.6931472
    %v2340 = vlog2.pop %v2186
    %v2341 = vmul.f32 %v2340, 0.6931472
    %v2342 = vlog2.pop %v2201
    %v2343 = vmul.f32 %v2342, 0.6931472
    %v2344 = vlog2.pop %v2216
    %v2345 = vmul.f32 %v2344, 0.6931472
    %v2346 = vlog2.pop %v2231
    %v2347 = vmul.f32 %v2346, 0.6931472
    %v2348 = vlog2.pop %v2246
    %v2349 = vmul.f32 %v2348, 0.6931472
    %v2350 = vlog2.pop %v2261
    %v2351 = vmul.f32 %v2350, 0.6931472
    %v2352 = vlog2.pop %v2276
    %v2353 = vmul.f32 %v2352, 0.6931472
    %v2354 = vlog2.pop %v2291
    %v2355 = vmul.f32 %v2354, 0.6931472
    %v2356 = vsub.f32 0.0, %v2293
    %v2357 = vsub.f32 0.0, %v2295
    %v2358 = vsub.f32 0.0, %v2297
    %v2359 = vsub.f32 0.0, %v2299
    %v2360 = vsub.f32 0.0, %v2301
    %v2361 = vsub.f32 0.0, %v2303
    %v2362 = vsub.f32 0.0, %v2305
    %v2363 = vsub.f32 0.0, %v2307
    %v2364 = vsub.f32 0.0, %v2309
    %v2365 = vsub.f32 0.0, %v2311
    %v2366 = vsub.f32 0.0, %v2313
    %v2367 = vsub.f32 0.0, %v2315
    %v2368 = vsub.f32 0.0, %v2317
    %v2369 = vsub.f32 0.0, %v2319
    %v2370 = vsub.f32 0.0, %v2321
    %v2371 = vsub.f32 0.0, %v2323
    %v2372 = vsub.f32 0.0, %v2325
    %v2373 = vsub.f32 0.0, %v2327
    %v2374 = vsub.f32 0.0, %v2329
    %v2375 = vsub.f32 0.0, %v2331
    %v2376 = vsub.f32 0.0, %v2333
    %v2377 = vsub.f32 0.0, %v2335
    %v2378 = vsub.f32 0.0, %v2337
    %v2379 = vsub.f32 0.0, %v2339
    %v2380 = vsub.f32 0.0, %v2341
    %v2381 = vsub.f32 0.0, %v2343
    %v2382 = vsub.f32 0.0, %v2345
    %v2383 = vsub.f32 0.0, %v2347
    %v2384 = vsub.f32 0.0, %v2349
    %v2385 = vsub.f32 0.0, %v2351
    %v2386 = vsub.f32 0.0, %v2353
    %v2387 = vsub.f32 0.0, %v2355
    %2388 = vst.msk [vmem:[%s4] sm:$0xff] %vm1195, %v2356
    %2389 = vst.msk [vmem:[%s4 + $0x8] sm:$0xff] %vm1195, %v2357
    %2390 = vst.msk [vmem:[%s4 + $0x10] sm:$0xff] %vm1195, %v2358
    %2391 = vst.msk [vmem:[%s4 + $0x18] sm:$0xff] %vm1195, %v2359
    %2392 = vst.msk [vmem:[%s4 + $0x20] sm:$0xff] %vm1195, %v2360
    %2393 = vst.msk [vmem:[%s4 + $0x28] sm:$0xff] %vm1195, %v2361
    %2394 = vst.msk [vmem:[%s4 + $0x30] sm:$0xff] %vm1195, %v2362
    %2395 = vst.msk [vmem:[%s4 + $0x38] sm:$0xff] %vm1195, %v2363
    %2396 = vst.msk [vmem:[%s4 + $0x40] sm:$0xff] %vm1195, %v2364
    %2397 = vst.msk [vmem:[%s4 + $0x48] sm:$0xff] %vm1195, %v2365
    %2398 = vst.msk [vmem:[%s4 + $0x50] sm:$0xff] %vm1195, %v2366
    %2399 = vst.msk [vmem:[%s4 + $0x58] sm:$0xff] %vm1195, %v2367
    %2400 = vst.msk [vmem:[%s4 + $0x60] sm:$0xff] %vm1195, %v2368
    %2401 = vst.msk [vmem:[%s4 + $0x68] sm:$0xff] %vm1195, %v2369
    %2402 = vst.msk [vmem:[%s4 + $0x70] sm:$0xff] %vm1195, %v2370
    %2403 = vst.msk [vmem:[%s4 + $0x78] sm:$0xff] %vm1195, %v2371
    %2404 = vst.msk [vmem:[%s4 + $0x80] sm:$0xff] %vm1195, %v2372
    %2405 = vst.msk [vmem:[%s4 + $0x88] sm:$0xff] %vm1195, %v2373
    %2406 = vst.msk [vmem:[%s4 + $0x90] sm:$0xff] %vm1195, %v2374
    %2407 = vst.msk [vmem:[%s4 + $0x98] sm:$0xff] %vm1195, %v2375
    %2408 = vst.msk [vmem:[%s4 + $0xa0] sm:$0xff] %vm1195, %v2376
    %2409 = vst.msk [vmem:[%s4 + $0xa8] sm:$0xff] %vm1195, %v2377
    %2410 = vst.msk [vmem:[%s4 + $0xb0] sm:$0xff] %vm1195, %v2378
    %2411 = vst.msk [vmem:[%s4 + $0xb8] sm:$0xff] %vm1195, %v2379
    %2412 = vst.msk [vmem:[%s4 + $0xc0] sm:$0xff] %vm1195, %v2380
    %2413 = vst.msk [vmem:[%s4 + $0xc8] sm:$0xff] %vm1195, %v2381
    %2414 = vst.msk [vmem:[%s4 + $0xd0] sm:$0xff] %vm1195, %v2382
    %2415 = vst.msk [vmem:[%s4 + $0xd8] sm:$0xff] %vm1195, %v2383
    %2416 = vst.msk [vmem:[%s4 + $0xe0] sm:$0xff] %vm1195, %v2384
    %2417 = vst.msk [vmem:[%s4 + $0xe8] sm:$0xff] %vm1195, %v2385
    %2418 = vst.msk [vmem:[%s4 + $0xf0] sm:$0xff] %vm1195, %v2386
    %2419 = vst.msk [vmem:[%s4 + $0xf8] sm:$0xff] %vm1195, %v2387
  $region25: #{heco_forward.11} parent=0 // pred_fallthru
    _
  // Predicated region
  $region26: #{heco_forward.11} parent=0 // pred_check
    _
  $region27: #{heco_forward.11} parent=0 // pred_check_branch
    %2421 = sbr.rel (0) target = $region29
  $region28: #{heco_forward.11} parent=0 // pred_region
    _
  $region29: #{heco_forward.11} parent=0 // pred_fallthru
    _
  // Predicated region
  $region30: #{heco_forward.11} parent=0 // pred_check
    _
  $region31: #{heco_forward.11} parent=0 // pred_check_branch
    %2423 = sbr.rel (0) target = $region33
  $region32: #{heco_forward.11} parent=0 // pred_region
    _
  $region33: #{heco_forward.11} parent=0 // pred_fallthru
    _
  // Predicated region
  $region34: #{heco_forward.11} parent=0 // pred_check
    _
  $region35: #{heco_forward.11} parent=0 // pred_check_branch
    %2425 = sbr.rel (0) target = $region37
  $region36: #{heco_forward.11} parent=0 // pred_region
    _
  $region37: #{heco_forward.11} parent=0 // pred_fallthru
    _
  // Predicated region
  $region38: #{heco_forward.11} parent=0 // pred_check
    _
  $region39: #{heco_forward.11} parent=0 // pred_check_branch
    %2427 = sbr.rel (0) target = $region41
  $region40: #{heco_forward.11} parent=0 // pred_region
    _
  $region41: #{heco_forward.11} parent=0 // pred_fallthru
    _
  // Predicated region
  $region42: #{heco_forward.11} parent=0 // pred_check
    _
  $region43: #{heco_forward.11} parent=0 // pred_check_branch
    %2429 = sbr.rel (0) target = $region45
  $region44: #{heco_forward.11} parent=0 // pred_region
    _
  $region45: #{heco_forward.11} parent=0 // pred_fallthru
    _
  // Predicated region
  $region46: #{heco_forward.11} parent=0 // pred_check
    _
  $region47: #{heco_forward.11} parent=0 // pred_check_branch
    %2431 = sbr.rel (0) target = $region49
  $region48: #{heco_forward.11} parent=0 // pred_region
    _
  $region49: #{heco_forward.11} parent=0 // pred_fallthru
    _

</llo_original>
